<compile_context>
chip_gen: v7x
topology: tpu7x:2x2x1
jax: 0.10.0
libtpu: 0.0.40
codegen_flags: <defaults>
</compile_context>

<pallas_src>
import functools

import jax
import jax.numpy as jnp
from jax import lax
from jax.experimental import pallas as pl
from jax.experimental.pallas import tpu as pltpu

EPS = 1e-5
LANE = 128


def _round_up(n, m):
    return ((n + m - 1) // m) * m


# ---------------------------------------------------------------------------
# Kernel
# ---------------------------------------------------------------------------
def bsnet_fc_kernel(
    x_ref,          # (B, Pb)   f32   zero-padded input
    vec_ref,        # (1, total) f32  all biases / BN gamma / BN beta, packed
    w_w1_ref,       # (Pb, 128)  bf16  weighter Linear(bands,64)
    w_w3_ref,       # (128, 128) bf16  weighter Linear(64,128)
    w_cw_ref,       # (128, Pb)  bf16  channel_weight Linear(128,bands)
    w_e1_ref,       # (Pb, 128)  bf16  encoder Linear(bands,64)
    w_e2_ref,       # (128, 128) bf16  encoder Linear(64,128)
    w_e3_ref,       # (128, 256) bf16  encoder Linear(128,256)
    w_e4_ref,       # (256, Pb)  bf16  encoder Linear(256,bands)
    out_ref,        # (B, 2*Pb) f32   [:, :Pb] = channel_weights, [:, Pb:] = output
    *,
    offs,           # static dict: name -> (lane offset, size) into vec_ref
    pb,             # static padded band count (lane multiple)
):
    x = x_ref[...]
    B = x.shape[0]
    # NOTE: inv_b must be the TRUE global batch size.  Valid here because the
    # whole batch is processed as one resident tile (see TODO about the grid).
    inv_b = 1.0 / B
    # Hoisted once: LHS for the MXU column-sum matmuls (broadcasts aren't CSE'd).
    ones_rows = jnp.ones((8, B), jnp.float32)

    def vec(name):
        off, size = offs[name]
        return vec_ref[:, off:off + size]          # static, lane-aligned slice

    def col_sum(v):
        # Per-feature column sum on the MXU (frees the binding VPU/XLU slots).
        # f32 operands / f32 accumulation; all 8 result rows are identical.
        return jnp.dot(ones_rows, v, preferred_element_type=jnp.float32)[0:1, :]

    def bn(v, g_name, b_name):
        # Training-mode BatchNorm1d, centered two-pass variance, f32 math.
        # Padded feature lanes: v == 0 and gamma/beta padded with 0 (see
        # pack_params), so mean = var = scale = 0 and the lanes stay 0.
        mean = col_sum(v) * inv_b
        d = v - mean
        var = col_sum(d * d) * inv_b
        scale = vec(g_name) * lax.rsqrt(var + EPS)
        return d * scale + vec(b_name)

    def linear(a, w_ref, b_name):
        # bf16 operands on the MXU, f32 accumulation.
        return jnp.dot(a.astype(jnp.bfloat16), w_ref[...],
                       preferred_element_type=jnp.float32) + vec(b_name)

    # --- weighter: BN -> Linear -> ReLU -> BN -> ReLU -> Linear -> ReLU ---
    h = bn(x, "g_w0", "b_w0")
    h = jnp.maximum(linear(h, w_w1_ref, "b_w1"), 0.0)
    h = jnp.maximum(bn(h, "g_w2", "b_w2"), 0.0)
    h = jnp.maximum(linear(h, w_w3_ref, "b_w3"), 0.0)

    # --- channel_weight_layer: Linear -> Sigmoid ---
    cw = jax.nn.sigmoid(linear(h, w_cw_ref, "b_cw"))
    out_ref[:, :pb] = cw                     # left half of the output slab

    # --- reweight + encoder ---
    rw = x * cw          # padded x columns are 0, so padded rw columns are 0
    e = jnp.maximum(bn(linear(rw, w_e1_ref, "b_e1"), "g_e1", "be_e1"), 0.0)
    e = jnp.maximum(bn(linear(e, w_e2_ref, "b_e2"), "g_e2", "be_e2"), 0.0)
    e = jnp.maximum(bn(linear(e, w_e3_ref, "b_e3"), "g_e3", "be_e3"), 0.0)
    e = bn(linear(e, w_e4_ref, "b_e4"), "g_e4", "be_e4")
    out_ref[:, pb:2 * pb] = jax.nn.sigmoid(e)   # right half of the output slab


# ---------------------------------------------------------------------------
# Parameter init (raw, natural shapes, f32) and packing (padded, bf16 weights)
# ---------------------------------------------------------------------------
def init_params(bands, key):
    """Deterministic parameter init (PyTorch default Linear init style)."""
    def linear(k, fan_in, fan_out):
        k1, k2 = jax.random.split(k)
        bound = 1.0 / float(fan_in) ** 0.5
        w = jax.random.uniform(k1, (fan_in, fan_out), jnp.float32, -bound, bound)
        b = jax.random.uniform(k2, (1, fan_out), jnp.float32, -bound, bound)
        return w, b

    def bn(dim):
        return jnp.ones((1, dim), jnp.float32), jnp.zeros((1, dim), jnp.float32)

    ks = jax.random.split(key, 6)
    g_w0, b_w0 = bn(bands)
    w_w1, b_w1 = linear(ks[0], bands, 64)
    g_w2, b_w2 = bn(64)
    w_w3, b_w3 = linear(ks[1], 64, 128)
    w_cw, b_cw = linear(ks[2], 128, bands)
    w_e1, b_e1 = linear(ks[3], bands, 64)
    g_e1, be_e1 = bn(64)
    w_e2, b_e2 = linear(ks[4], 64, 128)
    g_e2, be_e2 = bn(128)
    w_e3, b_e3 = linear(ks[5], 128, 256)
    g_e3, be_e3 = bn(256)
    w_e4, b_e4 = linear(jax.random.fold_in(key, 99), 256, bands)
    g_e4, be_e4 = bn(bands)

    return (
        g_w0, b_w0, w_w1, b_w1, g_w2, b_w2, w_w3, b_w3,
        w_cw, b_cw,
        w_e1, b_e1, g_e1, be_e1,
        w_e2, b_e2, g_e2, be_e2,
        w_e3, b_e3, g_e3, be_e3,
        w_e4, b_e4, g_e4, be_e4,
    )


def pack_params(raw_params, bands):
    """Pad feature dims to 128-lane multiples, cast weights to bf16 and
    concatenate all (1, dim) vectors into one VMEM array.

    NOTE: gamma/beta/bias are zero-padded (NOT gamma=1) in the dead lanes, so
    padded feature lanes carry scale==0 and stay exactly zero through every BN.
    """
    (g_w0, b_w0, w_w1, b_w1, g_w2, b_w2, w_w3, b_w3,
     w_cw, b_cw,
     w_e1, b_e1, g_e1, be_e1,
     w_e2, b_e2, g_e2, be_e2,
     w_e3, b_e3, g_e3, be_e3,
     w_e4, b_e4, g_e4, be_e4) = raw_params

    pb = _round_up(bands, LANE)   # bands -> 128
    ph = _round_up(64, LANE)      # 64    -> 128

    def pad_vec(v, dim):
        return jnp.pad(v, ((0, 0), (0, dim - v.shape[1])))

    def pad_w(w, rows, cols):
        return jnp.pad(w, ((0, rows - w.shape[0]),
                           (0, cols - w.shape[1]))).astype(jnp.bfloat16)

    vec_entries = [
        ("g_w0", g_w0, pb), ("b_w0", b_w0, pb),
        ("b_w1", b_w1, ph), ("g_w2", g_w2, ph), ("b_w2", b_w2, ph),
        ("b_w3", b_w3, 128),
        ("b_cw", b_cw, pb),
        ("b_e1", b_e1, ph), ("g_e1", g_e1, ph), ("be_e1", be_e1, ph),
        ("b_e2", b_e2, 128), ("g_e2", g_e2, 128), ("be_e2", be_e2, 128),
        ("b_e3", b_e3, 256), ("g_e3", g_e3, 256), ("be_e3", be_e3, 256),
        ("b_e4", b_e4, pb), ("g_e4", g_e4, pb), ("be_e4", be_e4, pb),
    ]
    offs, parts, off = {}, [], 0
    for name, v, dim in vec_entries:
        offs[name] = (off, dim)
        parts.append(pad_vec(v, dim))
        off += dim
    vec = jnp.concatenate(parts, axis=1)     # (1, 2816) for bands<=128

    weights = (
        pad_w(w_w1, pb, ph),
        pad_w(w_w3, ph, 128),
        pad_w(w_cw, 128, pb),
        pad_w(w_e1, pb, ph),
        pad_w(w_e2, ph, 128),
        pad_w(w_e3, 128, 256),
        pad_w(w_e4, 256, pb),
    )
    return {"vec": vec, "weights": weights, "offs": offs,
            "pb": pb, "bands": bands}


# ---------------------------------------------------------------------------
# Wrapper
# ---------------------------------------------------------------------------
def bsnet_fc_forward(x, packed):
    """Runs the fused forward pass.

    Returns a lane-dense f32 slab of shape (batch, 2*Pb) where Pb = bands
    rounded up to 128: columns [:Pb] hold channel_weights and columns [Pb:]
    hold the encoder output, both zero/0.5-padded past `bands`.  Use
    `unpack_outputs(slab, bands)` at the consumer to recover the
    (channel_weights, output) pair of the original module (fusing the band
    slice into the consumer avoids extra post-kernel slice launches).
    """
    B, bands = x.shape
    pb = packed["pb"]
    vec = packed["vec"]
    weights = packed["weights"]
    offs = packed["offs"]

    x_p = jnp.pad(x, ((0, 0), (0, pb - bands)))      # lane-dense input tile

    vmem = pl.BlockSpec(memory_space=pltpu.MemorySpace.VMEM)
    n_in = 2 + len(weights)

    # --- advisory cost estimate for the XLA scheduler -----------------------
    mm_flops = 2 * B * (pb * 128 + 128 * 128 + 128 * pb
                        + pb * 128 + 128 * 128 + 128 * 256 + 256 * pb)
    bn_feats = (pb, 128, 128, 128, 256, pb)          # feature width per BN layer
    stat_flops = sum(2 * 2 * 8 * B * f for f in bn_feats)   # 2 col-sum dots / BN
    w_bytes = sum(int(w.size) * 2 for w in weights)
    out_bytes = B * 2 * pb * 4
    bytes_accessed = int(x_p.size * 4 + vec.size * 4 + w_bytes + out_bytes)

    # --- scoped-VMEM budget derived from the actual footprint ---------------
    io_bytes = int(x_p.size) * 4 + int(vec.size) * 4 + w_bytes + out_bytes
    live_bytes = 16 * B * 2 * pb * 4   # generous allowance for live f32 activations
    vmem_limit = min(_round_up(io_bytes + live_bytes, 1 << 20), 64 * 1024 * 1024)

    kernel = functools.partial(bsnet_fc_kernel, offs=offs, pb=pb)
    out_slab = pl.pallas_call(
        kernel,
        out_shape=jax.ShapeDtypeStruct((B, 2 * pb), jnp.float32),
        in_specs=[vmem] * n_in,
        out_specs=vmem,
        compiler_params=pltpu.CompilerParams(vmem_limit_bytes=vmem_limit),
        cost_estimate=pl.CostEstimate(
            flops=int(mm_flops + stat_flops),
            transcendentals=int(2 * B * pb),
            bytes_accessed=bytes_accessed),
    )(x_p, vec, *weights)

    return out_slab


def unpack_outputs(out_slab, bands):
    """(channel_weights, output), each (batch, bands).  Fuse into the consumer."""
    pb = out_slab.shape[1] // 2
    return out_slab[:, :bands], out_slab[:, pb:pb + bands]


# ---------------------------------------------------------------------------
# Pure-JAX reference (same math, bf16 matmul operands / f32 accumulate)
# ---------------------------------------------------------------------------
def _reference_forward(x, raw_params):
    (g_w0, b_w0, w_w1, b_w1, g_w2, b_w2, w_w3, b_w3,
     w_cw, b_cw,
     w_e1, b_e1, g_e1, be_e1,
     w_e2, b_e2, g_e2, be_e2,
     w_e3, b_e3, g_e3, be_e3,
     w_e4, b_e4, g_e4, be_e4) = raw_params

    def bn(v, g, b):
        m = jnp.mean(v, axis=0, keepdims=True)
        var = jnp.mean((v - m) ** 2, axis=0, keepdims=True)
        return (v - m) / jnp.sqrt(var + EPS) * g + b

    def lin(a, w, b):
        return jnp.dot(a.astype(jnp.bfloat16), w.astype(jnp.bfloat16),
                       preferred_element_type=jnp.float32) + b

    h = bn(x, g_w0, b_w0)
    h = jnp.maximum(lin(h, w_w1, b_w1), 0.0)
    h = jnp.maximum(bn(h, g_w2, b_w2), 0.0)
    h = jnp.maximum(lin(h, w_w3, b_w3), 0.0)
    cw = jax.nn.sigmoid(lin(h, w_cw, b_cw))
    rw = x * cw
    e = jnp.maximum(bn(lin(rw, w_e1, b_e1), g_e1, be_e1), 0.0)
    e = jnp.maximum(bn(lin(e, w_e2, b_e2), g_e2, be_e2), 0.0)
    e = jnp.maximum(bn(lin(e, w_e3, b_e3), g_e3, be_e3), 0.0)
    e = jax.nn.sigmoid(bn(lin(e, w_e4, b_e4), g_e4, be_e4))
    return cw, e


if __name__ == "__main__":
    # 512 rows fills the 256-wide MXU of v6e/v7x (v5e is full at 128) and BN
    # statistics are taken over the whole batch, matching training-mode torch.
    BATCH = 512
    BANDS = 16

    key = jax.random.PRNGKey(0)
    kx, kp = jax.random.split(key)
    x = jax.random.normal(kx, (BATCH, BANDS), dtype=jnp.float32)

    raw_params = init_params(BANDS, kp)
    packed = pack_params(raw_params, BANDS)

    out_slab = jax.block_until_ready(bsnet_fc_forward(x, packed))
    cw, out = unpack_outputs(out_slab, BANDS)

    cw_ref, out_ref = _reference_forward(x, raw_params)
    assert cw.shape == (BATCH, BANDS) and out.shape == (BATCH, BANDS)
    # Tolerance sized for bf16 MXU operands in both implementations plus the
    # different (but f32-accumulated) BN reduction path; sigmoid outputs are in
    # [0,1] so 3e-3 abs still catches any structural error.
    assert jnp.allclose(cw, cw_ref, atol=3e-3, rtol=3e-3)
    assert jnp.allclose(out, out_ref, atol=3e-3, rtol=3e-3)

    print("KERNEL_OK")
</pallas_src>

<mosaic_0001>
module attributes {stable_mosaic.version = 11 : i64} {
  func.func @bsnet_fc_kernel(%arg0: memref<512x128xf32, #tpu.memory_space<vmem>>, %arg1: memref<1x2816xf32, #tpu.memory_space<vmem>>, %arg2: memref<128x128xbf16, #tpu.memory_space<vmem>>, %arg3: memref<128x128xbf16, #tpu.memory_space<vmem>>, %arg4: memref<128x128xbf16, #tpu.memory_space<vmem>>, %arg5: memref<128x128xbf16, #tpu.memory_space<vmem>>, %arg6: memref<128x128xbf16, #tpu.memory_space<vmem>>, %arg7: memref<128x256xbf16, #tpu.memory_space<vmem>>, %arg8: memref<256x128xbf16, #tpu.memory_space<vmem>>, %arg9: memref<512x256xf32, #tpu.memory_space<vmem>>) attributes {dimension_semantics = [], scalar_prefetch = 0 : i64, scratch_operands = 0 : i64, tpu.core_type = #tpu.core_type<tc>} {
    %c0 = arith.constant 0 : index
    %c0_0 = arith.constant 0 : index
    %0 = vector.load %arg0[%c0, %c0_0] : memref<512x128xf32, #tpu.memory_space<vmem>>, vector<512x128xf32>
    %cst = arith.constant 1.000000e+00 : f32
    %1 = vector.broadcast %cst : f32 to vector<8x512xf32>
    %cst_1 = arith.constant dense<0.000000e+00> : vector<8x128xf32>
    %2 = tpu.matmul %1, %0, %cst_1 {dimension_numbers = #tpu.dot_dimension_numbers<[1], [0], [0], [1], [0, 0, 1, 1], [], []>} : vector<8x512xf32>, vector<512x128xf32>, vector<8x128xf32> -> vector<8x128xf32>
    %3 = vector.extract_strided_slice %2 {offsets = [0, 0], sizes = [1, 128], strides = [1, 1]} : vector<8x128xf32> to vector<1x128xf32>
    %cst_2 = arith.constant 0.001953125 : f32
    %4 = vector.broadcast %cst_2 : f32 to vector<1x128xf32>
    %5 = arith.mulf %3, %4 : vector<1x128xf32>
    %6 = vector.broadcast %5 : vector<1x128xf32> to vector<512x128xf32>
    %7 = arith.subf %0, %6 : vector<512x128xf32>
    %8 = arith.mulf %7, %7 : vector<512x128xf32>
    %cst_3 = arith.constant dense<0.000000e+00> : vector<8x128xf32>
    %9 = tpu.matmul %1, %8, %cst_3 {dimension_numbers = #tpu.dot_dimension_numbers<[1], [0], [0], [1], [0, 0, 1, 1], [], []>} : vector<8x512xf32>, vector<512x128xf32>, vector<8x128xf32> -> vector<8x128xf32>
    %10 = vector.extract_strided_slice %9 {offsets = [0, 0], sizes = [1, 128], strides = [1, 1]} : vector<8x128xf32> to vector<1x128xf32>
    %cst_4 = arith.constant 0.001953125 : f32
    %11 = vector.broadcast %cst_4 : f32 to vector<1x128xf32>
    %12 = arith.mulf %10, %11 : vector<1x128xf32>
    %c0_5 = arith.constant 0 : index
    %c0_6 = arith.constant 0 : index
    %13 = vector.load %arg1[%c0_5, %c0_6] : memref<1x2816xf32, #tpu.memory_space<vmem>>, vector<1x128xf32>
    %cst_7 = arith.constant 9.99999974E-6 : f32
    %14 = vector.broadcast %cst_7 : f32 to vector<1x128xf32>
    %15 = arith.addf %12, %14 : vector<1x128xf32>
    %16 = math.rsqrt %15 : vector<1x128xf32>
    %17 = arith.mulf %13, %16 : vector<1x128xf32>
    %18 = vector.broadcast %17 : vector<1x128xf32> to vector<512x128xf32>
    %19 = arith.mulf %7, %18 : vector<512x128xf32>
    %c0_8 = arith.constant 0 : index
    %c128 = arith.constant 128 : index
    %20 = vector.load %arg1[%c0_8, %c128] : memref<1x2816xf32, #tpu.memory_space<vmem>>, vector<1x128xf32>
    %21 = vector.broadcast %20 : vector<1x128xf32> to vector<512x128xf32>
    %22 = arith.addf %19, %21 : vector<512x128xf32>
    %23 = arith.truncf %22 : vector<512x128xf32> to vector<512x128xbf16>
    %c0_9 = arith.constant 0 : index
    %c0_10 = arith.constant 0 : index
    %24 = vector.load %arg2[%c0_9, %c0_10] : memref<128x128xbf16, #tpu.memory_space<vmem>>, vector<128x128xbf16>
    %cst_11 = arith.constant dense<0.000000e+00> : vector<512x128xf32>
    %25 = tpu.matmul %23, %24, %cst_11 {dimension_numbers = #tpu.dot_dimension_numbers<[1], [0], [0], [1], [0, 0, 1, 1], [], []>} : vector<512x128xbf16>, vector<128x128xbf16>, vector<512x128xf32> -> vector<512x128xf32>
    %c0_12 = arith.constant 0 : index
    %c256 = arith.constant 256 : index
    %26 = vector.load %arg1[%c0_12, %c256] : memref<1x2816xf32, #tpu.memory_space<vmem>>, vector<1x128xf32>
    %27 = vector.broadcast %26 : vector<1x128xf32> to vector<512x128xf32>
    %28 = arith.addf %25, %27 : vector<512x128xf32>
    %cst_13 = arith.constant 0.000000e+00 : f32
    %29 = vector.broadcast %cst_13 : f32 to vector<512x128xf32>
    %30 = arith.maximumf %28, %29 : vector<512x128xf32>
    %cst_14 = arith.constant dense<0.000000e+00> : vector<8x128xf32>
    %31 = tpu.matmul %1, %30, %cst_14 {dimension_numbers = #tpu.dot_dimension_numbers<[1], [0], [0], [1], [0, 0, 1, 1], [], []>} : vector<8x512xf32>, vector<512x128xf32>, vector<8x128xf32> -> vector<8x128xf32>
    %32 = vector.extract_strided_slice %31 {offsets = [0, 0], sizes = [1, 128], strides = [1, 1]} : vector<8x128xf32> to vector<1x128xf32>
    %cst_15 = arith.constant 0.001953125 : f32
    %33 = vector.broadcast %cst_15 : f32 to vector<1x128xf32>
    %34 = arith.mulf %32, %33 : vector<1x128xf32>
    %35 = vector.broadcast %34 : vector<1x128xf32> to vector<512x128xf32>
    %36 = arith.subf %30, %35 : vector<512x128xf32>
    %37 = arith.mulf %36, %36 : vector<512x128xf32>
    %cst_16 = arith.constant dense<0.000000e+00> : vector<8x128xf32>
    %38 = tpu.matmul %1, %37, %cst_16 {dimension_numbers = #tpu.dot_dimension_numbers<[1], [0], [0], [1], [0, 0, 1, 1], [], []>} : vector<8x512xf32>, vector<512x128xf32>, vector<8x128xf32> -> vector<8x128xf32>
    %39 = vector.extract_strided_slice %38 {offsets = [0, 0], sizes = [1, 128], strides = [1, 1]} : vector<8x128xf32> to vector<1x128xf32>
    %cst_17 = arith.constant 0.001953125 : f32
    %40 = vector.broadcast %cst_17 : f32 to vector<1x128xf32>
    %41 = arith.mulf %39, %40 : vector<1x128xf32>
    %c0_18 = arith.constant 0 : index
    %c384 = arith.constant 384 : index
    %42 = vector.load %arg1[%c0_18, %c384] : memref<1x2816xf32, #tpu.memory_space<vmem>>, vector<1x128xf32>
    %cst_19 = arith.constant 9.99999974E-6 : f32
    %43 = vector.broadcast %cst_19 : f32 to vector<1x128xf32>
    %44 = arith.addf %41, %43 : vector<1x128xf32>
    %45 = math.rsqrt %44 : vector<1x128xf32>
    %46 = arith.mulf %42, %45 : vector<1x128xf32>
    %47 = vector.broadcast %46 : vector<1x128xf32> to vector<512x128xf32>
    %48 = arith.mulf %36, %47 : vector<512x128xf32>
    %c0_20 = arith.constant 0 : index
    %c512 = arith.constant 512 : index
    %49 = vector.load %arg1[%c0_20, %c512] : memref<1x2816xf32, #tpu.memory_space<vmem>>, vector<1x128xf32>
    %50 = vector.broadcast %49 : vector<1x128xf32> to vector<512x128xf32>
    %51 = arith.addf %48, %50 : vector<512x128xf32>
    %cst_21 = arith.constant 0.000000e+00 : f32
    %52 = vector.broadcast %cst_21 : f32 to vector<512x128xf32>
    %53 = arith.maximumf %51, %52 : vector<512x128xf32>
    %54 = arith.truncf %53 : vector<512x128xf32> to vector<512x128xbf16>
    %c0_22 = arith.constant 0 : index
    %c0_23 = arith.constant 0 : index
    %55 = vector.load %arg3[%c0_22, %c0_23] : memref<128x128xbf16, #tpu.memory_space<vmem>>, vector<128x128xbf16>
    %cst_24 = arith.constant dense<0.000000e+00> : vector<512x128xf32>
    %56 = tpu.matmul %54, %55, %cst_24 {dimension_numbers = #tpu.dot_dimension_numbers<[1], [0], [0], [1], [0, 0, 1, 1], [], []>} : vector<512x128xbf16>, vector<128x128xbf16>, vector<512x128xf32> -> vector<512x128xf32>
    %c0_25 = arith.constant 0 : index
    %c640 = arith.constant 640 : index
    %57 = vector.load %arg1[%c0_25, %c640] : memref<1x2816xf32, #tpu.memory_space<vmem>>, vector<1x128xf32>
    %58 = vector.broadcast %57 : vector<1x128xf32> to vector<512x128xf32>
    %59 = arith.addf %56, %58 : vector<512x128xf32>
    %cst_26 = arith.constant 0.000000e+00 : f32
    %60 = vector.broadcast %cst_26 : f32 to vector<512x128xf32>
    %61 = arith.maximumf %59, %60 : vector<512x128xf32>
    %62 = arith.truncf %61 : vector<512x128xf32> to vector<512x128xbf16>
    %c0_27 = arith.constant 0 : index
    %c0_28 = arith.constant 0 : index
    %63 = vector.load %arg4[%c0_27, %c0_28] : memref<128x128xbf16, #tpu.memory_space<vmem>>, vector<128x128xbf16>
    %cst_29 = arith.constant dense<0.000000e+00> : vector<512x128xf32>
    %64 = tpu.matmul %62, %63, %cst_29 {dimension_numbers = #tpu.dot_dimension_numbers<[1], [0], [0], [1], [0, 0, 1, 1], [], []>} : vector<512x128xbf16>, vector<128x128xbf16>, vector<512x128xf32> -> vector<512x128xf32>
    %c0_30 = arith.constant 0 : index
    %c768 = arith.constant 768 : index
    %65 = vector.load %arg1[%c0_30, %c768] : memref<1x2816xf32, #tpu.memory_space<vmem>>, vector<1x128xf32>
    %66 = vector.broadcast %65 : vector<1x128xf32> to vector<512x128xf32>
    %67 = arith.addf %64, %66 : vector<512x128xf32>
    %68 = arith.negf %67 : vector<512x128xf32>
    %69 = math.exp %68 : vector<512x128xf32>
    %cst_31 = arith.constant 1.000000e+00 : f32
    %70 = vector.broadcast %cst_31 : f32 to vector<512x128xf32>
    %71 = arith.addf %70, %69 : vector<512x128xf32>
    %72 = arith.divf %70, %71 : vector<512x128xf32>
    %c0_32 = arith.constant 0 : index
    %c0_33 = arith.constant 0 : index
    %73 = vector.load %arg9[%c0_32, %c0_33] : memref<512x256xf32, #tpu.memory_space<vmem>>, vector<512x128xf32>
    tpu.vector_store %arg9[%c0_32, %c0_33], %72 {strides = array<i32>} : memref<512x256xf32, #tpu.memory_space<vmem>>, vector<512x128xf32>,
    %74 = arith.mulf %0, %72 : vector<512x128xf32>
    %75 = arith.truncf %74 : vector<512x128xf32> to vector<512x128xbf16>
    %c0_34 = arith.constant 0 : index
    %c0_35 = arith.constant 0 : index
    %76 = vector.load %arg5[%c0_34, %c0_35] : memref<128x128xbf16, #tpu.memory_space<vmem>>, vector<128x128xbf16>
    %cst_36 = arith.constant dense<0.000000e+00> : vector<512x128xf32>
    %77 = tpu.matmul %75, %76, %cst_36 {dimension_numbers = #tpu.dot_dimension_numbers<[1], [0], [0], [1], [0, 0, 1, 1], [], []>} : vector<512x128xbf16>, vector<128x128xbf16>, vector<512x128xf32> -> vector<512x128xf32>
    %c0_37 = arith.constant 0 : index
    %c896 = arith.constant 896 : index
    %78 = vector.load %arg1[%c0_37, %c896] : memref<1x2816xf32, #tpu.memory_space<vmem>>, vector<1x128xf32>
    %79 = vector.broadcast %78 : vector<1x128xf32> to vector<512x128xf32>
    %80 = arith.addf %77, %79 : vector<512x128xf32>
    %cst_38 = arith.constant dense<0.000000e+00> : vector<8x128xf32>
    %81 = tpu.matmul %1, %80, %cst_38 {dimension_numbers = #tpu.dot_dimension_numbers<[1], [0], [0], [1], [0, 0, 1, 1], [], []>} : vector<8x512xf32>, vector<512x128xf32>, vector<8x128xf32> -> vector<8x128xf32>
    %82 = vector.extract_strided_slice %81 {offsets = [0, 0], sizes = [1, 128], strides = [1, 1]} : vector<8x128xf32> to vector<1x128xf32>
    %cst_39 = arith.constant 0.001953125 : f32
    %83 = vector.broadcast %cst_39 : f32 to vector<1x128xf32>
    %84 = arith.mulf %82, %83 : vector<1x128xf32>
    %85 = vector.broadcast %84 : vector<1x128xf32> to vector<512x128xf32>
    %86 = arith.subf %80, %85 : vector<512x128xf32>
    %87 = arith.mulf %86, %86 : vector<512x128xf32>
    %cst_40 = arith.constant dense<0.000000e+00> : vector<8x128xf32>
    %88 = tpu.matmul %1, %87, %cst_40 {dimension_numbers = #tpu.dot_dimension_numbers<[1], [0], [0], [1], [0, 0, 1, 1], [], []>} : vector<8x512xf32>, vector<512x128xf32>, vector<8x128xf32> -> vector<8x128xf32>
    %89 = vector.extract_strided_slice %88 {offsets = [0, 0], sizes = [1, 128], strides = [1, 1]} : vector<8x128xf32> to vector<1x128xf32>
    %cst_41 = arith.constant 0.001953125 : f32
    %90 = vector.broadcast %cst_41 : f32 to vector<1x128xf32>
    %91 = arith.mulf %89, %90 : vector<1x128xf32>
    %c0_42 = arith.constant 0 : index
    %c1024 = arith.constant 1024 : index
    %92 = vector.load %arg1[%c0_42, %c1024] : memref<1x2816xf32, #tpu.memory_space<vmem>>, vector<1x128xf32>
    %cst_43 = arith.constant 9.99999974E-6 : f32
    %93 = vector.broadcast %cst_43 : f32 to vector<1x128xf32>
    %94 = arith.addf %91, %93 : vector<1x128xf32>
    %95 = math.rsqrt %94 : vector<1x128xf32>
    %96 = arith.mulf %92, %95 : vector<1x128xf32>
    %97 = vector.broadcast %96 : vector<1x128xf32> to vector<512x128xf32>
    %98 = arith.mulf %86, %97 : vector<512x128xf32>
    %c0_44 = arith.constant 0 : index
    %c1152 = arith.constant 1152 : index
    %99 = vector.load %arg1[%c0_44, %c1152] : memref<1x2816xf32, #tpu.memory_space<vmem>>, vector<1x128xf32>
    %100 = vector.broadcast %99 : vector<1x128xf32> to vector<512x128xf32>
    %101 = arith.addf %98, %100 : vector<512x128xf32>
    %cst_45 = arith.constant 0.000000e+00 : f32
    %102 = vector.broadcast %cst_45 : f32 to vector<512x128xf32>
    %103 = arith.maximumf %101, %102 : vector<512x128xf32>
    %104 = arith.truncf %103 : vector<512x128xf32> to vector<512x128xbf16>
    %c0_46 = arith.constant 0 : index
    %c0_47 = arith.constant 0 : index
    %105 = vector.load %arg6[%c0_46, %c0_47] : memref<128x128xbf16, #tpu.memory_space<vmem>>, vector<128x128xbf16>
    %cst_48 = arith.constant dense<0.000000e+00> : vector<512x128xf32>
    %106 = tpu.matmul %104, %105, %cst_48 {dimension_numbers = #tpu.dot_dimension_numbers<[1], [0], [0], [1], [0, 0, 1, 1], [], []>} : vector<512x128xbf16>, vector<128x128xbf16>, vector<512x128xf32> -> vector<512x128xf32>
    %c0_49 = arith.constant 0 : index
    %c1280 = arith.constant 1280 : index
    %107 = vector.load %arg1[%c0_49, %c1280] : memref<1x2816xf32, #tpu.memory_space<vmem>>, vector<1x128xf32>
    %108 = vector.broadcast %107 : vector<1x128xf32> to vector<512x128xf32>
    %109 = arith.addf %106, %108 : vector<512x128xf32>
    %cst_50 = arith.constant dense<0.000000e+00> : vector<8x128xf32>
    %110 = tpu.matmul %1, %109, %cst_50 {dimension_numbers = #tpu.dot_dimension_numbers<[1], [0], [0], [1], [0, 0, 1, 1], [], []>} : vector<8x512xf32>, vector<512x128xf32>, vector<8x128xf32> -> vector<8x128xf32>
    %111 = vector.extract_strided_slice %110 {offsets = [0, 0], sizes = [1, 128], strides = [1, 1]} : vector<8x128xf32> to vector<1x128xf32>
    %cst_51 = arith.constant 0.001953125 : f32
    %112 = vector.broadcast %cst_51 : f32 to vector<1x128xf32>
    %113 = arith.mulf %111, %112 : vector<1x128xf32>
    %114 = vector.broadcast %113 : vector<1x128xf32> to vector<512x128xf32>
    %115 = arith.subf %109, %114 : vector<512x128xf32>
    %116 = arith.mulf %115, %115 : vector<512x128xf32>
    %cst_52 = arith.constant dense<0.000000e+00> : vector<8x128xf32>
    %117 = tpu.matmul %1, %116, %cst_52 {dimension_numbers = #tpu.dot_dimension_numbers<[1], [0], [0], [1], [0, 0, 1, 1], [], []>} : vector<8x512xf32>, vector<512x128xf32>, vector<8x128xf32> -> vector<8x128xf32>
    %118 = vector.extract_strided_slice %117 {offsets = [0, 0], sizes = [1, 128], strides = [1, 1]} : vector<8x128xf32> to vector<1x128xf32>
    %cst_53 = arith.constant 0.001953125 : f32
    %119 = vector.broadcast %cst_53 : f32 to vector<1x128xf32>
    %120 = arith.mulf %118, %119 : vector<1x128xf32>
    %c0_54 = arith.constant 0 : index
    %c1408 = arith.constant 1408 : index
    %121 = vector.load %arg1[%c0_54, %c1408] : memref<1x2816xf32, #tpu.memory_space<vmem>>, vector<1x128xf32>
    %cst_55 = arith.constant 9.99999974E-6 : f32
    %122 = vector.broadcast %cst_55 : f32 to vector<1x128xf32>
    %123 = arith.addf %120, %122 : vector<1x128xf32>
    %124 = math.rsqrt %123 : vector<1x128xf32>
    %125 = arith.mulf %121, %124 : vector<1x128xf32>
    %126 = vector.broadcast %125 : vector<1x128xf32> to vector<512x128xf32>
    %127 = arith.mulf %115, %126 : vector<512x128xf32>
    %c0_56 = arith.constant 0 : index
    %c1536 = arith.constant 1536 : index
    %128 = vector.load %arg1[%c0_56, %c1536] : memref<1x2816xf32, #tpu.memory_space<vmem>>, vector<1x128xf32>
    %129 = vector.broadcast %128 : vector<1x128xf32> to vector<512x128xf32>
    %130 = arith.addf %127, %129 : vector<512x128xf32>
    %cst_57 = arith.constant 0.000000e+00 : f32
    %131 = vector.broadcast %cst_57 : f32 to vector<512x128xf32>
    %132 = arith.maximumf %130, %131 : vector<512x128xf32>
    %133 = arith.truncf %132 : vector<512x128xf32> to vector<512x128xbf16>
    %c0_58 = arith.constant 0 : index
    %c0_59 = arith.constant 0 : index
    %134 = vector.load %arg7[%c0_58, %c0_59] : memref<128x256xbf16, #tpu.memory_space<vmem>>, vector<128x256xbf16>
    %cst_60 = arith.constant dense<0.000000e+00> : vector<512x256xf32>
    %135 = tpu.matmul %133, %134, %cst_60 {dimension_numbers = #tpu.dot_dimension_numbers<[1], [0], [0], [1], [0, 0, 1, 1], [], []>} : vector<512x128xbf16>, vector<128x256xbf16>, vector<512x256xf32> -> vector<512x256xf32>
    %c0_61 = arith.constant 0 : index
    %c1664 = arith.constant 1664 : index
    %136 = vector.load %arg1[%c0_61, %c1664] : memref<1x2816xf32, #tpu.memory_space<vmem>>, vector<1x256xf32>
    %137 = vector.broadcast %136 : vector<1x256xf32> to vector<512x256xf32>
    %138 = arith.addf %135, %137 : vector<512x256xf32>
    %cst_62 = arith.constant dense<0.000000e+00> : vector<8x256xf32>
    %139 = tpu.matmul %1, %138, %cst_62 {dimension_numbers = #tpu.dot_dimension_numbers<[1], [0], [0], [1], [0, 0, 1, 1], [], []>} : vector<8x512xf32>, vector<512x256xf32>, vector<8x256xf32> -> vector<8x256xf32>
    %140 = vector.extract_strided_slice %139 {offsets = [0, 0], sizes = [1, 256], strides = [1, 1]} : vector<8x256xf32> to vector<1x256xf32>
    %cst_63 = arith.constant 0.001953125 : f32
    %141 = vector.broadcast %cst_63 : f32 to vector<1x256xf32>
    %142 = arith.mulf %140, %141 : vector<1x256xf32>
    %143 = vector.broadcast %142 : vector<1x256xf32> to vector<512x256xf32>
    %144 = arith.subf %138, %143 : vector<512x256xf32>
    %145 = arith.mulf %144, %144 : vector<512x256xf32>
    %cst_64 = arith.constant dense<0.000000e+00> : vector<8x256xf32>
    %146 = tpu.matmul %1, %145, %cst_64 {dimension_numbers = #tpu.dot_dimension_numbers<[1], [0], [0], [1], [0, 0, 1, 1], [], []>} : vector<8x512xf32>, vector<512x256xf32>, vector<8x256xf32> -> vector<8x256xf32>
    %147 = vector.extract_strided_slice %146 {offsets = [0, 0], sizes = [1, 256], strides = [1, 1]} : vector<8x256xf32> to vector<1x256xf32>
    %cst_65 = arith.constant 0.001953125 : f32
    %148 = vector.broadcast %cst_65 : f32 to vector<1x256xf32>
    %149 = arith.mulf %147, %148 : vector<1x256xf32>
    %c0_66 = arith.constant 0 : index
    %c1920 = arith.constant 1920 : index
    %150 = vector.load %arg1[%c0_66, %c1920] : memref<1x2816xf32, #tpu.memory_space<vmem>>, vector<1x256xf32>
    %cst_67 = arith.constant 9.99999974E-6 : f32
    %151 = vector.broadcast %cst_67 : f32 to vector<1x256xf32>
    %152 = arith.addf %149, %151 : vector<1x256xf32>
    %153 = math.rsqrt %152 : vector<1x256xf32>
    %154 = arith.mulf %150, %153 : vector<1x256xf32>
    %155 = vector.broadcast %154 : vector<1x256xf32> to vector<512x256xf32>
    %156 = arith.mulf %144, %155 : vector<512x256xf32>
    %c0_68 = arith.constant 0 : index
    %c2176 = arith.constant 2176 : index
    %157 = vector.load %arg1[%c0_68, %c2176] : memref<1x2816xf32, #tpu.memory_space<vmem>>, vector<1x256xf32>
    %158 = vector.broadcast %157 : vector<1x256xf32> to vector<512x256xf32>
    %159 = arith.addf %156, %158 : vector<512x256xf32>
    %cst_69 = arith.constant 0.000000e+00 : f32
    %160 = vector.broadcast %cst_69 : f32 to vector<512x256xf32>
    %161 = arith.maximumf %159, %160 : vector<512x256xf32>
    %162 = arith.truncf %161 : vector<512x256xf32> to vector<512x256xbf16>
    %c0_70 = arith.constant 0 : index
    %c0_71 = arith.constant 0 : index
    %163 = vector.load %arg8[%c0_70, %c0_71] : memref<256x128xbf16, #tpu.memory_space<vmem>>, vector<256x128xbf16>
    %cst_72 = arith.constant dense<0.000000e+00> : vector<512x128xf32>
    %164 = tpu.matmul %162, %163, %cst_72 {dimension_numbers = #tpu.dot_dimension_numbers<[1], [0], [0], [1], [0, 0, 1, 1], [], []>} : vector<512x256xbf16>, vector<256x128xbf16>, vector<512x128xf32> -> vector<512x128xf32>
    %c0_73 = arith.constant 0 : index
    %c2432 = arith.constant 2432 : index
    %165 = vector.load %arg1[%c0_73, %c2432] : memref<1x2816xf32, #tpu.memory_space<vmem>>, vector<1x128xf32>
    %166 = vector.broadcast %165 : vector<1x128xf32> to vector<512x128xf32>
    %167 = arith.addf %164, %166 : vector<512x128xf32>
    %cst_74 = arith.constant dense<0.000000e+00> : vector<8x128xf32>
    %168 = tpu.matmul %1, %167, %cst_74 {dimension_numbers = #tpu.dot_dimension_numbers<[1], [0], [0], [1], [0, 0, 1, 1], [], []>} : vector<8x512xf32>, vector<512x128xf32>, vector<8x128xf32> -> vector<8x128xf32>
    %169 = vector.extract_strided_slice %168 {offsets = [0, 0], sizes = [1, 128], strides = [1, 1]} : vector<8x128xf32> to vector<1x128xf32>
    %cst_75 = arith.constant 0.001953125 : f32
    %170 = vector.broadcast %cst_75 : f32 to vector<1x128xf32>
    %171 = arith.mulf %169, %170 : vector<1x128xf32>
    %172 = vector.broadcast %171 : vector<1x128xf32> to vector<512x128xf32>
    %173 = arith.subf %167, %172 : vector<512x128xf32>
    %174 = arith.mulf %173, %173 : vector<512x128xf32>
    %cst_76 = arith.constant dense<0.000000e+00> : vector<8x128xf32>
    %175 = tpu.matmul %1, %174, %cst_76 {dimension_numbers = #tpu.dot_dimension_numbers<[1], [0], [0], [1], [0, 0, 1, 1], [], []>} : vector<8x512xf32>, vector<512x128xf32>, vector<8x128xf32> -> vector<8x128xf32>
    %176 = vector.extract_strided_slice %175 {offsets = [0, 0], sizes = [1, 128], strides = [1, 1]} : vector<8x128xf32> to vector<1x128xf32>
    %cst_77 = arith.constant 0.001953125 : f32
    %177 = vector.broadcast %cst_77 : f32 to vector<1x128xf32>
    %178 = arith.mulf %176, %177 : vector<1x128xf32>
    %c0_78 = arith.constant 0 : index
    %c2560 = arith.constant 2560 : index
    %179 = vector.load %arg1[%c0_78, %c2560] : memref<1x2816xf32, #tpu.memory_space<vmem>>, vector<1x128xf32>
    %cst_79 = arith.constant 9.99999974E-6 : f32
    %180 = vector.broadcast %cst_79 : f32 to vector<1x128xf32>
    %181 = arith.addf %178, %180 : vector<1x128xf32>
    %182 = math.rsqrt %181 : vector<1x128xf32>
    %183 = arith.mulf %179, %182 : vector<1x128xf32>
    %184 = vector.broadcast %183 : vector<1x128xf32> to vector<512x128xf32>
    %185 = arith.mulf %173, %184 : vector<512x128xf32>
    %c0_80 = arith.constant 0 : index
    %c2688 = arith.constant 2688 : index
    %186 = vector.load %arg1[%c0_80, %c2688] : memref<1x2816xf32, #tpu.memory_space<vmem>>, vector<1x128xf32>
    %187 = vector.broadcast %186 : vector<1x128xf32> to vector<512x128xf32>
    %188 = arith.addf %185, %187 : vector<512x128xf32>
    %189 = arith.negf %188 : vector<512x128xf32>
    %190 = math.exp %189 : vector<512x128xf32>
    %cst_81 = arith.constant 1.000000e+00 : f32
    %191 = vector.broadcast %cst_81 : f32 to vector<512x128xf32>
    %192 = arith.addf %191, %190 : vector<512x128xf32>
    %193 = arith.divf %191, %192 : vector<512x128xf32>
    %c0_82 = arith.constant 0 : index
    %c128_83 = arith.constant 128 : index
    %194 = vector.load %arg9[%c0_82, %c128_83] : memref<512x256xf32, #tpu.memory_space<vmem>>, vector<512x128xf32>
    tpu.vector_store %arg9[%c0_82, %c128_83], %193 {strides = array<i32>} : memref<512x256xf32, #tpu.memory_space<vmem>>, vector<512x128xf32>,
    return
  }
}

</mosaic_0001>

<llo_original>
// kernel: tpu_custom_call.1
$region0: #{tpu_custom_call.1}
  #allocation0 [shape = 'u32[]', space=smem, size = 0x4, offset = 0x4, fixed_abs, tag = 'smem constant byte address 0x4 - core index']
  #allocation1 [shape = 'u32[144,128]{1,0:T(1,128)}', space=vmem, size = 0x12000, scoped, tag = 'internal scratch']
  %s0 = inlined_call_operand.hbm [shape: f32[512,128], index: 0, kind: input, shape index: {}]
  %s1 = inlined_call_operand.hbm [shape: f32[1,2816], index: 1, kind: input, shape index: {}]
  %s2 = inlined_call_operand.hbm [shape: bf16[128,128], index: 2, kind: input, shape index: {}]
  %s3 = inlined_call_operand.hbm [shape: bf16[128,128], index: 3, kind: input, shape index: {}]
  %s4 = inlined_call_operand.hbm [shape: bf16[128,128], index: 4, kind: input, shape index: {}]
  %s5 = inlined_call_operand.hbm [shape: bf16[128,128], index: 5, kind: input, shape index: {}]
  %s6 = inlined_call_operand.hbm [shape: bf16[128,128], index: 6, kind: input, shape index: {}]
  %s7 = inlined_call_operand.hbm [shape: bf16[128,256], index: 7, kind: input, shape index: {}]
  %s8 = inlined_call_operand.hbm [shape: bf16[256,128], index: 8, kind: input, shape index: {}]
  %s9 = inlined_call_operand.hbm [shape: f32[512,256], index: 9, kind: output, shape index: {}]
  %s10 = sld [smem:[#allocation0]]
  $region82: #{tpu_custom_call.1} parent=0
    _
  %s12 = ssub.s32 1, %s10
  %s13 = scalar_select 0, %s12, %s10
  $region1: #{tpu_custom_call.1} parent=0
    #allocation2 [shape = 'u8[262144]{0}', space=vmem, size = 0x40000, scoped, tag = 'input window, operand 0, single buffered']
    #allocation3 [shape = 's32[1]{0}', space=sflag, size = 0x4, scoped, tag = 'scoped memory for tpu_custom_call.1']
    #allocation4 [shape = 's32[1]{0}', space=sflag, size = 0x4, scoped, tag = 'scoped memory for tpu_custom_call.1']
    #allocation5 [shape = 'u8[11264]{0}', space=vmem, size = 0x2c00, scoped, tag = 'input window, operand 1, single buffered']
    #allocation6 [shape = 's32[1]{0}', space=sflag, size = 0x4, scoped, tag = 'scoped memory for tpu_custom_call.1']
    #allocation7 [shape = 'u8[32768]{0}', space=vmem, size = 0x8000, scoped, tag = 'input window, operand 2, single buffered']
    #allocation8 [shape = 'u8[32768]{0}', space=vmem, size = 0x8000, scoped, tag = 'input window, operand 3, single buffered']
    #allocation9 [shape = 's32[1]{0}', space=sflag, size = 0x4, scoped, tag = 'scoped memory for tpu_custom_call.1']
    #allocation10 [shape = 'u8[32768]{0}', space=vmem, size = 0x8000, scoped, tag = 'input window, operand 4, single buffered']
    #allocation11 [shape = 'u8[32768]{0}', space=vmem, size = 0x8000, scoped, tag = 'input window, operand 5, single buffered']
    #allocation12 [shape = 's32[1]{0}', space=sflag, size = 0x4, scoped, tag = 'scoped memory for tpu_custom_call.1']
    #allocation13 [shape = 'u8[32768]{0}', space=vmem, size = 0x8000, scoped, tag = 'input window, operand 6, single buffered']
    #allocation14 [shape = 'u8[65536]{0}', space=vmem, size = 0x10000, scoped, tag = 'input window, operand 7, single buffered']
    #allocation15 [shape = 's32[1]{0}', space=sflag, size = 0x4, scoped, tag = 'scoped memory for tpu_custom_call.1']
    #allocation16 [shape = 'u8[65536]{0}', space=vmem, size = 0x10000, scoped, tag = 'input window, operand 8, single buffered']
    #allocation17 [shape = 'u8[524288]{0}', space=vmem, size = 0x80000, scoped, tag = 'output window, operand 0, single buffered']
    %14 = vsyncpa [#allocation3], 0
    %15 = vsyncpa [#allocation6], 0
    %16 = vsyncpa [#allocation9], 0
    %17 = vsyncpa [#allocation12], 0
    %18 = vsyncpa [#allocation15], 0
    %19 = vsyncpa [#allocation4], 0
    // Predicated region
    $region2: #{tpu_custom_call.1} parent=1 // pred_check
      _
    $region3: #{tpu_custom_call.1} parent=1 // pred_check_branch
      %21 = sbr.rel (0) target = $region5
    $region4: #{tpu_custom_call.1} parent=1 // pred_region
      %s23 = ssub.s32 8192, 8192
      %24 = vsyncadd [#allocation3], %s23
      %s25 = sshll.u32 [#allocation2], 4
      %s26 = int_to_ptr.vmem [resolvable:$true] %s25
      %31 = dma.hbm_to_vmem [thread:$0]  %s0, 8192, %s26, [#allocation3], 128, 128, 8
    $region5: #{tpu_custom_call.1} parent=1 // pred_fallthru
      _
    // Predicated region
    $region6: #{tpu_custom_call.1} parent=1 // pred_check
      _
    $region7: #{tpu_custom_call.1} parent=1 // pred_check_branch
      %33 = sbr.rel (0) target = $region9
    $region8: #{tpu_custom_call.1} parent=1 // pred_region
      %s35 = ssub.s32 352, 352
      %36 = vsyncadd [#allocation6], %s35
      %s38 = sshll.u32 [#allocation5], 4
      %s39 = int_to_ptr.vmem [resolvable:$true] %s38
      %41 = dma.hbm_to_vmem [thread:$0]  %s1, 352, %s39, [#allocation6]
    $region9: #{tpu_custom_call.1} parent=1 // pred_fallthru
      _
    // Predicated region
    $region10: #{tpu_custom_call.1} parent=1 // pred_check
      _
    $region11: #{tpu_custom_call.1} parent=1 // pred_check_branch
      %43 = sbr.rel (0) target = $region13
    $region12: #{tpu_custom_call.1} parent=1 // pred_region
      %s45 = ssub.s32 1024, 1024
      %46 = vsyncadd [#allocation6], %s45
      %s47 = sshll.u32 [#allocation7], 4
      %s48 = int_to_ptr.vmem [resolvable:$true] %s47
      %53 = dma.hbm_to_vmem [thread:$0]  %s2, 1024, %s48, [#allocation6], 64, 64, 4
    $region13: #{tpu_custom_call.1} parent=1 // pred_fallthru
      _
    // Predicated region
    $region14: #{tpu_custom_call.1} parent=1 // pred_check
      _
    $region15: #{tpu_custom_call.1} parent=1 // pred_check_branch
      %55 = sbr.rel (0) target = $region17
    $region16: #{tpu_custom_call.1} parent=1 // pred_region
      %s57 = ssub.s32 1024, 1024
      %58 = vsyncadd [#allocation9], %s57
      %s59 = sshll.u32 [#allocation8], 4
      %s60 = int_to_ptr.vmem [resolvable:$true] %s59
      %65 = dma.hbm_to_vmem [thread:$0]  %s3, 1024, %s60, [#allocation9], 64, 64, 4
    $region17: #{tpu_custom_call.1} parent=1 // pred_fallthru
      _
    // Predicated region
    $region18: #{tpu_custom_call.1} parent=1 // pred_check
      _
    $region19: #{tpu_custom_call.1} parent=1 // pred_check_branch
      %67 = sbr.rel (0) target = $region21
    $region20: #{tpu_custom_call.1} parent=1 // pred_region
      %s69 = ssub.s32 1024, 1024
      %70 = vsyncadd [#allocation9], %s69
      %s71 = sshll.u32 [#allocation10], 4
      %s72 = int_to_ptr.vmem [resolvable:$true] %s71
      %77 = dma.hbm_to_vmem [thread:$0]  %s4, 1024, %s72, [#allocation9], 64, 64, 4
    $region21: #{tpu_custom_call.1} parent=1 // pred_fallthru
      _
    // Predicated region
    $region22: #{tpu_custom_call.1} parent=1 // pred_check
      _
    $region23: #{tpu_custom_call.1} parent=1 // pred_check_branch
      %79 = sbr.rel (0) target = $region25
    $region24: #{tpu_custom_call.1} parent=1 // pred_region
      %s81 = ssub.s32 1024, 1024
      %82 = vsyncadd [#allocation12], %s81
      %s83 = sshll.u32 [#allocation11], 4
      %s84 = int_to_ptr.vmem [resolvable:$true] %s83
      %89 = dma.hbm_to_vmem [thread:$0]  %s5, 1024, %s84, [#allocation12], 64, 64, 4
    $region25: #{tpu_custom_call.1} parent=1 // pred_fallthru
      _
    // Predicated region
    $region26: #{tpu_custom_call.1} parent=1 // pred_check
      _
    $region27: #{tpu_custom_call.1} parent=1 // pred_check_branch
      %91 = sbr.rel (0) target = $region29
    $region28: #{tpu_custom_call.1} parent=1 // pred_region
      %s93 = ssub.s32 1024, 1024
      %94 = vsyncadd [#allocation12], %s93
      %s95 = sshll.u32 [#allocation13], 4
      %s96 = int_to_ptr.vmem [resolvable:$true] %s95
      %101 = dma.hbm_to_vmem [thread:$0]  %s6, 1024, %s96, [#allocation12], 64, 64, 4
    $region29: #{tpu_custom_call.1} parent=1 // pred_fallthru
      _
    // Predicated region
    $region30: #{tpu_custom_call.1} parent=1 // pred_check
      _
    $region31: #{tpu_custom_call.1} parent=1 // pred_check_branch
      %103 = sbr.rel (0) target = $region33
    $region32: #{tpu_custom_call.1} parent=1 // pred_region
      %s105 = ssub.s32 2048, 2048
      %106 = vsyncadd [#allocation15], %s105
      %s107 = sshll.u32 [#allocation14], 4
      %s108 = int_to_ptr.vmem [resolvable:$true] %s107
      %113 = dma.hbm_to_vmem [thread:$0]  %s7, 2048, %s108, [#allocation15], 128, 128, 8
    $region33: #{tpu_custom_call.1} parent=1 // pred_fallthru
      _
    // Predicated region
    $region34: #{tpu_custom_call.1} parent=1 // pred_check
      _
    $region35: #{tpu_custom_call.1} parent=1 // pred_check_branch
      %115 = sbr.rel (0) target = $region37
    $region36: #{tpu_custom_call.1} parent=1 // pred_region
      %s117 = ssub.s32 2048, 2048
      %118 = vsyncadd [#allocation15], %s117
      %s119 = sshll.u32 [#allocation16], 4
      %s120 = int_to_ptr.vmem [resolvable:$true] %s119
      %125 = dma.hbm_to_vmem [thread:$0]  %s8, 2048, %s120, [#allocation15], 64, 64, 4
    $region37: #{tpu_custom_call.1} parent=1 // pred_fallthru
      _
    // Predicated region
    $region38: #{tpu_custom_call.1} parent=1 // pred_check
      _
    $region39: #{tpu_custom_call.1} parent=1 // pred_check_branch
      %127 = sbr.rel (0) target = $region41
    $region40: #{tpu_custom_call.1} parent=1 // pred_region
      %128 = dma.done [#allocation3], 8192
    $region41: #{tpu_custom_call.1} parent=1 // pred_fallthru
      _
    // Predicated region
    $region42: #{tpu_custom_call.1} parent=1 // pred_check
      _
    $region43: #{tpu_custom_call.1} parent=1 // pred_check_branch
      %130 = sbr.rel (0) target = $region45
    $region44: #{tpu_custom_call.1} parent=1 // pred_region
      %131 = dma.done [#allocation6], 352
    $region45: #{tpu_custom_call.1} parent=1 // pred_fallthru
      _
    // Predicated region
    $region46: #{tpu_custom_call.1} parent=1 // pred_check
      _
    $region47: #{tpu_custom_call.1} parent=1 // pred_check_branch
      %133 = sbr.rel (0) target = $region49
    $region48: #{tpu_custom_call.1} parent=1 // pred_region
      %134 = dma.done [#allocation6], 1024
    $region49: #{tpu_custom_call.1} parent=1 // pred_fallthru
      _
    // Predicated region
    $region50: #{tpu_custom_call.1} parent=1 // pred_check
      _
    $region51: #{tpu_custom_call.1} parent=1 // pred_check_branch
      %136 = sbr.rel (0) target = $region53
    $region52: #{tpu_custom_call.1} parent=1 // pred_region
      %137 = dma.done [#allocation9], 1024
    $region53: #{tpu_custom_call.1} parent=1 // pred_fallthru
      _
    // Predicated region
    $region54: #{tpu_custom_call.1} parent=1 // pred_check
      _
    $region55: #{tpu_custom_call.1} parent=1 // pred_check_branch
      %139 = sbr.rel (0) target = $region57
    $region56: #{tpu_custom_call.1} parent=1 // pred_region
      %140 = dma.done [#allocation9], 1024
    $region57: #{tpu_custom_call.1} parent=1 // pred_fallthru
      _
    // Predicated region
    $region58: #{tpu_custom_call.1} parent=1 // pred_check
      _
    $region59: #{tpu_custom_call.1} parent=1 // pred_check_branch
      %142 = sbr.rel (0) target = $region61
    $region60: #{tpu_custom_call.1} parent=1 // pred_region
      %143 = dma.done [#allocation12], 1024
    $region61: #{tpu_custom_call.1} parent=1 // pred_fallthru
      _
    // Predicated region
    $region62: #{tpu_custom_call.1} parent=1 // pred_check
      _
    $region63: #{tpu_custom_call.1} parent=1 // pred_check_branch
      %145 = sbr.rel (0) target = $region65
    $region64: #{tpu_custom_call.1} parent=1 // pred_region
      %146 = dma.done [#allocation12], 1024
    $region65: #{tpu_custom_call.1} parent=1 // pred_fallthru
      _
    // Predicated region
    $region66: #{tpu_custom_call.1} parent=1 // pred_check
      _
    $region67: #{tpu_custom_call.1} parent=1 // pred_check_branch
      %148 = sbr.rel (0) target = $region69
    $region68: #{tpu_custom_call.1} parent=1 // pred_region
      %149 = dma.done [#allocation15], 2048
    $region69: #{tpu_custom_call.1} parent=1 // pred_fallthru
      _
    // Predicated region
    $region70: #{tpu_custom_call.1} parent=1 // pred_check
      _
    $region71: #{tpu_custom_call.1} parent=1 // pred_check_branch
      %151 = sbr.rel (0) target = $region73
    $region72: #{tpu_custom_call.1} parent=1 // pred_region
      %152 = dma.done [#allocation15], 2048
    $region73: #{tpu_custom_call.1} parent=1 // pred_fallthru
      _
    %v154 = vld [vmem:[#allocation2] sm:$0xff]
    %v155 = vld [vmem:[#allocation2 + $0x8] sm:$0xff]
    %v156 = vld [vmem:[#allocation2 + $0x10] sm:$0xff]
    %v157 = vld [vmem:[#allocation2 + $0x18] sm:$0xff]
    %v158 = vld [vmem:[#allocation2 + $0x20] sm:$0xff]
    %v159 = vld [vmem:[#allocation2 + $0x28] sm:$0xff]
    %v160 = vld [vmem:[#allocation2 + $0x30] sm:$0xff]
    %v161 = vld [vmem:[#allocation2 + $0x38] sm:$0xff]
    %v162 = vld [vmem:[#allocation2 + $0x40] sm:$0xff]
    %v163 = vld [vmem:[#allocation2 + $0x48] sm:$0xff]
    %v164 = vld [vmem:[#allocation2 + $0x50] sm:$0xff]
    %v165 = vld [vmem:[#allocation2 + $0x58] sm:$0xff]
    %v166 = vld [vmem:[#allocation2 + $0x60] sm:$0xff]
    %v167 = vld [vmem:[#allocation2 + $0x68] sm:$0xff]
    %v168 = vld [vmem:[#allocation2 + $0x70] sm:$0xff]
    %v169 = vld [vmem:[#allocation2 + $0x78] sm:$0xff]
    %v170 = vld [vmem:[#allocation2 + $0x80] sm:$0xff]
    %v171 = vld [vmem:[#allocation2 + $0x88] sm:$0xff]
    %v172 = vld [vmem:[#allocation2 + $0x90] sm:$0xff]
    %v173 = vld [vmem:[#allocation2 + $0x98] sm:$0xff]
    %v174 = vld [vmem:[#allocation2 + $0xa0] sm:$0xff]
    %v175 = vld [vmem:[#allocation2 + $0xa8] sm:$0xff]
    %v176 = vld [vmem:[#allocation2 + $0xb0] sm:$0xff]
    %v177 = vld [vmem:[#allocation2 + $0xb8] sm:$0xff]
    %v178 = vld [vmem:[#allocation2 + $0xc0] sm:$0xff]
    %v179 = vld [vmem:[#allocation2 + $0xc8] sm:$0xff]
    %v180 = vld [vmem:[#allocation2 + $0xd0] sm:$0xff]
    %v181 = vld [vmem:[#allocation2 + $0xd8] sm:$0xff]
    %v182 = vld [vmem:[#allocation2 + $0xe0] sm:$0xff]
    %v183 = vld [vmem:[#allocation2 + $0xe8] sm:$0xff]
    %v184 = vld [vmem:[#allocation2 + $0xf0] sm:$0xff]
    %v185 = vld [vmem:[#allocation2 + $0xf8] sm:$0xff]
    %v186 = vld [vmem:[#allocation2 + $0x100] sm:$0xff]
    %v187 = vld [vmem:[#allocation2 + $0x108] sm:$0xff]
    %v188 = vld [vmem:[#allocation2 + $0x110] sm:$0xff]
    %v189 = vld [vmem:[#allocation2 + $0x118] sm:$0xff]
    %v190 = vld [vmem:[#allocation2 + $0x120] sm:$0xff]
    %v191 = vld [vmem:[#allocation2 + $0x128] sm:$0xff]
    %v192 = vld [vmem:[#allocation2 + $0x130] sm:$0xff]
    %v193 = vld [vmem:[#allocation2 + $0x138] sm:$0xff]
    %v194 = vld [vmem:[#allocation2 + $0x140] sm:$0xff]
    %v195 = vld [vmem:[#allocation2 + $0x148] sm:$0xff]
    %v196 = vld [vmem:[#allocation2 + $0x150] sm:$0xff]
    %v197 = vld [vmem:[#allocation2 + $0x158] sm:$0xff]
    %v198 = vld [vmem:[#allocation2 + $0x160] sm:$0xff]
    %v199 = vld [vmem:[#allocation2 + $0x168] sm:$0xff]
    %v200 = vld [vmem:[#allocation2 + $0x170] sm:$0xff]
    %v201 = vld [vmem:[#allocation2 + $0x178] sm:$0xff]
    %v202 = vld [vmem:[#allocation2 + $0x180] sm:$0xff]
    %v203 = vld [vmem:[#allocation2 + $0x188] sm:$0xff]
    %v204 = vld [vmem:[#allocation2 + $0x190] sm:$0xff]
    %v205 = vld [vmem:[#allocation2 + $0x198] sm:$0xff]
    %v206 = vld [vmem:[#allocation2 + $0x1a0] sm:$0xff]
    %v207 = vld [vmem:[#allocation2 + $0x1a8] sm:$0xff]
    %v208 = vld [vmem:[#allocation2 + $0x1b0] sm:$0xff]
    %v209 = vld [vmem:[#allocation2 + $0x1b8] sm:$0xff]
    %v210 = vld [vmem:[#allocation2 + $0x1c0] sm:$0xff]
    %v211 = vld [vmem:[#allocation2 + $0x1c8] sm:$0xff]
    %v212 = vld [vmem:[#allocation2 + $0x1d0] sm:$0xff]
    %v213 = vld [vmem:[#allocation2 + $0x1d8] sm:$0xff]
    %v214 = vld [vmem:[#allocation2 + $0x1e0] sm:$0xff]
    %v215 = vld [vmem:[#allocation2 + $0x1e8] sm:$0xff]
    %v216 = vld [vmem:[#allocation2 + $0x1f0] sm:$0xff]
    %v217 = vld [vmem:[#allocation2 + $0x1f8] sm:$0xff]
    %218 = vmatprep.subr.mxu0 0.0
    %219 = vmatpush1.msra.mxu0 %v154
    %220 = vmatprep.subr.mxu0 0.0
    %221 = vmatpush1.msra.mxu0 %v155
    %222 = vmatprep.subr.mxu0 0.0
    %223 = vmatpush1.msra.mxu0 %v156
    %224 = vmatprep.subr.mxu0 0.0
    %225 = vmatpush1.msra.mxu0 %v157
    %226 = vmatprep.subr.mxu0 0.0
    %227 = vmatpush1.msra.mxu0 %v158
    %228 = vmatprep.subr.mxu0 0.0
    %229 = vmatpush1.msra.mxu0 %v159
    %230 = vmatprep.subr.mxu0 0.0
    %231 = vmatpush1.msra.mxu0 %v160
    %232 = vmatprep.subr.mxu0 0.0
    %233 = vmatpush1.msra.mxu0 %v161
    %234 = vmatprep.subr.mxu0 0.0
    %235 = vmatpush1.msra.mxu0 %v162
    %236 = vmatprep.subr.mxu0 0.0
    %237 = vmatpush1.msra.mxu0 %v163
    %238 = vmatprep.subr.mxu0 0.0
    %239 = vmatpush1.msra.mxu0 %v164
    %240 = vmatprep.subr.mxu0 0.0
    %241 = vmatpush1.msra.mxu0 %v165
    %242 = vmatprep.subr.mxu0 0.0
    %243 = vmatpush1.msra.mxu0 %v166
    %244 = vmatprep.subr.mxu0 0.0
    %245 = vmatpush1.msra.mxu0 %v167
    %246 = vmatprep.subr.mxu0 0.0
    %247 = vmatpush1.msra.mxu0 %v168
    %248 = vmatprep.subr.mxu0 0.0
    %249 = vmatpush1.msra.mxu0 %v169
    %250 = vmatprep.subr.mxu0 0.0
    %251 = vmatpush1.msra.mxu0 %v170
    %252 = vmatprep.subr.mxu0 0.0
    %253 = vmatpush1.msra.mxu0 %v171
    %254 = vmatprep.subr.mxu0 0.0
    %255 = vmatpush1.msra.mxu0 %v172
    %256 = vmatprep.subr.mxu0 0.0
    %257 = vmatpush1.msra.mxu0 %v173
    %258 = vmatprep.subr.mxu0 0.0
    %259 = vmatpush1.msra.mxu0 %v174
    %260 = vmatprep.subr.mxu0 0.0
    %261 = vmatpush1.msra.mxu0 %v175
    %262 = vmatprep.subr.mxu0 0.0
    %263 = vmatpush1.msra.mxu0 %v176
    %264 = vmatprep.subr.mxu0 0.0
    %265 = vmatpush1.msra.mxu0 %v177
    %266 = vmatprep.subr.mxu0 0.0
    %267 = vmatpush1.msra.mxu0 %v178
    %268 = vmatprep.subr.mxu0 0.0
    %269 = vmatpush1.msra.mxu0 %v179
    %270 = vmatprep.subr.mxu0 0.0
    %271 = vmatpush1.msra.mxu0 %v180
    %272 = vmatprep.subr.mxu0 0.0
    %273 = vmatpush1.msra.mxu0 %v181
    %274 = vmatprep.subr.mxu0 0.0
    %275 = vmatpush1.msra.mxu0 %v182
    %276 = vmatprep.subr.mxu0 0.0
    %277 = vmatpush1.msra.mxu0 %v183
    %278 = vmatprep.subr.mxu0 0.0
    %279 = vmatpush1.msra.mxu0 %v184
    %280 = vmatprep.subr.mxu0 0.0
    %281 = vmatpush1.msra.mxu0 %v185
    %282 = vmatprep.mubr.f32.mxu0 1.0
    %283 = vmatmul.mubr.f32.gmra.mrb[0].mxu0 1.0
    %v284 = vpop.f32.mrb[0].mxu0
    %v285 = vadd.f32 0.0, %v284
    %v286 = vpop.f32.mrb[0].mxu0
    %287 = vdwg.mxu0
    %288 = vmatprep.subr.mxu0 0.0
    %289 = vmatpush1.msra.mxu0 %v186
    %290 = vmatprep.subr.mxu0 0.0
    %291 = vmatpush1.msra.mxu0 %v187
    %292 = vmatprep.subr.mxu0 0.0
    %293 = vmatpush1.msra.mxu0 %v188
    %294 = vmatprep.subr.mxu0 0.0
    %295 = vmatpush1.msra.mxu0 %v189
    %296 = vmatprep.subr.mxu0 0.0
    %297 = vmatpush1.msra.mxu0 %v190
    %298 = vmatprep.subr.mxu0 0.0
    %299 = vmatpush1.msra.mxu0 %v191
    %300 = vmatprep.subr.mxu0 0.0
    %301 = vmatpush1.msra.mxu0 %v192
    %302 = vmatprep.subr.mxu0 0.0
    %303 = vmatpush1.msra.mxu0 %v193
    %304 = vmatprep.subr.mxu0 0.0
    %305 = vmatpush1.msra.mxu0 %v194
    %306 = vmatprep.subr.mxu0 0.0
    %307 = vmatpush1.msra.mxu0 %v195
    %308 = vmatprep.subr.mxu0 0.0
    %309 = vmatpush1.msra.mxu0 %v196
    %310 = vmatprep.subr.mxu0 0.0
    %311 = vmatpush1.msra.mxu0 %v197
    %312 = vmatprep.subr.mxu0 0.0
    %313 = vmatpush1.msra.mxu0 %v198
    %314 = vmatprep.subr.mxu0 0.0
    %315 = vmatpush1.msra.mxu0 %v199
    %316 = vmatprep.subr.mxu0 0.0
    %317 = vmatpush1.msra.mxu0 %v200
    %318 = vmatprep.subr.mxu0 0.0
    %319 = vmatpush1.msra.mxu0 %v201
    %320 = vmatprep.subr.mxu0 0.0
    %321 = vmatpush1.msra.mxu0 %v202
    %322 = vmatprep.subr.mxu0 0.0
    %323 = vmatpush1.msra.mxu0 %v203
    %324 = vmatprep.subr.mxu0 0.0
    %325 = vmatpush1.msra.mxu0 %v204
    %326 = vmatprep.subr.mxu0 0.0
    %327 = vmatpush1.msra.mxu0 %v205
    %328 = vmatprep.subr.mxu0 0.0
    %329 = vmatpush1.msra.mxu0 %v206
    %330 = vmatprep.subr.mxu0 0.0
    %331 = vmatpush1.msra.mxu0 %v207
    %332 = vmatprep.subr.mxu0 0.0
    %333 = vmatpush1.msra.mxu0 %v208
    %334 = vmatprep.subr.mxu0 0.0
    %335 = vmatpush1.msra.mxu0 %v209
    %336 = vmatprep.subr.mxu0 0.0
    %337 = vmatpush1.msra.mxu0 %v210
    %338 = vmatprep.subr.mxu0 0.0
    %339 = vmatpush1.msra.mxu0 %v211
    %340 = vmatprep.subr.mxu0 0.0
    %341 = vmatpush1.msra.mxu0 %v212
    %342 = vmatprep.subr.mxu0 0.0
    %343 = vmatpush1.msra.mxu0 %v213
    %344 = vmatprep.subr.mxu0 0.0
    %345 = vmatpush1.msra.mxu0 %v214
    %346 = vmatprep.subr.mxu0 0.0
    %347 = vmatpush1.msra.mxu0 %v215
    %348 = vmatprep.subr.mxu0 0.0
    %349 = vmatpush1.msra.mxu0 %v216
    %350 = vmatprep.subr.mxu0 0.0
    %351 = vmatpush1.msra.mxu0 %v217
    %352 = vmatprep.mubr.f32.mxu0 1.0
    %353 = vmatmul.mubr.f32.gmra.mrb[0].mxu0 1.0
    %v354 = vpop.f32.mrb[0].mxu0
    %v355 = vadd.f32 %v285, %v354
    %v356 = vpop.f32.mrb[0].mxu0
    %357 = vdwg.mxu0
    %v358 = vmul.f32 %v355, 0.001953125
    %v359 = vlaneseq
    %v360 = vshrl.u32 %v359, 7
    %v361 = vsub.s32 0, %v360
    %v362 = vrot.slane %v358, %v361
    %v363 = vsub.f32 %v154, %v362
    %v364 = vsub.f32 %v155, %v362
    %v365 = vsub.f32 %v156, %v362
    %v366 = vsub.f32 %v157, %v362
    %v367 = vsub.f32 %v158, %v362
    %v368 = vsub.f32 %v159, %v362
    %v369 = vsub.f32 %v160, %v362
    %v370 = vsub.f32 %v161, %v362
    %v371 = vsub.f32 %v162, %v362
    %v372 = vsub.f32 %v163, %v362
    %v373 = vsub.f32 %v164, %v362
    %v374 = vsub.f32 %v165, %v362
    %v375 = vsub.f32 %v166, %v362
    %v376 = vsub.f32 %v167, %v362
    %v377 = vsub.f32 %v168, %v362
    %v378 = vsub.f32 %v169, %v362
    %v379 = vsub.f32 %v170, %v362
    %v380 = vsub.f32 %v171, %v362
    %v381 = vsub.f32 %v172, %v362
    %v382 = vsub.f32 %v173, %v362
    %v383 = vsub.f32 %v174, %v362
    %v384 = vsub.f32 %v175, %v362
    %v385 = vsub.f32 %v176, %v362
    %v386 = vsub.f32 %v177, %v362
    %v387 = vsub.f32 %v178, %v362
    %v388 = vsub.f32 %v179, %v362
    %v389 = vsub.f32 %v180, %v362
    %v390 = vsub.f32 %v181, %v362
    %v391 = vsub.f32 %v182, %v362
    %v392 = vsub.f32 %v183, %v362
    %v393 = vsub.f32 %v184, %v362
    %v394 = vsub.f32 %v185, %v362
    %v395 = vsub.f32 %v186, %v362
    %v396 = vsub.f32 %v187, %v362
    %v397 = vsub.f32 %v188, %v362
    %v398 = vsub.f32 %v189, %v362
    %v399 = vsub.f32 %v190, %v362
    %v400 = vsub.f32 %v191, %v362
    %v401 = vsub.f32 %v192, %v362
    %v402 = vsub.f32 %v193, %v362
    %v403 = vsub.f32 %v194, %v362
    %v404 = vsub.f32 %v195, %v362
    %v405 = vsub.f32 %v196, %v362
    %v406 = vsub.f32 %v197, %v362
    %v407 = vsub.f32 %v198, %v362
    %v408 = vsub.f32 %v199, %v362
    %v409 = vsub.f32 %v200, %v362
    %v410 = vsub.f32 %v201, %v362
    %v411 = vsub.f32 %v202, %v362
    %v412 = vsub.f32 %v203, %v362
    %v413 = vsub.f32 %v204, %v362
    %v414 = vsub.f32 %v205, %v362
    %v415 = vsub.f32 %v206, %v362
    %v416 = vsub.f32 %v207, %v362
    %v417 = vsub.f32 %v208, %v362
    %v418 = vsub.f32 %v209, %v362
    %v419 = vsub.f32 %v210, %v362
    %v420 = vsub.f32 %v211, %v362
    %v421 = vsub.f32 %v212, %v362
    %v422 = vsub.f32 %v213, %v362
    %v423 = vsub.f32 %v214, %v362
    %v424 = vsub.f32 %v215, %v362
    %v425 = vsub.f32 %v216, %v362
    %v426 = vsub.f32 %v217, %v362
    %v427 = vmul.f32 %v363, %v363
    %v428 = vmul.f32 %v364, %v364
    %v429 = vmul.f32 %v365, %v365
    %v430 = vmul.f32 %v366, %v366
    %v431 = vmul.f32 %v367, %v367
    %v432 = vmul.f32 %v368, %v368
    %v433 = vmul.f32 %v369, %v369
    %v434 = vmul.f32 %v370, %v370
    %v435 = vmul.f32 %v371, %v371
    %v436 = vmul.f32 %v372, %v372
    %v437 = vmul.f32 %v373, %v373
    %v438 = vmul.f32 %v374, %v374
    %v439 = vmul.f32 %v375, %v375
    %v440 = vmul.f32 %v376, %v376
    %v441 = vmul.f32 %v377, %v377
    %v442 = vmul.f32 %v378, %v378
    %v443 = vmul.f32 %v379, %v379
    %v444 = vmul.f32 %v380, %v380
    %v445 = vmul.f32 %v381, %v381
    %v446 = vmul.f32 %v382, %v382
    %v447 = vmul.f32 %v383, %v383
    %v448 = vmul.f32 %v384, %v384
    %v449 = vmul.f32 %v385, %v385
    %v450 = vmul.f32 %v386, %v386
    %v451 = vmul.f32 %v387, %v387
    %v452 = vmul.f32 %v388, %v388
    %v453 = vmul.f32 %v389, %v389
    %v454 = vmul.f32 %v390, %v390
    %v455 = vmul.f32 %v391, %v391
    %v456 = vmul.f32 %v392, %v392
    %v457 = vmul.f32 %v393, %v393
    %v458 = vmul.f32 %v394, %v394
    %v459 = vmul.f32 %v395, %v395
    %v460 = vmul.f32 %v396, %v396
    %v461 = vmul.f32 %v397, %v397
    %v462 = vmul.f32 %v398, %v398
    %v463 = vmul.f32 %v399, %v399
    %v464 = vmul.f32 %v400, %v400
    %v465 = vmul.f32 %v401, %v401
    %v466 = vmul.f32 %v402, %v402
    %v467 = vmul.f32 %v403, %v403
    %v468 = vmul.f32 %v404, %v404
    %v469 = vmul.f32 %v405, %v405
    %v470 = vmul.f32 %v406, %v406
    %v471 = vmul.f32 %v407, %v407
    %v472 = vmul.f32 %v408, %v408
    %v473 = vmul.f32 %v409, %v409
    %v474 = vmul.f32 %v410, %v410
    %v475 = vmul.f32 %v411, %v411
    %v476 = vmul.f32 %v412, %v412
    %v477 = vmul.f32 %v413, %v413
    %v478 = vmul.f32 %v414, %v414
    %v479 = vmul.f32 %v415, %v415
    %v480 = vmul.f32 %v416, %v416
    %v481 = vmul.f32 %v417, %v417
    %v482 = vmul.f32 %v418, %v418
    %v483 = vmul.f32 %v419, %v419
    %v484 = vmul.f32 %v420, %v420
    %v485 = vmul.f32 %v421, %v421
    %v486 = vmul.f32 %v422, %v422
    %v487 = vmul.f32 %v423, %v423
    %v488 = vmul.f32 %v424, %v424
    %v489 = vmul.f32 %v425, %v425
    %v490 = vmul.f32 %v426, %v426
    %491 = vmatprep.subr.mxu0 0.0
    %492 = vmatpush1.msra.mxu0 %v427
    %493 = vmatprep.subr.mxu0 0.0
    %494 = vmatpush1.msra.mxu0 %v428
    %495 = vmatprep.subr.mxu0 0.0
    %496 = vmatpush1.msra.mxu0 %v429
    %497 = vmatprep.subr.mxu0 0.0
    %498 = vmatpush1.msra.mxu0 %v430
    %499 = vmatprep.subr.mxu0 0.0
    %500 = vmatpush1.msra.mxu0 %v431
    %501 = vmatprep.subr.mxu0 0.0
    %502 = vmatpush1.msra.mxu0 %v432
    %503 = vmatprep.subr.mxu0 0.0
    %504 = vmatpush1.msra.mxu0 %v433
    %505 = vmatprep.subr.mxu0 0.0
    %506 = vmatpush1.msra.mxu0 %v434
    %507 = vmatprep.subr.mxu0 0.0
    %508 = vmatpush1.msra.mxu0 %v435
    %509 = vmatprep.subr.mxu0 0.0
    %510 = vmatpush1.msra.mxu0 %v436
    %511 = vmatprep.subr.mxu0 0.0
    %512 = vmatpush1.msra.mxu0 %v437
    %513 = vmatprep.subr.mxu0 0.0
    %514 = vmatpush1.msra.mxu0 %v438
    %515 = vmatprep.subr.mxu0 0.0
    %516 = vmatpush1.msra.mxu0 %v439
    %517 = vmatprep.subr.mxu0 0.0
    %518 = vmatpush1.msra.mxu0 %v440
    %519 = vmatprep.subr.mxu0 0.0
    %520 = vmatpush1.msra.mxu0 %v441
    %521 = vmatprep.subr.mxu0 0.0
    %522 = vmatpush1.msra.mxu0 %v442
    %523 = vmatprep.subr.mxu0 0.0
    %524 = vmatpush1.msra.mxu0 %v443
    %525 = vmatprep.subr.mxu0 0.0
    %526 = vmatpush1.msra.mxu0 %v444
    %527 = vmatprep.subr.mxu0 0.0
    %528 = vmatpush1.msra.mxu0 %v445
    %529 = vmatprep.subr.mxu0 0.0
    %530 = vmatpush1.msra.mxu0 %v446
    %531 = vmatprep.subr.mxu0 0.0
    %532 = vmatpush1.msra.mxu0 %v447
    %533 = vmatprep.subr.mxu0 0.0
    %534 = vmatpush1.msra.mxu0 %v448
    %535 = vmatprep.subr.mxu0 0.0
    %536 = vmatpush1.msra.mxu0 %v449
    %537 = vmatprep.subr.mxu0 0.0
    %538 = vmatpush1.msra.mxu0 %v450
    %539 = vmatprep.subr.mxu0 0.0
    %540 = vmatpush1.msra.mxu0 %v451
    %541 = vmatprep.subr.mxu0 0.0
    %542 = vmatpush1.msra.mxu0 %v452
    %543 = vmatprep.subr.mxu0 0.0
    %544 = vmatpush1.msra.mxu0 %v453
    %545 = vmatprep.subr.mxu0 0.0
    %546 = vmatpush1.msra.mxu0 %v454
    %547 = vmatprep.subr.mxu0 0.0
    %548 = vmatpush1.msra.mxu0 %v455
    %549 = vmatprep.subr.mxu0 0.0
    %550 = vmatpush1.msra.mxu0 %v456
    %551 = vmatprep.subr.mxu0 0.0
    %552 = vmatpush1.msra.mxu0 %v457
    %553 = vmatprep.subr.mxu0 0.0
    %554 = vmatpush1.msra.mxu0 %v458
    %555 = vmatprep.mubr.f32.mxu0 1.0
    %556 = vmatmul.mubr.f32.gmra.mrb[0].mxu0 1.0
    %v557 = vpop.f32.mrb[0].mxu0
    %v558 = vadd.f32 0.0, %v557
    %v559 = vpop.f32.mrb[0].mxu0
    %560 = vdwg.mxu0
    %561 = vmatprep.subr.mxu0 0.0
    %562 = vmatpush1.msra.mxu0 %v459
    %563 = vmatprep.subr.mxu0 0.0
    %564 = vmatpush1.msra.mxu0 %v460
    %565 = vmatprep.subr.mxu0 0.0
    %566 = vmatpush1.msra.mxu0 %v461
    %567 = vmatprep.subr.mxu0 0.0
    %568 = vmatpush1.msra.mxu0 %v462
    %569 = vmatprep.subr.mxu0 0.0
    %570 = vmatpush1.msra.mxu0 %v463
    %571 = vmatprep.subr.mxu0 0.0
    %572 = vmatpush1.msra.mxu0 %v464
    %573 = vmatprep.subr.mxu0 0.0
    %574 = vmatpush1.msra.mxu0 %v465
    %575 = vmatprep.subr.mxu0 0.0
    %576 = vmatpush1.msra.mxu0 %v466
    %577 = vmatprep.subr.mxu0 0.0
    %578 = vmatpush1.msra.mxu0 %v467
    %579 = vmatprep.subr.mxu0 0.0
    %580 = vmatpush1.msra.mxu0 %v468
    %581 = vmatprep.subr.mxu0 0.0
    %582 = vmatpush1.msra.mxu0 %v469
    %583 = vmatprep.subr.mxu0 0.0
    %584 = vmatpush1.msra.mxu0 %v470
    %585 = vmatprep.subr.mxu0 0.0
    %586 = vmatpush1.msra.mxu0 %v471
    %587 = vmatprep.subr.mxu0 0.0
    %588 = vmatpush1.msra.mxu0 %v472
    %589 = vmatprep.subr.mxu0 0.0
    %590 = vmatpush1.msra.mxu0 %v473
    %591 = vmatprep.subr.mxu0 0.0
    %592 = vmatpush1.msra.mxu0 %v474
    %593 = vmatprep.subr.mxu0 0.0
    %594 = vmatpush1.msra.mxu0 %v475
    %595 = vmatprep.subr.mxu0 0.0
    %596 = vmatpush1.msra.mxu0 %v476
    %597 = vmatprep.subr.mxu0 0.0
    %598 = vmatpush1.msra.mxu0 %v477
    %599 = vmatprep.subr.mxu0 0.0
    %600 = vmatpush1.msra.mxu0 %v478
    %601 = vmatprep.subr.mxu0 0.0
    %602 = vmatpush1.msra.mxu0 %v479
    %603 = vmatprep.subr.mxu0 0.0
    %604 = vmatpush1.msra.mxu0 %v480
    %605 = vmatprep.subr.mxu0 0.0
    %606 = vmatpush1.msra.mxu0 %v481
    %607 = vmatprep.subr.mxu0 0.0
    %608 = vmatpush1.msra.mxu0 %v482
    %609 = vmatprep.subr.mxu0 0.0
    %610 = vmatpush1.msra.mxu0 %v483
    %611 = vmatprep.subr.mxu0 0.0
    %612 = vmatpush1.msra.mxu0 %v484
    %613 = vmatprep.subr.mxu0 0.0
    %614 = vmatpush1.msra.mxu0 %v485
    %615 = vmatprep.subr.mxu0 0.0
    %616 = vmatpush1.msra.mxu0 %v486
    %617 = vmatprep.subr.mxu0 0.0
    %618 = vmatpush1.msra.mxu0 %v487
    %619 = vmatprep.subr.mxu0 0.0
    %620 = vmatpush1.msra.mxu0 %v488
    %621 = vmatprep.subr.mxu0 0.0
    %622 = vmatpush1.msra.mxu0 %v489
    %623 = vmatprep.subr.mxu0 0.0
    %624 = vmatpush1.msra.mxu0 %v490
    %625 = vmatprep.mubr.f32.mxu0 1.0
    %626 = vmatmul.mubr.f32.gmra.mrb[0].mxu0 1.0
    %v627 = vpop.f32.mrb[0].mxu0
    %v628 = vadd.f32 %v558, %v627
    %v629 = vpop.f32.mrb[0].mxu0
    %630 = vdwg.mxu0
    %v631 = vmul.f32 %v628, 0.001953125
    %v632 = vld [vmem:[#allocation5] sm:$0x1]
    %v633 = vadd.f32 %v631, 1e-05
    %v634 = vrsqrt.pop %v633
    %v635 = vmul.f32 %v632, %v634
    %v637 = vlaneseq
    %v638 = vshrl.u32 %v637, 7
    %v639 = vsub.s32 0, %v638
    %v640 = vrot.slane %v635, %v639
    %v642 = vmul.f32 %v363, %v640
    %v643 = vmul.f32 %v364, %v640
    %v644 = vmul.f32 %v365, %v640
    %v645 = vmul.f32 %v366, %v640
    %v646 = vmul.f32 %v367, %v640
    %v647 = vmul.f32 %v368, %v640
    %v648 = vmul.f32 %v369, %v640
    %v649 = vmul.f32 %v370, %v640
    %v650 = vmul.f32 %v371, %v640
    %v651 = vmul.f32 %v372, %v640
    %v652 = vmul.f32 %v373, %v640
    %v653 = vmul.f32 %v374, %v640
    %v654 = vmul.f32 %v375, %v640
    %v655 = vmul.f32 %v376, %v640
    %v656 = vmul.f32 %v377, %v640
    %v657 = vmul.f32 %v378, %v640
    %v658 = vmul.f32 %v379, %v640
    %v659 = vmul.f32 %v380, %v640
    %v660 = vmul.f32 %v381, %v640
    %v661 = vmul.f32 %v382, %v640
    %v662 = vmul.f32 %v383, %v640
    %v663 = vmul.f32 %v384, %v640
    %v664 = vmul.f32 %v385, %v640
    %v665 = vmul.f32 %v386, %v640
    %v666 = vmul.f32 %v387, %v640
    %v667 = vmul.f32 %v388, %v640
    %v668 = vmul.f32 %v389, %v640
    %v669 = vmul.f32 %v390, %v640
    %v670 = vmul.f32 %v391, %v640
    %v671 = vmul.f32 %v392, %v640
    %v672 = vmul.f32 %v393, %v640
    %v673 = vmul.f32 %v394, %v640
    %v674 = vmul.f32 %v395, %v640
    %v675 = vmul.f32 %v396, %v640
    %v676 = vmul.f32 %v397, %v640
    %v677 = vmul.f32 %v398, %v640
    %v678 = vmul.f32 %v399, %v640
    %v679 = vmul.f32 %v400, %v640
    %v680 = vmul.f32 %v401, %v640
    %v681 = vmul.f32 %v402, %v640
    %v682 = vmul.f32 %v403, %v640
    %v683 = vmul.f32 %v404, %v640
    %v684 = vmul.f32 %v405, %v640
    %v685 = vmul.f32 %v406, %v640
    %v686 = vmul.f32 %v407, %v640
    %v687 = vmul.f32 %v408, %v640
    %v688 = vmul.f32 %v409, %v640
    %v689 = vmul.f32 %v410, %v640
    %v690 = vmul.f32 %v411, %v640
    %v691 = vmul.f32 %v412, %v640
    %v692 = vmul.f32 %v413, %v640
    %v693 = vmul.f32 %v414, %v640
    %v694 = vmul.f32 %v415, %v640
    %v695 = vmul.f32 %v416, %v640
    %v696 = vmul.f32 %v417, %v640
    %v697 = vmul.f32 %v418, %v640
    %v698 = vmul.f32 %v419, %v640
    %v699 = vmul.f32 %v420, %v640
    %v700 = vmul.f32 %v421, %v640
    %v701 = vmul.f32 %v422, %v640
    %v702 = vmul.f32 %v423, %v640
    %v703 = vmul.f32 %v424, %v640
    %v704 = vmul.f32 %v425, %v640
    %v705 = vmul.f32 %v426, %v640
    %v706 = vld [vmem:[#allocation5 + $0x1] sm:$0x1]
    %v708 = vlaneseq
    %v709 = vshrl.u32 %v708, 7
    %v710 = vsub.s32 0, %v709
    %v711 = vrot.slane %v706, %v710
    %v713 = vadd.f32 %v642, %v711
    %v714 = vadd.f32 %v643, %v711
    %v715 = vadd.f32 %v644, %v711
    %v716 = vadd.f32 %v645, %v711
    %v717 = vadd.f32 %v646, %v711
    %v718 = vadd.f32 %v647, %v711
    %v719 = vadd.f32 %v648, %v711
    %v720 = vadd.f32 %v649, %v711
    %v721 = vadd.f32 %v650, %v711
    %v722 = vadd.f32 %v651, %v711
    %v723 = vadd.f32 %v652, %v711
    %v724 = vadd.f32 %v653, %v711
    %v725 = vadd.f32 %v654, %v711
    %v726 = vadd.f32 %v655, %v711
    %v727 = vadd.f32 %v656, %v711
    %v728 = vadd.f32 %v657, %v711
    %v729 = vadd.f32 %v658, %v711
    %v730 = vadd.f32 %v659, %v711
    %v731 = vadd.f32 %v660, %v711
    %v732 = vadd.f32 %v661, %v711
    %v733 = vadd.f32 %v662, %v711
    %v734 = vadd.f32 %v663, %v711
    %v735 = vadd.f32 %v664, %v711
    %v736 = vadd.f32 %v665, %v711
    %v737 = vadd.f32 %v666, %v711
    %v738 = vadd.f32 %v667, %v711
    %v739 = vadd.f32 %v668, %v711
    %v740 = vadd.f32 %v669, %v711
    %v741 = vadd.f32 %v670, %v711
    %v742 = vadd.f32 %v671, %v711
    %v743 = vadd.f32 %v672, %v711
    %v744 = vadd.f32 %v673, %v711
    %v745 = vadd.f32 %v674, %v711
    %v746 = vadd.f32 %v675, %v711
    %v747 = vadd.f32 %v676, %v711
    %v748 = vadd.f32 %v677, %v711
    %v749 = vadd.f32 %v678, %v711
    %v750 = vadd.f32 %v679, %v711
    %v751 = vadd.f32 %v680, %v711
    %v752 = vadd.f32 %v681, %v711
    %v753 = vadd.f32 %v682, %v711
    %v754 = vadd.f32 %v683, %v711
    %v755 = vadd.f32 %v684, %v711
    %v756 = vadd.f32 %v685, %v711
    %v757 = vadd.f32 %v686, %v711
    %v758 = vadd.f32 %v687, %v711
    %v759 = vadd.f32 %v688, %v711
    %v760 = vadd.f32 %v689, %v711
    %v761 = vadd.f32 %v690, %v711
    %v762 = vadd.f32 %v691, %v711
    %v763 = vadd.f32 %v692, %v711
    %v764 = vadd.f32 %v693, %v711
    %v765 = vadd.f32 %v694, %v711
    %v766 = vadd.f32 %v695, %v711
    %v767 = vadd.f32 %v696, %v711
    %v768 = vadd.f32 %v697, %v711
    %v769 = vadd.f32 %v698, %v711
    %v770 = vadd.f32 %v699, %v711
    %v771 = vadd.f32 %v700, %v711
    %v772 = vadd.f32 %v701, %v711
    %v773 = vadd.f32 %v702, %v711
    %v774 = vadd.f32 %v703, %v711
    %v775 = vadd.f32 %v704, %v711
    %v776 = vadd.f32 %v705, %v711
    %v777 = vpack.c.bf16 %v714, %v713
    %v778 = vpack.c.bf16 %v716, %v715
    %v779 = vpack.c.bf16 %v718, %v717
    %v780 = vpack.c.bf16 %v720, %v719
    %v781 = vpack.c.bf16 %v722, %v721
    %v782 = vpack.c.bf16 %v724, %v723
    %v783 = vpack.c.bf16 %v726, %v725
    %v784 = vpack.c.bf16 %v728, %v727
    %v785 = vpack.c.bf16 %v730, %v729
    %v786 = vpack.c.bf16 %v732, %v731
    %v787 = vpack.c.bf16 %v734, %v733
    %v788 = vpack.c.bf16 %v736, %v735
    %v789 = vpack.c.bf16 %v738, %v737
    %v790 = vpack.c.bf16 %v740, %v739
    %v791 = vpack.c.bf16 %v742, %v741
    %v792 = vpack.c.bf16 %v744, %v743
    %v793 = vpack.c.bf16 %v746, %v745
    %v794 = vpack.c.bf16 %v748, %v747
    %v795 = vpack.c.bf16 %v750, %v749
    %v796 = vpack.c.bf16 %v752, %v751
    %v797 = vpack.c.bf16 %v754, %v753
    %v798 = vpack.c.bf16 %v756, %v755
    %v799 = vpack.c.bf16 %v758, %v757
    %v800 = vpack.c.bf16 %v760, %v759
    %v801 = vpack.c.bf16 %v762, %v761
    %v802 = vpack.c.bf16 %v764, %v763
    %v803 = vpack.c.bf16 %v766, %v765
    %v804 = vpack.c.bf16 %v768, %v767
    %v805 = vpack.c.bf16 %v770, %v769
    %v806 = vpack.c.bf16 %v772, %v771
    %v807 = vpack.c.bf16 %v774, %v773
    %v808 = vpack.c.bf16 %v776, %v775
    %v809 = vld [vmem:[#allocation7] sm:$0xf]
    %v810 = vld [vmem:[#allocation7 + $0x4] sm:$0xf]
    %v811 = vld [vmem:[#allocation7 + $0x8] sm:$0xf]
    %v812 = vld [vmem:[#allocation7 + $0xc] sm:$0xf]
    %v813 = vld [vmem:[#allocation7 + $0x10] sm:$0xf]
    %v814 = vld [vmem:[#allocation7 + $0x14] sm:$0xf]
    %v815 = vld [vmem:[#allocation7 + $0x18] sm:$0xf]
    %v816 = vld [vmem:[#allocation7 + $0x1c] sm:$0xf]
    %v817 = vld [vmem:[#allocation7 + $0x20] sm:$0xf]
    %v818 = vld [vmem:[#allocation7 + $0x24] sm:$0xf]
    %v819 = vld [vmem:[#allocation7 + $0x28] sm:$0xf]
    %v820 = vld [vmem:[#allocation7 + $0x2c] sm:$0xf]
    %v821 = vld [vmem:[#allocation7 + $0x30] sm:$0xf]
    %v822 = vld [vmem:[#allocation7 + $0x34] sm:$0xf]
    %v823 = vld [vmem:[#allocation7 + $0x38] sm:$0xf]
    %v824 = vld [vmem:[#allocation7 + $0x3c] sm:$0xf]
    %v825 = vld [vmem:[#allocation5 + $0x2] sm:$0x1]
    %v827 = vlaneseq
    %v828 = vshrl.u32 %v827, 7
    %v829 = vsub.s32 0, %v828
    %v830 = vrot.slane %v825, %v829
    %v848 = vunpack.c.l.b16 %v809
    %v849 = vunpack.c.l.b16 %v810
    %v850 = vunpack.c.l.b16 %v811
    %v851 = vunpack.c.l.b16 %v812
    %v852 = vunpack.c.l.b16 %v813
    %v853 = vunpack.c.l.b16 %v814
    %v854 = vunpack.c.l.b16 %v815
    %v855 = vunpack.c.l.b16 %v816
    %v856 = vunpack.c.l.b16 %v817
    %v857 = vunpack.c.l.b16 %v818
    %v858 = vunpack.c.l.b16 %v819
    %v859 = vunpack.c.l.b16 %v820
    %v860 = vunpack.c.l.b16 %v821
    %v861 = vunpack.c.l.b16 %v822
    %v862 = vunpack.c.l.b16 %v823
    %v863 = vunpack.c.l.b16 %v824
    %v864 = vpack.c.b16 %v849, %v848
    %v865 = vpack.c.b16 %v851, %v850
    %v866 = vpack.c.b16 %v853, %v852
    %v867 = vpack.c.b16 %v855, %v854
    %v868 = vpack.c.b16 %v857, %v856
    %v869 = vpack.c.b16 %v859, %v858
    %v870 = vpack.c.b16 %v861, %v860
    %v871 = vpack.c.b16 %v863, %v862
    %880 = vmatprep.subr.bf16.mxu0 0
    %881 = vmatpush1.bf16.msra.mxu0 %v864
    %882 = vmatprep.subr.bf16.mxu0 0
    %883 = vmatpush1.bf16.msra.mxu0 %v865
    %884 = vmatprep.subr.bf16.mxu0 0
    %885 = vmatpush1.bf16.msra.mxu0 %v866
    %886 = vmatprep.subr.bf16.mxu0 0
    %887 = vmatpush1.bf16.msra.mxu0 %v867
    %888 = vmatprep.subr.bf16.mxu0 0
    %889 = vmatpush1.bf16.msra.mxu0 %v868
    %890 = vmatprep.subr.bf16.mxu0 0
    %891 = vmatpush1.bf16.msra.mxu0 %v869
    %892 = vmatprep.subr.bf16.mxu0 0
    %893 = vmatpush1.bf16.msra.mxu0 %v870
    %894 = vmatprep.subr.bf16.mxu0 0
    %895 = vmatpush1.bf16.msra.mxu0 %v871
    %896 = vmatprep.subr.bf16.mxu0 0
    %897 = vmatpush1.bf16.msra.mxu0 0
    %898 = vmatprep.subr.bf16.mxu0 0
    %899 = vmatpush1.bf16.msra.mxu0 0
    %900 = vmatprep.subr.bf16.mxu0 0
    %901 = vmatpush1.bf16.msra.mxu0 0
    %902 = vmatprep.subr.bf16.mxu0 0
    %903 = vmatpush1.bf16.msra.mxu0 0
    %904 = vmatprep.subr.bf16.mxu0 0
    %905 = vmatpush1.bf16.msra.mxu0 0
    %906 = vmatprep.subr.bf16.mxu0 0
    %907 = vmatpush1.bf16.msra.mxu0 0
    %908 = vmatprep.subr.bf16.mxu0 0
    %909 = vmatpush1.bf16.msra.mxu0 0
    %910 = vmatprep.subr.bf16.mxu0 0
    %911 = vmatpush1.bf16.msra.mxu0 0
    %912 = vmatprep.mubr.bf16.mxu0 0
    %913 = vmatmul.mubr.bf16.gmra.mrb[0].mxu0 %v777
    %v914 = vpop.f32.mrb[0].mxu0
    %v915 = vadd.f32 %v830, %v914
    %v916 = vpop.f32.mrb[0].mxu0
    %v917 = vpop.f32.mrb[0].mxu0
    %v918 = vadd.f32 %v830, %v917
    %v919 = vpop.f32.mrb[0].mxu0
    %920 = vmatprep.mubr.bf16.mxu0 0
    %921 = vmatmul.mubr.bf16.gmra.mrb[0].mxu0 %v778
    %v922 = vpop.f32.mrb[0].mxu0
    %v923 = vadd.f32 %v830, %v922
    %v924 = vpop.f32.mrb[0].mxu0
    %v925 = vpop.f32.mrb[0].mxu0
    %v926 = vadd.f32 %v830, %v925
    %v927 = vpop.f32.mrb[0].mxu0
    %928 = vmatprep.mubr.bf16.mxu0 0
    %929 = vmatmul.mubr.bf16.gmra.mrb[0].mxu0 %v779
    %v930 = vpop.f32.mrb[0].mxu0
    %v931 = vadd.f32 %v830, %v930
    %v932 = vpop.f32.mrb[0].mxu0
    %v933 = vpop.f32.mrb[0].mxu0
    %v934 = vadd.f32 %v830, %v933
    %v935 = vpop.f32.mrb[0].mxu0
    %936 = vmatprep.mubr.bf16.mxu0 0
    %937 = vmatmul.mubr.bf16.gmra.mrb[0].mxu0 %v780
    %v938 = vpop.f32.mrb[0].mxu0
    %v939 = vadd.f32 %v830, %v938
    %v940 = vpop.f32.mrb[0].mxu0
    %v941 = vpop.f32.mrb[0].mxu0
    %v942 = vadd.f32 %v830, %v941
    %v943 = vpop.f32.mrb[0].mxu0
    %944 = vmatprep.mubr.bf16.mxu0 0
    %945 = vmatmul.mubr.bf16.gmra.mrb[0].mxu0 %v781
    %v946 = vpop.f32.mrb[0].mxu0
    %v947 = vadd.f32 %v830, %v946
    %v948 = vpop.f32.mrb[0].mxu0
    %v949 = vpop.f32.mrb[0].mxu0
    %v950 = vadd.f32 %v830, %v949
    %v951 = vpop.f32.mrb[0].mxu0
    %952 = vmatprep.mubr.bf16.mxu0 0
    %953 = vmatmul.mubr.bf16.gmra.mrb[0].mxu0 %v782
    %v954 = vpop.f32.mrb[0].mxu0
    %v955 = vadd.f32 %v830, %v954
    %v956 = vpop.f32.mrb[0].mxu0
    %v957 = vpop.f32.mrb[0].mxu0
    %v958 = vadd.f32 %v830, %v957
    %v959 = vpop.f32.mrb[0].mxu0
    %960 = vmatprep.mubr.bf16.mxu0 0
    %961 = vmatmul.mubr.bf16.gmra.mrb[0].mxu0 %v783
    %v962 = vpop.f32.mrb[0].mxu0
    %v963 = vadd.f32 %v830, %v962
    %v964 = vpop.f32.mrb[0].mxu0
    %v965 = vpop.f32.mrb[0].mxu0
    %v966 = vadd.f32 %v830, %v965
    %v967 = vpop.f32.mrb[0].mxu0
    %968 = vmatprep.mubr.bf16.mxu0 0
    %969 = vmatmul.mubr.bf16.gmra.mrb[0].mxu0 %v784
    %v970 = vpop.f32.mrb[0].mxu0
    %v971 = vadd.f32 %v830, %v970
    %v972 = vpop.f32.mrb[0].mxu0
    %v973 = vpop.f32.mrb[0].mxu0
    %v974 = vadd.f32 %v830, %v973
    %v975 = vpop.f32.mrb[0].mxu0
    %976 = vmatprep.mubr.bf16.mxu0 0
    %977 = vmatmul.mubr.bf16.gmra.mrb[0].mxu0 %v785
    %v978 = vpop.f32.mrb[0].mxu0
    %v979 = vadd.f32 %v830, %v978
    %v980 = vpop.f32.mrb[0].mxu0
    %v981 = vpop.f32.mrb[0].mxu0
    %v982 = vadd.f32 %v830, %v981
    %v983 = vpop.f32.mrb[0].mxu0
    %984 = vmatprep.mubr.bf16.mxu0 0
    %985 = vmatmul.mubr.bf16.gmra.mrb[0].mxu0 %v786
    %v986 = vpop.f32.mrb[0].mxu0
    %v987 = vadd.f32 %v830, %v986
    %v988 = vpop.f32.mrb[0].mxu0
    %v989 = vpop.f32.mrb[0].mxu0
    %v990 = vadd.f32 %v830, %v989
    %v991 = vpop.f32.mrb[0].mxu0
    %992 = vmatprep.mubr.bf16.mxu0 0
    %993 = vmatmul.mubr.bf16.gmra.mrb[0].mxu0 %v787
    %v994 = vpop.f32.mrb[0].mxu0
    %v995 = vadd.f32 %v830, %v994
    %v996 = vpop.f32.mrb[0].mxu0
    %v997 = vpop.f32.mrb[0].mxu0
    %v998 = vadd.f32 %v830, %v997
    %v999 = vpop.f32.mrb[0].mxu0
    %1000 = vmatprep.mubr.bf16.mxu0 0
    %1001 = vmatmul.mubr.bf16.gmra.mrb[0].mxu0 %v788
    %v1002 = vpop.f32.mrb[0].mxu0
    %v1003 = vadd.f32 %v830, %v1002
    %v1004 = vpop.f32.mrb[0].mxu0
    %v1005 = vpop.f32.mrb[0].mxu0
    %v1006 = vadd.f32 %v830, %v1005
    %v1007 = vpop.f32.mrb[0].mxu0
    %1008 = vmatprep.mubr.bf16.mxu0 0
    %1009 = vmatmul.mubr.bf16.gmra.mrb[0].mxu0 %v789
    %v1010 = vpop.f32.mrb[0].mxu0
    %v1011 = vadd.f32 %v830, %v1010
    %v1012 = vpop.f32.mrb[0].mxu0
    %v1013 = vpop.f32.mrb[0].mxu0
    %v1014 = vadd.f32 %v830, %v1013
    %v1015 = vpop.f32.mrb[0].mxu0
    %1016 = vmatprep.mubr.bf16.mxu0 0
    %1017 = vmatmul.mubr.bf16.gmra.mrb[0].mxu0 %v790
    %v1018 = vpop.f32.mrb[0].mxu0
    %v1019 = vadd.f32 %v830, %v1018
    %v1020 = vpop.f32.mrb[0].mxu0
    %v1021 = vpop.f32.mrb[0].mxu0
    %v1022 = vadd.f32 %v830, %v1021
    %v1023 = vpop.f32.mrb[0].mxu0
    %1024 = vmatprep.mubr.bf16.mxu0 0
    %1025 = vmatmul.mubr.bf16.gmra.mrb[0].mxu0 %v791
    %v1026 = vpop.f32.mrb[0].mxu0
    %v1027 = vadd.f32 %v830, %v1026
    %v1028 = vpop.f32.mrb[0].mxu0
    %v1029 = vpop.f32.mrb[0].mxu0
    %v1030 = vadd.f32 %v830, %v1029
    %v1031 = vpop.f32.mrb[0].mxu0
    %1032 = vmatprep.mubr.bf16.mxu0 0
    %1033 = vmatmul.mubr.bf16.gmra.mrb[0].mxu0 %v792
    %v1034 = vpop.f32.mrb[0].mxu0
    %v1035 = vadd.f32 %v830, %v1034
    %v1036 = vpop.f32.mrb[0].mxu0
    %v1037 = vpop.f32.mrb[0].mxu0
    %v1038 = vadd.f32 %v830, %v1037
    %v1039 = vpop.f32.mrb[0].mxu0
    %1040 = vmatprep.mubr.bf16.mxu0 0
    %1041 = vmatmul.mubr.bf16.gmra.mrb[0].mxu0 %v793
    %v1042 = vpop.f32.mrb[0].mxu0
    %v1043 = vadd.f32 %v830, %v1042
    %v1044 = vpop.f32.mrb[0].mxu0
    %v1045 = vpop.f32.mrb[0].mxu0
    %v1046 = vadd.f32 %v830, %v1045
    %v1047 = vpop.f32.mrb[0].mxu0
    %1048 = vmatprep.mubr.bf16.mxu0 0
    %1049 = vmatmul.mubr.bf16.gmra.mrb[0].mxu0 %v794
    %v1050 = vpop.f32.mrb[0].mxu0
    %v1051 = vadd.f32 %v830, %v1050
    %v1052 = vpop.f32.mrb[0].mxu0
    %v1053 = vpop.f32.mrb[0].mxu0
    %v1054 = vadd.f32 %v830, %v1053
    %v1055 = vpop.f32.mrb[0].mxu0
    %1056 = vmatprep.mubr.bf16.mxu0 0
    %1057 = vmatmul.mubr.bf16.gmra.mrb[0].mxu0 %v795
    %v1058 = vpop.f32.mrb[0].mxu0
    %v1059 = vadd.f32 %v830, %v1058
    %v1060 = vpop.f32.mrb[0].mxu0
    %v1061 = vpop.f32.mrb[0].mxu0
    %v1062 = vadd.f32 %v830, %v1061
    %v1063 = vpop.f32.mrb[0].mxu0
    %1064 = vmatprep.mubr.bf16.mxu0 0
    %1065 = vmatmul.mubr.bf16.gmra.mrb[0].mxu0 %v796
    %v1066 = vpop.f32.mrb[0].mxu0
    %v1067 = vadd.f32 %v830, %v1066
    %v1068 = vpop.f32.mrb[0].mxu0
    %v1069 = vpop.f32.mrb[0].mxu0
    %v1070 = vadd.f32 %v830, %v1069
    %v1071 = vpop.f32.mrb[0].mxu0
    %1072 = vmatprep.mubr.bf16.mxu0 0
    %1073 = vmatmul.mubr.bf16.gmra.mrb[0].mxu0 %v797
    %v1074 = vpop.f32.mrb[0].mxu0
    %v1075 = vadd.f32 %v830, %v1074
    %v1076 = vpop.f32.mrb[0].mxu0
    %v1077 = vpop.f32.mrb[0].mxu0
    %v1078 = vadd.f32 %v830, %v1077
    %v1079 = vpop.f32.mrb[0].mxu0
    %1080 = vmatprep.mubr.bf16.mxu0 0
    %1081 = vmatmul.mubr.bf16.gmra.mrb[0].mxu0 %v798
    %v1082 = vpop.f32.mrb[0].mxu0
    %v1083 = vadd.f32 %v830, %v1082
    %v1084 = vpop.f32.mrb[0].mxu0
    %v1085 = vpop.f32.mrb[0].mxu0
    %v1086 = vadd.f32 %v830, %v1085
    %v1087 = vpop.f32.mrb[0].mxu0
    %1088 = vmatprep.mubr.bf16.mxu0 0
    %1089 = vmatmul.mubr.bf16.gmra.mrb[0].mxu0 %v799
    %v1090 = vpop.f32.mrb[0].mxu0
    %v1091 = vadd.f32 %v830, %v1090
    %v1092 = vpop.f32.mrb[0].mxu0
    %v1093 = vpop.f32.mrb[0].mxu0
    %v1094 = vadd.f32 %v830, %v1093
    %v1095 = vpop.f32.mrb[0].mxu0
    %1096 = vmatprep.mubr.bf16.mxu0 0
    %1097 = vmatmul.mubr.bf16.gmra.mrb[0].mxu0 %v800
    %v1098 = vpop.f32.mrb[0].mxu0
    %v1099 = vadd.f32 %v830, %v1098
    %v1100 = vpop.f32.mrb[0].mxu0
    %v1101 = vpop.f32.mrb[0].mxu0
    %v1102 = vadd.f32 %v830, %v1101
    %v1103 = vpop.f32.mrb[0].mxu0
    %1104 = vmatprep.mubr.bf16.mxu0 0
    %1105 = vmatmul.mubr.bf16.gmra.mrb[0].mxu0 %v801
    %v1106 = vpop.f32.mrb[0].mxu0
    %v1107 = vadd.f32 %v830, %v1106
    %v1108 = vpop.f32.mrb[0].mxu0
    %v1109 = vpop.f32.mrb[0].mxu0
    %v1110 = vadd.f32 %v830, %v1109
    %v1111 = vpop.f32.mrb[0].mxu0
    %1112 = vmatprep.mubr.bf16.mxu0 0
    %1113 = vmatmul.mubr.bf16.gmra.mrb[0].mxu0 %v802
    %v1114 = vpop.f32.mrb[0].mxu0
    %v1115 = vadd.f32 %v830, %v1114
    %v1116 = vpop.f32.mrb[0].mxu0
    %v1117 = vpop.f32.mrb[0].mxu0
    %v1118 = vadd.f32 %v830, %v1117
    %v1119 = vpop.f32.mrb[0].mxu0
    %1120 = vmatprep.mubr.bf16.mxu0 0
    %1121 = vmatmul.mubr.bf16.gmra.mrb[0].mxu0 %v803
    %v1122 = vpop.f32.mrb[0].mxu0
    %v1123 = vadd.f32 %v830, %v1122
    %v1124 = vpop.f32.mrb[0].mxu0
    %v1125 = vpop.f32.mrb[0].mxu0
    %v1126 = vadd.f32 %v830, %v1125
    %v1127 = vpop.f32.mrb[0].mxu0
    %1128 = vmatprep.mubr.bf16.mxu0 0
    %1129 = vmatmul.mubr.bf16.gmra.mrb[0].mxu0 %v804
    %v1130 = vpop.f32.mrb[0].mxu0
    %v1131 = vadd.f32 %v830, %v1130
    %v1132 = vpop.f32.mrb[0].mxu0
    %v1133 = vpop.f32.mrb[0].mxu0
    %v1134 = vadd.f32 %v830, %v1133
    %v1135 = vpop.f32.mrb[0].mxu0
    %1136 = vmatprep.mubr.bf16.mxu0 0
    %1137 = vmatmul.mubr.bf16.gmra.mrb[0].mxu0 %v805
    %v1138 = vpop.f32.mrb[0].mxu0
    %v1139 = vadd.f32 %v830, %v1138
    %v1140 = vpop.f32.mrb[0].mxu0
    %v1141 = vpop.f32.mrb[0].mxu0
    %v1142 = vadd.f32 %v830, %v1141
    %v1143 = vpop.f32.mrb[0].mxu0
    %1144 = vmatprep.mubr.bf16.mxu0 0
    %1145 = vmatmul.mubr.bf16.gmra.mrb[0].mxu0 %v806
    %v1146 = vpop.f32.mrb[0].mxu0
    %v1147 = vadd.f32 %v830, %v1146
    %v1148 = vpop.f32.mrb[0].mxu0
    %v1149 = vpop.f32.mrb[0].mxu0
    %v1150 = vadd.f32 %v830, %v1149
    %v1151 = vpop.f32.mrb[0].mxu0
    %1152 = vmatprep.mubr.bf16.mxu0 0
    %1153 = vmatmul.mubr.bf16.gmra.mrb[0].mxu0 %v807
    %v1154 = vpop.f32.mrb[0].mxu0
    %v1155 = vadd.f32 %v830, %v1154
    %v1156 = vpop.f32.mrb[0].mxu0
    %v1157 = vpop.f32.mrb[0].mxu0
    %v1158 = vadd.f32 %v830, %v1157
    %v1159 = vpop.f32.mrb[0].mxu0
    %1160 = vmatprep.mubr.bf16.mxu0 0
    %1161 = vmatmul.mubr.bf16.gmra.mrb[0].mxu0 %v808
    %v1162 = vpop.f32.mrb[0].mxu0
    %v1163 = vadd.f32 %v830, %v1162
    %v1164 = vpop.f32.mrb[0].mxu0
    %v1165 = vpop.f32.mrb[0].mxu0
    %v1166 = vadd.f32 %v830, %v1165
    %v1167 = vpop.f32.mrb[0].mxu0
    %1168 = vdwg.mxu0
    %v1169 = vmax.f32 %v915, 0.0
    %v1170 = vmax.f32 %v918, 0.0
    %v1171 = vmax.f32 %v923, 0.0
    %v1172 = vmax.f32 %v926, 0.0
    %v1173 = vmax.f32 %v931, 0.0
    %v1174 = vmax.f32 %v934, 0.0
    %v1175 = vmax.f32 %v939, 0.0
    %v1176 = vmax.f32 %v942, 0.0
    %v1177 = vmax.f32 %v947, 0.0
    %v1178 = vmax.f32 %v950, 0.0
    %v1179 = vmax.f32 %v955, 0.0
    %v1180 = vmax.f32 %v958, 0.0
    %v1181 = vmax.f32 %v963, 0.0
    %v1182 = vmax.f32 %v966, 0.0
    %v1183 = vmax.f32 %v971, 0.0
    %v1184 = vmax.f32 %v974, 0.0
    %v1185 = vmax.f32 %v979, 0.0
    %v1186 = vmax.f32 %v982, 0.0
    %v1187 = vmax.f32 %v987, 0.0
    %v1188 = vmax.f32 %v990, 0.0
    %v1189 = vmax.f32 %v995, 0.0
    %v1190 = vmax.f32 %v998, 0.0
    %v1191 = vmax.f32 %v1003, 0.0
    %v1192 = vmax.f32 %v1006, 0.0
    %v1193 = vmax.f32 %v1011, 0.0
    %v1194 = vmax.f32 %v1014, 0.0
    %v1195 = vmax.f32 %v1019, 0.0
    %v1196 = vmax.f32 %v1022, 0.0
    %v1197 = vmax.f32 %v1027, 0.0
    %v1198 = vmax.f32 %v1030, 0.0
    %v1199 = vmax.f32 %v1035, 0.0
    %v1200 = vmax.f32 %v1038, 0.0
    %v1201 = vmax.f32 %v1043, 0.0
    %v1202 = vmax.f32 %v1046, 0.0
    %v1203 = vmax.f32 %v1051, 0.0
    %v1204 = vmax.f32 %v1054, 0.0
    %v1205 = vmax.f32 %v1059, 0.0
    %v1206 = vmax.f32 %v1062, 0.0
    %v1207 = vmax.f32 %v1067, 0.0
    %v1208 = vmax.f32 %v1070, 0.0
    %v1209 = vmax.f32 %v1075, 0.0
    %v1210 = vmax.f32 %v1078, 0.0
    %v1211 = vmax.f32 %v1083, 0.0
    %v1212 = vmax.f32 %v1086, 0.0
    %v1213 = vmax.f32 %v1091, 0.0
    %v1214 = vmax.f32 %v1094, 0.0
    %v1215 = vmax.f32 %v1099, 0.0
    %v1216 = vmax.f32 %v1102, 0.0
    %v1217 = vmax.f32 %v1107, 0.0
    %v1218 = vmax.f32 %v1110, 0.0
    %v1219 = vmax.f32 %v1115, 0.0
    %v1220 = vmax.f32 %v1118, 0.0
    %v1221 = vmax.f32 %v1123, 0.0
    %v1222 = vmax.f32 %v1126, 0.0
    %v1223 = vmax.f32 %v1131, 0.0
    %v1224 = vmax.f32 %v1134, 0.0
    %v1225 = vmax.f32 %v1139, 0.0
    %v1226 = vmax.f32 %v1142, 0.0
    %v1227 = vmax.f32 %v1147, 0.0
    %v1228 = vmax.f32 %v1150, 0.0
    %v1229 = vmax.f32 %v1155, 0.0
    %v1230 = vmax.f32 %v1158, 0.0
    %v1231 = vmax.f32 %v1163, 0.0
    %v1232 = vmax.f32 %v1166, 0.0
    %1233 = vmatprep.subr.mxu0 0.0
    %1234 = vmatpush1.msra.mxu0 %v1169
    %1235 = vmatprep.subr.mxu0 0.0
    %1236 = vmatpush1.msra.mxu0 %v1170
    %1237 = vmatprep.subr.mxu0 0.0
    %1238 = vmatpush1.msra.mxu0 %v1171
    %1239 = vmatprep.subr.mxu0 0.0
    %1240 = vmatpush1.msra.mxu0 %v1172
    %1241 = vmatprep.subr.mxu0 0.0
    %1242 = vmatpush1.msra.mxu0 %v1173
    %1243 = vmatprep.subr.mxu0 0.0
    %1244 = vmatpush1.msra.mxu0 %v1174
    %1245 = vmatprep.subr.mxu0 0.0
    %1246 = vmatpush1.msra.mxu0 %v1175
    %1247 = vmatprep.subr.mxu0 0.0
    %1248 = vmatpush1.msra.mxu0 %v1176
    %1249 = vmatprep.subr.mxu0 0.0
    %1250 = vmatpush1.msra.mxu0 %v1177
    %1251 = vmatprep.subr.mxu0 0.0
    %1252 = vmatpush1.msra.mxu0 %v1178
    %1253 = vmatprep.subr.mxu0 0.0
    %1254 = vmatpush1.msra.mxu0 %v1179
    %1255 = vmatprep.subr.mxu0 0.0
    %1256 = vmatpush1.msra.mxu0 %v1180
    %1257 = vmatprep.subr.mxu0 0.0
    %1258 = vmatpush1.msra.mxu0 %v1181
    %1259 = vmatprep.subr.mxu0 0.0
    %1260 = vmatpush1.msra.mxu0 %v1182
    %1261 = vmatprep.subr.mxu0 0.0
    %1262 = vmatpush1.msra.mxu0 %v1183
    %1263 = vmatprep.subr.mxu0 0.0
    %1264 = vmatpush1.msra.mxu0 %v1184
    %1265 = vmatprep.subr.mxu0 0.0
    %1266 = vmatpush1.msra.mxu0 %v1185
    %1267 = vmatprep.subr.mxu0 0.0
    %1268 = vmatpush1.msra.mxu0 %v1186
    %1269 = vmatprep.subr.mxu0 0.0
    %1270 = vmatpush1.msra.mxu0 %v1187
    %1271 = vmatprep.subr.mxu0 0.0
    %1272 = vmatpush1.msra.mxu0 %v1188
    %1273 = vmatprep.subr.mxu0 0.0
    %1274 = vmatpush1.msra.mxu0 %v1189
    %1275 = vmatprep.subr.mxu0 0.0
    %1276 = vmatpush1.msra.mxu0 %v1190
    %1277 = vmatprep.subr.mxu0 0.0
    %1278 = vmatpush1.msra.mxu0 %v1191
    %1279 = vmatprep.subr.mxu0 0.0
    %1280 = vmatpush1.msra.mxu0 %v1192
    %1281 = vmatprep.subr.mxu0 0.0
    %1282 = vmatpush1.msra.mxu0 %v1193
    %1283 = vmatprep.subr.mxu0 0.0
    %1284 = vmatpush1.msra.mxu0 %v1194
    %1285 = vmatprep.subr.mxu0 0.0
    %1286 = vmatpush1.msra.mxu0 %v1195
    %1287 = vmatprep.subr.mxu0 0.0
    %1288 = vmatpush1.msra.mxu0 %v1196
    %1289 = vmatprep.subr.mxu0 0.0
    %1290 = vmatpush1.msra.mxu0 %v1197
    %1291 = vmatprep.subr.mxu0 0.0
    %1292 = vmatpush1.msra.mxu0 %v1198
    %1293 = vmatprep.subr.mxu0 0.0
    %1294 = vmatpush1.msra.mxu0 %v1199
    %1295 = vmatprep.subr.mxu0 0.0
    %1296 = vmatpush1.msra.mxu0 %v1200
    %1297 = vmatprep.mubr.f32.mxu0 1.0
    %1298 = vmatmul.mubr.f32.gmra.mrb[0].mxu0 1.0
    %v1299 = vpop.f32.mrb[0].mxu0
    %v1300 = vadd.f32 0.0, %v1299
    %v1301 = vpop.f32.mrb[0].mxu0
    %1302 = vdwg.mxu0
    %1303 = vmatprep.subr.mxu0 0.0
    %1304 = vmatpush1.msra.mxu0 %v1201
    %1305 = vmatprep.subr.mxu0 0.0
    %1306 = vmatpush1.msra.mxu0 %v1202
    %1307 = vmatprep.subr.mxu0 0.0
    %1308 = vmatpush1.msra.mxu0 %v1203
    %1309 = vmatprep.subr.mxu0 0.0
    %1310 = vmatpush1.msra.mxu0 %v1204
    %1311 = vmatprep.subr.mxu0 0.0
    %1312 = vmatpush1.msra.mxu0 %v1205
    %1313 = vmatprep.subr.mxu0 0.0
    %1314 = vmatpush1.msra.mxu0 %v1206
    %1315 = vmatprep.subr.mxu0 0.0
    %1316 = vmatpush1.msra.mxu0 %v1207
    %1317 = vmatprep.subr.mxu0 0.0
    %1318 = vmatpush1.msra.mxu0 %v1208
    %1319 = vmatprep.subr.mxu0 0.0
    %1320 = vmatpush1.msra.mxu0 %v1209
    %1321 = vmatprep.subr.mxu0 0.0
    %1322 = vmatpush1.msra.mxu0 %v1210
    %1323 = vmatprep.subr.mxu0 0.0
    %1324 = vmatpush1.msra.mxu0 %v1211
    %1325 = vmatprep.subr.mxu0 0.0
    %1326 = vmatpush1.msra.mxu0 %v1212
    %1327 = vmatprep.subr.mxu0 0.0
    %1328 = vmatpush1.msra.mxu0 %v1213
    %1329 = vmatprep.subr.mxu0 0.0
    %1330 = vmatpush1.msra.mxu0 %v1214
    %1331 = vmatprep.subr.mxu0 0.0
    %1332 = vmatpush1.msra.mxu0 %v1215
    %1333 = vmatprep.subr.mxu0 0.0
    %1334 = vmatpush1.msra.mxu0 %v1216
    %1335 = vmatprep.subr.mxu0 0.0
    %1336 = vmatpush1.msra.mxu0 %v1217
    %1337 = vmatprep.subr.mxu0 0.0
    %1338 = vmatpush1.msra.mxu0 %v1218
    %1339 = vmatprep.subr.mxu0 0.0
    %1340 = vmatpush1.msra.mxu0 %v1219
    %1341 = vmatprep.subr.mxu0 0.0
    %1342 = vmatpush1.msra.mxu0 %v1220
    %1343 = vmatprep.subr.mxu0 0.0
    %1344 = vmatpush1.msra.mxu0 %v1221
    %1345 = vmatprep.subr.mxu0 0.0
    %1346 = vmatpush1.msra.mxu0 %v1222
    %1347 = vmatprep.subr.mxu0 0.0
    %1348 = vmatpush1.msra.mxu0 %v1223
    %1349 = vmatprep.subr.mxu0 0.0
    %1350 = vmatpush1.msra.mxu0 %v1224
    %1351 = vmatprep.subr.mxu0 0.0
    %1352 = vmatpush1.msra.mxu0 %v1225
    %1353 = vmatprep.subr.mxu0 0.0
    %1354 = vmatpush1.msra.mxu0 %v1226
    %1355 = vmatprep.subr.mxu0 0.0
    %1356 = vmatpush1.msra.mxu0 %v1227
    %1357 = vmatprep.subr.mxu0 0.0
    %1358 = vmatpush1.msra.mxu0 %v1228
    %1359 = vmatprep.subr.mxu0 0.0
    %1360 = vmatpush1.msra.mxu0 %v1229
    %1361 = vmatprep.subr.mxu0 0.0
    %1362 = vmatpush1.msra.mxu0 %v1230
    %1363 = vmatprep.subr.mxu0 0.0
    %1364 = vmatpush1.msra.mxu0 %v1231
    %1365 = vmatprep.subr.mxu0 0.0
    %1366 = vmatpush1.msra.mxu0 %v1232
    %1367 = vmatprep.mubr.f32.mxu0 1.0
    %1368 = vmatmul.mubr.f32.gmra.mrb[0].mxu0 1.0
    %v1369 = vpop.f32.mrb[0].mxu0
    %v1370 = vadd.f32 %v1300, %v1369
    %v1371 = vpop.f32.mrb[0].mxu0
    %1372 = vdwg.mxu0
    %v1373 = vmul.f32 %v1370, 0.001953125
    %v1374 = vlaneseq
    %v1375 = vshrl.u32 %v1374, 7
    %v1376 = vsub.s32 0, %v1375
    %v1377 = vrot.slane %v1373, %v1376
    %v1378 = vsub.f32 %v1169, %v1377
    %v1379 = vsub.f32 %v1170, %v1377
    %v1380 = vsub.f32 %v1171, %v1377
    %v1381 = vsub.f32 %v1172, %v1377
    %v1382 = vsub.f32 %v1173, %v1377
    %v1383 = vsub.f32 %v1174, %v1377
    %v1384 = vsub.f32 %v1175, %v1377
    %v1385 = vsub.f32 %v1176, %v1377
    %v1386 = vsub.f32 %v1177, %v1377
    %v1387 = vsub.f32 %v1178, %v1377
    %v1388 = vsub.f32 %v1179, %v1377
    %v1389 = vsub.f32 %v1180, %v1377
    %v1390 = vsub.f32 %v1181, %v1377
    %v1391 = vsub.f32 %v1182, %v1377
    %v1392 = vsub.f32 %v1183, %v1377
    %v1393 = vsub.f32 %v1184, %v1377
    %v1394 = vsub.f32 %v1185, %v1377
    %v1395 = vsub.f32 %v1186, %v1377
    %v1396 = vsub.f32 %v1187, %v1377
    %v1397 = vsub.f32 %v1188, %v1377
    %v1398 = vsub.f32 %v1189, %v1377
    %v1399 = vsub.f32 %v1190, %v1377
    %v1400 = vsub.f32 %v1191, %v1377
    %v1401 = vsub.f32 %v1192, %v1377
    %v1402 = vsub.f32 %v1193, %v1377
    %v1403 = vsub.f32 %v1194, %v1377
    %v1404 = vsub.f32 %v1195, %v1377
    %v1405 = vsub.f32 %v1196, %v1377
    %v1406 = vsub.f32 %v1197, %v1377
    %v1407 = vsub.f32 %v1198, %v1377
    %v1408 = vsub.f32 %v1199, %v1377
    %v1409 = vsub.f32 %v1200, %v1377
    %v1410 = vsub.f32 %v1201, %v1377
    %v1411 = vsub.f32 %v1202, %v1377
    %v1412 = vsub.f32 %v1203, %v1377
    %v1413 = vsub.f32 %v1204, %v1377
    %v1414 = vsub.f32 %v1205, %v1377
    %v1415 = vsub.f32 %v1206, %v1377
    %v1416 = vsub.f32 %v1207, %v1377
    %v1417 = vsub.f32 %v1208, %v1377
    %v1418 = vsub.f32 %v1209, %v1377
    %v1419 = vsub.f32 %v1210, %v1377
    %v1420 = vsub.f32 %v1211, %v1377
    %v1421 = vsub.f32 %v1212, %v1377
    %v1422 = vsub.f32 %v1213, %v1377
    %v1423 = vsub.f32 %v1214, %v1377
    %v1424 = vsub.f32 %v1215, %v1377
    %v1425 = vsub.f32 %v1216, %v1377
    %v1426 = vsub.f32 %v1217, %v1377
    %v1427 = vsub.f32 %v1218, %v1377
    %v1428 = vsub.f32 %v1219, %v1377
    %v1429 = vsub.f32 %v1220, %v1377
    %v1430 = vsub.f32 %v1221, %v1377
    %v1431 = vsub.f32 %v1222, %v1377
    %v1432 = vsub.f32 %v1223, %v1377
    %v1433 = vsub.f32 %v1224, %v1377
    %v1434 = vsub.f32 %v1225, %v1377
    %v1435 = vsub.f32 %v1226, %v1377
    %v1436 = vsub.f32 %v1227, %v1377
    %v1437 = vsub.f32 %v1228, %v1377
    %v1438 = vsub.f32 %v1229, %v1377
    %v1439 = vsub.f32 %v1230, %v1377
    %v1440 = vsub.f32 %v1231, %v1377
    %v1441 = vsub.f32 %v1232, %v1377
    %v1442 = vmul.f32 %v1378, %v1378
    %v1443 = vmul.f32 %v1379, %v1379
    %v1444 = vmul.f32 %v1380, %v1380
    %v1445 = vmul.f32 %v1381, %v1381
    %v1446 = vmul.f32 %v1382, %v1382
    %v1447 = vmul.f32 %v1383, %v1383
    %v1448 = vmul.f32 %v1384, %v1384
    %v1449 = vmul.f32 %v1385, %v1385
    %v1450 = vmul.f32 %v1386, %v1386
    %v1451 = vmul.f32 %v1387, %v1387
    %v1452 = vmul.f32 %v1388, %v1388
    %v1453 = vmul.f32 %v1389, %v1389
    %v1454 = vmul.f32 %v1390, %v1390
    %v1455 = vmul.f32 %v1391, %v1391
    %v1456 = vmul.f32 %v1392, %v1392
    %v1457 = vmul.f32 %v1393, %v1393
    %v1458 = vmul.f32 %v1394, %v1394
    %v1459 = vmul.f32 %v1395, %v1395
    %v1460 = vmul.f32 %v1396, %v1396
    %v1461 = vmul.f32 %v1397, %v1397
    %v1462 = vmul.f32 %v1398, %v1398
    %v1463 = vmul.f32 %v1399, %v1399
    %v1464 = vmul.f32 %v1400, %v1400
    %v1465 = vmul.f32 %v1401, %v1401
    %v1466 = vmul.f32 %v1402, %v1402
    %v1467 = vmul.f32 %v1403, %v1403
    %v1468 = vmul.f32 %v1404, %v1404
    %v1469 = vmul.f32 %v1405, %v1405
    %v1470 = vmul.f32 %v1406, %v1406
    %v1471 = vmul.f32 %v1407, %v1407
    %v1472 = vmul.f32 %v1408, %v1408
    %v1473 = vmul.f32 %v1409, %v1409
    %v1474 = vmul.f32 %v1410, %v1410
    %v1475 = vmul.f32 %v1411, %v1411
    %v1476 = vmul.f32 %v1412, %v1412
    %v1477 = vmul.f32 %v1413, %v1413
    %v1478 = vmul.f32 %v1414, %v1414
    %v1479 = vmul.f32 %v1415, %v1415
    %v1480 = vmul.f32 %v1416, %v1416
    %v1481 = vmul.f32 %v1417, %v1417
    %v1482 = vmul.f32 %v1418, %v1418
    %v1483 = vmul.f32 %v1419, %v1419
    %v1484 = vmul.f32 %v1420, %v1420
    %v1485 = vmul.f32 %v1421, %v1421
    %v1486 = vmul.f32 %v1422, %v1422
    %v1487 = vmul.f32 %v1423, %v1423
    %v1488 = vmul.f32 %v1424, %v1424
    %v1489 = vmul.f32 %v1425, %v1425
    %v1490 = vmul.f32 %v1426, %v1426
    %v1491 = vmul.f32 %v1427, %v1427
    %v1492 = vmul.f32 %v1428, %v1428
    %v1493 = vmul.f32 %v1429, %v1429
    %v1494 = vmul.f32 %v1430, %v1430
    %v1495 = vmul.f32 %v1431, %v1431
    %v1496 = vmul.f32 %v1432, %v1432
    %v1497 = vmul.f32 %v1433, %v1433
    %v1498 = vmul.f32 %v1434, %v1434
    %v1499 = vmul.f32 %v1435, %v1435
    %v1500 = vmul.f32 %v1436, %v1436
    %v1501 = vmul.f32 %v1437, %v1437
    %v1502 = vmul.f32 %v1438, %v1438
    %v1503 = vmul.f32 %v1439, %v1439
    %v1504 = vmul.f32 %v1440, %v1440
    %v1505 = vmul.f32 %v1441, %v1441
    %1506 = vmatprep.subr.mxu0 0.0
    %1507 = vmatpush1.msra.mxu0 %v1442
    %1508 = vmatprep.subr.mxu0 0.0
    %1509 = vmatpush1.msra.mxu0 %v1443
    %1510 = vmatprep.subr.mxu0 0.0
    %1511 = vmatpush1.msra.mxu0 %v1444
    %1512 = vmatprep.subr.mxu0 0.0
    %1513 = vmatpush1.msra.mxu0 %v1445
    %1514 = vmatprep.subr.mxu0 0.0
    %1515 = vmatpush1.msra.mxu0 %v1446
    %1516 = vmatprep.subr.mxu0 0.0
    %1517 = vmatpush1.msra.mxu0 %v1447
    %1518 = vmatprep.subr.mxu0 0.0
    %1519 = vmatpush1.msra.mxu0 %v1448
    %1520 = vmatprep.subr.mxu0 0.0
    %1521 = vmatpush1.msra.mxu0 %v1449
    %1522 = vmatprep.subr.mxu0 0.0
    %1523 = vmatpush1.msra.mxu0 %v1450
    %1524 = vmatprep.subr.mxu0 0.0
    %1525 = vmatpush1.msra.mxu0 %v1451
    %1526 = vmatprep.subr.mxu0 0.0
    %1527 = vmatpush1.msra.mxu0 %v1452
    %1528 = vmatprep.subr.mxu0 0.0
    %1529 = vmatpush1.msra.mxu0 %v1453
    %1530 = vmatprep.subr.mxu0 0.0
    %1531 = vmatpush1.msra.mxu0 %v1454
    %1532 = vmatprep.subr.mxu0 0.0
    %1533 = vmatpush1.msra.mxu0 %v1455
    %1534 = vmatprep.subr.mxu0 0.0
    %1535 = vmatpush1.msra.mxu0 %v1456
    %1536 = vmatprep.subr.mxu0 0.0
    %1537 = vmatpush1.msra.mxu0 %v1457
    %1538 = vmatprep.subr.mxu0 0.0
    %1539 = vmatpush1.msra.mxu0 %v1458
    %1540 = vmatprep.subr.mxu0 0.0
    %1541 = vmatpush1.msra.mxu0 %v1459
    %1542 = vmatprep.subr.mxu0 0.0
    %1543 = vmatpush1.msra.mxu0 %v1460
    %1544 = vmatprep.subr.mxu0 0.0
    %1545 = vmatpush1.msra.mxu0 %v1461
    %1546 = vmatprep.subr.mxu0 0.0
    %1547 = vmatpush1.msra.mxu0 %v1462
    %1548 = vmatprep.subr.mxu0 0.0
    %1549 = vmatpush1.msra.mxu0 %v1463
    %1550 = vmatprep.subr.mxu0 0.0
    %1551 = vmatpush1.msra.mxu0 %v1464
    %1552 = vmatprep.subr.mxu0 0.0
    %1553 = vmatpush1.msra.mxu0 %v1465
    %1554 = vmatprep.subr.mxu0 0.0
    %1555 = vmatpush1.msra.mxu0 %v1466
    %1556 = vmatprep.subr.mxu0 0.0
    %1557 = vmatpush1.msra.mxu0 %v1467
    %1558 = vmatprep.subr.mxu0 0.0
    %1559 = vmatpush1.msra.mxu0 %v1468
    %1560 = vmatprep.subr.mxu0 0.0
    %1561 = vmatpush1.msra.mxu0 %v1469
    %1562 = vmatprep.subr.mxu0 0.0
    %1563 = vmatpush1.msra.mxu0 %v1470
    %1564 = vmatprep.subr.mxu0 0.0
    %1565 = vmatpush1.msra.mxu0 %v1471
    %1566 = vmatprep.subr.mxu0 0.0
    %1567 = vmatpush1.msra.mxu0 %v1472
    %1568 = vmatprep.subr.mxu0 0.0
    %1569 = vmatpush1.msra.mxu0 %v1473
    %1570 = vmatprep.mubr.f32.mxu0 1.0
    %1571 = vmatmul.mubr.f32.gmra.mrb[0].mxu0 1.0
    %v1572 = vpop.f32.mrb[0].mxu0
    %v1573 = vadd.f32 0.0, %v1572
    %v1574 = vpop.f32.mrb[0].mxu0
    %1575 = vdwg.mxu0
    %1576 = vmatprep.subr.mxu0 0.0
    %1577 = vmatpush1.msra.mxu0 %v1474
    %1578 = vmatprep.subr.mxu0 0.0
    %1579 = vmatpush1.msra.mxu0 %v1475
    %1580 = vmatprep.subr.mxu0 0.0
    %1581 = vmatpush1.msra.mxu0 %v1476
    %1582 = vmatprep.subr.mxu0 0.0
    %1583 = vmatpush1.msra.mxu0 %v1477
    %1584 = vmatprep.subr.mxu0 0.0
    %1585 = vmatpush1.msra.mxu0 %v1478
    %1586 = vmatprep.subr.mxu0 0.0
    %1587 = vmatpush1.msra.mxu0 %v1479
    %1588 = vmatprep.subr.mxu0 0.0
    %1589 = vmatpush1.msra.mxu0 %v1480
    %1590 = vmatprep.subr.mxu0 0.0
    %1591 = vmatpush1.msra.mxu0 %v1481
    %1592 = vmatprep.subr.mxu0 0.0
    %1593 = vmatpush1.msra.mxu0 %v1482
    %1594 = vmatprep.subr.mxu0 0.0
    %1595 = vmatpush1.msra.mxu0 %v1483
    %1596 = vmatprep.subr.mxu0 0.0
    %1597 = vmatpush1.msra.mxu0 %v1484
    %1598 = vmatprep.subr.mxu0 0.0
    %1599 = vmatpush1.msra.mxu0 %v1485
    %1600 = vmatprep.subr.mxu0 0.0
    %1601 = vmatpush1.msra.mxu0 %v1486
    %1602 = vmatprep.subr.mxu0 0.0
    %1603 = vmatpush1.msra.mxu0 %v1487
    %1604 = vmatprep.subr.mxu0 0.0
    %1605 = vmatpush1.msra.mxu0 %v1488
    %1606 = vmatprep.subr.mxu0 0.0
    %1607 = vmatpush1.msra.mxu0 %v1489
    %1608 = vmatprep.subr.mxu0 0.0
    %1609 = vmatpush1.msra.mxu0 %v1490
    %1610 = vmatprep.subr.mxu0 0.0
    %1611 = vmatpush1.msra.mxu0 %v1491
    %1612 = vmatprep.subr.mxu0 0.0
    %1613 = vmatpush1.msra.mxu0 %v1492
    %1614 = vmatprep.subr.mxu0 0.0
    %1615 = vmatpush1.msra.mxu0 %v1493
    %1616 = vmatprep.subr.mxu0 0.0
    %1617 = vmatpush1.msra.mxu0 %v1494
    %1618 = vmatprep.subr.mxu0 0.0
    %1619 = vmatpush1.msra.mxu0 %v1495
    %1620 = vmatprep.subr.mxu0 0.0
    %1621 = vmatpush1.msra.mxu0 %v1496
    %1622 = vmatprep.subr.mxu0 0.0
    %1623 = vmatpush1.msra.mxu0 %v1497
    %1624 = vmatprep.subr.mxu0 0.0
    %1625 = vmatpush1.msra.mxu0 %v1498
    %1626 = vmatprep.subr.mxu0 0.0
    %1627 = vmatpush1.msra.mxu0 %v1499
    %1628 = vmatprep.subr.mxu0 0.0
    %1629 = vmatpush1.msra.mxu0 %v1500
    %1630 = vmatprep.subr.mxu0 0.0
    %1631 = vmatpush1.msra.mxu0 %v1501
    %1632 = vmatprep.subr.mxu0 0.0
    %1633 = vmatpush1.msra.mxu0 %v1502
    %1634 = vmatprep.subr.mxu0 0.0
    %1635 = vmatpush1.msra.mxu0 %v1503
    %1636 = vmatprep.subr.mxu0 0.0
    %1637 = vmatpush1.msra.mxu0 %v1504
    %1638 = vmatprep.subr.mxu0 0.0
    %1639 = vmatpush1.msra.mxu0 %v1505
    %1640 = vmatprep.mubr.f32.mxu0 1.0
    %1641 = vmatmul.mubr.f32.gmra.mrb[0].mxu0 1.0
    %v1642 = vpop.f32.mrb[0].mxu0
    %v1643 = vadd.f32 %v1573, %v1642
    %v1644 = vpop.f32.mrb[0].mxu0
    %1645 = vdwg.mxu0
    %v1646 = vmul.f32 %v1643, 0.001953125
    %v1647 = vld [vmem:[#allocation5 + $0x3] sm:$0x1]
    %v1648 = vadd.f32 %v1646, 1e-05
    %v1649 = vrsqrt.pop %v1648
    %v1650 = vmul.f32 %v1647, %v1649
    %v1652 = vlaneseq
    %v1653 = vshrl.u32 %v1652, 7
    %v1654 = vsub.s32 0, %v1653
    %v1655 = vrot.slane %v1650, %v1654
    %v1657 = vmul.f32 %v1378, %v1655
    %v1658 = vmul.f32 %v1379, %v1655
    %v1659 = vmul.f32 %v1380, %v1655
    %v1660 = vmul.f32 %v1381, %v1655
    %v1661 = vmul.f32 %v1382, %v1655
    %v1662 = vmul.f32 %v1383, %v1655
    %v1663 = vmul.f32 %v1384, %v1655
    %v1664 = vmul.f32 %v1385, %v1655
    %v1665 = vmul.f32 %v1386, %v1655
    %v1666 = vmul.f32 %v1387, %v1655
    %v1667 = vmul.f32 %v1388, %v1655
    %v1668 = vmul.f32 %v1389, %v1655
    %v1669 = vmul.f32 %v1390, %v1655
    %v1670 = vmul.f32 %v1391, %v1655
    %v1671 = vmul.f32 %v1392, %v1655
    %v1672 = vmul.f32 %v1393, %v1655
    %v1673 = vmul.f32 %v1394, %v1655
    %v1674 = vmul.f32 %v1395, %v1655
    %v1675 = vmul.f32 %v1396, %v1655
    %v1676 = vmul.f32 %v1397, %v1655
    %v1677 = vmul.f32 %v1398, %v1655
    %v1678 = vmul.f32 %v1399, %v1655
    %v1679 = vmul.f32 %v1400, %v1655
    %v1680 = vmul.f32 %v1401, %v1655
    %v1681 = vmul.f32 %v1402, %v1655
    %v1682 = vmul.f32 %v1403, %v1655
    %v1683 = vmul.f32 %v1404, %v1655
    %v1684 = vmul.f32 %v1405, %v1655
    %v1685 = vmul.f32 %v1406, %v1655
    %v1686 = vmul.f32 %v1407, %v1655
    %v1687 = vmul.f32 %v1408, %v1655
    %v1688 = vmul.f32 %v1409, %v1655
    %v1689 = vmul.f32 %v1410, %v1655
    %v1690 = vmul.f32 %v1411, %v1655
    %v1691 = vmul.f32 %v1412, %v1655
    %v1692 = vmul.f32 %v1413, %v1655
    %v1693 = vmul.f32 %v1414, %v1655
    %v1694 = vmul.f32 %v1415, %v1655
    %v1695 = vmul.f32 %v1416, %v1655
    %v1696 = vmul.f32 %v1417, %v1655
    %v1697 = vmul.f32 %v1418, %v1655
    %v1698 = vmul.f32 %v1419, %v1655
    %v1699 = vmul.f32 %v1420, %v1655
    %v1700 = vmul.f32 %v1421, %v1655
    %v1701 = vmul.f32 %v1422, %v1655
    %v1702 = vmul.f32 %v1423, %v1655
    %v1703 = vmul.f32 %v1424, %v1655
    %v1704 = vmul.f32 %v1425, %v1655
    %v1705 = vmul.f32 %v1426, %v1655
    %v1706 = vmul.f32 %v1427, %v1655
    %v1707 = vmul.f32 %v1428, %v1655
    %v1708 = vmul.f32 %v1429, %v1655
    %v1709 = vmul.f32 %v1430, %v1655
    %v1710 = vmul.f32 %v1431, %v1655
    %v1711 = vmul.f32 %v1432, %v1655
    %v1712 = vmul.f32 %v1433, %v1655
    %v1713 = vmul.f32 %v1434, %v1655
    %v1714 = vmul.f32 %v1435, %v1655
    %v1715 = vmul.f32 %v1436, %v1655
    %v1716 = vmul.f32 %v1437, %v1655
    %v1717 = vmul.f32 %v1438, %v1655
    %v1718 = vmul.f32 %v1439, %v1655
    %v1719 = vmul.f32 %v1440, %v1655
    %v1720 = vmul.f32 %v1441, %v1655
    %v1721 = vld [vmem:[#allocation5 + $0x4] sm:$0x1]
    %v1723 = vlaneseq
    %v1724 = vshrl.u32 %v1723, 7
    %v1725 = vsub.s32 0, %v1724
    %v1726 = vrot.slane %v1721, %v1725
    %v1728 = vadd.f32 %v1657, %v1726
    %v1729 = vadd.f32 %v1658, %v1726
    %v1730 = vadd.f32 %v1659, %v1726
    %v1731 = vadd.f32 %v1660, %v1726
    %v1732 = vadd.f32 %v1661, %v1726
    %v1733 = vadd.f32 %v1662, %v1726
    %v1734 = vadd.f32 %v1663, %v1726
    %v1735 = vadd.f32 %v1664, %v1726
    %v1736 = vadd.f32 %v1665, %v1726
    %v1737 = vadd.f32 %v1666, %v1726
    %v1738 = vadd.f32 %v1667, %v1726
    %v1739 = vadd.f32 %v1668, %v1726
    %v1740 = vadd.f32 %v1669, %v1726
    %v1741 = vadd.f32 %v1670, %v1726
    %v1742 = vadd.f32 %v1671, %v1726
    %v1743 = vadd.f32 %v1672, %v1726
    %v1744 = vadd.f32 %v1673, %v1726
    %v1745 = vadd.f32 %v1674, %v1726
    %v1746 = vadd.f32 %v1675, %v1726
    %v1747 = vadd.f32 %v1676, %v1726
    %v1748 = vadd.f32 %v1677, %v1726
    %v1749 = vadd.f32 %v1678, %v1726
    %v1750 = vadd.f32 %v1679, %v1726
    %v1751 = vadd.f32 %v1680, %v1726
    %v1752 = vadd.f32 %v1681, %v1726
    %v1753 = vadd.f32 %v1682, %v1726
    %v1754 = vadd.f32 %v1683, %v1726
    %v1755 = vadd.f32 %v1684, %v1726
    %v1756 = vadd.f32 %v1685, %v1726
    %v1757 = vadd.f32 %v1686, %v1726
    %v1758 = vadd.f32 %v1687, %v1726
    %v1759 = vadd.f32 %v1688, %v1726
    %v1760 = vadd.f32 %v1689, %v1726
    %v1761 = vadd.f32 %v1690, %v1726
    %v1762 = vadd.f32 %v1691, %v1726
    %v1763 = vadd.f32 %v1692, %v1726
    %v1764 = vadd.f32 %v1693, %v1726
    %v1765 = vadd.f32 %v1694, %v1726
    %v1766 = vadd.f32 %v1695, %v1726
    %v1767 = vadd.f32 %v1696, %v1726
    %v1768 = vadd.f32 %v1697, %v1726
    %v1769 = vadd.f32 %v1698, %v1726
    %v1770 = vadd.f32 %v1699, %v1726
    %v1771 = vadd.f32 %v1700, %v1726
    %v1772 = vadd.f32 %v1701, %v1726
    %v1773 = vadd.f32 %v1702, %v1726
    %v1774 = vadd.f32 %v1703, %v1726
    %v1775 = vadd.f32 %v1704, %v1726
    %v1776 = vadd.f32 %v1705, %v1726
    %v1777 = vadd.f32 %v1706, %v1726
    %v1778 = vadd.f32 %v1707, %v1726
    %v1779 = vadd.f32 %v1708, %v1726
    %v1780 = vadd.f32 %v1709, %v1726
    %v1781 = vadd.f32 %v1710, %v1726
    %v1782 = vadd.f32 %v1711, %v1726
    %v1783 = vadd.f32 %v1712, %v1726
    %v1784 = vadd.f32 %v1713, %v1726
    %v1785 = vadd.f32 %v1714, %v1726
    %v1786 = vadd.f32 %v1715, %v1726
    %v1787 = vadd.f32 %v1716, %v1726
    %v1788 = vadd.f32 %v1717, %v1726
    %v1789 = vadd.f32 %v1718, %v1726
    %v1790 = vadd.f32 %v1719, %v1726
    %v1791 = vadd.f32 %v1720, %v1726
    %v1792 = vmax.f32 %v1728, 0.0
    %v1793 = vmax.f32 %v1729, 0.0
    %v1794 = vmax.f32 %v1730, 0.0
    %v1795 = vmax.f32 %v1731, 0.0
    %v1796 = vmax.f32 %v1732, 0.0
    %v1797 = vmax.f32 %v1733, 0.0
    %v1798 = vmax.f32 %v1734, 0.0
    %v1799 = vmax.f32 %v1735, 0.0
    %v1800 = vmax.f32 %v1736, 0.0
    %v1801 = vmax.f32 %v1737, 0.0
    %v1802 = vmax.f32 %v1738, 0.0
    %v1803 = vmax.f32 %v1739, 0.0
    %v1804 = vmax.f32 %v1740, 0.0
    %v1805 = vmax.f32 %v1741, 0.0
    %v1806 = vmax.f32 %v1742, 0.0
    %v1807 = vmax.f32 %v1743, 0.0
    %v1808 = vmax.f32 %v1744, 0.0
    %v1809 = vmax.f32 %v1745, 0.0
    %v1810 = vmax.f32 %v1746, 0.0
    %v1811 = vmax.f32 %v1747, 0.0
    %v1812 = vmax.f32 %v1748, 0.0
    %v1813 = vmax.f32 %v1749, 0.0
    %v1814 = vmax.f32 %v1750, 0.0
    %v1815 = vmax.f32 %v1751, 0.0
    %v1816 = vmax.f32 %v1752, 0.0
    %v1817 = vmax.f32 %v1753, 0.0
    %v1818 = vmax.f32 %v1754, 0.0
    %v1819 = vmax.f32 %v1755, 0.0
    %v1820 = vmax.f32 %v1756, 0.0
    %v1821 = vmax.f32 %v1757, 0.0
    %v1822 = vmax.f32 %v1758, 0.0
    %v1823 = vmax.f32 %v1759, 0.0
    %v1824 = vmax.f32 %v1760, 0.0
    %v1825 = vmax.f32 %v1761, 0.0
    %v1826 = vmax.f32 %v1762, 0.0
    %v1827 = vmax.f32 %v1763, 0.0
    %v1828 = vmax.f32 %v1764, 0.0
    %v1829 = vmax.f32 %v1765, 0.0
    %v1830 = vmax.f32 %v1766, 0.0
    %v1831 = vmax.f32 %v1767, 0.0
    %v1832 = vmax.f32 %v1768, 0.0
    %v1833 = vmax.f32 %v1769, 0.0
    %v1834 = vmax.f32 %v1770, 0.0
    %v1835 = vmax.f32 %v1771, 0.0
    %v1836 = vmax.f32 %v1772, 0.0
    %v1837 = vmax.f32 %v1773, 0.0
    %v1838 = vmax.f32 %v1774, 0.0
    %v1839 = vmax.f32 %v1775, 0.0
    %v1840 = vmax.f32 %v1776, 0.0
    %v1841 = vmax.f32 %v1777, 0.0
    %v1842 = vmax.f32 %v1778, 0.0
    %v1843 = vmax.f32 %v1779, 0.0
    %v1844 = vmax.f32 %v1780, 0.0
    %v1845 = vmax.f32 %v1781, 0.0
    %v1846 = vmax.f32 %v1782, 0.0
    %v1847 = vmax.f32 %v1783, 0.0
    %v1848 = vmax.f32 %v1784, 0.0
    %v1849 = vmax.f32 %v1785, 0.0
    %v1850 = vmax.f32 %v1786, 0.0
    %v1851 = vmax.f32 %v1787, 0.0
    %v1852 = vmax.f32 %v1788, 0.0
    %v1853 = vmax.f32 %v1789, 0.0
    %v1854 = vmax.f32 %v1790, 0.0
    %v1855 = vmax.f32 %v1791, 0.0
    %v1856 = vpack.c.bf16 %v1793, %v1792
    %v1857 = vpack.c.bf16 %v1795, %v1794
    %v1858 = vpack.c.bf16 %v1797, %v1796
    %v1859 = vpack.c.bf16 %v1799, %v1798
    %v1860 = vpack.c.bf16 %v1801, %v1800
    %v1861 = vpack.c.bf16 %v1803, %v1802
    %v1862 = vpack.c.bf16 %v1805, %v1804
    %v1863 = vpack.c.bf16 %v1807, %v1806
    %v1864 = vpack.c.bf16 %v1809, %v1808
    %v1865 = vpack.c.bf16 %v1811, %v1810
    %v1866 = vpack.c.bf16 %v1813, %v1812
    %v1867 = vpack.c.bf16 %v1815, %v1814
    %v1868 = vpack.c.bf16 %v1817, %v1816
    %v1869 = vpack.c.bf16 %v1819, %v1818
    %v1870 = vpack.c.bf16 %v1821, %v1820
    %v1871 = vpack.c.bf16 %v1823, %v1822
    %v1872 = vpack.c.bf16 %v1825, %v1824
    %v1873 = vpack.c.bf16 %v1827, %v1826
    %v1874 = vpack.c.bf16 %v1829, %v1828
    %v1875 = vpack.c.bf16 %v1831, %v1830
    %v1876 = vpack.c.bf16 %v1833, %v1832
    %v1877 = vpack.c.bf16 %v1835, %v1834
    %v1878 = vpack.c.bf16 %v1837, %v1836
    %v1879 = vpack.c.bf16 %v1839, %v1838
    %v1880 = vpack.c.bf16 %v1841, %v1840
    %v1881 = vpack.c.bf16 %v1843, %v1842
    %v1882 = vpack.c.bf16 %v1845, %v1844
    %v1883 = vpack.c.bf16 %v1847, %v1846
    %v1884 = vpack.c.bf16 %v1849, %v1848
    %v1885 = vpack.c.bf16 %v1851, %v1850
    %v1886 = vpack.c.bf16 %v1853, %v1852
    %v1887 = vpack.c.bf16 %v1855, %v1854
    %v1888 = vld [vmem:[#allocation8] sm:$0xf]
    %v1889 = vld [vmem:[#allocation8 + $0x4] sm:$0xf]
    %v1890 = vld [vmem:[#allocation8 + $0x8] sm:$0xf]
    %v1891 = vld [vmem:[#allocation8 + $0xc] sm:$0xf]
    %v1892 = vld [vmem:[#allocation8 + $0x10] sm:$0xf]
    %v1893 = vld [vmem:[#allocation8 + $0x14] sm:$0xf]
    %v1894 = vld [vmem:[#allocation8 + $0x18] sm:$0xf]
    %v1895 = vld [vmem:[#allocation8 + $0x1c] sm:$0xf]
    %v1896 = vld [vmem:[#allocation8 + $0x20] sm:$0xf]
    %v1897 = vld [vmem:[#allocation8 + $0x24] sm:$0xf]
    %v1898 = vld [vmem:[#allocation8 + $0x28] sm:$0xf]
    %v1899 = vld [vmem:[#allocation8 + $0x2c] sm:$0xf]
    %v1900 = vld [vmem:[#allocation8 + $0x30] sm:$0xf]
    %v1901 = vld [vmem:[#allocation8 + $0x34] sm:$0xf]
    %v1902 = vld [vmem:[#allocation8 + $0x38] sm:$0xf]
    %v1903 = vld [vmem:[#allocation8 + $0x3c] sm:$0xf]
    %v1904 = vld [vmem:[#allocation5 + $0x5] sm:$0x1]
    %v1906 = vlaneseq
    %v1907 = vshrl.u32 %v1906, 7
    %v1908 = vsub.s32 0, %v1907
    %v1909 = vrot.slane %v1904, %v1908
    %v1927 = vunpack.c.l.b16 %v1888
    %v1928 = vunpack.c.l.b16 %v1889
    %v1929 = vunpack.c.l.b16 %v1890
    %v1930 = vunpack.c.l.b16 %v1891
    %v1931 = vunpack.c.l.b16 %v1892
    %v1932 = vunpack.c.l.b16 %v1893
    %v1933 = vunpack.c.l.b16 %v1894
    %v1934 = vunpack.c.l.b16 %v1895
    %v1935 = vunpack.c.l.b16 %v1896
    %v1936 = vunpack.c.l.b16 %v1897
    %v1937 = vunpack.c.l.b16 %v1898
    %v1938 = vunpack.c.l.b16 %v1899
    %v1939 = vunpack.c.l.b16 %v1900
    %v1940 = vunpack.c.l.b16 %v1901
    %v1941 = vunpack.c.l.b16 %v1902
    %v1942 = vunpack.c.l.b16 %v1903
    %v1943 = vpack.c.b16 %v1928, %v1927
    %v1944 = vpack.c.b16 %v1930, %v1929
    %v1945 = vpack.c.b16 %v1932, %v1931
    %v1946 = vpack.c.b16 %v1934, %v1933
    %v1947 = vpack.c.b16 %v1936, %v1935
    %v1948 = vpack.c.b16 %v1938, %v1937
    %v1949 = vpack.c.b16 %v1940, %v1939
    %v1950 = vpack.c.b16 %v1942, %v1941
    %1959 = vmatprep.subr.bf16.mxu0 0
    %1960 = vmatpush1.bf16.msra.mxu0 %v1943
    %1961 = vmatprep.subr.bf16.mxu0 0
    %1962 = vmatpush1.bf16.msra.mxu0 %v1944
    %1963 = vmatprep.subr.bf16.mxu0 0
    %1964 = vmatpush1.bf16.msra.mxu0 %v1945
    %1965 = vmatprep.subr.bf16.mxu0 0
    %1966 = vmatpush1.bf16.msra.mxu0 %v1946
    %1967 = vmatprep.subr.bf16.mxu0 0
    %1968 = vmatpush1.bf16.msra.mxu0 %v1947
    %1969 = vmatprep.subr.bf16.mxu0 0
    %1970 = vmatpush1.bf16.msra.mxu0 %v1948
    %1971 = vmatprep.subr.bf16.mxu0 0
    %1972 = vmatpush1.bf16.msra.mxu0 %v1949
    %1973 = vmatprep.subr.bf16.mxu0 0
    %1974 = vmatpush1.bf16.msra.mxu0 %v1950
    %1975 = vmatprep.subr.bf16.mxu0 0
    %1976 = vmatpush1.bf16.msra.mxu0 0
    %1977 = vmatprep.subr.bf16.mxu0 0
    %1978 = vmatpush1.bf16.msra.mxu0 0
    %1979 = vmatprep.subr.bf16.mxu0 0
    %1980 = vmatpush1.bf16.msra.mxu0 0
    %1981 = vmatprep.subr.bf16.mxu0 0
    %1982 = vmatpush1.bf16.msra.mxu0 0
    %1983 = vmatprep.subr.bf16.mxu0 0
    %1984 = vmatpush1.bf16.msra.mxu0 0
    %1985 = vmatprep.subr.bf16.mxu0 0
    %1986 = vmatpush1.bf16.msra.mxu0 0
    %1987 = vmatprep.subr.bf16.mxu0 0
    %1988 = vmatpush1.bf16.msra.mxu0 0
    %1989 = vmatprep.subr.bf16.mxu0 0
    %1990 = vmatpush1.bf16.msra.mxu0 0
    %1991 = vmatprep.mubr.bf16.mxu0 0
    %1992 = vmatmul.mubr.bf16.gmra.mrb[0].mxu0 %v1856
    %v1993 = vpop.f32.mrb[0].mxu0
    %v1994 = vadd.f32 %v1909, %v1993
    %v1995 = vpop.f32.mrb[0].mxu0
    %v1996 = vpop.f32.mrb[0].mxu0
    %v1997 = vadd.f32 %v1909, %v1996
    %v1998 = vpop.f32.mrb[0].mxu0
    %1999 = vmatprep.mubr.bf16.mxu0 0
    %2000 = vmatmul.mubr.bf16.gmra.mrb[0].mxu0 %v1857
    %v2001 = vpop.f32.mrb[0].mxu0
    %v2002 = vadd.f32 %v1909, %v2001
    %v2003 = vpop.f32.mrb[0].mxu0
    %v2004 = vpop.f32.mrb[0].mxu0
    %v2005 = vadd.f32 %v1909, %v2004
    %v2006 = vpop.f32.mrb[0].mxu0
    %2007 = vmatprep.mubr.bf16.mxu0 0
    %2008 = vmatmul.mubr.bf16.gmra.mrb[0].mxu0 %v1858
    %v2009 = vpop.f32.mrb[0].mxu0
    %v2010 = vadd.f32 %v1909, %v2009
    %v2011 = vpop.f32.mrb[0].mxu0
    %v2012 = vpop.f32.mrb[0].mxu0
    %v2013 = vadd.f32 %v1909, %v2012
    %v2014 = vpop.f32.mrb[0].mxu0
    %2015 = vmatprep.mubr.bf16.mxu0 0
    %2016 = vmatmul.mubr.bf16.gmra.mrb[0].mxu0 %v1859
    %v2017 = vpop.f32.mrb[0].mxu0
    %v2018 = vadd.f32 %v1909, %v2017
    %v2019 = vpop.f32.mrb[0].mxu0
    %v2020 = vpop.f32.mrb[0].mxu0
    %v2021 = vadd.f32 %v1909, %v2020
    %v2022 = vpop.f32.mrb[0].mxu0
    %2023 = vmatprep.mubr.bf16.mxu0 0
    %2024 = vmatmul.mubr.bf16.gmra.mrb[0].mxu0 %v1860
    %v2025 = vpop.f32.mrb[0].mxu0
    %v2026 = vadd.f32 %v1909, %v2025
    %v2027 = vpop.f32.mrb[0].mxu0
    %v2028 = vpop.f32.mrb[0].mxu0
    %v2029 = vadd.f32 %v1909, %v2028
    %v2030 = vpop.f32.mrb[0].mxu0
    %2031 = vmatprep.mubr.bf16.mxu0 0
    %2032 = vmatmul.mubr.bf16.gmra.mrb[0].mxu0 %v1861
    %v2033 = vpop.f32.mrb[0].mxu0
    %v2034 = vadd.f32 %v1909, %v2033
    %v2035 = vpop.f32.mrb[0].mxu0
    %v2036 = vpop.f32.mrb[0].mxu0
    %v2037 = vadd.f32 %v1909, %v2036
    %v2038 = vpop.f32.mrb[0].mxu0
    %2039 = vmatprep.mubr.bf16.mxu0 0
    %2040 = vmatmul.mubr.bf16.gmra.mrb[0].mxu0 %v1862
    %v2041 = vpop.f32.mrb[0].mxu0
    %v2042 = vadd.f32 %v1909, %v2041
    %v2043 = vpop.f32.mrb[0].mxu0
    %v2044 = vpop.f32.mrb[0].mxu0
    %v2045 = vadd.f32 %v1909, %v2044
    %v2046 = vpop.f32.mrb[0].mxu0
    %2047 = vmatprep.mubr.bf16.mxu0 0
    %2048 = vmatmul.mubr.bf16.gmra.mrb[0].mxu0 %v1863
    %v2049 = vpop.f32.mrb[0].mxu0
    %v2050 = vadd.f32 %v1909, %v2049
    %v2051 = vpop.f32.mrb[0].mxu0
    %v2052 = vpop.f32.mrb[0].mxu0
    %v2053 = vadd.f32 %v1909, %v2052
    %v2054 = vpop.f32.mrb[0].mxu0
    %2055 = vmatprep.mubr.bf16.mxu0 0
    %2056 = vmatmul.mubr.bf16.gmra.mrb[0].mxu0 %v1864
    %v2057 = vpop.f32.mrb[0].mxu0
    %v2058 = vadd.f32 %v1909, %v2057
    %v2059 = vpop.f32.mrb[0].mxu0
    %v2060 = vpop.f32.mrb[0].mxu0
    %v2061 = vadd.f32 %v1909, %v2060
    %v2062 = vpop.f32.mrb[0].mxu0
    %2063 = vmatprep.mubr.bf16.mxu0 0
    %2064 = vmatmul.mubr.bf16.gmra.mrb[0].mxu0 %v1865
    %v2065 = vpop.f32.mrb[0].mxu0
    %v2066 = vadd.f32 %v1909, %v2065
    %v2067 = vpop.f32.mrb[0].mxu0
    %v2068 = vpop.f32.mrb[0].mxu0
    %v2069 = vadd.f32 %v1909, %v2068
    %v2070 = vpop.f32.mrb[0].mxu0
    %2071 = vmatprep.mubr.bf16.mxu0 0
    %2072 = vmatmul.mubr.bf16.gmra.mrb[0].mxu0 %v1866
    %v2073 = vpop.f32.mrb[0].mxu0
    %v2074 = vadd.f32 %v1909, %v2073
    %v2075 = vpop.f32.mrb[0].mxu0
    %v2076 = vpop.f32.mrb[0].mxu0
    %v2077 = vadd.f32 %v1909, %v2076
    %v2078 = vpop.f32.mrb[0].mxu0
    %2079 = vmatprep.mubr.bf16.mxu0 0
    %2080 = vmatmul.mubr.bf16.gmra.mrb[0].mxu0 %v1867
    %v2081 = vpop.f32.mrb[0].mxu0
    %v2082 = vadd.f32 %v1909, %v2081
    %v2083 = vpop.f32.mrb[0].mxu0
    %v2084 = vpop.f32.mrb[0].mxu0
    %v2085 = vadd.f32 %v1909, %v2084
    %v2086 = vpop.f32.mrb[0].mxu0
    %2087 = vmatprep.mubr.bf16.mxu0 0
    %2088 = vmatmul.mubr.bf16.gmra.mrb[0].mxu0 %v1868
    %v2089 = vpop.f32.mrb[0].mxu0
    %v2090 = vadd.f32 %v1909, %v2089
    %v2091 = vpop.f32.mrb[0].mxu0
    %v2092 = vpop.f32.mrb[0].mxu0
    %v2093 = vadd.f32 %v1909, %v2092
    %v2094 = vpop.f32.mrb[0].mxu0
    %2095 = vmatprep.mubr.bf16.mxu0 0
    %2096 = vmatmul.mubr.bf16.gmra.mrb[0].mxu0 %v1869
    %v2097 = vpop.f32.mrb[0].mxu0
    %v2098 = vadd.f32 %v1909, %v2097
    %v2099 = vpop.f32.mrb[0].mxu0
    %v2100 = vpop.f32.mrb[0].mxu0
    %v2101 = vadd.f32 %v1909, %v2100
    %v2102 = vpop.f32.mrb[0].mxu0
    %2103 = vmatprep.mubr.bf16.mxu0 0
    %2104 = vmatmul.mubr.bf16.gmra.mrb[0].mxu0 %v1870
    %v2105 = vpop.f32.mrb[0].mxu0
    %v2106 = vadd.f32 %v1909, %v2105
    %v2107 = vpop.f32.mrb[0].mxu0
    %v2108 = vpop.f32.mrb[0].mxu0
    %v2109 = vadd.f32 %v1909, %v2108
    %v2110 = vpop.f32.mrb[0].mxu0
    %2111 = vmatprep.mubr.bf16.mxu0 0
    %2112 = vmatmul.mubr.bf16.gmra.mrb[0].mxu0 %v1871
    %v2113 = vpop.f32.mrb[0].mxu0
    %v2114 = vadd.f32 %v1909, %v2113
    %v2115 = vpop.f32.mrb[0].mxu0
    %v2116 = vpop.f32.mrb[0].mxu0
    %v2117 = vadd.f32 %v1909, %v2116
    %v2118 = vpop.f32.mrb[0].mxu0
    %2119 = vmatprep.mubr.bf16.mxu0 0
    %2120 = vmatmul.mubr.bf16.gmra.mrb[0].mxu0 %v1872
    %v2121 = vpop.f32.mrb[0].mxu0
    %v2122 = vadd.f32 %v1909, %v2121
    %v2123 = vpop.f32.mrb[0].mxu0
    %v2124 = vpop.f32.mrb[0].mxu0
    %v2125 = vadd.f32 %v1909, %v2124
    %v2126 = vpop.f32.mrb[0].mxu0
    %2127 = vmatprep.mubr.bf16.mxu0 0
    %2128 = vmatmul.mubr.bf16.gmra.mrb[0].mxu0 %v1873
    %v2129 = vpop.f32.mrb[0].mxu0
    %v2130 = vadd.f32 %v1909, %v2129
    %v2131 = vpop.f32.mrb[0].mxu0
    %v2132 = vpop.f32.mrb[0].mxu0
    %v2133 = vadd.f32 %v1909, %v2132
    %v2134 = vpop.f32.mrb[0].mxu0
    %2135 = vmatprep.mubr.bf16.mxu0 0
    %2136 = vmatmul.mubr.bf16.gmra.mrb[0].mxu0 %v1874
    %v2137 = vpop.f32.mrb[0].mxu0
    %v2138 = vadd.f32 %v1909, %v2137
    %v2139 = vpop.f32.mrb[0].mxu0
    %v2140 = vpop.f32.mrb[0].mxu0
    %v2141 = vadd.f32 %v1909, %v2140
    %v2142 = vpop.f32.mrb[0].mxu0
    %2143 = vmatprep.mubr.bf16.mxu0 0
    %2144 = vmatmul.mubr.bf16.gmra.mrb[0].mxu0 %v1875
    %v2145 = vpop.f32.mrb[0].mxu0
    %v2146 = vadd.f32 %v1909, %v2145
    %v2147 = vpop.f32.mrb[0].mxu0
    %v2148 = vpop.f32.mrb[0].mxu0
    %v2149 = vadd.f32 %v1909, %v2148
    %v2150 = vpop.f32.mrb[0].mxu0
    %2151 = vmatprep.mubr.bf16.mxu0 0
    %2152 = vmatmul.mubr.bf16.gmra.mrb[0].mxu0 %v1876
    %v2153 = vpop.f32.mrb[0].mxu0
    %v2154 = vadd.f32 %v1909, %v2153
    %v2155 = vpop.f32.mrb[0].mxu0
    %v2156 = vpop.f32.mrb[0].mxu0
    %v2157 = vadd.f32 %v1909, %v2156
    %v2158 = vpop.f32.mrb[0].mxu0
    %2159 = vmatprep.mubr.bf16.mxu0 0
    %2160 = vmatmul.mubr.bf16.gmra.mrb[0].mxu0 %v1877
    %v2161 = vpop.f32.mrb[0].mxu0
    %v2162 = vadd.f32 %v1909, %v2161
    %v2163 = vpop.f32.mrb[0].mxu0
    %v2164 = vpop.f32.mrb[0].mxu0
    %v2165 = vadd.f32 %v1909, %v2164
    %v2166 = vpop.f32.mrb[0].mxu0
    %2167 = vmatprep.mubr.bf16.mxu0 0
    %2168 = vmatmul.mubr.bf16.gmra.mrb[0].mxu0 %v1878
    %v2169 = vpop.f32.mrb[0].mxu0
    %v2170 = vadd.f32 %v1909, %v2169
    %v2171 = vpop.f32.mrb[0].mxu0
    %v2172 = vpop.f32.mrb[0].mxu0
    %v2173 = vadd.f32 %v1909, %v2172
    %v2174 = vpop.f32.mrb[0].mxu0
    %2175 = vmatprep.mubr.bf16.mxu0 0
    %2176 = vmatmul.mubr.bf16.gmra.mrb[0].mxu0 %v1879
    %v2177 = vpop.f32.mrb[0].mxu0
    %v2178 = vadd.f32 %v1909, %v2177
    %v2179 = vpop.f32.mrb[0].mxu0
    %v2180 = vpop.f32.mrb[0].mxu0
    %v2181 = vadd.f32 %v1909, %v2180
    %v2182 = vpop.f32.mrb[0].mxu0
    %2183 = vmatprep.mubr.bf16.mxu0 0
    %2184 = vmatmul.mubr.bf16.gmra.mrb[0].mxu0 %v1880
    %v2185 = vpop.f32.mrb[0].mxu0
    %v2186 = vadd.f32 %v1909, %v2185
    %v2187 = vpop.f32.mrb[0].mxu0
    %v2188 = vpop.f32.mrb[0].mxu0
    %v2189 = vadd.f32 %v1909, %v2188
    %v2190 = vpop.f32.mrb[0].mxu0
    %2191 = vmatprep.mubr.bf16.mxu0 0
    %2192 = vmatmul.mubr.bf16.gmra.mrb[0].mxu0 %v1881
    %v2193 = vpop.f32.mrb[0].mxu0
    %v2194 = vadd.f32 %v1909, %v2193
    %v2195 = vpop.f32.mrb[0].mxu0
    %v2196 = vpop.f32.mrb[0].mxu0
    %v2197 = vadd.f32 %v1909, %v2196
    %v2198 = vpop.f32.mrb[0].mxu0
    %2199 = vmatprep.mubr.bf16.mxu0 0
    %2200 = vmatmul.mubr.bf16.gmra.mrb[0].mxu0 %v1882
    %v2201 = vpop.f32.mrb[0].mxu0
    %v2202 = vadd.f32 %v1909, %v2201
    %v2203 = vpop.f32.mrb[0].mxu0
    %v2204 = vpop.f32.mrb[0].mxu0
    %v2205 = vadd.f32 %v1909, %v2204
    %v2206 = vpop.f32.mrb[0].mxu0
    %2207 = vmatprep.mubr.bf16.mxu0 0
    %2208 = vmatmul.mubr.bf16.gmra.mrb[0].mxu0 %v1883
    %v2209 = vpop.f32.mrb[0].mxu0
    %v2210 = vadd.f32 %v1909, %v2209
    %v2211 = vpop.f32.mrb[0].mxu0
    %v2212 = vpop.f32.mrb[0].mxu0
    %v2213 = vadd.f32 %v1909, %v2212
    %v2214 = vpop.f32.mrb[0].mxu0
    %2215 = vmatprep.mubr.bf16.mxu0 0
    %2216 = vmatmul.mubr.bf16.gmra.mrb[0].mxu0 %v1884
    %v2217 = vpop.f32.mrb[0].mxu0
    %v2218 = vadd.f32 %v1909, %v2217
    %v2219 = vpop.f32.mrb[0].mxu0
    %v2220 = vpop.f32.mrb[0].mxu0
    %v2221 = vadd.f32 %v1909, %v2220
    %v2222 = vpop.f32.mrb[0].mxu0
    %2223 = vmatprep.mubr.bf16.mxu0 0
    %2224 = vmatmul.mubr.bf16.gmra.mrb[0].mxu0 %v1885
    %v2225 = vpop.f32.mrb[0].mxu0
    %v2226 = vadd.f32 %v1909, %v2225
    %v2227 = vpop.f32.mrb[0].mxu0
    %v2228 = vpop.f32.mrb[0].mxu0
    %v2229 = vadd.f32 %v1909, %v2228
    %v2230 = vpop.f32.mrb[0].mxu0
    %2231 = vmatprep.mubr.bf16.mxu0 0
    %2232 = vmatmul.mubr.bf16.gmra.mrb[0].mxu0 %v1886
    %v2233 = vpop.f32.mrb[0].mxu0
    %v2234 = vadd.f32 %v1909, %v2233
    %v2235 = vpop.f32.mrb[0].mxu0
    %v2236 = vpop.f32.mrb[0].mxu0
    %v2237 = vadd.f32 %v1909, %v2236
    %v2238 = vpop.f32.mrb[0].mxu0
    %2239 = vmatprep.mubr.bf16.mxu0 0
    %2240 = vmatmul.mubr.bf16.gmra.mrb[0].mxu0 %v1887
    %v2241 = vpop.f32.mrb[0].mxu0
    %v2242 = vadd.f32 %v1909, %v2241
    %v2243 = vpop.f32.mrb[0].mxu0
    %v2244 = vpop.f32.mrb[0].mxu0
    %v2245 = vadd.f32 %v1909, %v2244
    %v2246 = vpop.f32.mrb[0].mxu0
    %2247 = vdwg.mxu0
    %v2248 = vmax.f32 %v1994, 0.0
    %v2249 = vmax.f32 %v1997, 0.0
    %v2250 = vmax.f32 %v2002, 0.0
    %v2251 = vmax.f32 %v2005, 0.0
    %v2252 = vmax.f32 %v2010, 0.0
    %v2253 = vmax.f32 %v2013, 0.0
    %v2254 = vmax.f32 %v2018, 0.0
    %v2255 = vmax.f32 %v2021, 0.0
    %v2256 = vmax.f32 %v2026, 0.0
    %v2257 = vmax.f32 %v2029, 0.0
    %v2258 = vmax.f32 %v2034, 0.0
    %v2259 = vmax.f32 %v2037, 0.0
    %v2260 = vmax.f32 %v2042, 0.0
    %v2261 = vmax.f32 %v2045, 0.0
    %v2262 = vmax.f32 %v2050, 0.0
    %v2263 = vmax.f32 %v2053, 0.0
    %v2264 = vmax.f32 %v2058, 0.0
    %v2265 = vmax.f32 %v2061, 0.0
    %v2266 = vmax.f32 %v2066, 0.0
    %v2267 = vmax.f32 %v2069, 0.0
    %v2268 = vmax.f32 %v2074, 0.0
    %v2269 = vmax.f32 %v2077, 0.0
    %v2270 = vmax.f32 %v2082, 0.0
    %v2271 = vmax.f32 %v2085, 0.0
    %v2272 = vmax.f32 %v2090, 0.0
    %v2273 = vmax.f32 %v2093, 0.0
    %v2274 = vmax.f32 %v2098, 0.0
    %v2275 = vmax.f32 %v2101, 0.0
    %v2276 = vmax.f32 %v2106, 0.0
    %v2277 = vmax.f32 %v2109, 0.0
    %v2278 = vmax.f32 %v2114, 0.0
    %v2279 = vmax.f32 %v2117, 0.0
    %v2280 = vmax.f32 %v2122, 0.0
    %v2281 = vmax.f32 %v2125, 0.0
    %v2282 = vmax.f32 %v2130, 0.0
    %v2283 = vmax.f32 %v2133, 0.0
    %v2284 = vmax.f32 %v2138, 0.0
    %v2285 = vmax.f32 %v2141, 0.0
    %v2286 = vmax.f32 %v2146, 0.0
    %v2287 = vmax.f32 %v2149, 0.0
    %v2288 = vmax.f32 %v2154, 0.0
    %v2289 = vmax.f32 %v2157, 0.0
    %v2290 = vmax.f32 %v2162, 0.0
    %v2291 = vmax.f32 %v2165, 0.0
    %v2292 = vmax.f32 %v2170, 0.0
    %v2293 = vmax.f32 %v2173, 0.0
    %v2294 = vmax.f32 %v2178, 0.0
    %v2295 = vmax.f32 %v2181, 0.0
    %v2296 = vmax.f32 %v2186, 0.0
    %v2297 = vmax.f32 %v2189, 0.0
    %v2298 = vmax.f32 %v2194, 0.0
    %v2299 = vmax.f32 %v2197, 0.0
    %v2300 = vmax.f32 %v2202, 0.0
    %v2301 = vmax.f32 %v2205, 0.0
    %v2302 = vmax.f32 %v2210, 0.0
    %v2303 = vmax.f32 %v2213, 0.0
    %v2304 = vmax.f32 %v2218, 0.0
    %v2305 = vmax.f32 %v2221, 0.0
    %v2306 = vmax.f32 %v2226, 0.0
    %v2307 = vmax.f32 %v2229, 0.0
    %v2308 = vmax.f32 %v2234, 0.0
    %v2309 = vmax.f32 %v2237, 0.0
    %v2310 = vmax.f32 %v2242, 0.0
    %v2311 = vmax.f32 %v2245, 0.0
    %v2312 = vpack.c.bf16 %v2249, %v2248
    %v2313 = vpack.c.bf16 %v2251, %v2250
    %v2314 = vpack.c.bf16 %v2253, %v2252
    %v2315 = vpack.c.bf16 %v2255, %v2254
    %v2316 = vpack.c.bf16 %v2257, %v2256
    %v2317 = vpack.c.bf16 %v2259, %v2258
    %v2318 = vpack.c.bf16 %v2261, %v2260
    %v2319 = vpack.c.bf16 %v2263, %v2262
    %v2320 = vpack.c.bf16 %v2265, %v2264
    %v2321 = vpack.c.bf16 %v2267, %v2266
    %v2322 = vpack.c.bf16 %v2269, %v2268
    %v2323 = vpack.c.bf16 %v2271, %v2270
    %v2324 = vpack.c.bf16 %v2273, %v2272
    %v2325 = vpack.c.bf16 %v2275, %v2274
    %v2326 = vpack.c.bf16 %v2277, %v2276
    %v2327 = vpack.c.bf16 %v2279, %v2278
    %v2328 = vpack.c.bf16 %v2281, %v2280
    %v2329 = vpack.c.bf16 %v2283, %v2282
    %v2330 = vpack.c.bf16 %v2285, %v2284
    %v2331 = vpack.c.bf16 %v2287, %v2286
    %v2332 = vpack.c.bf16 %v2289, %v2288
    %v2333 = vpack.c.bf16 %v2291, %v2290
    %v2334 = vpack.c.bf16 %v2293, %v2292
    %v2335 = vpack.c.bf16 %v2295, %v2294
    %v2336 = vpack.c.bf16 %v2297, %v2296
    %v2337 = vpack.c.bf16 %v2299, %v2298
    %v2338 = vpack.c.bf16 %v2301, %v2300
    %v2339 = vpack.c.bf16 %v2303, %v2302
    %v2340 = vpack.c.bf16 %v2305, %v2304
    %v2341 = vpack.c.bf16 %v2307, %v2306
    %v2342 = vpack.c.bf16 %v2309, %v2308
    %v2343 = vpack.c.bf16 %v2311, %v2310
    %v2344 = vld [vmem:[#allocation10] sm:$0xf]
    %v2345 = vld [vmem:[#allocation10 + $0x4] sm:$0xf]
    %v2346 = vld [vmem:[#allocation10 + $0x8] sm:$0xf]
    %v2347 = vld [vmem:[#allocation10 + $0xc] sm:$0xf]
    %v2348 = vld [vmem:[#allocation10 + $0x10] sm:$0xf]
    %v2349 = vld [vmem:[#allocation10 + $0x14] sm:$0xf]
    %v2350 = vld [vmem:[#allocation10 + $0x18] sm:$0xf]
    %v2351 = vld [vmem:[#allocation10 + $0x1c] sm:$0xf]
    %v2352 = vld [vmem:[#allocation10 + $0x20] sm:$0xf]
    %v2353 = vld [vmem:[#allocation10 + $0x24] sm:$0xf]
    %v2354 = vld [vmem:[#allocation10 + $0x28] sm:$0xf]
    %v2355 = vld [vmem:[#allocation10 + $0x2c] sm:$0xf]
    %v2356 = vld [vmem:[#allocation10 + $0x30] sm:$0xf]
    %v2357 = vld [vmem:[#allocation10 + $0x34] sm:$0xf]
    %v2358 = vld [vmem:[#allocation10 + $0x38] sm:$0xf]
    %v2359 = vld [vmem:[#allocation10 + $0x3c] sm:$0xf]
    %v2360 = vld [vmem:[#allocation5 + $0x6] sm:$0x1]
    %v2362 = vlaneseq
    %v2363 = vshrl.u32 %v2362, 7
    %v2364 = vsub.s32 0, %v2363
    %v2365 = vrot.slane %v2360, %v2364
    %v2383 = vunpack.c.l.b16 %v2344
    %v2384 = vunpack.c.l.b16 %v2345
    %v2385 = vunpack.c.l.b16 %v2346
    %v2386 = vunpack.c.l.b16 %v2347
    %v2387 = vunpack.c.l.b16 %v2348
    %v2388 = vunpack.c.l.b16 %v2349
    %v2389 = vunpack.c.l.b16 %v2350
    %v2390 = vunpack.c.l.b16 %v2351
    %v2391 = vunpack.c.l.b16 %v2352
    %v2392 = vunpack.c.l.b16 %v2353
    %v2393 = vunpack.c.l.b16 %v2354
    %v2394 = vunpack.c.l.b16 %v2355
    %v2395 = vunpack.c.l.b16 %v2356
    %v2396 = vunpack.c.l.b16 %v2357
    %v2397 = vunpack.c.l.b16 %v2358
    %v2398 = vunpack.c.l.b16 %v2359
    %v2399 = vpack.c.b16 %v2384, %v2383
    %v2400 = vpack.c.b16 %v2386, %v2385
    %v2401 = vpack.c.b16 %v2388, %v2387
    %v2402 = vpack.c.b16 %v2390, %v2389
    %v2403 = vpack.c.b16 %v2392, %v2391
    %v2404 = vpack.c.b16 %v2394, %v2393
    %v2405 = vpack.c.b16 %v2396, %v2395
    %v2406 = vpack.c.b16 %v2398, %v2397
    %2415 = vmatprep.subr.bf16.mxu0 0
    %2416 = vmatpush1.bf16.msra.mxu0 %v2399
    %2417 = vmatprep.subr.bf16.mxu0 0
    %2418 = vmatpush1.bf16.msra.mxu0 %v2400
    %2419 = vmatprep.subr.bf16.mxu0 0
    %2420 = vmatpush1.bf16.msra.mxu0 %v2401
    %2421 = vmatprep.subr.bf16.mxu0 0
    %2422 = vmatpush1.bf16.msra.mxu0 %v2402
    %2423 = vmatprep.subr.bf16.mxu0 0
    %2424 = vmatpush1.bf16.msra.mxu0 %v2403
    %2425 = vmatprep.subr.bf16.mxu0 0
    %2426 = vmatpush1.bf16.msra.mxu0 %v2404
    %2427 = vmatprep.subr.bf16.mxu0 0
    %2428 = vmatpush1.bf16.msra.mxu0 %v2405
    %2429 = vmatprep.subr.bf16.mxu0 0
    %2430 = vmatpush1.bf16.msra.mxu0 %v2406
    %2431 = vmatprep.subr.bf16.mxu0 0
    %2432 = vmatpush1.bf16.msra.mxu0 0
    %2433 = vmatprep.subr.bf16.mxu0 0
    %2434 = vmatpush1.bf16.msra.mxu0 0
    %2435 = vmatprep.subr.bf16.mxu0 0
    %2436 = vmatpush1.bf16.msra.mxu0 0
    %2437 = vmatprep.subr.bf16.mxu0 0
    %2438 = vmatpush1.bf16.msra.mxu0 0
    %2439 = vmatprep.subr.bf16.mxu0 0
    %2440 = vmatpush1.bf16.msra.mxu0 0
    %2441 = vmatprep.subr.bf16.mxu0 0
    %2442 = vmatpush1.bf16.msra.mxu0 0
    %2443 = vmatprep.subr.bf16.mxu0 0
    %2444 = vmatpush1.bf16.msra.mxu0 0
    %2445 = vmatprep.subr.bf16.mxu0 0
    %2446 = vmatpush1.bf16.msra.mxu0 0
    %2447 = vmatprep.mubr.bf16.mxu0 0
    %2448 = vmatmul.mubr.bf16.gmra.mrb[0].mxu0 %v2312
    %v2449 = vpop.f32.mrb[0].mxu0
    %v2450 = vadd.f32 %v2365, %v2449
    %v2451 = vpop.f32.mrb[0].mxu0
    %v2452 = vpop.f32.mrb[0].mxu0
    %v2453 = vadd.f32 %v2365, %v2452
    %v2454 = vpop.f32.mrb[0].mxu0
    %2455 = vmatprep.mubr.bf16.mxu0 0
    %2456 = vmatmul.mubr.bf16.gmra.mrb[0].mxu0 %v2313
    %v2457 = vpop.f32.mrb[0].mxu0
    %v2458 = vadd.f32 %v2365, %v2457
    %v2459 = vpop.f32.mrb[0].mxu0
    %v2460 = vpop.f32.mrb[0].mxu0
    %v2461 = vadd.f32 %v2365, %v2460
    %v2462 = vpop.f32.mrb[0].mxu0
    %2463 = vmatprep.mubr.bf16.mxu0 0
    %2464 = vmatmul.mubr.bf16.gmra.mrb[0].mxu0 %v2314
    %v2465 = vpop.f32.mrb[0].mxu0
    %v2466 = vadd.f32 %v2365, %v2465
    %v2467 = vpop.f32.mrb[0].mxu0
    %v2468 = vpop.f32.mrb[0].mxu0
    %v2469 = vadd.f32 %v2365, %v2468
    %v2470 = vpop.f32.mrb[0].mxu0
    %2471 = vmatprep.mubr.bf16.mxu0 0
    %2472 = vmatmul.mubr.bf16.gmra.mrb[0].mxu0 %v2315
    %v2473 = vpop.f32.mrb[0].mxu0
    %v2474 = vadd.f32 %v2365, %v2473
    %v2475 = vpop.f32.mrb[0].mxu0
    %v2476 = vpop.f32.mrb[0].mxu0
    %v2477 = vadd.f32 %v2365, %v2476
    %v2478 = vpop.f32.mrb[0].mxu0
    %2479 = vmatprep.mubr.bf16.mxu0 0
    %2480 = vmatmul.mubr.bf16.gmra.mrb[0].mxu0 %v2316
    %v2481 = vpop.f32.mrb[0].mxu0
    %v2482 = vadd.f32 %v2365, %v2481
    %v2483 = vpop.f32.mrb[0].mxu0
    %v2484 = vpop.f32.mrb[0].mxu0
    %v2485 = vadd.f32 %v2365, %v2484
    %v2486 = vpop.f32.mrb[0].mxu0
    %2487 = vmatprep.mubr.bf16.mxu0 0
    %2488 = vmatmul.mubr.bf16.gmra.mrb[0].mxu0 %v2317
    %v2489 = vpop.f32.mrb[0].mxu0
    %v2490 = vadd.f32 %v2365, %v2489
    %v2491 = vpop.f32.mrb[0].mxu0
    %v2492 = vpop.f32.mrb[0].mxu0
    %v2493 = vadd.f32 %v2365, %v2492
    %v2494 = vpop.f32.mrb[0].mxu0
    %2495 = vmatprep.mubr.bf16.mxu0 0
    %2496 = vmatmul.mubr.bf16.gmra.mrb[0].mxu0 %v2318
    %v2497 = vpop.f32.mrb[0].mxu0
    %v2498 = vadd.f32 %v2365, %v2497
    %v2499 = vpop.f32.mrb[0].mxu0
    %v2500 = vpop.f32.mrb[0].mxu0
    %v2501 = vadd.f32 %v2365, %v2500
    %v2502 = vpop.f32.mrb[0].mxu0
    %2503 = vmatprep.mubr.bf16.mxu0 0
    %2504 = vmatmul.mubr.bf16.gmra.mrb[0].mxu0 %v2319
    %v2505 = vpop.f32.mrb[0].mxu0
    %v2506 = vadd.f32 %v2365, %v2505
    %v2507 = vpop.f32.mrb[0].mxu0
    %v2508 = vpop.f32.mrb[0].mxu0
    %v2509 = vadd.f32 %v2365, %v2508
    %v2510 = vpop.f32.mrb[0].mxu0
    %2511 = vmatprep.mubr.bf16.mxu0 0
    %2512 = vmatmul.mubr.bf16.gmra.mrb[0].mxu0 %v2320
    %v2513 = vpop.f32.mrb[0].mxu0
    %v2514 = vadd.f32 %v2365, %v2513
    %v2515 = vpop.f32.mrb[0].mxu0
    %v2516 = vpop.f32.mrb[0].mxu0
    %v2517 = vadd.f32 %v2365, %v2516
    %v2518 = vpop.f32.mrb[0].mxu0
    %2519 = vmatprep.mubr.bf16.mxu0 0
    %2520 = vmatmul.mubr.bf16.gmra.mrb[0].mxu0 %v2321
    %v2521 = vpop.f32.mrb[0].mxu0
    %v2522 = vadd.f32 %v2365, %v2521
    %v2523 = vpop.f32.mrb[0].mxu0
    %v2524 = vpop.f32.mrb[0].mxu0
    %v2525 = vadd.f32 %v2365, %v2524
    %v2526 = vpop.f32.mrb[0].mxu0
    %2527 = vmatprep.mubr.bf16.mxu0 0
    %2528 = vmatmul.mubr.bf16.gmra.mrb[0].mxu0 %v2322
    %v2529 = vpop.f32.mrb[0].mxu0
    %v2530 = vadd.f32 %v2365, %v2529
    %v2531 = vpop.f32.mrb[0].mxu0
    %v2532 = vpop.f32.mrb[0].mxu0
    %v2533 = vadd.f32 %v2365, %v2532
    %v2534 = vpop.f32.mrb[0].mxu0
    %2535 = vmatprep.mubr.bf16.mxu0 0
    %2536 = vmatmul.mubr.bf16.gmra.mrb[0].mxu0 %v2323
    %v2537 = vpop.f32.mrb[0].mxu0
    %v2538 = vadd.f32 %v2365, %v2537
    %v2539 = vpop.f32.mrb[0].mxu0
    %v2540 = vpop.f32.mrb[0].mxu0
    %v2541 = vadd.f32 %v2365, %v2540
    %v2542 = vpop.f32.mrb[0].mxu0
    %2543 = vmatprep.mubr.bf16.mxu0 0
    %2544 = vmatmul.mubr.bf16.gmra.mrb[0].mxu0 %v2324
    %v2545 = vpop.f32.mrb[0].mxu0
    %v2546 = vadd.f32 %v2365, %v2545
    %v2547 = vpop.f32.mrb[0].mxu0
    %v2548 = vpop.f32.mrb[0].mxu0
    %v2549 = vadd.f32 %v2365, %v2548
    %v2550 = vpop.f32.mrb[0].mxu0
    %2551 = vmatprep.mubr.bf16.mxu0 0
    %2552 = vmatmul.mubr.bf16.gmra.mrb[0].mxu0 %v2325
    %v2553 = vpop.f32.mrb[0].mxu0
    %v2554 = vadd.f32 %v2365, %v2553
    %v2555 = vpop.f32.mrb[0].mxu0
    %v2556 = vpop.f32.mrb[0].mxu0
    %v2557 = vadd.f32 %v2365, %v2556
    %v2558 = vpop.f32.mrb[0].mxu0
    %2559 = vmatprep.mubr.bf16.mxu0 0
    %2560 = vmatmul.mubr.bf16.gmra.mrb[0].mxu0 %v2326
    %v2561 = vpop.f32.mrb[0].mxu0
    %v2562 = vadd.f32 %v2365, %v2561
    %v2563 = vpop.f32.mrb[0].mxu0
    %v2564 = vpop.f32.mrb[0].mxu0
    %v2565 = vadd.f32 %v2365, %v2564
    %v2566 = vpop.f32.mrb[0].mxu0
    %2567 = vmatprep.mubr.bf16.mxu0 0
    %2568 = vmatmul.mubr.bf16.gmra.mrb[0].mxu0 %v2327
    %v2569 = vpop.f32.mrb[0].mxu0
    %v2570 = vadd.f32 %v2365, %v2569
    %v2571 = vpop.f32.mrb[0].mxu0
    %v2572 = vpop.f32.mrb[0].mxu0
    %v2573 = vadd.f32 %v2365, %v2572
    %v2574 = vpop.f32.mrb[0].mxu0
    %2575 = vmatprep.mubr.bf16.mxu0 0
    %2576 = vmatmul.mubr.bf16.gmra.mrb[0].mxu0 %v2328
    %v2577 = vpop.f32.mrb[0].mxu0
    %v2578 = vadd.f32 %v2365, %v2577
    %v2579 = vpop.f32.mrb[0].mxu0
    %v2580 = vpop.f32.mrb[0].mxu0
    %v2581 = vadd.f32 %v2365, %v2580
    %v2582 = vpop.f32.mrb[0].mxu0
    %2583 = vmatprep.mubr.bf16.mxu0 0
    %2584 = vmatmul.mubr.bf16.gmra.mrb[0].mxu0 %v2329
    %v2585 = vpop.f32.mrb[0].mxu0
    %v2586 = vadd.f32 %v2365, %v2585
    %v2587 = vpop.f32.mrb[0].mxu0
    %v2588 = vpop.f32.mrb[0].mxu0
    %v2589 = vadd.f32 %v2365, %v2588
    %v2590 = vpop.f32.mrb[0].mxu0
    %2591 = vmatprep.mubr.bf16.mxu0 0
    %2592 = vmatmul.mubr.bf16.gmra.mrb[0].mxu0 %v2330
    %v2593 = vpop.f32.mrb[0].mxu0
    %v2594 = vadd.f32 %v2365, %v2593
    %v2595 = vpop.f32.mrb[0].mxu0
    %v2596 = vpop.f32.mrb[0].mxu0
    %v2597 = vadd.f32 %v2365, %v2596
    %v2598 = vpop.f32.mrb[0].mxu0
    %2599 = vmatprep.mubr.bf16.mxu0 0
    %2600 = vmatmul.mubr.bf16.gmra.mrb[0].mxu0 %v2331
    %v2601 = vpop.f32.mrb[0].mxu0
    %v2602 = vadd.f32 %v2365, %v2601
    %v2603 = vpop.f32.mrb[0].mxu0
    %v2604 = vpop.f32.mrb[0].mxu0
    %v2605 = vadd.f32 %v2365, %v2604
    %v2606 = vpop.f32.mrb[0].mxu0
    %2607 = vmatprep.mubr.bf16.mxu0 0
    %2608 = vmatmul.mubr.bf16.gmra.mrb[0].mxu0 %v2332
    %v2609 = vpop.f32.mrb[0].mxu0
    %v2610 = vadd.f32 %v2365, %v2609
    %v2611 = vpop.f32.mrb[0].mxu0
    %v2612 = vpop.f32.mrb[0].mxu0
    %v2613 = vadd.f32 %v2365, %v2612
    %v2614 = vpop.f32.mrb[0].mxu0
    %2615 = vmatprep.mubr.bf16.mxu0 0
    %2616 = vmatmul.mubr.bf16.gmra.mrb[0].mxu0 %v2333
    %v2617 = vpop.f32.mrb[0].mxu0
    %v2618 = vadd.f32 %v2365, %v2617
    %v2619 = vpop.f32.mrb[0].mxu0
    %v2620 = vpop.f32.mrb[0].mxu0
    %v2621 = vadd.f32 %v2365, %v2620
    %v2622 = vpop.f32.mrb[0].mxu0
    %2623 = vmatprep.mubr.bf16.mxu0 0
    %2624 = vmatmul.mubr.bf16.gmra.mrb[0].mxu0 %v2334
    %v2625 = vpop.f32.mrb[0].mxu0
    %v2626 = vadd.f32 %v2365, %v2625
    %v2627 = vpop.f32.mrb[0].mxu0
    %v2628 = vpop.f32.mrb[0].mxu0
    %v2629 = vadd.f32 %v2365, %v2628
    %v2630 = vpop.f32.mrb[0].mxu0
    %2631 = vmatprep.mubr.bf16.mxu0 0
    %2632 = vmatmul.mubr.bf16.gmra.mrb[0].mxu0 %v2335
    %v2633 = vpop.f32.mrb[0].mxu0
    %v2634 = vadd.f32 %v2365, %v2633
    %v2635 = vpop.f32.mrb[0].mxu0
    %v2636 = vpop.f32.mrb[0].mxu0
    %v2637 = vadd.f32 %v2365, %v2636
    %v2638 = vpop.f32.mrb[0].mxu0
    %2639 = vmatprep.mubr.bf16.mxu0 0
    %2640 = vmatmul.mubr.bf16.gmra.mrb[0].mxu0 %v2336
    %v2641 = vpop.f32.mrb[0].mxu0
    %v2642 = vadd.f32 %v2365, %v2641
    %v2643 = vpop.f32.mrb[0].mxu0
    %v2644 = vpop.f32.mrb[0].mxu0
    %v2645 = vadd.f32 %v2365, %v2644
    %v2646 = vpop.f32.mrb[0].mxu0
    %2647 = vmatprep.mubr.bf16.mxu0 0
    %2648 = vmatmul.mubr.bf16.gmra.mrb[0].mxu0 %v2337
    %v2649 = vpop.f32.mrb[0].mxu0
    %v2650 = vadd.f32 %v2365, %v2649
    %v2651 = vpop.f32.mrb[0].mxu0
    %v2652 = vpop.f32.mrb[0].mxu0
    %v2653 = vadd.f32 %v2365, %v2652
    %v2654 = vpop.f32.mrb[0].mxu0
    %2655 = vmatprep.mubr.bf16.mxu0 0
    %2656 = vmatmul.mubr.bf16.gmra.mrb[0].mxu0 %v2338
    %v2657 = vpop.f32.mrb[0].mxu0
    %v2658 = vadd.f32 %v2365, %v2657
    %v2659 = vpop.f32.mrb[0].mxu0
    %v2660 = vpop.f32.mrb[0].mxu0
    %v2661 = vadd.f32 %v2365, %v2660
    %v2662 = vpop.f32.mrb[0].mxu0
    %2663 = vmatprep.mubr.bf16.mxu0 0
    %2664 = vmatmul.mubr.bf16.gmra.mrb[0].mxu0 %v2339
    %v2665 = vpop.f32.mrb[0].mxu0
    %v2666 = vadd.f32 %v2365, %v2665
    %v2667 = vpop.f32.mrb[0].mxu0
    %v2668 = vpop.f32.mrb[0].mxu0
    %v2669 = vadd.f32 %v2365, %v2668
    %v2670 = vpop.f32.mrb[0].mxu0
    %2671 = vmatprep.mubr.bf16.mxu0 0
    %2672 = vmatmul.mubr.bf16.gmra.mrb[0].mxu0 %v2340
    %v2673 = vpop.f32.mrb[0].mxu0
    %v2674 = vadd.f32 %v2365, %v2673
    %v2675 = vpop.f32.mrb[0].mxu0
    %v2676 = vpop.f32.mrb[0].mxu0
    %v2677 = vadd.f32 %v2365, %v2676
    %v2678 = vpop.f32.mrb[0].mxu0
    %2679 = vmatprep.mubr.bf16.mxu0 0
    %2680 = vmatmul.mubr.bf16.gmra.mrb[0].mxu0 %v2341
    %v2681 = vpop.f32.mrb[0].mxu0
    %v2682 = vadd.f32 %v2365, %v2681
    %v2683 = vpop.f32.mrb[0].mxu0
    %v2684 = vpop.f32.mrb[0].mxu0
    %v2685 = vadd.f32 %v2365, %v2684
    %v2686 = vpop.f32.mrb[0].mxu0
    %2687 = vmatprep.mubr.bf16.mxu0 0
    %2688 = vmatmul.mubr.bf16.gmra.mrb[0].mxu0 %v2342
    %v2689 = vpop.f32.mrb[0].mxu0
    %v2690 = vadd.f32 %v2365, %v2689
    %v2691 = vpop.f32.mrb[0].mxu0
    %v2692 = vpop.f32.mrb[0].mxu0
    %v2693 = vadd.f32 %v2365, %v2692
    %v2694 = vpop.f32.mrb[0].mxu0
    %2695 = vmatprep.mubr.bf16.mxu0 0
    %2696 = vmatmul.mubr.bf16.gmra.mrb[0].mxu0 %v2343
    %v2697 = vpop.f32.mrb[0].mxu0
    %v2698 = vadd.f32 %v2365, %v2697
    %v2699 = vpop.f32.mrb[0].mxu0
    %v2700 = vpop.f32.mrb[0].mxu0
    %v2701 = vadd.f32 %v2365, %v2700
    %v2702 = vpop.f32.mrb[0].mxu0
    %2703 = vdwg.mxu0
    %v2704 = vxor.u32 %v2450, 2147483648
    %v2705 = vxor.u32 %v2453, 2147483648
    %v2706 = vxor.u32 %v2458, 2147483648
    %v2707 = vxor.u32 %v2461, 2147483648
    %v2708 = vxor.u32 %v2466, 2147483648
    %v2709 = vxor.u32 %v2469, 2147483648
    %v2710 = vxor.u32 %v2474, 2147483648
    %v2711 = vxor.u32 %v2477, 2147483648
    %v2712 = vxor.u32 %v2482, 2147483648
    %v2713 = vxor.u32 %v2485, 2147483648
    %v2714 = vxor.u32 %v2490, 2147483648
    %v2715 = vxor.u32 %v2493, 2147483648
    %v2716 = vxor.u32 %v2498, 2147483648
    %v2717 = vxor.u32 %v2501, 2147483648
    %v2718 = vxor.u32 %v2506, 2147483648
    %v2719 = vxor.u32 %v2509, 2147483648
    %v2720 = vxor.u32 %v2514, 2147483648
    %v2721 = vxor.u32 %v2517, 2147483648
    %v2722 = vxor.u32 %v2522, 2147483648
    %v2723 = vxor.u32 %v2525, 2147483648
    %v2724 = vxor.u32 %v2530, 2147483648
    %v2725 = vxor.u32 %v2533, 2147483648
    %v2726 = vxor.u32 %v2538, 2147483648
    %v2727 = vxor.u32 %v2541, 2147483648
    %v2728 = vxor.u32 %v2546, 2147483648
    %v2729 = vxor.u32 %v2549, 2147483648
    %v2730 = vxor.u32 %v2554, 2147483648
    %v2731 = vxor.u32 %v2557, 2147483648
    %v2732 = vxor.u32 %v2562, 2147483648
    %v2733 = vxor.u32 %v2565, 2147483648
    %v2734 = vxor.u32 %v2570, 2147483648
    %v2735 = vxor.u32 %v2573, 2147483648
    %v2736 = vxor.u32 %v2578, 2147483648
    %v2737 = vxor.u32 %v2581, 2147483648
    %v2738 = vxor.u32 %v2586, 2147483648
    %v2739 = vxor.u32 %v2589, 2147483648
    %v2740 = vxor.u32 %v2594, 2147483648
    %v2741 = vxor.u32 %v2597, 2147483648
    %v2742 = vxor.u32 %v2602, 2147483648
    %v2743 = vxor.u32 %v2605, 2147483648
    %v2744 = vxor.u32 %v2610, 2147483648
    %v2745 = vxor.u32 %v2613, 2147483648
    %v2746 = vxor.u32 %v2618, 2147483648
    %v2747 = vxor.u32 %v2621, 2147483648
    %v2748 = vxor.u32 %v2626, 2147483648
    %v2749 = vxor.u32 %v2629, 2147483648
    %v2750 = vxor.u32 %v2634, 2147483648
    %v2751 = vxor.u32 %v2637, 2147483648
    %v2752 = vxor.u32 %v2642, 2147483648
    %v2753 = vxor.u32 %v2645, 2147483648
    %v2754 = vxor.u32 %v2650, 2147483648
    %v2755 = vxor.u32 %v2653, 2147483648
    %v2756 = vxor.u32 %v2658, 2147483648
    %v2757 = vxor.u32 %v2661, 2147483648
    %v2758 = vxor.u32 %v2666, 2147483648
    %v2759 = vxor.u32 %v2669, 2147483648
    %v2760 = vxor.u32 %v2674, 2147483648
    %v2761 = vxor.u32 %v2677, 2147483648
    %v2762 = vxor.u32 %v2682, 2147483648
    %v2763 = vxor.u32 %v2685, 2147483648
    %v2764 = vxor.u32 %v2690, 2147483648
    %v2765 = vxor.u32 %v2693, 2147483648
    %v2766 = vxor.u32 %v2698, 2147483648
    %v2767 = vxor.u32 %v2701, 2147483648
    %v2768 = vmul.f32 %v2704, 1.442695
    %v2769 = vpow.pop %v2768
    %v2770 = vmul.f32 %v2705, 1.442695
    %v2771 = vpow.pop %v2770
    %v2772 = vmul.f32 %v2706, 1.442695
    %v2773 = vpow.pop %v2772
    %v2774 = vmul.f32 %v2707, 1.442695
    %v2775 = vpow.pop %v2774
    %v2776 = vmul.f32 %v2708, 1.442695
    %v2777 = vpow.pop %v2776
    %v2778 = vmul.f32 %v2709, 1.442695
    %v2779 = vpow.pop %v2778
    %v2780 = vmul.f32 %v2710, 1.442695
    %v2781 = vpow.pop %v2780
    %v2782 = vmul.f32 %v2711, 1.442695
    %v2783 = vpow.pop %v2782
    %v2784 = vmul.f32 %v2712, 1.442695
    %v2785 = vpow.pop %v2784
    %v2786 = vmul.f32 %v2713, 1.442695
    %v2787 = vpow.pop %v2786
    %v2788 = vmul.f32 %v2714, 1.442695
    %v2789 = vpow.pop %v2788
    %v2790 = vmul.f32 %v2715, 1.442695
    %v2791 = vpow.pop %v2790
    %v2792 = vmul.f32 %v2716, 1.442695
    %v2793 = vpow.pop %v2792
    %v2794 = vmul.f32 %v2717, 1.442695
    %v2795 = vpow.pop %v2794
    %v2796 = vmul.f32 %v2718, 1.442695
    %v2797 = vpow.pop %v2796
    %v2798 = vmul.f32 %v2719, 1.442695
    %v2799 = vpow.pop %v2798
    %v2800 = vmul.f32 %v2720, 1.442695
    %v2801 = vpow.pop %v2800
    %v2802 = vmul.f32 %v2721, 1.442695
    %v2803 = vpow.pop %v2802
    %v2804 = vmul.f32 %v2722, 1.442695
    %v2805 = vpow.pop %v2804
    %v2806 = vmul.f32 %v2723, 1.442695
    %v2807 = vpow.pop %v2806
    %v2808 = vmul.f32 %v2724, 1.442695
    %v2809 = vpow.pop %v2808
    %v2810 = vmul.f32 %v2725, 1.442695
    %v2811 = vpow.pop %v2810
    %v2812 = vmul.f32 %v2726, 1.442695
    %v2813 = vpow.pop %v2812
    %v2814 = vmul.f32 %v2727, 1.442695
    %v2815 = vpow.pop %v2814
    %v2816 = vmul.f32 %v2728, 1.442695
    %v2817 = vpow.pop %v2816
    %v2818 = vmul.f32 %v2729, 1.442695
    %v2819 = vpow.pop %v2818
    %v2820 = vmul.f32 %v2730, 1.442695
    %v2821 = vpow.pop %v2820
    %v2822 = vmul.f32 %v2731, 1.442695
    %v2823 = vpow.pop %v2822
    %v2824 = vmul.f32 %v2732, 1.442695
    %v2825 = vpow.pop %v2824
    %v2826 = vmul.f32 %v2733, 1.442695
    %v2827 = vpow.pop %v2826
    %v2828 = vmul.f32 %v2734, 1.442695
    %v2829 = vpow.pop %v2828
    %v2830 = vmul.f32 %v2735, 1.442695
    %v2831 = vpow.pop %v2830
    %v2832 = vmul.f32 %v2736, 1.442695
    %v2833 = vpow.pop %v2832
    %v2834 = vmul.f32 %v2737, 1.442695
    %v2835 = vpow.pop %v2834
    %v2836 = vmul.f32 %v2738, 1.442695
    %v2837 = vpow.pop %v2836
    %v2838 = vmul.f32 %v2739, 1.442695
    %v2839 = vpow.pop %v2838
    %v2840 = vmul.f32 %v2740, 1.442695
    %v2841 = vpow.pop %v2840
    %v2842 = vmul.f32 %v2741, 1.442695
    %v2843 = vpow.pop %v2842
    %v2844 = vmul.f32 %v2742, 1.442695
    %v2845 = vpow.pop %v2844
    %v2846 = vmul.f32 %v2743, 1.442695
    %v2847 = vpow.pop %v2846
    %v2848 = vmul.f32 %v2744, 1.442695
    %v2849 = vpow.pop %v2848
    %v2850 = vmul.f32 %v2745, 1.442695
    %v2851 = vpow.pop %v2850
    %v2852 = vmul.f32 %v2746, 1.442695
    %v2853 = vpow.pop %v2852
    %v2854 = vmul.f32 %v2747, 1.442695
    %v2855 = vpow.pop %v2854
    %v2856 = vmul.f32 %v2748, 1.442695
    %v2857 = vpow.pop %v2856
    %v2858 = vmul.f32 %v2749, 1.442695
    %v2859 = vpow.pop %v2858
    %v2860 = vmul.f32 %v2750, 1.442695
    %v2861 = vpow.pop %v2860
    %v2862 = vmul.f32 %v2751, 1.442695
    %v2863 = vpow.pop %v2862
    %v2864 = vmul.f32 %v2752, 1.442695
    %v2865 = vpow.pop %v2864
    %v2866 = vmul.f32 %v2753, 1.442695
    %v2867 = vpow.pop %v2866
    %v2868 = vmul.f32 %v2754, 1.442695
    %v2869 = vpow.pop %v2868
    %v2870 = vmul.f32 %v2755, 1.442695
    %v2871 = vpow.pop %v2870
    %v2872 = vmul.f32 %v2756, 1.442695
    %v2873 = vpow.pop %v2872
    %v2874 = vmul.f32 %v2757, 1.442695
    %v2875 = vpow.pop %v2874
    %v2876 = vmul.f32 %v2758, 1.442695
    %v2877 = vpow.pop %v2876
    %v2878 = vmul.f32 %v2759, 1.442695
    %v2879 = vpow.pop %v2878
    %v2880 = vmul.f32 %v2760, 1.442695
    %v2881 = vpow.pop %v2880
    %v2882 = vmul.f32 %v2761, 1.442695
    %v2883 = vpow.pop %v2882
    %v2884 = vmul.f32 %v2762, 1.442695
    %v2885 = vpow.pop %v2884
    %v2886 = vmul.f32 %v2763, 1.442695
    %v2887 = vpow.pop %v2886
    %v2888 = vmul.f32 %v2764, 1.442695
    %v2889 = vpow.pop %v2888
    %v2890 = vmul.f32 %v2765, 1.442695
    %v2891 = vpow.pop %v2890
    %v2892 = vmul.f32 %v2766, 1.442695
    %v2893 = vpow.pop %v2892
    %v2894 = vmul.f32 %v2767, 1.442695
    %v2895 = vpow.pop %v2894
    %v2896 = vadd.f32 %v2769, 1.0
    %v2897 = vadd.f32 %v2771, 1.0
    %v2898 = vadd.f32 %v2773, 1.0
    %v2899 = vadd.f32 %v2775, 1.0
    %v2900 = vadd.f32 %v2777, 1.0
    %v2901 = vadd.f32 %v2779, 1.0
    %v2902 = vadd.f32 %v2781, 1.0
    %v2903 = vadd.f32 %v2783, 1.0
    %v2904 = vadd.f32 %v2785, 1.0
    %v2905 = vadd.f32 %v2787, 1.0
    %v2906 = vadd.f32 %v2789, 1.0
    %v2907 = vadd.f32 %v2791, 1.0
    %v2908 = vadd.f32 %v2793, 1.0
    %v2909 = vadd.f32 %v2795, 1.0
    %v2910 = vadd.f32 %v2797, 1.0
    %v2911 = vadd.f32 %v2799, 1.0
    %v2912 = vadd.f32 %v2801, 1.0
    %v2913 = vadd.f32 %v2803, 1.0
    %v2914 = vadd.f32 %v2805, 1.0
    %v2915 = vadd.f32 %v2807, 1.0
    %v2916 = vadd.f32 %v2809, 1.0
    %v2917 = vadd.f32 %v2811, 1.0
    %v2918 = vadd.f32 %v2813, 1.0
    %v2919 = vadd.f32 %v2815, 1.0
    %v2920 = vadd.f32 %v2817, 1.0
    %v2921 = vadd.f32 %v2819, 1.0
    %v2922 = vadd.f32 %v2821, 1.0
    %v2923 = vadd.f32 %v2823, 1.0
    %v2924 = vadd.f32 %v2825, 1.0
    %v2925 = vadd.f32 %v2827, 1.0
    %v2926 = vadd.f32 %v2829, 1.0
    %v2927 = vadd.f32 %v2831, 1.0
    %v2928 = vadd.f32 %v2833, 1.0
    %v2929 = vadd.f32 %v2835, 1.0
    %v2930 = vadd.f32 %v2837, 1.0
    %v2931 = vadd.f32 %v2839, 1.0
    %v2932 = vadd.f32 %v2841, 1.0
    %v2933 = vadd.f32 %v2843, 1.0
    %v2934 = vadd.f32 %v2845, 1.0
    %v2935 = vadd.f32 %v2847, 1.0
    %v2936 = vadd.f32 %v2849, 1.0
    %v2937 = vadd.f32 %v2851, 1.0
    %v2938 = vadd.f32 %v2853, 1.0
    %v2939 = vadd.f32 %v2855, 1.0
    %v2940 = vadd.f32 %v2857, 1.0
    %v2941 = vadd.f32 %v2859, 1.0
    %v2942 = vadd.f32 %v2861, 1.0
    %v2943 = vadd.f32 %v2863, 1.0
    %v2944 = vadd.f32 %v2865, 1.0
    %v2945 = vadd.f32 %v2867, 1.0
    %v2946 = vadd.f32 %v2869, 1.0
    %v2947 = vadd.f32 %v2871, 1.0
    %v2948 = vadd.f32 %v2873, 1.0
    %v2949 = vadd.f32 %v2875, 1.0
    %v2950 = vadd.f32 %v2877, 1.0
    %v2951 = vadd.f32 %v2879, 1.0
    %v2952 = vadd.f32 %v2881, 1.0
    %v2953 = vadd.f32 %v2883, 1.0
    %v2954 = vadd.f32 %v2885, 1.0
    %v2955 = vadd.f32 %v2887, 1.0
    %v2956 = vadd.f32 %v2889, 1.0
    %v2957 = vadd.f32 %v2891, 1.0
    %v2958 = vadd.f32 %v2893, 1.0
    %v2959 = vadd.f32 %v2895, 1.0
    %v2960 = vrcp.pop %v2896
    %v2961 = vmul.f32 1.0, %v2960
    %v2962 = vrcp.pop %v2897
    %v2963 = vmul.f32 1.0, %v2962
    %v2964 = vrcp.pop %v2898
    %v2965 = vmul.f32 1.0, %v2964
    %v2966 = vrcp.pop %v2899
    %v2967 = vmul.f32 1.0, %v2966
    %v2968 = vrcp.pop %v2900
    %v2969 = vmul.f32 1.0, %v2968
    %v2970 = vrcp.pop %v2901
    %v2971 = vmul.f32 1.0, %v2970
    %v2972 = vrcp.pop %v2902
    %v2973 = vmul.f32 1.0, %v2972
    %v2974 = vrcp.pop %v2903
    %v2975 = vmul.f32 1.0, %v2974
    %v2976 = vrcp.pop %v2904
    %v2977 = vmul.f32 1.0, %v2976
    %v2978 = vrcp.pop %v2905
    %v2979 = vmul.f32 1.0, %v2978
    %v2980 = vrcp.pop %v2906
    %v2981 = vmul.f32 1.0, %v2980
    %v2982 = vrcp.pop %v2907
    %v2983 = vmul.f32 1.0, %v2982
    %v2984 = vrcp.pop %v2908
    %v2985 = vmul.f32 1.0, %v2984
    %v2986 = vrcp.pop %v2909
    %v2987 = vmul.f32 1.0, %v2986
    %v2988 = vrcp.pop %v2910
    %v2989 = vmul.f32 1.0, %v2988
    %v2990 = vrcp.pop %v2911
    %v2991 = vmul.f32 1.0, %v2990
    %v2992 = vrcp.pop %v2912
    %v2993 = vmul.f32 1.0, %v2992
    %v2994 = vrcp.pop %v2913
    %v2995 = vmul.f32 1.0, %v2994
    %v2996 = vrcp.pop %v2914
    %v2997 = vmul.f32 1.0, %v2996
    %v2998 = vrcp.pop %v2915
    %v2999 = vmul.f32 1.0, %v2998
    %v3000 = vrcp.pop %v2916
    %v3001 = vmul.f32 1.0, %v3000
    %v3002 = vrcp.pop %v2917
    %v3003 = vmul.f32 1.0, %v3002
    %v3004 = vrcp.pop %v2918
    %v3005 = vmul.f32 1.0, %v3004
    %v3006 = vrcp.pop %v2919
    %v3007 = vmul.f32 1.0, %v3006
    %v3008 = vrcp.pop %v2920
    %v3009 = vmul.f32 1.0, %v3008
    %v3010 = vrcp.pop %v2921
    %v3011 = vmul.f32 1.0, %v3010
    %v3012 = vrcp.pop %v2922
    %v3013 = vmul.f32 1.0, %v3012
    %v3014 = vrcp.pop %v2923
    %v3015 = vmul.f32 1.0, %v3014
    %v3016 = vrcp.pop %v2924
    %v3017 = vmul.f32 1.0, %v3016
    %v3018 = vrcp.pop %v2925
    %v3019 = vmul.f32 1.0, %v3018
    %v3020 = vrcp.pop %v2926
    %v3021 = vmul.f32 1.0, %v3020
    %v3022 = vrcp.pop %v2927
    %v3023 = vmul.f32 1.0, %v3022
    %v3024 = vrcp.pop %v2928
    %v3025 = vmul.f32 1.0, %v3024
    %v3026 = vrcp.pop %v2929
    %v3027 = vmul.f32 1.0, %v3026
    %v3028 = vrcp.pop %v2930
    %v3029 = vmul.f32 1.0, %v3028
    %v3030 = vrcp.pop %v2931
    %v3031 = vmul.f32 1.0, %v3030
    %v3032 = vrcp.pop %v2932
    %v3033 = vmul.f32 1.0, %v3032
    %v3034 = vrcp.pop %v2933
    %v3035 = vmul.f32 1.0, %v3034
    %v3036 = vrcp.pop %v2934
    %v3037 = vmul.f32 1.0, %v3036
    %v3038 = vrcp.pop %v2935
    %v3039 = vmul.f32 1.0, %v3038
    %v3040 = vrcp.pop %v2936
    %v3041 = vmul.f32 1.0, %v3040
    %v3042 = vrcp.pop %v2937
    %v3043 = vmul.f32 1.0, %v3042
    %v3044 = vrcp.pop %v2938
    %v3045 = vmul.f32 1.0, %v3044
    %v3046 = vrcp.pop %v2939
    %v3047 = vmul.f32 1.0, %v3046
    %v3048 = vrcp.pop %v2940
    %v3049 = vmul.f32 1.0, %v3048
    %v3050 = vrcp.pop %v2941
    %v3051 = vmul.f32 1.0, %v3050
    %v3052 = vrcp.pop %v2942
    %v3053 = vmul.f32 1.0, %v3052
    %v3054 = vrcp.pop %v2943
    %v3055 = vmul.f32 1.0, %v3054
    %v3056 = vrcp.pop %v2944
    %v3057 = vmul.f32 1.0, %v3056
    %v3058 = vrcp.pop %v2945
    %v3059 = vmul.f32 1.0, %v3058
    %v3060 = vrcp.pop %v2946
    %v3061 = vmul.f32 1.0, %v3060
    %v3062 = vrcp.pop %v2947
    %v3063 = vmul.f32 1.0, %v3062
    %v3064 = vrcp.pop %v2948
    %v3065 = vmul.f32 1.0, %v3064
    %v3066 = vrcp.pop %v2949
    %v3067 = vmul.f32 1.0, %v3066
    %v3068 = vrcp.pop %v2950
    %v3069 = vmul.f32 1.0, %v3068
    %v3070 = vrcp.pop %v2951
    %v3071 = vmul.f32 1.0, %v3070
    %v3072 = vrcp.pop %v2952
    %v3073 = vmul.f32 1.0, %v3072
    %v3074 = vrcp.pop %v2953
    %v3075 = vmul.f32 1.0, %v3074
    %v3076 = vrcp.pop %v2954
    %v3077 = vmul.f32 1.0, %v3076
    %v3078 = vrcp.pop %v2955
    %v3079 = vmul.f32 1.0, %v3078
    %v3080 = vrcp.pop %v2956
    %v3081 = vmul.f32 1.0, %v3080
    %v3082 = vrcp.pop %v2957
    %v3083 = vmul.f32 1.0, %v3082
    %v3084 = vrcp.pop %v2958
    %v3085 = vmul.f32 1.0, %v3084
    %v3086 = vrcp.pop %v2959
    %v3087 = vmul.f32 1.0, %v3086
    %3088 = vst [vmem:[#allocation17] sm:$0xff] %v2961
    %3089 = vst [vmem:[#allocation17 + $0x10] sm:$0xff] %v2963
    %3090 = vst [vmem:[#allocation17 + $0x20] sm:$0xff] %v2965
    %3091 = vst [vmem:[#allocation17 + $0x30] sm:$0xff] %v2967
    %3092 = vst [vmem:[#allocation17 + $0x40] sm:$0xff] %v2969
    %3093 = vst [vmem:[#allocation17 + $0x50] sm:$0xff] %v2971
    %3094 = vst [vmem:[#allocation17 + $0x60] sm:$0xff] %v2973
    %3095 = vst [vmem:[#allocation17 + $0x70] sm:$0xff] %v2975
    %3096 = vst [vmem:[#allocation17 + $0x80] sm:$0xff] %v2977
    %3097 = vst [vmem:[#allocation17 + $0x90] sm:$0xff] %v2979
    %3098 = vst [vmem:[#allocation17 + $0xa0] sm:$0xff] %v2981
    %3099 = vst [vmem:[#allocation17 + $0xb0] sm:$0xff] %v2983
    %3100 = vst [vmem:[#allocation17 + $0xc0] sm:$0xff] %v2985
    %3101 = vst [vmem:[#allocation17 + $0xd0] sm:$0xff] %v2987
    %3102 = vst [vmem:[#allocation17 + $0xe0] sm:$0xff] %v2989
    %3103 = vst [vmem:[#allocation17 + $0xf0] sm:$0xff] %v2991
    %3104 = vst [vmem:[#allocation17 + $0x100] sm:$0xff] %v2993
    %3105 = vst [vmem:[#allocation17 + $0x110] sm:$0xff] %v2995
    %3106 = vst [vmem:[#allocation17 + $0x120] sm:$0xff] %v2997
    %3107 = vst [vmem:[#allocation17 + $0x130] sm:$0xff] %v2999
    %3108 = vst [vmem:[#allocation17 + $0x140] sm:$0xff] %v3001
    %3109 = vst [vmem:[#allocation17 + $0x150] sm:$0xff] %v3003
    %3110 = vst [vmem:[#allocation17 + $0x160] sm:$0xff] %v3005
    %3111 = vst [vmem:[#allocation17 + $0x170] sm:$0xff] %v3007
    %3112 = vst [vmem:[#allocation17 + $0x180] sm:$0xff] %v3009
    %3113 = vst [vmem:[#allocation17 + $0x190] sm:$0xff] %v3011
    %3114 = vst [vmem:[#allocation17 + $0x1a0] sm:$0xff] %v3013
    %3115 = vst [vmem:[#allocation17 + $0x1b0] sm:$0xff] %v3015
    %3116 = vst [vmem:[#allocation17 + $0x1c0] sm:$0xff] %v3017
    %3117 = vst [vmem:[#allocation17 + $0x1d0] sm:$0xff] %v3019
    %3118 = vst [vmem:[#allocation17 + $0x1e0] sm:$0xff] %v3021
    %3119 = vst [vmem:[#allocation17 + $0x1f0] sm:$0xff] %v3023
    %3120 = vst [vmem:[#allocation17 + $0x200] sm:$0xff] %v3025
    %3121 = vst [vmem:[#allocation17 + $0x210] sm:$0xff] %v3027
    %3122 = vst [vmem:[#allocation17 + $0x220] sm:$0xff] %v3029
    %3123 = vst [vmem:[#allocation17 + $0x230] sm:$0xff] %v3031
    %3124 = vst [vmem:[#allocation17 + $0x240] sm:$0xff] %v3033
    %3125 = vst [vmem:[#allocation17 + $0x250] sm:$0xff] %v3035
    %3126 = vst [vmem:[#allocation17 + $0x260] sm:$0xff] %v3037
    %3127 = vst [vmem:[#allocation17 + $0x270] sm:$0xff] %v3039
    %3128 = vst [vmem:[#allocation17 + $0x280] sm:$0xff] %v3041
    %3129 = vst [vmem:[#allocation17 + $0x290] sm:$0xff] %v3043
    %3130 = vst [vmem:[#allocation17 + $0x2a0] sm:$0xff] %v3045
    %3131 = vst [vmem:[#allocation17 + $0x2b0] sm:$0xff] %v3047
    %3132 = vst [vmem:[#allocation17 + $0x2c0] sm:$0xff] %v3049
    %3133 = vst [vmem:[#allocation17 + $0x2d0] sm:$0xff] %v3051
    %3134 = vst [vmem:[#allocation17 + $0x2e0] sm:$0xff] %v3053
    %3135 = vst [vmem:[#allocation17 + $0x2f0] sm:$0xff] %v3055
    %3136 = vst [vmem:[#allocation17 + $0x300] sm:$0xff] %v3057
    %3137 = vst [vmem:[#allocation17 + $0x310] sm:$0xff] %v3059
    %3138 = vst [vmem:[#allocation17 + $0x320] sm:$0xff] %v3061
    %3139 = vst [vmem:[#allocation17 + $0x330] sm:$0xff] %v3063
    %3140 = vst [vmem:[#allocation17 + $0x340] sm:$0xff] %v3065
    %3141 = vst [vmem:[#allocation17 + $0x350] sm:$0xff] %v3067
    %3142 = vst [vmem:[#allocation17 + $0x360] sm:$0xff] %v3069
    %3143 = vst [vmem:[#allocation17 + $0x370] sm:$0xff] %v3071
    %3144 = vst [vmem:[#allocation17 + $0x380] sm:$0xff] %v3073
    %3145 = vst [vmem:[#allocation17 + $0x390] sm:$0xff] %v3075
    %3146 = vst [vmem:[#allocation17 + $0x3a0] sm:$0xff] %v3077
    %3147 = vst [vmem:[#allocation17 + $0x3b0] sm:$0xff] %v3079
    %3148 = vst [vmem:[#allocation17 + $0x3c0] sm:$0xff] %v3081
    %3149 = vst [vmem:[#allocation17 + $0x3d0] sm:$0xff] %v3083
    %3150 = vst [vmem:[#allocation17 + $0x3e0] sm:$0xff] %v3085
    %3151 = vst [vmem:[#allocation17 + $0x3f0] sm:$0xff] %v3087
    %v3152 = vmul.f32 %v154, %v2961
    %v3153 = vmul.f32 %v155, %v2963
    %v3154 = vmul.f32 %v156, %v2965
    %v3155 = vmul.f32 %v157, %v2967
    %v3156 = vmul.f32 %v158, %v2969
    %v3157 = vmul.f32 %v159, %v2971
    %v3158 = vmul.f32 %v160, %v2973
    %v3159 = vmul.f32 %v161, %v2975
    %v3160 = vmul.f32 %v162, %v2977
    %v3161 = vmul.f32 %v163, %v2979
    %v3162 = vmul.f32 %v164, %v2981
    %v3163 = vmul.f32 %v165, %v2983
    %v3164 = vmul.f32 %v166, %v2985
    %v3165 = vmul.f32 %v167, %v2987
    %v3166 = vmul.f32 %v168, %v2989
    %v3167 = vmul.f32 %v169, %v2991
    %v3168 = vmul.f32 %v170, %v2993
    %v3169 = vmul.f32 %v171, %v2995
    %v3170 = vmul.f32 %v172, %v2997
    %v3171 = vmul.f32 %v173, %v2999
    %v3172 = vmul.f32 %v174, %v3001
    %v3173 = vmul.f32 %v175, %v3003
    %v3174 = vmul.f32 %v176, %v3005
    %v3175 = vmul.f32 %v177, %v3007
    %v3176 = vmul.f32 %v178, %v3009
    %v3177 = vmul.f32 %v179, %v3011
    %v3178 = vmul.f32 %v180, %v3013
    %v3179 = vmul.f32 %v181, %v3015
    %v3180 = vmul.f32 %v182, %v3017
    %v3181 = vmul.f32 %v183, %v3019
    %v3182 = vmul.f32 %v184, %v3021
    %v3183 = vmul.f32 %v185, %v3023
    %v3184 = vmul.f32 %v186, %v3025
    %v3185 = vmul.f32 %v187, %v3027
    %v3186 = vmul.f32 %v188, %v3029
    %v3187 = vmul.f32 %v189, %v3031
    %v3188 = vmul.f32 %v190, %v3033
    %v3189 = vmul.f32 %v191, %v3035
    %v3190 = vmul.f32 %v192, %v3037
    %v3191 = vmul.f32 %v193, %v3039
    %v3192 = vmul.f32 %v194, %v3041
    %v3193 = vmul.f32 %v195, %v3043
    %v3194 = vmul.f32 %v196, %v3045
    %v3195 = vmul.f32 %v197, %v3047
    %v3196 = vmul.f32 %v198, %v3049
    %v3197 = vmul.f32 %v199, %v3051
    %v3198 = vmul.f32 %v200, %v3053
    %v3199 = vmul.f32 %v201, %v3055
    %v3200 = vmul.f32 %v202, %v3057
    %v3201 = vmul.f32 %v203, %v3059
    %v3202 = vmul.f32 %v204, %v3061
    %v3203 = vmul.f32 %v205, %v3063
    %v3204 = vmul.f32 %v206, %v3065
    %v3205 = vmul.f32 %v207, %v3067
    %v3206 = vmul.f32 %v208, %v3069
    %v3207 = vmul.f32 %v209, %v3071
    %v3208 = vmul.f32 %v210, %v3073
    %v3209 = vmul.f32 %v211, %v3075
    %v3210 = vmul.f32 %v212, %v3077
    %v3211 = vmul.f32 %v213, %v3079
    %v3212 = vmul.f32 %v214, %v3081
    %v3213 = vmul.f32 %v215, %v3083
    %v3214 = vmul.f32 %v216, %v3085
    %v3215 = vmul.f32 %v217, %v3087
    %v3216 = vpack.c.bf16 %v3153, %v3152
    %v3217 = vpack.c.bf16 %v3155, %v3154
    %v3218 = vpack.c.bf16 %v3157, %v3156
    %v3219 = vpack.c.bf16 %v3159, %v3158
    %v3220 = vpack.c.bf16 %v3161, %v3160
    %v3221 = vpack.c.bf16 %v3163, %v3162
    %v3222 = vpack.c.bf16 %v3165, %v3164
    %v3223 = vpack.c.bf16 %v3167, %v3166
    %v3224 = vpack.c.bf16 %v3169, %v3168
    %v3225 = vpack.c.bf16 %v3171, %v3170
    %v3226 = vpack.c.bf16 %v3173, %v3172
    %v3227 = vpack.c.bf16 %v3175, %v3174
    %v3228 = vpack.c.bf16 %v3177, %v3176
    %v3229 = vpack.c.bf16 %v3179, %v3178
    %v3230 = vpack.c.bf16 %v3181, %v3180
    %v3231 = vpack.c.bf16 %v3183, %v3182
    %v3232 = vpack.c.bf16 %v3185, %v3184
    %v3233 = vpack.c.bf16 %v3187, %v3186
    %v3234 = vpack.c.bf16 %v3189, %v3188
    %v3235 = vpack.c.bf16 %v3191, %v3190
    %v3236 = vpack.c.bf16 %v3193, %v3192
    %v3237 = vpack.c.bf16 %v3195, %v3194
    %v3238 = vpack.c.bf16 %v3197, %v3196
    %v3239 = vpack.c.bf16 %v3199, %v3198
    %v3240 = vpack.c.bf16 %v3201, %v3200
    %v3241 = vpack.c.bf16 %v3203, %v3202
    %v3242 = vpack.c.bf16 %v3205, %v3204
    %v3243 = vpack.c.bf16 %v3207, %v3206
    %v3244 = vpack.c.bf16 %v3209, %v3208
    %v3245 = vpack.c.bf16 %v3211, %v3210
    %v3246 = vpack.c.bf16 %v3213, %v3212
    %v3247 = vpack.c.bf16 %v3215, %v3214
    %v3248 = vld [vmem:[#allocation11] sm:$0xf]
    %v3249 = vld [vmem:[#allocation11 + $0x4] sm:$0xf]
    %v3250 = vld [vmem:[#allocation11 + $0x8] sm:$0xf]
    %v3251 = vld [vmem:[#allocation11 + $0xc] sm:$0xf]
    %v3252 = vld [vmem:[#allocation11 + $0x10] sm:$0xf]
    %v3253 = vld [vmem:[#allocation11 + $0x14] sm:$0xf]
    %v3254 = vld [vmem:[#allocation11 + $0x18] sm:$0xf]
    %v3255 = vld [vmem:[#allocation11 + $0x1c] sm:$0xf]
    %v3256 = vld [vmem:[#allocation11 + $0x20] sm:$0xf]
    %v3257 = vld [vmem:[#allocation11 + $0x24] sm:$0xf]
    %v3258 = vld [vmem:[#allocation11 + $0x28] sm:$0xf]
    %v3259 = vld [vmem:[#allocation11 + $0x2c] sm:$0xf]
    %v3260 = vld [vmem:[#allocation11 + $0x30] sm:$0xf]
    %v3261 = vld [vmem:[#allocation11 + $0x34] sm:$0xf]
    %v3262 = vld [vmem:[#allocation11 + $0x38] sm:$0xf]
    %v3263 = vld [vmem:[#allocation11 + $0x3c] sm:$0xf]
    %v3264 = vld [vmem:[#allocation5 + $0x7] sm:$0x1]
    %v3266 = vlaneseq
    %v3267 = vshrl.u32 %v3266, 7
    %v3268 = vsub.s32 0, %v3267
    %v3269 = vrot.slane %v3264, %v3268
    %v3287 = vunpack.c.l.b16 %v3248
    %v3288 = vunpack.c.l.b16 %v3249
    %v3289 = vunpack.c.l.b16 %v3250
    %v3290 = vunpack.c.l.b16 %v3251
    %v3291 = vunpack.c.l.b16 %v3252
    %v3292 = vunpack.c.l.b16 %v3253
    %v3293 = vunpack.c.l.b16 %v3254
    %v3294 = vunpack.c.l.b16 %v3255
    %v3295 = vunpack.c.l.b16 %v3256
    %v3296 = vunpack.c.l.b16 %v3257
    %v3297 = vunpack.c.l.b16 %v3258
    %v3298 = vunpack.c.l.b16 %v3259
    %v3299 = vunpack.c.l.b16 %v3260
    %v3300 = vunpack.c.l.b16 %v3261
    %v3301 = vunpack.c.l.b16 %v3262
    %v3302 = vunpack.c.l.b16 %v3263
    %v3303 = vpack.c.b16 %v3288, %v3287
    %v3304 = vpack.c.b16 %v3290, %v3289
    %v3305 = vpack.c.b16 %v3292, %v3291
    %v3306 = vpack.c.b16 %v3294, %v3293
    %v3307 = vpack.c.b16 %v3296, %v3295
    %v3308 = vpack.c.b16 %v3298, %v3297
    %v3309 = vpack.c.b16 %v3300, %v3299
    %v3310 = vpack.c.b16 %v3302, %v3301
    %3319 = vmatprep.subr.bf16.mxu0 0
    %3320 = vmatpush1.bf16.msra.mxu0 %v3303
    %3321 = vmatprep.subr.bf16.mxu0 0
    %3322 = vmatpush1.bf16.msra.mxu0 %v3304
    %3323 = vmatprep.subr.bf16.mxu0 0
    %3324 = vmatpush1.bf16.msra.mxu0 %v3305
    %3325 = vmatprep.subr.bf16.mxu0 0
    %3326 = vmatpush1.bf16.msra.mxu0 %v3306
    %3327 = vmatprep.subr.bf16.mxu0 0
    %3328 = vmatpush1.bf16.msra.mxu0 %v3307
    %3329 = vmatprep.subr.bf16.mxu0 0
    %3330 = vmatpush1.bf16.msra.mxu0 %v3308
    %3331 = vmatprep.subr.bf16.mxu0 0
    %3332 = vmatpush1.bf16.msra.mxu0 %v3309
    %3333 = vmatprep.subr.bf16.mxu0 0
    %3334 = vmatpush1.bf16.msra.mxu0 %v3310
    %3335 = vmatprep.subr.bf16.mxu0 0
    %3336 = vmatpush1.bf16.msra.mxu0 0
    %3337 = vmatprep.subr.bf16.mxu0 0
    %3338 = vmatpush1.bf16.msra.mxu0 0
    %3339 = vmatprep.subr.bf16.mxu0 0
    %3340 = vmatpush1.bf16.msra.mxu0 0
    %3341 = vmatprep.subr.bf16.mxu0 0
    %3342 = vmatpush1.bf16.msra.mxu0 0
    %3343 = vmatprep.subr.bf16.mxu0 0
    %3344 = vmatpush1.bf16.msra.mxu0 0
    %3345 = vmatprep.subr.bf16.mxu0 0
    %3346 = vmatpush1.bf16.msra.mxu0 0
    %3347 = vmatprep.subr.bf16.mxu0 0
    %3348 = vmatpush1.bf16.msra.mxu0 0
    %3349 = vmatprep.subr.bf16.mxu0 0
    %3350 = vmatpush1.bf16.msra.mxu0 0
    %3351 = vmatprep.mubr.bf16.mxu0 0
    %3352 = vmatmul.mubr.bf16.gmra.mrb[0].mxu0 %v3216
    %v3353 = vpop.f32.mrb[0].mxu0
    %v3354 = vadd.f32 %v3269, %v3353
    %v3355 = vpop.f32.mrb[0].mxu0
    %v3356 = vpop.f32.mrb[0].mxu0
    %v3357 = vadd.f32 %v3269, %v3356
    %v3358 = vpop.f32.mrb[0].mxu0
    %3359 = vmatprep.mubr.bf16.mxu0 0
    %3360 = vmatmul.mubr.bf16.gmra.mrb[0].mxu0 %v3217
    %v3361 = vpop.f32.mrb[0].mxu0
    %v3362 = vadd.f32 %v3269, %v3361
    %v3363 = vpop.f32.mrb[0].mxu0
    %v3364 = vpop.f32.mrb[0].mxu0
    %v3365 = vadd.f32 %v3269, %v3364
    %v3366 = vpop.f32.mrb[0].mxu0
    %3367 = vmatprep.mubr.bf16.mxu0 0
    %3368 = vmatmul.mubr.bf16.gmra.mrb[0].mxu0 %v3218
    %v3369 = vpop.f32.mrb[0].mxu0
    %v3370 = vadd.f32 %v3269, %v3369
    %v3371 = vpop.f32.mrb[0].mxu0
    %v3372 = vpop.f32.mrb[0].mxu0
    %v3373 = vadd.f32 %v3269, %v3372
    %v3374 = vpop.f32.mrb[0].mxu0
    %3375 = vmatprep.mubr.bf16.mxu0 0
    %3376 = vmatmul.mubr.bf16.gmra.mrb[0].mxu0 %v3219
    %v3377 = vpop.f32.mrb[0].mxu0
    %v3378 = vadd.f32 %v3269, %v3377
    %v3379 = vpop.f32.mrb[0].mxu0
    %v3380 = vpop.f32.mrb[0].mxu0
    %v3381 = vadd.f32 %v3269, %v3380
    %v3382 = vpop.f32.mrb[0].mxu0
    %3383 = vmatprep.mubr.bf16.mxu0 0
    %3384 = vmatmul.mubr.bf16.gmra.mrb[0].mxu0 %v3220
    %v3385 = vpop.f32.mrb[0].mxu0
    %v3386 = vadd.f32 %v3269, %v3385
    %v3387 = vpop.f32.mrb[0].mxu0
    %v3388 = vpop.f32.mrb[0].mxu0
    %v3389 = vadd.f32 %v3269, %v3388
    %v3390 = vpop.f32.mrb[0].mxu0
    %3391 = vmatprep.mubr.bf16.mxu0 0
    %3392 = vmatmul.mubr.bf16.gmra.mrb[0].mxu0 %v3221
    %v3393 = vpop.f32.mrb[0].mxu0
    %v3394 = vadd.f32 %v3269, %v3393
    %v3395 = vpop.f32.mrb[0].mxu0
    %v3396 = vpop.f32.mrb[0].mxu0
    %v3397 = vadd.f32 %v3269, %v3396
    %v3398 = vpop.f32.mrb[0].mxu0
    %3399 = vmatprep.mubr.bf16.mxu0 0
    %3400 = vmatmul.mubr.bf16.gmra.mrb[0].mxu0 %v3222
    %v3401 = vpop.f32.mrb[0].mxu0
    %v3402 = vadd.f32 %v3269, %v3401
    %v3403 = vpop.f32.mrb[0].mxu0
    %v3404 = vpop.f32.mrb[0].mxu0
    %v3405 = vadd.f32 %v3269, %v3404
    %v3406 = vpop.f32.mrb[0].mxu0
    %3407 = vmatprep.mubr.bf16.mxu0 0
    %3408 = vmatmul.mubr.bf16.gmra.mrb[0].mxu0 %v3223
    %v3409 = vpop.f32.mrb[0].mxu0
    %v3410 = vadd.f32 %v3269, %v3409
    %v3411 = vpop.f32.mrb[0].mxu0
    %v3412 = vpop.f32.mrb[0].mxu0
    %v3413 = vadd.f32 %v3269, %v3412
    %v3414 = vpop.f32.mrb[0].mxu0
    %3415 = vmatprep.mubr.bf16.mxu0 0
    %3416 = vmatmul.mubr.bf16.gmra.mrb[0].mxu0 %v3224
    %v3417 = vpop.f32.mrb[0].mxu0
    %v3418 = vadd.f32 %v3269, %v3417
    %v3419 = vpop.f32.mrb[0].mxu0
    %v3420 = vpop.f32.mrb[0].mxu0
    %v3421 = vadd.f32 %v3269, %v3420
    %v3422 = vpop.f32.mrb[0].mxu0
    %3423 = vmatprep.mubr.bf16.mxu0 0
    %3424 = vmatmul.mubr.bf16.gmra.mrb[0].mxu0 %v3225
    %v3425 = vpop.f32.mrb[0].mxu0
    %v3426 = vadd.f32 %v3269, %v3425
    %v3427 = vpop.f32.mrb[0].mxu0
    %v3428 = vpop.f32.mrb[0].mxu0
    %v3429 = vadd.f32 %v3269, %v3428
    %v3430 = vpop.f32.mrb[0].mxu0
    %3431 = vmatprep.mubr.bf16.mxu0 0
    %3432 = vmatmul.mubr.bf16.gmra.mrb[0].mxu0 %v3226
    %v3433 = vpop.f32.mrb[0].mxu0
    %v3434 = vadd.f32 %v3269, %v3433
    %v3435 = vpop.f32.mrb[0].mxu0
    %v3436 = vpop.f32.mrb[0].mxu0
    %v3437 = vadd.f32 %v3269, %v3436
    %v3438 = vpop.f32.mrb[0].mxu0
    %3439 = vmatprep.mubr.bf16.mxu0 0
    %3440 = vmatmul.mubr.bf16.gmra.mrb[0].mxu0 %v3227
    %v3441 = vpop.f32.mrb[0].mxu0
    %v3442 = vadd.f32 %v3269, %v3441
    %v3443 = vpop.f32.mrb[0].mxu0
    %v3444 = vpop.f32.mrb[0].mxu0
    %v3445 = vadd.f32 %v3269, %v3444
    %v3446 = vpop.f32.mrb[0].mxu0
    %3447 = vmatprep.mubr.bf16.mxu0 0
    %3448 = vmatmul.mubr.bf16.gmra.mrb[0].mxu0 %v3228
    %v3449 = vpop.f32.mrb[0].mxu0
    %v3450 = vadd.f32 %v3269, %v3449
    %v3451 = vpop.f32.mrb[0].mxu0
    %v3452 = vpop.f32.mrb[0].mxu0
    %v3453 = vadd.f32 %v3269, %v3452
    %v3454 = vpop.f32.mrb[0].mxu0
    %3455 = vmatprep.mubr.bf16.mxu0 0
    %3456 = vmatmul.mubr.bf16.gmra.mrb[0].mxu0 %v3229
    %v3457 = vpop.f32.mrb[0].mxu0
    %v3458 = vadd.f32 %v3269, %v3457
    %v3459 = vpop.f32.mrb[0].mxu0
    %v3460 = vpop.f32.mrb[0].mxu0
    %v3461 = vadd.f32 %v3269, %v3460
    %v3462 = vpop.f32.mrb[0].mxu0
    %3463 = vmatprep.mubr.bf16.mxu0 0
    %3464 = vmatmul.mubr.bf16.gmra.mrb[0].mxu0 %v3230
    %v3465 = vpop.f32.mrb[0].mxu0
    %v3466 = vadd.f32 %v3269, %v3465
    %v3467 = vpop.f32.mrb[0].mxu0
    %v3468 = vpop.f32.mrb[0].mxu0
    %v3469 = vadd.f32 %v3269, %v3468
    %v3470 = vpop.f32.mrb[0].mxu0
    %3471 = vmatprep.mubr.bf16.mxu0 0
    %3472 = vmatmul.mubr.bf16.gmra.mrb[0].mxu0 %v3231
    %v3473 = vpop.f32.mrb[0].mxu0
    %v3474 = vadd.f32 %v3269, %v3473
    %v3475 = vpop.f32.mrb[0].mxu0
    %v3476 = vpop.f32.mrb[0].mxu0
    %v3477 = vadd.f32 %v3269, %v3476
    %v3478 = vpop.f32.mrb[0].mxu0
    %3479 = vmatprep.mubr.bf16.mxu0 0
    %3480 = vmatmul.mubr.bf16.gmra.mrb[0].mxu0 %v3232
    %v3481 = vpop.f32.mrb[0].mxu0
    %v3482 = vadd.f32 %v3269, %v3481
    %v3483 = vpop.f32.mrb[0].mxu0
    %v3484 = vpop.f32.mrb[0].mxu0
    %v3485 = vadd.f32 %v3269, %v3484
    %v3486 = vpop.f32.mrb[0].mxu0
    %3487 = vmatprep.mubr.bf16.mxu0 0
    %3488 = vmatmul.mubr.bf16.gmra.mrb[0].mxu0 %v3233
    %v3489 = vpop.f32.mrb[0].mxu0
    %v3490 = vadd.f32 %v3269, %v3489
    %v3491 = vpop.f32.mrb[0].mxu0
    %v3492 = vpop.f32.mrb[0].mxu0
    %v3493 = vadd.f32 %v3269, %v3492
    %v3494 = vpop.f32.mrb[0].mxu0
    %3495 = vmatprep.mubr.bf16.mxu0 0
    %3496 = vmatmul.mubr.bf16.gmra.mrb[0].mxu0 %v3234
    %v3497 = vpop.f32.mrb[0].mxu0
    %v3498 = vadd.f32 %v3269, %v3497
    %v3499 = vpop.f32.mrb[0].mxu0
    %v3500 = vpop.f32.mrb[0].mxu0
    %v3501 = vadd.f32 %v3269, %v3500
    %v3502 = vpop.f32.mrb[0].mxu0
    %3503 = vmatprep.mubr.bf16.mxu0 0
    %3504 = vmatmul.mubr.bf16.gmra.mrb[0].mxu0 %v3235
    %v3505 = vpop.f32.mrb[0].mxu0
    %v3506 = vadd.f32 %v3269, %v3505
    %v3507 = vpop.f32.mrb[0].mxu0
    %v3508 = vpop.f32.mrb[0].mxu0
    %v3509 = vadd.f32 %v3269, %v3508
    %v3510 = vpop.f32.mrb[0].mxu0
    %3511 = vmatprep.mubr.bf16.mxu0 0
    %3512 = vmatmul.mubr.bf16.gmra.mrb[0].mxu0 %v3236
    %v3513 = vpop.f32.mrb[0].mxu0
    %v3514 = vadd.f32 %v3269, %v3513
    %v3515 = vpop.f32.mrb[0].mxu0
    %v3516 = vpop.f32.mrb[0].mxu0
    %v3517 = vadd.f32 %v3269, %v3516
    %v3518 = vpop.f32.mrb[0].mxu0
    %3519 = vmatprep.mubr.bf16.mxu0 0
    %3520 = vmatmul.mubr.bf16.gmra.mrb[0].mxu0 %v3237
    %v3521 = vpop.f32.mrb[0].mxu0
    %v3522 = vadd.f32 %v3269, %v3521
    %v3523 = vpop.f32.mrb[0].mxu0
    %v3524 = vpop.f32.mrb[0].mxu0
    %v3525 = vadd.f32 %v3269, %v3524
    %v3526 = vpop.f32.mrb[0].mxu0
    %3527 = vmatprep.mubr.bf16.mxu0 0
    %3528 = vmatmul.mubr.bf16.gmra.mrb[0].mxu0 %v3238
    %v3529 = vpop.f32.mrb[0].mxu0
    %v3530 = vadd.f32 %v3269, %v3529
    %v3531 = vpop.f32.mrb[0].mxu0
    %v3532 = vpop.f32.mrb[0].mxu0
    %v3533 = vadd.f32 %v3269, %v3532
    %v3534 = vpop.f32.mrb[0].mxu0
    %3535 = vmatprep.mubr.bf16.mxu0 0
    %3536 = vmatmul.mubr.bf16.gmra.mrb[0].mxu0 %v3239
    %v3537 = vpop.f32.mrb[0].mxu0
    %v3538 = vadd.f32 %v3269, %v3537
    %v3539 = vpop.f32.mrb[0].mxu0
    %v3540 = vpop.f32.mrb[0].mxu0
    %v3541 = vadd.f32 %v3269, %v3540
    %v3542 = vpop.f32.mrb[0].mxu0
    %3543 = vmatprep.mubr.bf16.mxu0 0
    %3544 = vmatmul.mubr.bf16.gmra.mrb[0].mxu0 %v3240
    %v3545 = vpop.f32.mrb[0].mxu0
    %v3546 = vadd.f32 %v3269, %v3545
    %v3547 = vpop.f32.mrb[0].mxu0
    %v3548 = vpop.f32.mrb[0].mxu0
    %v3549 = vadd.f32 %v3269, %v3548
    %v3550 = vpop.f32.mrb[0].mxu0
    %3551 = vmatprep.mubr.bf16.mxu0 0
    %3552 = vmatmul.mubr.bf16.gmra.mrb[0].mxu0 %v3241
    %v3553 = vpop.f32.mrb[0].mxu0
    %v3554 = vadd.f32 %v3269, %v3553
    %v3555 = vpop.f32.mrb[0].mxu0
    %v3556 = vpop.f32.mrb[0].mxu0
    %v3557 = vadd.f32 %v3269, %v3556
    %v3558 = vpop.f32.mrb[0].mxu0
    %3559 = vmatprep.mubr.bf16.mxu0 0
    %3560 = vmatmul.mubr.bf16.gmra.mrb[0].mxu0 %v3242
    %v3561 = vpop.f32.mrb[0].mxu0
    %v3562 = vadd.f32 %v3269, %v3561
    %v3563 = vpop.f32.mrb[0].mxu0
    %v3564 = vpop.f32.mrb[0].mxu0
    %v3565 = vadd.f32 %v3269, %v3564
    %v3566 = vpop.f32.mrb[0].mxu0
    %3567 = vmatprep.mubr.bf16.mxu0 0
    %3568 = vmatmul.mubr.bf16.gmra.mrb[0].mxu0 %v3243
    %v3569 = vpop.f32.mrb[0].mxu0
    %v3570 = vadd.f32 %v3269, %v3569
    %v3571 = vpop.f32.mrb[0].mxu0
    %v3572 = vpop.f32.mrb[0].mxu0
    %v3573 = vadd.f32 %v3269, %v3572
    %v3574 = vpop.f32.mrb[0].mxu0
    %3575 = vmatprep.mubr.bf16.mxu0 0
    %3576 = vmatmul.mubr.bf16.gmra.mrb[0].mxu0 %v3244
    %v3577 = vpop.f32.mrb[0].mxu0
    %v3578 = vadd.f32 %v3269, %v3577
    %v3579 = vpop.f32.mrb[0].mxu0
    %v3580 = vpop.f32.mrb[0].mxu0
    %v3581 = vadd.f32 %v3269, %v3580
    %v3582 = vpop.f32.mrb[0].mxu0
    %3583 = vmatprep.mubr.bf16.mxu0 0
    %3584 = vmatmul.mubr.bf16.gmra.mrb[0].mxu0 %v3245
    %v3585 = vpop.f32.mrb[0].mxu0
    %v3586 = vadd.f32 %v3269, %v3585
    %v3587 = vpop.f32.mrb[0].mxu0
    %v3588 = vpop.f32.mrb[0].mxu0
    %v3589 = vadd.f32 %v3269, %v3588
    %v3590 = vpop.f32.mrb[0].mxu0
    %3591 = vmatprep.mubr.bf16.mxu0 0
    %3592 = vmatmul.mubr.bf16.gmra.mrb[0].mxu0 %v3246
    %v3593 = vpop.f32.mrb[0].mxu0
    %v3594 = vadd.f32 %v3269, %v3593
    %v3595 = vpop.f32.mrb[0].mxu0
    %v3596 = vpop.f32.mrb[0].mxu0
    %v3597 = vadd.f32 %v3269, %v3596
    %v3598 = vpop.f32.mrb[0].mxu0
    %3599 = vmatprep.mubr.bf16.mxu0 0
    %3600 = vmatmul.mubr.bf16.gmra.mrb[0].mxu0 %v3247
    %v3601 = vpop.f32.mrb[0].mxu0
    %v3602 = vadd.f32 %v3269, %v3601
    %v3603 = vpop.f32.mrb[0].mxu0
    %v3604 = vpop.f32.mrb[0].mxu0
    %v3605 = vadd.f32 %v3269, %v3604
    %v3606 = vpop.f32.mrb[0].mxu0
    %3607 = vdwg.mxu0
    %3608 = vmatprep.subr.mxu0 0.0
    %3609 = vmatpush1.msra.mxu0 %v3354
    %3610 = vmatprep.subr.mxu0 0.0
    %3611 = vmatpush1.msra.mxu0 %v3357
    %3612 = vmatprep.subr.mxu0 0.0
    %3613 = vmatpush1.msra.mxu0 %v3362
    %3614 = vmatprep.subr.mxu0 0.0
    %3615 = vmatpush1.msra.mxu0 %v3365
    %3616 = vmatprep.subr.mxu0 0.0
    %3617 = vmatpush1.msra.mxu0 %v3370
    %3618 = vmatprep.subr.mxu0 0.0
    %3619 = vmatpush1.msra.mxu0 %v3373
    %3620 = vmatprep.subr.mxu0 0.0
    %3621 = vmatpush1.msra.mxu0 %v3378
    %3622 = vmatprep.subr.mxu0 0.0
    %3623 = vmatpush1.msra.mxu0 %v3381
    %3624 = vmatprep.subr.mxu0 0.0
    %3625 = vmatpush1.msra.mxu0 %v3386
    %3626 = vmatprep.subr.mxu0 0.0
    %3627 = vmatpush1.msra.mxu0 %v3389
    %3628 = vmatprep.subr.mxu0 0.0
    %3629 = vmatpush1.msra.mxu0 %v3394
    %3630 = vmatprep.subr.mxu0 0.0
    %3631 = vmatpush1.msra.mxu0 %v3397
    %3632 = vmatprep.subr.mxu0 0.0
    %3633 = vmatpush1.msra.mxu0 %v3402
    %3634 = vmatprep.subr.mxu0 0.0
    %3635 = vmatpush1.msra.mxu0 %v3405
    %3636 = vmatprep.subr.mxu0 0.0
    %3637 = vmatpush1.msra.mxu0 %v3410
    %3638 = vmatprep.subr.mxu0 0.0
    %3639 = vmatpush1.msra.mxu0 %v3413
    %3640 = vmatprep.subr.mxu0 0.0
    %3641 = vmatpush1.msra.mxu0 %v3418
    %3642 = vmatprep.subr.mxu0 0.0
    %3643 = vmatpush1.msra.mxu0 %v3421
    %3644 = vmatprep.subr.mxu0 0.0
    %3645 = vmatpush1.msra.mxu0 %v3426
    %3646 = vmatprep.subr.mxu0 0.0
    %3647 = vmatpush1.msra.mxu0 %v3429
    %3648 = vmatprep.subr.mxu0 0.0
    %3649 = vmatpush1.msra.mxu0 %v3434
    %3650 = vmatprep.subr.mxu0 0.0
    %3651 = vmatpush1.msra.mxu0 %v3437
    %3652 = vmatprep.subr.mxu0 0.0
    %3653 = vmatpush1.msra.mxu0 %v3442
    %3654 = vmatprep.subr.mxu0 0.0
    %3655 = vmatpush1.msra.mxu0 %v3445
    %3656 = vmatprep.subr.mxu0 0.0
    %3657 = vmatpush1.msra.mxu0 %v3450
    %3658 = vmatprep.subr.mxu0 0.0
    %3659 = vmatpush1.msra.mxu0 %v3453
    %3660 = vmatprep.subr.mxu0 0.0
    %3661 = vmatpush1.msra.mxu0 %v3458
    %3662 = vmatprep.subr.mxu0 0.0
    %3663 = vmatpush1.msra.mxu0 %v3461
    %3664 = vmatprep.subr.mxu0 0.0
    %3665 = vmatpush1.msra.mxu0 %v3466
    %3666 = vmatprep.subr.mxu0 0.0
    %3667 = vmatpush1.msra.mxu0 %v3469
    %3668 = vmatprep.subr.mxu0 0.0
    %3669 = vmatpush1.msra.mxu0 %v3474
    %3670 = vmatprep.subr.mxu0 0.0
    %3671 = vmatpush1.msra.mxu0 %v3477
    %3672 = vmatprep.mubr.f32.mxu0 1.0
    %3673 = vmatmul.mubr.f32.gmra.mrb[0].mxu0 1.0
    %v3674 = vpop.f32.mrb[0].mxu0
    %v3675 = vadd.f32 0.0, %v3674
    %v3676 = vpop.f32.mrb[0].mxu0
    %3677 = vdwg.mxu0
    %3678 = vmatprep.subr.mxu0 0.0
    %3679 = vmatpush1.msra.mxu0 %v3482
    %3680 = vmatprep.subr.mxu0 0.0
    %3681 = vmatpush1.msra.mxu0 %v3485
    %3682 = vmatprep.subr.mxu0 0.0
    %3683 = vmatpush1.msra.mxu0 %v3490
    %3684 = vmatprep.subr.mxu0 0.0
    %3685 = vmatpush1.msra.mxu0 %v3493
    %3686 = vmatprep.subr.mxu0 0.0
    %3687 = vmatpush1.msra.mxu0 %v3498
    %3688 = vmatprep.subr.mxu0 0.0
    %3689 = vmatpush1.msra.mxu0 %v3501
    %3690 = vmatprep.subr.mxu0 0.0
    %3691 = vmatpush1.msra.mxu0 %v3506
    %3692 = vmatprep.subr.mxu0 0.0
    %3693 = vmatpush1.msra.mxu0 %v3509
    %3694 = vmatprep.subr.mxu0 0.0
    %3695 = vmatpush1.msra.mxu0 %v3514
    %3696 = vmatprep.subr.mxu0 0.0
    %3697 = vmatpush1.msra.mxu0 %v3517
    %3698 = vmatprep.subr.mxu0 0.0
    %3699 = vmatpush1.msra.mxu0 %v3522
    %3700 = vmatprep.subr.mxu0 0.0
    %3701 = vmatpush1.msra.mxu0 %v3525
    %3702 = vmatprep.subr.mxu0 0.0
    %3703 = vmatpush1.msra.mxu0 %v3530
    %3704 = vmatprep.subr.mxu0 0.0
    %3705 = vmatpush1.msra.mxu0 %v3533
    %3706 = vmatprep.subr.mxu0 0.0
    %3707 = vmatpush1.msra.mxu0 %v3538
    %3708 = vmatprep.subr.mxu0 0.0
    %3709 = vmatpush1.msra.mxu0 %v3541
    %3710 = vmatprep.subr.mxu0 0.0
    %3711 = vmatpush1.msra.mxu0 %v3546
    %3712 = vmatprep.subr.mxu0 0.0
    %3713 = vmatpush1.msra.mxu0 %v3549
    %3714 = vmatprep.subr.mxu0 0.0
    %3715 = vmatpush1.msra.mxu0 %v3554
    %3716 = vmatprep.subr.mxu0 0.0
    %3717 = vmatpush1.msra.mxu0 %v3557
    %3718 = vmatprep.subr.mxu0 0.0
    %3719 = vmatpush1.msra.mxu0 %v3562
    %3720 = vmatprep.subr.mxu0 0.0
    %3721 = vmatpush1.msra.mxu0 %v3565
    %3722 = vmatprep.subr.mxu0 0.0
    %3723 = vmatpush1.msra.mxu0 %v3570
    %3724 = vmatprep.subr.mxu0 0.0
    %3725 = vmatpush1.msra.mxu0 %v3573
    %3726 = vmatprep.subr.mxu0 0.0
    %3727 = vmatpush1.msra.mxu0 %v3578
    %3728 = vmatprep.subr.mxu0 0.0
    %3729 = vmatpush1.msra.mxu0 %v3581
    %3730 = vmatprep.subr.mxu0 0.0
    %3731 = vmatpush1.msra.mxu0 %v3586
    %3732 = vmatprep.subr.mxu0 0.0
    %3733 = vmatpush1.msra.mxu0 %v3589
    %3734 = vmatprep.subr.mxu0 0.0
    %3735 = vmatpush1.msra.mxu0 %v3594
    %3736 = vmatprep.subr.mxu0 0.0
    %3737 = vmatpush1.msra.mxu0 %v3597
    %3738 = vmatprep.subr.mxu0 0.0
    %3739 = vmatpush1.msra.mxu0 %v3602
    %3740 = vmatprep.subr.mxu0 0.0
    %3741 = vmatpush1.msra.mxu0 %v3605
    %3742 = vmatprep.mubr.f32.mxu0 1.0
    %3743 = vmatmul.mubr.f32.gmra.mrb[0].mxu0 1.0
    %v3744 = vpop.f32.mrb[0].mxu0
    %v3745 = vadd.f32 %v3675, %v3744
    %v3746 = vpop.f32.mrb[0].mxu0
    %3747 = vdwg.mxu0
    %v3748 = vmul.f32 %v3745, 0.001953125
    %v3749 = vlaneseq
    %v3750 = vshrl.u32 %v3749, 7
    %v3751 = vsub.s32 0, %v3750
    %v3752 = vrot.slane %v3748, %v3751
    %v3753 = vsub.f32 %v3354, %v3752
    %v3754 = vsub.f32 %v3357, %v3752
    %v3755 = vsub.f32 %v3362, %v3752
    %v3756 = vsub.f32 %v3365, %v3752
    %v3757 = vsub.f32 %v3370, %v3752
    %v3758 = vsub.f32 %v3373, %v3752
    %v3759 = vsub.f32 %v3378, %v3752
    %v3760 = vsub.f32 %v3381, %v3752
    %v3761 = vsub.f32 %v3386, %v3752
    %v3762 = vsub.f32 %v3389, %v3752
    %v3763 = vsub.f32 %v3394, %v3752
    %v3764 = vsub.f32 %v3397, %v3752
    %v3765 = vsub.f32 %v3402, %v3752
    %v3766 = vsub.f32 %v3405, %v3752
    %v3767 = vsub.f32 %v3410, %v3752
    %v3768 = vsub.f32 %v3413, %v3752
    %v3769 = vsub.f32 %v3418, %v3752
    %v3770 = vsub.f32 %v3421, %v3752
    %v3771 = vsub.f32 %v3426, %v3752
    %v3772 = vsub.f32 %v3429, %v3752
    %v3773 = vsub.f32 %v3434, %v3752
    %v3774 = vsub.f32 %v3437, %v3752
    %v3775 = vsub.f32 %v3442, %v3752
    %v3776 = vsub.f32 %v3445, %v3752
    %v3777 = vsub.f32 %v3450, %v3752
    %v3778 = vsub.f32 %v3453, %v3752
    %v3779 = vsub.f32 %v3458, %v3752
    %v3780 = vsub.f32 %v3461, %v3752
    %v3781 = vsub.f32 %v3466, %v3752
    %v3782 = vsub.f32 %v3469, %v3752
    %v3783 = vsub.f32 %v3474, %v3752
    %v3784 = vsub.f32 %v3477, %v3752
    %v3785 = vsub.f32 %v3482, %v3752
    %v3786 = vsub.f32 %v3485, %v3752
    %v3787 = vsub.f32 %v3490, %v3752
    %v3788 = vsub.f32 %v3493, %v3752
    %v3789 = vsub.f32 %v3498, %v3752
    %v3790 = vsub.f32 %v3501, %v3752
    %v3791 = vsub.f32 %v3506, %v3752
    %v3792 = vsub.f32 %v3509, %v3752
    %v3793 = vsub.f32 %v3514, %v3752
    %v3794 = vsub.f32 %v3517, %v3752
    %v3795 = vsub.f32 %v3522, %v3752
    %v3796 = vsub.f32 %v3525, %v3752
    %v3797 = vsub.f32 %v3530, %v3752
    %v3798 = vsub.f32 %v3533, %v3752
    %v3799 = vsub.f32 %v3538, %v3752
    %v3800 = vsub.f32 %v3541, %v3752
    %v3801 = vsub.f32 %v3546, %v3752
    %v3802 = vsub.f32 %v3549, %v3752
    %v3803 = vsub.f32 %v3554, %v3752
    %v3804 = vsub.f32 %v3557, %v3752
    %v3805 = vsub.f32 %v3562, %v3752
    %v3806 = vsub.f32 %v3565, %v3752
    %v3807 = vsub.f32 %v3570, %v3752
    %v3808 = vsub.f32 %v3573, %v3752
    %v3809 = vsub.f32 %v3578, %v3752
    %v3810 = vsub.f32 %v3581, %v3752
    %v3811 = vsub.f32 %v3586, %v3752
    %v3812 = vsub.f32 %v3589, %v3752
    %v3813 = vsub.f32 %v3594, %v3752
    %v3814 = vsub.f32 %v3597, %v3752
    %v3815 = vsub.f32 %v3602, %v3752
    %v3816 = vsub.f32 %v3605, %v3752
    %v3817 = vmul.f32 %v3753, %v3753
    %v3818 = vmul.f32 %v3754, %v3754
    %v3819 = vmul.f32 %v3755, %v3755
    %v3820 = vmul.f32 %v3756, %v3756
    %v3821 = vmul.f32 %v3757, %v3757
    %v3822 = vmul.f32 %v3758, %v3758
    %v3823 = vmul.f32 %v3759, %v3759
    %v3824 = vmul.f32 %v3760, %v3760
    %v3825 = vmul.f32 %v3761, %v3761
    %v3826 = vmul.f32 %v3762, %v3762
    %v3827 = vmul.f32 %v3763, %v3763
    %v3828 = vmul.f32 %v3764, %v3764
    %v3829 = vmul.f32 %v3765, %v3765
    %v3830 = vmul.f32 %v3766, %v3766
    %v3831 = vmul.f32 %v3767, %v3767
    %v3832 = vmul.f32 %v3768, %v3768
    %v3833 = vmul.f32 %v3769, %v3769
    %v3834 = vmul.f32 %v3770, %v3770
    %v3835 = vmul.f32 %v3771, %v3771
    %v3836 = vmul.f32 %v3772, %v3772
    %v3837 = vmul.f32 %v3773, %v3773
    %v3838 = vmul.f32 %v3774, %v3774
    %v3839 = vmul.f32 %v3775, %v3775
    %v3840 = vmul.f32 %v3776, %v3776
    %v3841 = vmul.f32 %v3777, %v3777
    %v3842 = vmul.f32 %v3778, %v3778
    %v3843 = vmul.f32 %v3779, %v3779
    %v3844 = vmul.f32 %v3780, %v3780
    %v3845 = vmul.f32 %v3781, %v3781
    %v3846 = vmul.f32 %v3782, %v3782
    %v3847 = vmul.f32 %v3783, %v3783
    %v3848 = vmul.f32 %v3784, %v3784
    %v3849 = vmul.f32 %v3785, %v3785
    %v3850 = vmul.f32 %v3786, %v3786
    %v3851 = vmul.f32 %v3787, %v3787
    %v3852 = vmul.f32 %v3788, %v3788
    %v3853 = vmul.f32 %v3789, %v3789
    %v3854 = vmul.f32 %v3790, %v3790
    %v3855 = vmul.f32 %v3791, %v3791
    %v3856 = vmul.f32 %v3792, %v3792
    %v3857 = vmul.f32 %v3793, %v3793
    %v3858 = vmul.f32 %v3794, %v3794
    %v3859 = vmul.f32 %v3795, %v3795
    %v3860 = vmul.f32 %v3796, %v3796
    %v3861 = vmul.f32 %v3797, %v3797
    %v3862 = vmul.f32 %v3798, %v3798
    %v3863 = vmul.f32 %v3799, %v3799
    %v3864 = vmul.f32 %v3800, %v3800
    %v3865 = vmul.f32 %v3801, %v3801
    %v3866 = vmul.f32 %v3802, %v3802
    %v3867 = vmul.f32 %v3803, %v3803
    %v3868 = vmul.f32 %v3804, %v3804
    %v3869 = vmul.f32 %v3805, %v3805
    %v3870 = vmul.f32 %v3806, %v3806
    %v3871 = vmul.f32 %v3807, %v3807
    %v3872 = vmul.f32 %v3808, %v3808
    %v3873 = vmul.f32 %v3809, %v3809
    %v3874 = vmul.f32 %v3810, %v3810
    %v3875 = vmul.f32 %v3811, %v3811
    %v3876 = vmul.f32 %v3812, %v3812
    %v3877 = vmul.f32 %v3813, %v3813
    %v3878 = vmul.f32 %v3814, %v3814
    %v3879 = vmul.f32 %v3815, %v3815
    %v3880 = vmul.f32 %v3816, %v3816
    %3881 = vmatprep.subr.mxu0 0.0
    %3882 = vmatpush1.msra.mxu0 %v3817
    %3883 = vmatprep.subr.mxu0 0.0
    %3884 = vmatpush1.msra.mxu0 %v3818
    %3885 = vmatprep.subr.mxu0 0.0
    %3886 = vmatpush1.msra.mxu0 %v3819
    %3887 = vmatprep.subr.mxu0 0.0
    %3888 = vmatpush1.msra.mxu0 %v3820
    %3889 = vmatprep.subr.mxu0 0.0
    %3890 = vmatpush1.msra.mxu0 %v3821
    %3891 = vmatprep.subr.mxu0 0.0
    %3892 = vmatpush1.msra.mxu0 %v3822
    %3893 = vmatprep.subr.mxu0 0.0
    %3894 = vmatpush1.msra.mxu0 %v3823
    %3895 = vmatprep.subr.mxu0 0.0
    %3896 = vmatpush1.msra.mxu0 %v3824
    %3897 = vmatprep.subr.mxu0 0.0
    %3898 = vmatpush1.msra.mxu0 %v3825
    %3899 = vmatprep.subr.mxu0 0.0
    %3900 = vmatpush1.msra.mxu0 %v3826
    %3901 = vmatprep.subr.mxu0 0.0
    %3902 = vmatpush1.msra.mxu0 %v3827
    %3903 = vmatprep.subr.mxu0 0.0
    %3904 = vmatpush1.msra.mxu0 %v3828
    %3905 = vmatprep.subr.mxu0 0.0
    %3906 = vmatpush1.msra.mxu0 %v3829
    %3907 = vmatprep.subr.mxu0 0.0
    %3908 = vmatpush1.msra.mxu0 %v3830
    %3909 = vmatprep.subr.mxu0 0.0
    %3910 = vmatpush1.msra.mxu0 %v3831
    %3911 = vmatprep.subr.mxu0 0.0
    %3912 = vmatpush1.msra.mxu0 %v3832
    %3913 = vmatprep.subr.mxu0 0.0
    %3914 = vmatpush1.msra.mxu0 %v3833
    %3915 = vmatprep.subr.mxu0 0.0
    %3916 = vmatpush1.msra.mxu0 %v3834
    %3917 = vmatprep.subr.mxu0 0.0
    %3918 = vmatpush1.msra.mxu0 %v3835
    %3919 = vmatprep.subr.mxu0 0.0
    %3920 = vmatpush1.msra.mxu0 %v3836
    %3921 = vmatprep.subr.mxu0 0.0
    %3922 = vmatpush1.msra.mxu0 %v3837
    %3923 = vmatprep.subr.mxu0 0.0
    %3924 = vmatpush1.msra.mxu0 %v3838
    %3925 = vmatprep.subr.mxu0 0.0
    %3926 = vmatpush1.msra.mxu0 %v3839
    %3927 = vmatprep.subr.mxu0 0.0
    %3928 = vmatpush1.msra.mxu0 %v3840
    %3929 = vmatprep.subr.mxu0 0.0
    %3930 = vmatpush1.msra.mxu0 %v3841
    %3931 = vmatprep.subr.mxu0 0.0
    %3932 = vmatpush1.msra.mxu0 %v3842
    %3933 = vmatprep.subr.mxu0 0.0
    %3934 = vmatpush1.msra.mxu0 %v3843
    %3935 = vmatprep.subr.mxu0 0.0
    %3936 = vmatpush1.msra.mxu0 %v3844
    %3937 = vmatprep.subr.mxu0 0.0
    %3938 = vmatpush1.msra.mxu0 %v3845
    %3939 = vmatprep.subr.mxu0 0.0
    %3940 = vmatpush1.msra.mxu0 %v3846
    %3941 = vmatprep.subr.mxu0 0.0
    %3942 = vmatpush1.msra.mxu0 %v3847
    %3943 = vmatprep.subr.mxu0 0.0
    %3944 = vmatpush1.msra.mxu0 %v3848
    %3945 = vmatprep.mubr.f32.mxu0 1.0
    %3946 = vmatmul.mubr.f32.gmra.mrb[0].mxu0 1.0
    %v3947 = vpop.f32.mrb[0].mxu0
    %v3948 = vadd.f32 0.0, %v3947
    %v3949 = vpop.f32.mrb[0].mxu0
    %3950 = vdwg.mxu0
    %3951 = vmatprep.subr.mxu0 0.0
    %3952 = vmatpush1.msra.mxu0 %v3849
    %3953 = vmatprep.subr.mxu0 0.0
    %3954 = vmatpush1.msra.mxu0 %v3850
    %3955 = vmatprep.subr.mxu0 0.0
    %3956 = vmatpush1.msra.mxu0 %v3851
    %3957 = vmatprep.subr.mxu0 0.0
    %3958 = vmatpush1.msra.mxu0 %v3852
    %3959 = vmatprep.subr.mxu0 0.0
    %3960 = vmatpush1.msra.mxu0 %v3853
    %3961 = vmatprep.subr.mxu0 0.0
    %3962 = vmatpush1.msra.mxu0 %v3854
    %3963 = vmatprep.subr.mxu0 0.0
    %3964 = vmatpush1.msra.mxu0 %v3855
    %3965 = vmatprep.subr.mxu0 0.0
    %3966 = vmatpush1.msra.mxu0 %v3856
    %3967 = vmatprep.subr.mxu0 0.0
    %3968 = vmatpush1.msra.mxu0 %v3857
    %3969 = vmatprep.subr.mxu0 0.0
    %3970 = vmatpush1.msra.mxu0 %v3858
    %3971 = vmatprep.subr.mxu0 0.0
    %3972 = vmatpush1.msra.mxu0 %v3859
    %3973 = vmatprep.subr.mxu0 0.0
    %3974 = vmatpush1.msra.mxu0 %v3860
    %3975 = vmatprep.subr.mxu0 0.0
    %3976 = vmatpush1.msra.mxu0 %v3861
    %3977 = vmatprep.subr.mxu0 0.0
    %3978 = vmatpush1.msra.mxu0 %v3862
    %3979 = vmatprep.subr.mxu0 0.0
    %3980 = vmatpush1.msra.mxu0 %v3863
    %3981 = vmatprep.subr.mxu0 0.0
    %3982 = vmatpush1.msra.mxu0 %v3864
    %3983 = vmatprep.subr.mxu0 0.0
    %3984 = vmatpush1.msra.mxu0 %v3865
    %3985 = vmatprep.subr.mxu0 0.0
    %3986 = vmatpush1.msra.mxu0 %v3866
    %3987 = vmatprep.subr.mxu0 0.0
    %3988 = vmatpush1.msra.mxu0 %v3867
    %3989 = vmatprep.subr.mxu0 0.0
    %3990 = vmatpush1.msra.mxu0 %v3868
    %3991 = vmatprep.subr.mxu0 0.0
    %3992 = vmatpush1.msra.mxu0 %v3869
    %3993 = vmatprep.subr.mxu0 0.0
    %3994 = vmatpush1.msra.mxu0 %v3870
    %3995 = vmatprep.subr.mxu0 0.0
    %3996 = vmatpush1.msra.mxu0 %v3871
    %3997 = vmatprep.subr.mxu0 0.0
    %3998 = vmatpush1.msra.mxu0 %v3872
    %3999 = vmatprep.subr.mxu0 0.0
    %4000 = vmatpush1.msra.mxu0 %v3873
    %4001 = vmatprep.subr.mxu0 0.0
    %4002 = vmatpush1.msra.mxu0 %v3874
    %4003 = vmatprep.subr.mxu0 0.0
    %4004 = vmatpush1.msra.mxu0 %v3875
    %4005 = vmatprep.subr.mxu0 0.0
    %4006 = vmatpush1.msra.mxu0 %v3876
    %4007 = vmatprep.subr.mxu0 0.0
    %4008 = vmatpush1.msra.mxu0 %v3877
    %4009 = vmatprep.subr.mxu0 0.0
    %4010 = vmatpush1.msra.mxu0 %v3878
    %4011 = vmatprep.subr.mxu0 0.0
    %4012 = vmatpush1.msra.mxu0 %v3879
    %4013 = vmatprep.subr.mxu0 0.0
    %4014 = vmatpush1.msra.mxu0 %v3880
    %4015 = vmatprep.mubr.f32.mxu0 1.0
    %4016 = vmatmul.mubr.f32.gmra.mrb[0].mxu0 1.0
    %v4017 = vpop.f32.mrb[0].mxu0
    %v4018 = vadd.f32 %v3948, %v4017
    %v4019 = vpop.f32.mrb[0].mxu0
    %4020 = vdwg.mxu0
    %v4021 = vmul.f32 %v4018, 0.001953125
    %v4022 = vld [vmem:[#allocation5 + $0x8] sm:$0x1]
    %v4023 = vadd.f32 %v4021, 1e-05
    %v4024 = vrsqrt.pop %v4023
    %v4025 = vmul.f32 %v4022, %v4024
    %v4027 = vlaneseq
    %v4028 = vshrl.u32 %v4027, 7
    %v4029 = vsub.s32 0, %v4028
    %v4030 = vrot.slane %v4025, %v4029
    %v4032 = vmul.f32 %v3753, %v4030
    %v4033 = vmul.f32 %v3754, %v4030
    %v4034 = vmul.f32 %v3755, %v4030
    %v4035 = vmul.f32 %v3756, %v4030
    %v4036 = vmul.f32 %v3757, %v4030
    %v4037 = vmul.f32 %v3758, %v4030
    %v4038 = vmul.f32 %v3759, %v4030
    %v4039 = vmul.f32 %v3760, %v4030
    %v4040 = vmul.f32 %v3761, %v4030
    %v4041 = vmul.f32 %v3762, %v4030
    %v4042 = vmul.f32 %v3763, %v4030
    %v4043 = vmul.f32 %v3764, %v4030
    %v4044 = vmul.f32 %v3765, %v4030
    %v4045 = vmul.f32 %v3766, %v4030
    %v4046 = vmul.f32 %v3767, %v4030
    %v4047 = vmul.f32 %v3768, %v4030
    %v4048 = vmul.f32 %v3769, %v4030
    %v4049 = vmul.f32 %v3770, %v4030
    %v4050 = vmul.f32 %v3771, %v4030
    %v4051 = vmul.f32 %v3772, %v4030
    %v4052 = vmul.f32 %v3773, %v4030
    %v4053 = vmul.f32 %v3774, %v4030
    %v4054 = vmul.f32 %v3775, %v4030
    %v4055 = vmul.f32 %v3776, %v4030
    %v4056 = vmul.f32 %v3777, %v4030
    %v4057 = vmul.f32 %v3778, %v4030
    %v4058 = vmul.f32 %v3779, %v4030
    %v4059 = vmul.f32 %v3780, %v4030
    %v4060 = vmul.f32 %v3781, %v4030
    %v4061 = vmul.f32 %v3782, %v4030
    %v4062 = vmul.f32 %v3783, %v4030
    %v4063 = vmul.f32 %v3784, %v4030
    %v4064 = vmul.f32 %v3785, %v4030
    %v4065 = vmul.f32 %v3786, %v4030
    %v4066 = vmul.f32 %v3787, %v4030
    %v4067 = vmul.f32 %v3788, %v4030
    %v4068 = vmul.f32 %v3789, %v4030
    %v4069 = vmul.f32 %v3790, %v4030
    %v4070 = vmul.f32 %v3791, %v4030
    %v4071 = vmul.f32 %v3792, %v4030
    %v4072 = vmul.f32 %v3793, %v4030
    %v4073 = vmul.f32 %v3794, %v4030
    %v4074 = vmul.f32 %v3795, %v4030
    %v4075 = vmul.f32 %v3796, %v4030
    %v4076 = vmul.f32 %v3797, %v4030
    %v4077 = vmul.f32 %v3798, %v4030
    %v4078 = vmul.f32 %v3799, %v4030
    %v4079 = vmul.f32 %v3800, %v4030
    %v4080 = vmul.f32 %v3801, %v4030
    %v4081 = vmul.f32 %v3802, %v4030
    %v4082 = vmul.f32 %v3803, %v4030
    %v4083 = vmul.f32 %v3804, %v4030
    %v4084 = vmul.f32 %v3805, %v4030
    %v4085 = vmul.f32 %v3806, %v4030
    %v4086 = vmul.f32 %v3807, %v4030
    %v4087 = vmul.f32 %v3808, %v4030
    %v4088 = vmul.f32 %v3809, %v4030
    %v4089 = vmul.f32 %v3810, %v4030
    %v4090 = vmul.f32 %v3811, %v4030
    %v4091 = vmul.f32 %v3812, %v4030
    %v4092 = vmul.f32 %v3813, %v4030
    %v4093 = vmul.f32 %v3814, %v4030
    %v4094 = vmul.f32 %v3815, %v4030
    %v4095 = vmul.f32 %v3816, %v4030
    %v4096 = vld [vmem:[#allocation5 + $0x9] sm:$0x1]
    %v4098 = vlaneseq
    %v4099 = vshrl.u32 %v4098, 7
    %v4100 = vsub.s32 0, %v4099
    %v4101 = vrot.slane %v4096, %v4100
    %v4103 = vadd.f32 %v4032, %v4101
    %v4104 = vadd.f32 %v4033, %v4101
    %v4105 = vadd.f32 %v4034, %v4101
    %v4106 = vadd.f32 %v4035, %v4101
    %v4107 = vadd.f32 %v4036, %v4101
    %v4108 = vadd.f32 %v4037, %v4101
    %v4109 = vadd.f32 %v4038, %v4101
    %v4110 = vadd.f32 %v4039, %v4101
    %v4111 = vadd.f32 %v4040, %v4101
    %v4112 = vadd.f32 %v4041, %v4101
    %v4113 = vadd.f32 %v4042, %v4101
    %v4114 = vadd.f32 %v4043, %v4101
    %v4115 = vadd.f32 %v4044, %v4101
    %v4116 = vadd.f32 %v4045, %v4101
    %v4117 = vadd.f32 %v4046, %v4101
    %v4118 = vadd.f32 %v4047, %v4101
    %v4119 = vadd.f32 %v4048, %v4101
    %v4120 = vadd.f32 %v4049, %v4101
    %v4121 = vadd.f32 %v4050, %v4101
    %v4122 = vadd.f32 %v4051, %v4101
    %v4123 = vadd.f32 %v4052, %v4101
    %v4124 = vadd.f32 %v4053, %v4101
    %v4125 = vadd.f32 %v4054, %v4101
    %v4126 = vadd.f32 %v4055, %v4101
    %v4127 = vadd.f32 %v4056, %v4101
    %v4128 = vadd.f32 %v4057, %v4101
    %v4129 = vadd.f32 %v4058, %v4101
    %v4130 = vadd.f32 %v4059, %v4101
    %v4131 = vadd.f32 %v4060, %v4101
    %v4132 = vadd.f32 %v4061, %v4101
    %v4133 = vadd.f32 %v4062, %v4101
    %v4134 = vadd.f32 %v4063, %v4101
    %v4135 = vadd.f32 %v4064, %v4101
    %v4136 = vadd.f32 %v4065, %v4101
    %v4137 = vadd.f32 %v4066, %v4101
    %v4138 = vadd.f32 %v4067, %v4101
    %v4139 = vadd.f32 %v4068, %v4101
    %v4140 = vadd.f32 %v4069, %v4101
    %v4141 = vadd.f32 %v4070, %v4101
    %v4142 = vadd.f32 %v4071, %v4101
    %v4143 = vadd.f32 %v4072, %v4101
    %v4144 = vadd.f32 %v4073, %v4101
    %v4145 = vadd.f32 %v4074, %v4101
    %v4146 = vadd.f32 %v4075, %v4101
    %v4147 = vadd.f32 %v4076, %v4101
    %v4148 = vadd.f32 %v4077, %v4101
    %v4149 = vadd.f32 %v4078, %v4101
    %v4150 = vadd.f32 %v4079, %v4101
    %v4151 = vadd.f32 %v4080, %v4101
    %v4152 = vadd.f32 %v4081, %v4101
    %v4153 = vadd.f32 %v4082, %v4101
    %v4154 = vadd.f32 %v4083, %v4101
    %v4155 = vadd.f32 %v4084, %v4101
    %v4156 = vadd.f32 %v4085, %v4101
    %v4157 = vadd.f32 %v4086, %v4101
    %v4158 = vadd.f32 %v4087, %v4101
    %v4159 = vadd.f32 %v4088, %v4101
    %v4160 = vadd.f32 %v4089, %v4101
    %v4161 = vadd.f32 %v4090, %v4101
    %v4162 = vadd.f32 %v4091, %v4101
    %v4163 = vadd.f32 %v4092, %v4101
    %v4164 = vadd.f32 %v4093, %v4101
    %v4165 = vadd.f32 %v4094, %v4101
    %v4166 = vadd.f32 %v4095, %v4101
    %v4167 = vmax.f32 %v4103, 0.0
    %v4168 = vmax.f32 %v4104, 0.0
    %v4169 = vmax.f32 %v4105, 0.0
    %v4170 = vmax.f32 %v4106, 0.0
    %v4171 = vmax.f32 %v4107, 0.0
    %v4172 = vmax.f32 %v4108, 0.0
    %v4173 = vmax.f32 %v4109, 0.0
    %v4174 = vmax.f32 %v4110, 0.0
    %v4175 = vmax.f32 %v4111, 0.0
    %v4176 = vmax.f32 %v4112, 0.0
    %v4177 = vmax.f32 %v4113, 0.0
    %v4178 = vmax.f32 %v4114, 0.0
    %v4179 = vmax.f32 %v4115, 0.0
    %v4180 = vmax.f32 %v4116, 0.0
    %v4181 = vmax.f32 %v4117, 0.0
    %v4182 = vmax.f32 %v4118, 0.0
    %v4183 = vmax.f32 %v4119, 0.0
    %v4184 = vmax.f32 %v4120, 0.0
    %v4185 = vmax.f32 %v4121, 0.0
    %v4186 = vmax.f32 %v4122, 0.0
    %v4187 = vmax.f32 %v4123, 0.0
    %v4188 = vmax.f32 %v4124, 0.0
    %v4189 = vmax.f32 %v4125, 0.0
    %v4190 = vmax.f32 %v4126, 0.0
    %v4191 = vmax.f32 %v4127, 0.0
    %v4192 = vmax.f32 %v4128, 0.0
    %v4193 = vmax.f32 %v4129, 0.0
    %v4194 = vmax.f32 %v4130, 0.0
    %v4195 = vmax.f32 %v4131, 0.0
    %v4196 = vmax.f32 %v4132, 0.0
    %v4197 = vmax.f32 %v4133, 0.0
    %v4198 = vmax.f32 %v4134, 0.0
    %v4199 = vmax.f32 %v4135, 0.0
    %v4200 = vmax.f32 %v4136, 0.0
    %v4201 = vmax.f32 %v4137, 0.0
    %v4202 = vmax.f32 %v4138, 0.0
    %v4203 = vmax.f32 %v4139, 0.0
    %v4204 = vmax.f32 %v4140, 0.0
    %v4205 = vmax.f32 %v4141, 0.0
    %v4206 = vmax.f32 %v4142, 0.0
    %v4207 = vmax.f32 %v4143, 0.0
    %v4208 = vmax.f32 %v4144, 0.0
    %v4209 = vmax.f32 %v4145, 0.0
    %v4210 = vmax.f32 %v4146, 0.0
    %v4211 = vmax.f32 %v4147, 0.0
    %v4212 = vmax.f32 %v4148, 0.0
    %v4213 = vmax.f32 %v4149, 0.0
    %v4214 = vmax.f32 %v4150, 0.0
    %v4215 = vmax.f32 %v4151, 0.0
    %v4216 = vmax.f32 %v4152, 0.0
    %v4217 = vmax.f32 %v4153, 0.0
    %v4218 = vmax.f32 %v4154, 0.0
    %v4219 = vmax.f32 %v4155, 0.0
    %v4220 = vmax.f32 %v4156, 0.0
    %v4221 = vmax.f32 %v4157, 0.0
    %v4222 = vmax.f32 %v4158, 0.0
    %v4223 = vmax.f32 %v4159, 0.0
    %v4224 = vmax.f32 %v4160, 0.0
    %v4225 = vmax.f32 %v4161, 0.0
    %v4226 = vmax.f32 %v4162, 0.0
    %v4227 = vmax.f32 %v4163, 0.0
    %v4228 = vmax.f32 %v4164, 0.0
    %v4229 = vmax.f32 %v4165, 0.0
    %v4230 = vmax.f32 %v4166, 0.0
    %v4231 = vpack.c.bf16 %v4168, %v4167
    %v4232 = vpack.c.bf16 %v4170, %v4169
    %v4233 = vpack.c.bf16 %v4172, %v4171
    %v4234 = vpack.c.bf16 %v4174, %v4173
    %v4235 = vpack.c.bf16 %v4176, %v4175
    %v4236 = vpack.c.bf16 %v4178, %v4177
    %v4237 = vpack.c.bf16 %v4180, %v4179
    %v4238 = vpack.c.bf16 %v4182, %v4181
    %v4239 = vpack.c.bf16 %v4184, %v4183
    %v4240 = vpack.c.bf16 %v4186, %v4185
    %v4241 = vpack.c.bf16 %v4188, %v4187
    %v4242 = vpack.c.bf16 %v4190, %v4189
    %v4243 = vpack.c.bf16 %v4192, %v4191
    %v4244 = vpack.c.bf16 %v4194, %v4193
    %v4245 = vpack.c.bf16 %v4196, %v4195
    %v4246 = vpack.c.bf16 %v4198, %v4197
    %v4247 = vpack.c.bf16 %v4200, %v4199
    %v4248 = vpack.c.bf16 %v4202, %v4201
    %v4249 = vpack.c.bf16 %v4204, %v4203
    %v4250 = vpack.c.bf16 %v4206, %v4205
    %v4251 = vpack.c.bf16 %v4208, %v4207
    %v4252 = vpack.c.bf16 %v4210, %v4209
    %v4253 = vpack.c.bf16 %v4212, %v4211
    %v4254 = vpack.c.bf16 %v4214, %v4213
    %v4255 = vpack.c.bf16 %v4216, %v4215
    %v4256 = vpack.c.bf16 %v4218, %v4217
    %v4257 = vpack.c.bf16 %v4220, %v4219
    %v4258 = vpack.c.bf16 %v4222, %v4221
    %v4259 = vpack.c.bf16 %v4224, %v4223
    %v4260 = vpack.c.bf16 %v4226, %v4225
    %v4261 = vpack.c.bf16 %v4228, %v4227
    %v4262 = vpack.c.bf16 %v4230, %v4229
    %v4263 = vld [vmem:[#allocation13] sm:$0xf]
    %v4264 = vld [vmem:[#allocation13 + $0x4] sm:$0xf]
    %v4265 = vld [vmem:[#allocation13 + $0x8] sm:$0xf]
    %v4266 = vld [vmem:[#allocation13 + $0xc] sm:$0xf]
    %v4267 = vld [vmem:[#allocation13 + $0x10] sm:$0xf]
    %v4268 = vld [vmem:[#allocation13 + $0x14] sm:$0xf]
    %v4269 = vld [vmem:[#allocation13 + $0x18] sm:$0xf]
    %v4270 = vld [vmem:[#allocation13 + $0x1c] sm:$0xf]
    %v4271 = vld [vmem:[#allocation13 + $0x20] sm:$0xf]
    %v4272 = vld [vmem:[#allocation13 + $0x24] sm:$0xf]
    %v4273 = vld [vmem:[#allocation13 + $0x28] sm:$0xf]
    %v4274 = vld [vmem:[#allocation13 + $0x2c] sm:$0xf]
    %v4275 = vld [vmem:[#allocation13 + $0x30] sm:$0xf]
    %v4276 = vld [vmem:[#allocation13 + $0x34] sm:$0xf]
    %v4277 = vld [vmem:[#allocation13 + $0x38] sm:$0xf]
    %v4278 = vld [vmem:[#allocation13 + $0x3c] sm:$0xf]
    %v4279 = vld [vmem:[#allocation5 + $0xa] sm:$0x1]
    %v4281 = vlaneseq
    %v4282 = vshrl.u32 %v4281, 7
    %v4283 = vsub.s32 0, %v4282
    %v4284 = vrot.slane %v4279, %v4283
    %v4302 = vunpack.c.l.b16 %v4263
    %v4303 = vunpack.c.l.b16 %v4264
    %v4304 = vunpack.c.l.b16 %v4265
    %v4305 = vunpack.c.l.b16 %v4266
    %v4306 = vunpack.c.l.b16 %v4267
    %v4307 = vunpack.c.l.b16 %v4268
    %v4308 = vunpack.c.l.b16 %v4269
    %v4309 = vunpack.c.l.b16 %v4270
    %v4310 = vunpack.c.l.b16 %v4271
    %v4311 = vunpack.c.l.b16 %v4272
    %v4312 = vunpack.c.l.b16 %v4273
    %v4313 = vunpack.c.l.b16 %v4274
    %v4314 = vunpack.c.l.b16 %v4275
    %v4315 = vunpack.c.l.b16 %v4276
    %v4316 = vunpack.c.l.b16 %v4277
    %v4317 = vunpack.c.l.b16 %v4278
    %v4318 = vpack.c.b16 %v4303, %v4302
    %v4319 = vpack.c.b16 %v4305, %v4304
    %v4320 = vpack.c.b16 %v4307, %v4306
    %v4321 = vpack.c.b16 %v4309, %v4308
    %v4322 = vpack.c.b16 %v4311, %v4310
    %v4323 = vpack.c.b16 %v4313, %v4312
    %v4324 = vpack.c.b16 %v4315, %v4314
    %v4325 = vpack.c.b16 %v4317, %v4316
    %4334 = vmatprep.subr.bf16.mxu0 0
    %4335 = vmatpush1.bf16.msra.mxu0 %v4318
    %4336 = vmatprep.subr.bf16.mxu0 0
    %4337 = vmatpush1.bf16.msra.mxu0 %v4319
    %4338 = vmatprep.subr.bf16.mxu0 0
    %4339 = vmatpush1.bf16.msra.mxu0 %v4320
    %4340 = vmatprep.subr.bf16.mxu0 0
    %4341 = vmatpush1.bf16.msra.mxu0 %v4321
    %4342 = vmatprep.subr.bf16.mxu0 0
    %4343 = vmatpush1.bf16.msra.mxu0 %v4322
    %4344 = vmatprep.subr.bf16.mxu0 0
    %4345 = vmatpush1.bf16.msra.mxu0 %v4323
    %4346 = vmatprep.subr.bf16.mxu0 0
    %4347 = vmatpush1.bf16.msra.mxu0 %v4324
    %4348 = vmatprep.subr.bf16.mxu0 0
    %4349 = vmatpush1.bf16.msra.mxu0 %v4325
    %4350 = vmatprep.subr.bf16.mxu0 0
    %4351 = vmatpush1.bf16.msra.mxu0 0
    %4352 = vmatprep.subr.bf16.mxu0 0
    %4353 = vmatpush1.bf16.msra.mxu0 0
    %4354 = vmatprep.subr.bf16.mxu0 0
    %4355 = vmatpush1.bf16.msra.mxu0 0
    %4356 = vmatprep.subr.bf16.mxu0 0
    %4357 = vmatpush1.bf16.msra.mxu0 0
    %4358 = vmatprep.subr.bf16.mxu0 0
    %4359 = vmatpush1.bf16.msra.mxu0 0
    %4360 = vmatprep.subr.bf16.mxu0 0
    %4361 = vmatpush1.bf16.msra.mxu0 0
    %4362 = vmatprep.subr.bf16.mxu0 0
    %4363 = vmatpush1.bf16.msra.mxu0 0
    %4364 = vmatprep.subr.bf16.mxu0 0
    %4365 = vmatpush1.bf16.msra.mxu0 0
    %4366 = vmatprep.mubr.bf16.mxu0 0
    %4367 = vmatmul.mubr.bf16.gmra.mrb[0].mxu0 %v4231
    %v4368 = vpop.f32.mrb[0].mxu0
    %v4369 = vadd.f32 %v4284, %v4368
    %v4370 = vpop.f32.mrb[0].mxu0
    %v4371 = vpop.f32.mrb[0].mxu0
    %v4372 = vadd.f32 %v4284, %v4371
    %v4373 = vpop.f32.mrb[0].mxu0
    %4374 = vmatprep.mubr.bf16.mxu0 0
    %4375 = vmatmul.mubr.bf16.gmra.mrb[0].mxu0 %v4232
    %v4376 = vpop.f32.mrb[0].mxu0
    %v4377 = vadd.f32 %v4284, %v4376
    %v4378 = vpop.f32.mrb[0].mxu0
    %v4379 = vpop.f32.mrb[0].mxu0
    %v4380 = vadd.f32 %v4284, %v4379
    %v4381 = vpop.f32.mrb[0].mxu0
    %4382 = vmatprep.mubr.bf16.mxu0 0
    %4383 = vmatmul.mubr.bf16.gmra.mrb[0].mxu0 %v4233
    %v4384 = vpop.f32.mrb[0].mxu0
    %v4385 = vadd.f32 %v4284, %v4384
    %v4386 = vpop.f32.mrb[0].mxu0
    %v4387 = vpop.f32.mrb[0].mxu0
    %v4388 = vadd.f32 %v4284, %v4387
    %v4389 = vpop.f32.mrb[0].mxu0
    %4390 = vmatprep.mubr.bf16.mxu0 0
    %4391 = vmatmul.mubr.bf16.gmra.mrb[0].mxu0 %v4234
    %v4392 = vpop.f32.mrb[0].mxu0
    %v4393 = vadd.f32 %v4284, %v4392
    %v4394 = vpop.f32.mrb[0].mxu0
    %v4395 = vpop.f32.mrb[0].mxu0
    %v4396 = vadd.f32 %v4284, %v4395
    %v4397 = vpop.f32.mrb[0].mxu0
    %4398 = vmatprep.mubr.bf16.mxu0 0
    %4399 = vmatmul.mubr.bf16.gmra.mrb[0].mxu0 %v4235
    %v4400 = vpop.f32.mrb[0].mxu0
    %v4401 = vadd.f32 %v4284, %v4400
    %v4402 = vpop.f32.mrb[0].mxu0
    %v4403 = vpop.f32.mrb[0].mxu0
    %v4404 = vadd.f32 %v4284, %v4403
    %v4405 = vpop.f32.mrb[0].mxu0
    %4406 = vmatprep.mubr.bf16.mxu0 0
    %4407 = vmatmul.mubr.bf16.gmra.mrb[0].mxu0 %v4236
    %v4408 = vpop.f32.mrb[0].mxu0
    %v4409 = vadd.f32 %v4284, %v4408
    %v4410 = vpop.f32.mrb[0].mxu0
    %v4411 = vpop.f32.mrb[0].mxu0
    %v4412 = vadd.f32 %v4284, %v4411
    %v4413 = vpop.f32.mrb[0].mxu0
    %4414 = vmatprep.mubr.bf16.mxu0 0
    %4415 = vmatmul.mubr.bf16.gmra.mrb[0].mxu0 %v4237
    %v4416 = vpop.f32.mrb[0].mxu0
    %v4417 = vadd.f32 %v4284, %v4416
    %v4418 = vpop.f32.mrb[0].mxu0
    %v4419 = vpop.f32.mrb[0].mxu0
    %v4420 = vadd.f32 %v4284, %v4419
    %v4421 = vpop.f32.mrb[0].mxu0
    %4422 = vmatprep.mubr.bf16.mxu0 0
    %4423 = vmatmul.mubr.bf16.gmra.mrb[0].mxu0 %v4238
    %v4424 = vpop.f32.mrb[0].mxu0
    %v4425 = vadd.f32 %v4284, %v4424
    %v4426 = vpop.f32.mrb[0].mxu0
    %v4427 = vpop.f32.mrb[0].mxu0
    %v4428 = vadd.f32 %v4284, %v4427
    %v4429 = vpop.f32.mrb[0].mxu0
    %4430 = vmatprep.mubr.bf16.mxu0 0
    %4431 = vmatmul.mubr.bf16.gmra.mrb[0].mxu0 %v4239
    %v4432 = vpop.f32.mrb[0].mxu0
    %v4433 = vadd.f32 %v4284, %v4432
    %v4434 = vpop.f32.mrb[0].mxu0
    %v4435 = vpop.f32.mrb[0].mxu0
    %v4436 = vadd.f32 %v4284, %v4435
    %v4437 = vpop.f32.mrb[0].mxu0
    %4438 = vmatprep.mubr.bf16.mxu0 0
    %4439 = vmatmul.mubr.bf16.gmra.mrb[0].mxu0 %v4240
    %v4440 = vpop.f32.mrb[0].mxu0
    %v4441 = vadd.f32 %v4284, %v4440
    %v4442 = vpop.f32.mrb[0].mxu0
    %v4443 = vpop.f32.mrb[0].mxu0
    %v4444 = vadd.f32 %v4284, %v4443
    %v4445 = vpop.f32.mrb[0].mxu0
    %4446 = vmatprep.mubr.bf16.mxu0 0
    %4447 = vmatmul.mubr.bf16.gmra.mrb[0].mxu0 %v4241
    %v4448 = vpop.f32.mrb[0].mxu0
    %v4449 = vadd.f32 %v4284, %v4448
    %v4450 = vpop.f32.mrb[0].mxu0
    %v4451 = vpop.f32.mrb[0].mxu0
    %v4452 = vadd.f32 %v4284, %v4451
    %v4453 = vpop.f32.mrb[0].mxu0
    %4454 = vmatprep.mubr.bf16.mxu0 0
    %4455 = vmatmul.mubr.bf16.gmra.mrb[0].mxu0 %v4242
    %v4456 = vpop.f32.mrb[0].mxu0
    %v4457 = vadd.f32 %v4284, %v4456
    %v4458 = vpop.f32.mrb[0].mxu0
    %v4459 = vpop.f32.mrb[0].mxu0
    %v4460 = vadd.f32 %v4284, %v4459
    %v4461 = vpop.f32.mrb[0].mxu0
    %4462 = vmatprep.mubr.bf16.mxu0 0
    %4463 = vmatmul.mubr.bf16.gmra.mrb[0].mxu0 %v4243
    %v4464 = vpop.f32.mrb[0].mxu0
    %v4465 = vadd.f32 %v4284, %v4464
    %v4466 = vpop.f32.mrb[0].mxu0
    %v4467 = vpop.f32.mrb[0].mxu0
    %v4468 = vadd.f32 %v4284, %v4467
    %v4469 = vpop.f32.mrb[0].mxu0
    %4470 = vmatprep.mubr.bf16.mxu0 0
    %4471 = vmatmul.mubr.bf16.gmra.mrb[0].mxu0 %v4244
    %v4472 = vpop.f32.mrb[0].mxu0
    %v4473 = vadd.f32 %v4284, %v4472
    %v4474 = vpop.f32.mrb[0].mxu0
    %v4475 = vpop.f32.mrb[0].mxu0
    %v4476 = vadd.f32 %v4284, %v4475
    %v4477 = vpop.f32.mrb[0].mxu0
    %4478 = vmatprep.mubr.bf16.mxu0 0
    %4479 = vmatmul.mubr.bf16.gmra.mrb[0].mxu0 %v4245
    %v4480 = vpop.f32.mrb[0].mxu0
    %v4481 = vadd.f32 %v4284, %v4480
    %v4482 = vpop.f32.mrb[0].mxu0
    %v4483 = vpop.f32.mrb[0].mxu0
    %v4484 = vadd.f32 %v4284, %v4483
    %v4485 = vpop.f32.mrb[0].mxu0
    %4486 = vmatprep.mubr.bf16.mxu0 0
    %4487 = vmatmul.mubr.bf16.gmra.mrb[0].mxu0 %v4246
    %v4488 = vpop.f32.mrb[0].mxu0
    %v4489 = vadd.f32 %v4284, %v4488
    %v4490 = vpop.f32.mrb[0].mxu0
    %v4491 = vpop.f32.mrb[0].mxu0
    %v4492 = vadd.f32 %v4284, %v4491
    %v4493 = vpop.f32.mrb[0].mxu0
    %4494 = vmatprep.mubr.bf16.mxu0 0
    %4495 = vmatmul.mubr.bf16.gmra.mrb[0].mxu0 %v4247
    %v4496 = vpop.f32.mrb[0].mxu0
    %v4497 = vadd.f32 %v4284, %v4496
    %v4498 = vpop.f32.mrb[0].mxu0
    %v4499 = vpop.f32.mrb[0].mxu0
    %v4500 = vadd.f32 %v4284, %v4499
    %v4501 = vpop.f32.mrb[0].mxu0
    %4502 = vmatprep.mubr.bf16.mxu0 0
    %4503 = vmatmul.mubr.bf16.gmra.mrb[0].mxu0 %v4248
    %v4504 = vpop.f32.mrb[0].mxu0
    %v4505 = vadd.f32 %v4284, %v4504
    %v4506 = vpop.f32.mrb[0].mxu0
    %v4507 = vpop.f32.mrb[0].mxu0
    %v4508 = vadd.f32 %v4284, %v4507
    %v4509 = vpop.f32.mrb[0].mxu0
    %4510 = vmatprep.mubr.bf16.mxu0 0
    %4511 = vmatmul.mubr.bf16.gmra.mrb[0].mxu0 %v4249
    %v4512 = vpop.f32.mrb[0].mxu0
    %v4513 = vadd.f32 %v4284, %v4512
    %v4514 = vpop.f32.mrb[0].mxu0
    %v4515 = vpop.f32.mrb[0].mxu0
    %v4516 = vadd.f32 %v4284, %v4515
    %v4517 = vpop.f32.mrb[0].mxu0
    %4518 = vmatprep.mubr.bf16.mxu0 0
    %4519 = vmatmul.mubr.bf16.gmra.mrb[0].mxu0 %v4250
    %v4520 = vpop.f32.mrb[0].mxu0
    %v4521 = vadd.f32 %v4284, %v4520
    %v4522 = vpop.f32.mrb[0].mxu0
    %v4523 = vpop.f32.mrb[0].mxu0
    %v4524 = vadd.f32 %v4284, %v4523
    %v4525 = vpop.f32.mrb[0].mxu0
    %4526 = vmatprep.mubr.bf16.mxu0 0
    %4527 = vmatmul.mubr.bf16.gmra.mrb[0].mxu0 %v4251
    %v4528 = vpop.f32.mrb[0].mxu0
    %v4529 = vadd.f32 %v4284, %v4528
    %v4530 = vpop.f32.mrb[0].mxu0
    %v4531 = vpop.f32.mrb[0].mxu0
    %v4532 = vadd.f32 %v4284, %v4531
    %v4533 = vpop.f32.mrb[0].mxu0
    %4534 = vmatprep.mubr.bf16.mxu0 0
    %4535 = vmatmul.mubr.bf16.gmra.mrb[0].mxu0 %v4252
    %v4536 = vpop.f32.mrb[0].mxu0
    %v4537 = vadd.f32 %v4284, %v4536
    %v4538 = vpop.f32.mrb[0].mxu0
    %v4539 = vpop.f32.mrb[0].mxu0
    %v4540 = vadd.f32 %v4284, %v4539
    %v4541 = vpop.f32.mrb[0].mxu0
    %4542 = vmatprep.mubr.bf16.mxu0 0
    %4543 = vmatmul.mubr.bf16.gmra.mrb[0].mxu0 %v4253
    %v4544 = vpop.f32.mrb[0].mxu0
    %v4545 = vadd.f32 %v4284, %v4544
    %v4546 = vpop.f32.mrb[0].mxu0
    %v4547 = vpop.f32.mrb[0].mxu0
    %v4548 = vadd.f32 %v4284, %v4547
    %v4549 = vpop.f32.mrb[0].mxu0
    %4550 = vmatprep.mubr.bf16.mxu0 0
    %4551 = vmatmul.mubr.bf16.gmra.mrb[0].mxu0 %v4254
    %v4552 = vpop.f32.mrb[0].mxu0
    %v4553 = vadd.f32 %v4284, %v4552
    %v4554 = vpop.f32.mrb[0].mxu0
    %v4555 = vpop.f32.mrb[0].mxu0
    %v4556 = vadd.f32 %v4284, %v4555
    %v4557 = vpop.f32.mrb[0].mxu0
    %4558 = vmatprep.mubr.bf16.mxu0 0
    %4559 = vmatmul.mubr.bf16.gmra.mrb[0].mxu0 %v4255
    %v4560 = vpop.f32.mrb[0].mxu0
    %v4561 = vadd.f32 %v4284, %v4560
    %v4562 = vpop.f32.mrb[0].mxu0
    %v4563 = vpop.f32.mrb[0].mxu0
    %v4564 = vadd.f32 %v4284, %v4563
    %v4565 = vpop.f32.mrb[0].mxu0
    %4566 = vmatprep.mubr.bf16.mxu0 0
    %4567 = vmatmul.mubr.bf16.gmra.mrb[0].mxu0 %v4256
    %v4568 = vpop.f32.mrb[0].mxu0
    %v4569 = vadd.f32 %v4284, %v4568
    %v4570 = vpop.f32.mrb[0].mxu0
    %v4571 = vpop.f32.mrb[0].mxu0
    %v4572 = vadd.f32 %v4284, %v4571
    %v4573 = vpop.f32.mrb[0].mxu0
    %4574 = vmatprep.mubr.bf16.mxu0 0
    %4575 = vmatmul.mubr.bf16.gmra.mrb[0].mxu0 %v4257
    %v4576 = vpop.f32.mrb[0].mxu0
    %v4577 = vadd.f32 %v4284, %v4576
    %v4578 = vpop.f32.mrb[0].mxu0
    %v4579 = vpop.f32.mrb[0].mxu0
    %v4580 = vadd.f32 %v4284, %v4579
    %v4581 = vpop.f32.mrb[0].mxu0
    %4582 = vmatprep.mubr.bf16.mxu0 0
    %4583 = vmatmul.mubr.bf16.gmra.mrb[0].mxu0 %v4258
    %v4584 = vpop.f32.mrb[0].mxu0
    %v4585 = vadd.f32 %v4284, %v4584
    %v4586 = vpop.f32.mrb[0].mxu0
    %v4587 = vpop.f32.mrb[0].mxu0
    %v4588 = vadd.f32 %v4284, %v4587
    %v4589 = vpop.f32.mrb[0].mxu0
    %4590 = vmatprep.mubr.bf16.mxu0 0
    %4591 = vmatmul.mubr.bf16.gmra.mrb[0].mxu0 %v4259
    %v4592 = vpop.f32.mrb[0].mxu0
    %v4593 = vadd.f32 %v4284, %v4592
    %v4594 = vpop.f32.mrb[0].mxu0
    %v4595 = vpop.f32.mrb[0].mxu0
    %v4596 = vadd.f32 %v4284, %v4595
    %v4597 = vpop.f32.mrb[0].mxu0
    %4598 = vmatprep.mubr.bf16.mxu0 0
    %4599 = vmatmul.mubr.bf16.gmra.mrb[0].mxu0 %v4260
    %v4600 = vpop.f32.mrb[0].mxu0
    %v4601 = vadd.f32 %v4284, %v4600
    %v4602 = vpop.f32.mrb[0].mxu0
    %v4603 = vpop.f32.mrb[0].mxu0
    %v4604 = vadd.f32 %v4284, %v4603
    %v4605 = vpop.f32.mrb[0].mxu0
    %4606 = vmatprep.mubr.bf16.mxu0 0
    %4607 = vmatmul.mubr.bf16.gmra.mrb[0].mxu0 %v4261
    %v4608 = vpop.f32.mrb[0].mxu0
    %v4609 = vadd.f32 %v4284, %v4608
    %v4610 = vpop.f32.mrb[0].mxu0
    %v4611 = vpop.f32.mrb[0].mxu0
    %v4612 = vadd.f32 %v4284, %v4611
    %v4613 = vpop.f32.mrb[0].mxu0
    %4614 = vmatprep.mubr.bf16.mxu0 0
    %4615 = vmatmul.mubr.bf16.gmra.mrb[0].mxu0 %v4262
    %v4616 = vpop.f32.mrb[0].mxu0
    %v4617 = vadd.f32 %v4284, %v4616
    %v4618 = vpop.f32.mrb[0].mxu0
    %v4619 = vpop.f32.mrb[0].mxu0
    %v4620 = vadd.f32 %v4284, %v4619
    %v4621 = vpop.f32.mrb[0].mxu0
    %4622 = vdwg.mxu0
    %4623 = vmatprep.subr.mxu0 0.0
    %4624 = vmatpush1.msra.mxu0 %v4369
    %4625 = vmatprep.subr.mxu0 0.0
    %4626 = vmatpush1.msra.mxu0 %v4372
    %4627 = vmatprep.subr.mxu0 0.0
    %4628 = vmatpush1.msra.mxu0 %v4377
    %4629 = vmatprep.subr.mxu0 0.0
    %4630 = vmatpush1.msra.mxu0 %v4380
    %4631 = vmatprep.subr.mxu0 0.0
    %4632 = vmatpush1.msra.mxu0 %v4385
    %4633 = vmatprep.subr.mxu0 0.0
    %4634 = vmatpush1.msra.mxu0 %v4388
    %4635 = vmatprep.subr.mxu0 0.0
    %4636 = vmatpush1.msra.mxu0 %v4393
    %4637 = vmatprep.subr.mxu0 0.0
    %4638 = vmatpush1.msra.mxu0 %v4396
    %4639 = vmatprep.subr.mxu0 0.0
    %4640 = vmatpush1.msra.mxu0 %v4401
    %4641 = vmatprep.subr.mxu0 0.0
    %4642 = vmatpush1.msra.mxu0 %v4404
    %4643 = vmatprep.subr.mxu0 0.0
    %4644 = vmatpush1.msra.mxu0 %v4409
    %4645 = vmatprep.subr.mxu0 0.0
    %4646 = vmatpush1.msra.mxu0 %v4412
    %4647 = vmatprep.subr.mxu0 0.0
    %4648 = vmatpush1.msra.mxu0 %v4417
    %4649 = vmatprep.subr.mxu0 0.0
    %4650 = vmatpush1.msra.mxu0 %v4420
    %4651 = vmatprep.subr.mxu0 0.0
    %4652 = vmatpush1.msra.mxu0 %v4425
    %4653 = vmatprep.subr.mxu0 0.0
    %4654 = vmatpush1.msra.mxu0 %v4428
    %4655 = vmatprep.subr.mxu0 0.0
    %4656 = vmatpush1.msra.mxu0 %v4433
    %4657 = vmatprep.subr.mxu0 0.0
    %4658 = vmatpush1.msra.mxu0 %v4436
    %4659 = vmatprep.subr.mxu0 0.0
    %4660 = vmatpush1.msra.mxu0 %v4441
    %4661 = vmatprep.subr.mxu0 0.0
    %4662 = vmatpush1.msra.mxu0 %v4444
    %4663 = vmatprep.subr.mxu0 0.0
    %4664 = vmatpush1.msra.mxu0 %v4449
    %4665 = vmatprep.subr.mxu0 0.0
    %4666 = vmatpush1.msra.mxu0 %v4452
    %4667 = vmatprep.subr.mxu0 0.0
    %4668 = vmatpush1.msra.mxu0 %v4457
    %4669 = vmatprep.subr.mxu0 0.0
    %4670 = vmatpush1.msra.mxu0 %v4460
    %4671 = vmatprep.subr.mxu0 0.0
    %4672 = vmatpush1.msra.mxu0 %v4465
    %4673 = vmatprep.subr.mxu0 0.0
    %4674 = vmatpush1.msra.mxu0 %v4468
    %4675 = vmatprep.subr.mxu0 0.0
    %4676 = vmatpush1.msra.mxu0 %v4473
    %4677 = vmatprep.subr.mxu0 0.0
    %4678 = vmatpush1.msra.mxu0 %v4476
    %4679 = vmatprep.subr.mxu0 0.0
    %4680 = vmatpush1.msra.mxu0 %v4481
    %4681 = vmatprep.subr.mxu0 0.0
    %4682 = vmatpush1.msra.mxu0 %v4484
    %4683 = vmatprep.subr.mxu0 0.0
    %4684 = vmatpush1.msra.mxu0 %v4489
    %4685 = vmatprep.subr.mxu0 0.0
    %4686 = vmatpush1.msra.mxu0 %v4492
    %4687 = vmatprep.mubr.f32.mxu0 1.0
    %4688 = vmatmul.mubr.f32.gmra.mrb[0].mxu0 1.0
    %v4689 = vpop.f32.mrb[0].mxu0
    %v4690 = vadd.f32 0.0, %v4689
    %v4691 = vpop.f32.mrb[0].mxu0
    %4692 = vdwg.mxu0
    %4693 = vmatprep.subr.mxu0 0.0
    %4694 = vmatpush1.msra.mxu0 %v4497
    %4695 = vmatprep.subr.mxu0 0.0
    %4696 = vmatpush1.msra.mxu0 %v4500
    %4697 = vmatprep.subr.mxu0 0.0
    %4698 = vmatpush1.msra.mxu0 %v4505
    %4699 = vmatprep.subr.mxu0 0.0
    %4700 = vmatpush1.msra.mxu0 %v4508
    %4701 = vmatprep.subr.mxu0 0.0
    %4702 = vmatpush1.msra.mxu0 %v4513
    %4703 = vmatprep.subr.mxu0 0.0
    %4704 = vmatpush1.msra.mxu0 %v4516
    %4705 = vmatprep.subr.mxu0 0.0
    %4706 = vmatpush1.msra.mxu0 %v4521
    %4707 = vmatprep.subr.mxu0 0.0
    %4708 = vmatpush1.msra.mxu0 %v4524
    %4709 = vmatprep.subr.mxu0 0.0
    %4710 = vmatpush1.msra.mxu0 %v4529
    %4711 = vmatprep.subr.mxu0 0.0
    %4712 = vmatpush1.msra.mxu0 %v4532
    %4713 = vmatprep.subr.mxu0 0.0
    %4714 = vmatpush1.msra.mxu0 %v4537
    %4715 = vmatprep.subr.mxu0 0.0
    %4716 = vmatpush1.msra.mxu0 %v4540
    %4717 = vmatprep.subr.mxu0 0.0
    %4718 = vmatpush1.msra.mxu0 %v4545
    %4719 = vmatprep.subr.mxu0 0.0
    %4720 = vmatpush1.msra.mxu0 %v4548
    %4721 = vmatprep.subr.mxu0 0.0
    %4722 = vmatpush1.msra.mxu0 %v4553
    %4723 = vmatprep.subr.mxu0 0.0
    %4724 = vmatpush1.msra.mxu0 %v4556
    %4725 = vmatprep.subr.mxu0 0.0
    %4726 = vmatpush1.msra.mxu0 %v4561
    %4727 = vmatprep.subr.mxu0 0.0
    %4728 = vmatpush1.msra.mxu0 %v4564
    %4729 = vmatprep.subr.mxu0 0.0
    %4730 = vmatpush1.msra.mxu0 %v4569
    %4731 = vmatprep.subr.mxu0 0.0
    %4732 = vmatpush1.msra.mxu0 %v4572
    %4733 = vmatprep.subr.mxu0 0.0
    %4734 = vmatpush1.msra.mxu0 %v4577
    %4735 = vmatprep.subr.mxu0 0.0
    %4736 = vmatpush1.msra.mxu0 %v4580
    %4737 = vmatprep.subr.mxu0 0.0
    %4738 = vmatpush1.msra.mxu0 %v4585
    %4739 = vmatprep.subr.mxu0 0.0
    %4740 = vmatpush1.msra.mxu0 %v4588
    %4741 = vmatprep.subr.mxu0 0.0
    %4742 = vmatpush1.msra.mxu0 %v4593
    %4743 = vmatprep.subr.mxu0 0.0
    %4744 = vmatpush1.msra.mxu0 %v4596
    %4745 = vmatprep.subr.mxu0 0.0
    %4746 = vmatpush1.msra.mxu0 %v4601
    %4747 = vmatprep.subr.mxu0 0.0
    %4748 = vmatpush1.msra.mxu0 %v4604
    %4749 = vmatprep.subr.mxu0 0.0
    %4750 = vmatpush1.msra.mxu0 %v4609
    %4751 = vmatprep.subr.mxu0 0.0
    %4752 = vmatpush1.msra.mxu0 %v4612
    %4753 = vmatprep.subr.mxu0 0.0
    %4754 = vmatpush1.msra.mxu0 %v4617
    %4755 = vmatprep.subr.mxu0 0.0
    %4756 = vmatpush1.msra.mxu0 %v4620
    %4757 = vmatprep.mubr.f32.mxu0 1.0
    %4758 = vmatmul.mubr.f32.gmra.mrb[0].mxu0 1.0
    %v4759 = vpop.f32.mrb[0].mxu0
    %v4760 = vadd.f32 %v4690, %v4759
    %v4761 = vpop.f32.mrb[0].mxu0
    %4762 = vdwg.mxu0
    %v4763 = vmul.f32 %v4760, 0.001953125
    %v4764 = vlaneseq
    %v4765 = vshrl.u32 %v4764, 7
    %v4766 = vsub.s32 0, %v4765
    %v4767 = vrot.slane %v4763, %v4766
    %v4768 = vsub.f32 %v4369, %v4767
    %v4769 = vsub.f32 %v4372, %v4767
    %v4770 = vsub.f32 %v4377, %v4767
    %v4771 = vsub.f32 %v4380, %v4767
    %v4772 = vsub.f32 %v4385, %v4767
    %v4773 = vsub.f32 %v4388, %v4767
    %v4774 = vsub.f32 %v4393, %v4767
    %v4775 = vsub.f32 %v4396, %v4767
    %v4776 = vsub.f32 %v4401, %v4767
    %v4777 = vsub.f32 %v4404, %v4767
    %v4778 = vsub.f32 %v4409, %v4767
    %v4779 = vsub.f32 %v4412, %v4767
    %v4780 = vsub.f32 %v4417, %v4767
    %v4781 = vsub.f32 %v4420, %v4767
    %v4782 = vsub.f32 %v4425, %v4767
    %v4783 = vsub.f32 %v4428, %v4767
    %v4784 = vsub.f32 %v4433, %v4767
    %v4785 = vsub.f32 %v4436, %v4767
    %v4786 = vsub.f32 %v4441, %v4767
    %v4787 = vsub.f32 %v4444, %v4767
    %v4788 = vsub.f32 %v4449, %v4767
    %v4789 = vsub.f32 %v4452, %v4767
    %v4790 = vsub.f32 %v4457, %v4767
    %v4791 = vsub.f32 %v4460, %v4767
    %v4792 = vsub.f32 %v4465, %v4767
    %v4793 = vsub.f32 %v4468, %v4767
    %v4794 = vsub.f32 %v4473, %v4767
    %v4795 = vsub.f32 %v4476, %v4767
    %v4796 = vsub.f32 %v4481, %v4767
    %v4797 = vsub.f32 %v4484, %v4767
    %v4798 = vsub.f32 %v4489, %v4767
    %v4799 = vsub.f32 %v4492, %v4767
    %v4800 = vsub.f32 %v4497, %v4767
    %v4801 = vsub.f32 %v4500, %v4767
    %v4802 = vsub.f32 %v4505, %v4767
    %v4803 = vsub.f32 %v4508, %v4767
    %v4804 = vsub.f32 %v4513, %v4767
    %v4805 = vsub.f32 %v4516, %v4767
    %v4806 = vsub.f32 %v4521, %v4767
    %v4807 = vsub.f32 %v4524, %v4767
    %v4808 = vsub.f32 %v4529, %v4767
    %v4809 = vsub.f32 %v4532, %v4767
    %v4810 = vsub.f32 %v4537, %v4767
    %v4811 = vsub.f32 %v4540, %v4767
    %v4812 = vsub.f32 %v4545, %v4767
    %v4813 = vsub.f32 %v4548, %v4767
    %v4814 = vsub.f32 %v4553, %v4767
    %v4815 = vsub.f32 %v4556, %v4767
    %v4816 = vsub.f32 %v4561, %v4767
    %v4817 = vsub.f32 %v4564, %v4767
    %v4818 = vsub.f32 %v4569, %v4767
    %v4819 = vsub.f32 %v4572, %v4767
    %v4820 = vsub.f32 %v4577, %v4767
    %v4821 = vsub.f32 %v4580, %v4767
    %v4822 = vsub.f32 %v4585, %v4767
    %v4823 = vsub.f32 %v4588, %v4767
    %v4824 = vsub.f32 %v4593, %v4767
    %v4825 = vsub.f32 %v4596, %v4767
    %v4826 = vsub.f32 %v4601, %v4767
    %v4827 = vsub.f32 %v4604, %v4767
    %v4828 = vsub.f32 %v4609, %v4767
    %v4829 = vsub.f32 %v4612, %v4767
    %v4830 = vsub.f32 %v4617, %v4767
    %v4831 = vsub.f32 %v4620, %v4767
    %v4832 = vmul.f32 %v4768, %v4768
    %v4833 = vmul.f32 %v4769, %v4769
    %v4834 = vmul.f32 %v4770, %v4770
    %v4835 = vmul.f32 %v4771, %v4771
    %v4836 = vmul.f32 %v4772, %v4772
    %v4837 = vmul.f32 %v4773, %v4773
    %v4838 = vmul.f32 %v4774, %v4774
    %v4839 = vmul.f32 %v4775, %v4775
    %v4840 = vmul.f32 %v4776, %v4776
    %v4841 = vmul.f32 %v4777, %v4777
    %v4842 = vmul.f32 %v4778, %v4778
    %v4843 = vmul.f32 %v4779, %v4779
    %v4844 = vmul.f32 %v4780, %v4780
    %v4845 = vmul.f32 %v4781, %v4781
    %v4846 = vmul.f32 %v4782, %v4782
    %v4847 = vmul.f32 %v4783, %v4783
    %v4848 = vmul.f32 %v4784, %v4784
    %v4849 = vmul.f32 %v4785, %v4785
    %v4850 = vmul.f32 %v4786, %v4786
    %v4851 = vmul.f32 %v4787, %v4787
    %v4852 = vmul.f32 %v4788, %v4788
    %v4853 = vmul.f32 %v4789, %v4789
    %v4854 = vmul.f32 %v4790, %v4790
    %v4855 = vmul.f32 %v4791, %v4791
    %v4856 = vmul.f32 %v4792, %v4792
    %v4857 = vmul.f32 %v4793, %v4793
    %v4858 = vmul.f32 %v4794, %v4794
    %v4859 = vmul.f32 %v4795, %v4795
    %v4860 = vmul.f32 %v4796, %v4796
    %v4861 = vmul.f32 %v4797, %v4797
    %v4862 = vmul.f32 %v4798, %v4798
    %v4863 = vmul.f32 %v4799, %v4799
    %v4864 = vmul.f32 %v4800, %v4800
    %v4865 = vmul.f32 %v4801, %v4801
    %v4866 = vmul.f32 %v4802, %v4802
    %v4867 = vmul.f32 %v4803, %v4803
    %v4868 = vmul.f32 %v4804, %v4804
    %v4869 = vmul.f32 %v4805, %v4805
    %v4870 = vmul.f32 %v4806, %v4806
    %v4871 = vmul.f32 %v4807, %v4807
    %v4872 = vmul.f32 %v4808, %v4808
    %v4873 = vmul.f32 %v4809, %v4809
    %v4874 = vmul.f32 %v4810, %v4810
    %v4875 = vmul.f32 %v4811, %v4811
    %v4876 = vmul.f32 %v4812, %v4812
    %v4877 = vmul.f32 %v4813, %v4813
    %v4878 = vmul.f32 %v4814, %v4814
    %v4879 = vmul.f32 %v4815, %v4815
    %v4880 = vmul.f32 %v4816, %v4816
    %v4881 = vmul.f32 %v4817, %v4817
    %v4882 = vmul.f32 %v4818, %v4818
    %v4883 = vmul.f32 %v4819, %v4819
    %v4884 = vmul.f32 %v4820, %v4820
    %v4885 = vmul.f32 %v4821, %v4821
    %v4886 = vmul.f32 %v4822, %v4822
    %v4887 = vmul.f32 %v4823, %v4823
    %v4888 = vmul.f32 %v4824, %v4824
    %v4889 = vmul.f32 %v4825, %v4825
    %v4890 = vmul.f32 %v4826, %v4826
    %v4891 = vmul.f32 %v4827, %v4827
    %v4892 = vmul.f32 %v4828, %v4828
    %v4893 = vmul.f32 %v4829, %v4829
    %v4894 = vmul.f32 %v4830, %v4830
    %v4895 = vmul.f32 %v4831, %v4831
    %4896 = vmatprep.subr.mxu0 0.0
    %4897 = vmatpush1.msra.mxu0 %v4832
    %4898 = vmatprep.subr.mxu0 0.0
    %4899 = vmatpush1.msra.mxu0 %v4833
    %4900 = vmatprep.subr.mxu0 0.0
    %4901 = vmatpush1.msra.mxu0 %v4834
    %4902 = vmatprep.subr.mxu0 0.0
    %4903 = vmatpush1.msra.mxu0 %v4835
    %4904 = vmatprep.subr.mxu0 0.0
    %4905 = vmatpush1.msra.mxu0 %v4836
    %4906 = vmatprep.subr.mxu0 0.0
    %4907 = vmatpush1.msra.mxu0 %v4837
    %4908 = vmatprep.subr.mxu0 0.0
    %4909 = vmatpush1.msra.mxu0 %v4838
    %4910 = vmatprep.subr.mxu0 0.0
    %4911 = vmatpush1.msra.mxu0 %v4839
    %4912 = vmatprep.subr.mxu0 0.0
    %4913 = vmatpush1.msra.mxu0 %v4840
    %4914 = vmatprep.subr.mxu0 0.0
    %4915 = vmatpush1.msra.mxu0 %v4841
    %4916 = vmatprep.subr.mxu0 0.0
    %4917 = vmatpush1.msra.mxu0 %v4842
    %4918 = vmatprep.subr.mxu0 0.0
    %4919 = vmatpush1.msra.mxu0 %v4843
    %4920 = vmatprep.subr.mxu0 0.0
    %4921 = vmatpush1.msra.mxu0 %v4844
    %4922 = vmatprep.subr.mxu0 0.0
    %4923 = vmatpush1.msra.mxu0 %v4845
    %4924 = vmatprep.subr.mxu0 0.0
    %4925 = vmatpush1.msra.mxu0 %v4846
    %4926 = vmatprep.subr.mxu0 0.0
    %4927 = vmatpush1.msra.mxu0 %v4847
    %4928 = vmatprep.subr.mxu0 0.0
    %4929 = vmatpush1.msra.mxu0 %v4848
    %4930 = vmatprep.subr.mxu0 0.0
    %4931 = vmatpush1.msra.mxu0 %v4849
    %4932 = vmatprep.subr.mxu0 0.0
    %4933 = vmatpush1.msra.mxu0 %v4850
    %4934 = vmatprep.subr.mxu0 0.0
    %4935 = vmatpush1.msra.mxu0 %v4851
    %4936 = vmatprep.subr.mxu0 0.0
    %4937 = vmatpush1.msra.mxu0 %v4852
    %4938 = vmatprep.subr.mxu0 0.0
    %4939 = vmatpush1.msra.mxu0 %v4853
    %4940 = vmatprep.subr.mxu0 0.0
    %4941 = vmatpush1.msra.mxu0 %v4854
    %4942 = vmatprep.subr.mxu0 0.0
    %4943 = vmatpush1.msra.mxu0 %v4855
    %4944 = vmatprep.subr.mxu0 0.0
    %4945 = vmatpush1.msra.mxu0 %v4856
    %4946 = vmatprep.subr.mxu0 0.0
    %4947 = vmatpush1.msra.mxu0 %v4857
    %4948 = vmatprep.subr.mxu0 0.0
    %4949 = vmatpush1.msra.mxu0 %v4858
    %4950 = vmatprep.subr.mxu0 0.0
    %4951 = vmatpush1.msra.mxu0 %v4859
    %4952 = vmatprep.subr.mxu0 0.0
    %4953 = vmatpush1.msra.mxu0 %v4860
    %4954 = vmatprep.subr.mxu0 0.0
    %4955 = vmatpush1.msra.mxu0 %v4861
    %4956 = vmatprep.subr.mxu0 0.0
    %4957 = vmatpush1.msra.mxu0 %v4862
    %4958 = vmatprep.subr.mxu0 0.0
    %4959 = vmatpush1.msra.mxu0 %v4863
    %4960 = vmatprep.mubr.f32.mxu0 1.0
    %4961 = vmatmul.mubr.f32.gmra.mrb[0].mxu0 1.0
    %v4962 = vpop.f32.mrb[0].mxu0
    %v4963 = vadd.f32 0.0, %v4962
    %v4964 = vpop.f32.mrb[0].mxu0
    %4965 = vdwg.mxu0
    %4966 = vmatprep.subr.mxu0 0.0
    %4967 = vmatpush1.msra.mxu0 %v4864
    %4968 = vmatprep.subr.mxu0 0.0
    %4969 = vmatpush1.msra.mxu0 %v4865
    %4970 = vmatprep.subr.mxu0 0.0
    %4971 = vmatpush1.msra.mxu0 %v4866
    %4972 = vmatprep.subr.mxu0 0.0
    %4973 = vmatpush1.msra.mxu0 %v4867
    %4974 = vmatprep.subr.mxu0 0.0
    %4975 = vmatpush1.msra.mxu0 %v4868
    %4976 = vmatprep.subr.mxu0 0.0
    %4977 = vmatpush1.msra.mxu0 %v4869
    %4978 = vmatprep.subr.mxu0 0.0
    %4979 = vmatpush1.msra.mxu0 %v4870
    %4980 = vmatprep.subr.mxu0 0.0
    %4981 = vmatpush1.msra.mxu0 %v4871
    %4982 = vmatprep.subr.mxu0 0.0
    %4983 = vmatpush1.msra.mxu0 %v4872
    %4984 = vmatprep.subr.mxu0 0.0
    %4985 = vmatpush1.msra.mxu0 %v4873
    %4986 = vmatprep.subr.mxu0 0.0
    %4987 = vmatpush1.msra.mxu0 %v4874
    %4988 = vmatprep.subr.mxu0 0.0
    %4989 = vmatpush1.msra.mxu0 %v4875
    %4990 = vmatprep.subr.mxu0 0.0
    %4991 = vmatpush1.msra.mxu0 %v4876
    %4992 = vmatprep.subr.mxu0 0.0
    %4993 = vmatpush1.msra.mxu0 %v4877
    %4994 = vmatprep.subr.mxu0 0.0
    %4995 = vmatpush1.msra.mxu0 %v4878
    %4996 = vmatprep.subr.mxu0 0.0
    %4997 = vmatpush1.msra.mxu0 %v4879
    %4998 = vmatprep.subr.mxu0 0.0
    %4999 = vmatpush1.msra.mxu0 %v4880
    %5000 = vmatprep.subr.mxu0 0.0
    %5001 = vmatpush1.msra.mxu0 %v4881
    %5002 = vmatprep.subr.mxu0 0.0
    %5003 = vmatpush1.msra.mxu0 %v4882
    %5004 = vmatprep.subr.mxu0 0.0
    %5005 = vmatpush1.msra.mxu0 %v4883
    %5006 = vmatprep.subr.mxu0 0.0
    %5007 = vmatpush1.msra.mxu0 %v4884
    %5008 = vmatprep.subr.mxu0 0.0
    %5009 = vmatpush1.msra.mxu0 %v4885
    %5010 = vmatprep.subr.mxu0 0.0
    %5011 = vmatpush1.msra.mxu0 %v4886
    %5012 = vmatprep.subr.mxu0 0.0
    %5013 = vmatpush1.msra.mxu0 %v4887
    %5014 = vmatprep.subr.mxu0 0.0
    %5015 = vmatpush1.msra.mxu0 %v4888
    %5016 = vmatprep.subr.mxu0 0.0
    %5017 = vmatpush1.msra.mxu0 %v4889
    %5018 = vmatprep.subr.mxu0 0.0
    %5019 = vmatpush1.msra.mxu0 %v4890
    %5020 = vmatprep.subr.mxu0 0.0
    %5021 = vmatpush1.msra.mxu0 %v4891
    %5022 = vmatprep.subr.mxu0 0.0
    %5023 = vmatpush1.msra.mxu0 %v4892
    %5024 = vmatprep.subr.mxu0 0.0
    %5025 = vmatpush1.msra.mxu0 %v4893
    %5026 = vmatprep.subr.mxu0 0.0
    %5027 = vmatpush1.msra.mxu0 %v4894
    %5028 = vmatprep.subr.mxu0 0.0
    %5029 = vmatpush1.msra.mxu0 %v4895
    %5030 = vmatprep.mubr.f32.mxu0 1.0
    %5031 = vmatmul.mubr.f32.gmra.mrb[0].mxu0 1.0
    %v5032 = vpop.f32.mrb[0].mxu0
    %v5033 = vadd.f32 %v4963, %v5032
    %v5034 = vpop.f32.mrb[0].mxu0
    %5035 = vdwg.mxu0
    %v5036 = vmul.f32 %v5033, 0.001953125
    %v5037 = vld [vmem:[#allocation5 + $0xb] sm:$0x1]
    %v5038 = vadd.f32 %v5036, 1e-05
    %v5039 = vrsqrt.pop %v5038
    %v5040 = vmul.f32 %v5037, %v5039
    %v5042 = vlaneseq
    %v5043 = vshrl.u32 %v5042, 7
    %v5044 = vsub.s32 0, %v5043
    %v5045 = vrot.slane %v5040, %v5044
    %v5047 = vmul.f32 %v4768, %v5045
    %v5048 = vmul.f32 %v4769, %v5045
    %v5049 = vmul.f32 %v4770, %v5045
    %v5050 = vmul.f32 %v4771, %v5045
    %v5051 = vmul.f32 %v4772, %v5045
    %v5052 = vmul.f32 %v4773, %v5045
    %v5053 = vmul.f32 %v4774, %v5045
    %v5054 = vmul.f32 %v4775, %v5045
    %v5055 = vmul.f32 %v4776, %v5045
    %v5056 = vmul.f32 %v4777, %v5045
    %v5057 = vmul.f32 %v4778, %v5045
    %v5058 = vmul.f32 %v4779, %v5045
    %v5059 = vmul.f32 %v4780, %v5045
    %v5060 = vmul.f32 %v4781, %v5045
    %v5061 = vmul.f32 %v4782, %v5045
    %v5062 = vmul.f32 %v4783, %v5045
    %v5063 = vmul.f32 %v4784, %v5045
    %v5064 = vmul.f32 %v4785, %v5045
    %v5065 = vmul.f32 %v4786, %v5045
    %v5066 = vmul.f32 %v4787, %v5045
    %v5067 = vmul.f32 %v4788, %v5045
    %v5068 = vmul.f32 %v4789, %v5045
    %v5069 = vmul.f32 %v4790, %v5045
    %v5070 = vmul.f32 %v4791, %v5045
    %v5071 = vmul.f32 %v4792, %v5045
    %v5072 = vmul.f32 %v4793, %v5045
    %v5073 = vmul.f32 %v4794, %v5045
    %v5074 = vmul.f32 %v4795, %v5045
    %v5075 = vmul.f32 %v4796, %v5045
    %v5076 = vmul.f32 %v4797, %v5045
    %v5077 = vmul.f32 %v4798, %v5045
    %v5078 = vmul.f32 %v4799, %v5045
    %v5079 = vmul.f32 %v4800, %v5045
    %v5080 = vmul.f32 %v4801, %v5045
    %v5081 = vmul.f32 %v4802, %v5045
    %v5082 = vmul.f32 %v4803, %v5045
    %v5083 = vmul.f32 %v4804, %v5045
    %v5084 = vmul.f32 %v4805, %v5045
    %v5085 = vmul.f32 %v4806, %v5045
    %v5086 = vmul.f32 %v4807, %v5045
    %v5087 = vmul.f32 %v4808, %v5045
    %v5088 = vmul.f32 %v4809, %v5045
    %v5089 = vmul.f32 %v4810, %v5045
    %v5090 = vmul.f32 %v4811, %v5045
    %v5091 = vmul.f32 %v4812, %v5045
    %v5092 = vmul.f32 %v4813, %v5045
    %v5093 = vmul.f32 %v4814, %v5045
    %v5094 = vmul.f32 %v4815, %v5045
    %v5095 = vmul.f32 %v4816, %v5045
    %v5096 = vmul.f32 %v4817, %v5045
    %v5097 = vmul.f32 %v4818, %v5045
    %v5098 = vmul.f32 %v4819, %v5045
    %v5099 = vmul.f32 %v4820, %v5045
    %v5100 = vmul.f32 %v4821, %v5045
    %v5101 = vmul.f32 %v4822, %v5045
    %v5102 = vmul.f32 %v4823, %v5045
    %v5103 = vmul.f32 %v4824, %v5045
    %v5104 = vmul.f32 %v4825, %v5045
    %v5105 = vmul.f32 %v4826, %v5045
    %v5106 = vmul.f32 %v4827, %v5045
    %v5107 = vmul.f32 %v4828, %v5045
    %v5108 = vmul.f32 %v4829, %v5045
    %v5109 = vmul.f32 %v4830, %v5045
    %v5110 = vmul.f32 %v4831, %v5045
    %v5111 = vld [vmem:[#allocation5 + $0xc] sm:$0x1]
    %v5113 = vlaneseq
    %v5114 = vshrl.u32 %v5113, 7
    %v5115 = vsub.s32 0, %v5114
    %v5116 = vrot.slane %v5111, %v5115
    %v5118 = vadd.f32 %v5047, %v5116
    %v5119 = vadd.f32 %v5048, %v5116
    %v5120 = vadd.f32 %v5049, %v5116
    %v5121 = vadd.f32 %v5050, %v5116
    %v5122 = vadd.f32 %v5051, %v5116
    %v5123 = vadd.f32 %v5052, %v5116
    %v5124 = vadd.f32 %v5053, %v5116
    %v5125 = vadd.f32 %v5054, %v5116
    %v5126 = vadd.f32 %v5055, %v5116
    %v5127 = vadd.f32 %v5056, %v5116
    %v5128 = vadd.f32 %v5057, %v5116
    %v5129 = vadd.f32 %v5058, %v5116
    %v5130 = vadd.f32 %v5059, %v5116
    %v5131 = vadd.f32 %v5060, %v5116
    %v5132 = vadd.f32 %v5061, %v5116
    %v5133 = vadd.f32 %v5062, %v5116
    %v5134 = vadd.f32 %v5063, %v5116
    %v5135 = vadd.f32 %v5064, %v5116
    %v5136 = vadd.f32 %v5065, %v5116
    %v5137 = vadd.f32 %v5066, %v5116
    %v5138 = vadd.f32 %v5067, %v5116
    %v5139 = vadd.f32 %v5068, %v5116
    %v5140 = vadd.f32 %v5069, %v5116
    %v5141 = vadd.f32 %v5070, %v5116
    %v5142 = vadd.f32 %v5071, %v5116
    %v5143 = vadd.f32 %v5072, %v5116
    %v5144 = vadd.f32 %v5073, %v5116
    %v5145 = vadd.f32 %v5074, %v5116
    %v5146 = vadd.f32 %v5075, %v5116
    %v5147 = vadd.f32 %v5076, %v5116
    %v5148 = vadd.f32 %v5077, %v5116
    %v5149 = vadd.f32 %v5078, %v5116
    %v5150 = vadd.f32 %v5079, %v5116
    %v5151 = vadd.f32 %v5080, %v5116
    %v5152 = vadd.f32 %v5081, %v5116
    %v5153 = vadd.f32 %v5082, %v5116
    %v5154 = vadd.f32 %v5083, %v5116
    %v5155 = vadd.f32 %v5084, %v5116
    %v5156 = vadd.f32 %v5085, %v5116
    %v5157 = vadd.f32 %v5086, %v5116
    %v5158 = vadd.f32 %v5087, %v5116
    %v5159 = vadd.f32 %v5088, %v5116
    %v5160 = vadd.f32 %v5089, %v5116
    %v5161 = vadd.f32 %v5090, %v5116
    %v5162 = vadd.f32 %v5091, %v5116
    %v5163 = vadd.f32 %v5092, %v5116
    %v5164 = vadd.f32 %v5093, %v5116
    %v5165 = vadd.f32 %v5094, %v5116
    %v5166 = vadd.f32 %v5095, %v5116
    %v5167 = vadd.f32 %v5096, %v5116
    %v5168 = vadd.f32 %v5097, %v5116
    %v5169 = vadd.f32 %v5098, %v5116
    %v5170 = vadd.f32 %v5099, %v5116
    %v5171 = vadd.f32 %v5100, %v5116
    %v5172 = vadd.f32 %v5101, %v5116
    %v5173 = vadd.f32 %v5102, %v5116
    %v5174 = vadd.f32 %v5103, %v5116
    %v5175 = vadd.f32 %v5104, %v5116
    %v5176 = vadd.f32 %v5105, %v5116
    %v5177 = vadd.f32 %v5106, %v5116
    %v5178 = vadd.f32 %v5107, %v5116
    %v5179 = vadd.f32 %v5108, %v5116
    %v5180 = vadd.f32 %v5109, %v5116
    %v5181 = vadd.f32 %v5110, %v5116
    %v5182 = vmax.f32 %v5118, 0.0
    %v5183 = vmax.f32 %v5119, 0.0
    %v5184 = vmax.f32 %v5120, 0.0
    %v5185 = vmax.f32 %v5121, 0.0
    %v5186 = vmax.f32 %v5122, 0.0
    %v5187 = vmax.f32 %v5123, 0.0
    %v5188 = vmax.f32 %v5124, 0.0
    %v5189 = vmax.f32 %v5125, 0.0
    %v5190 = vmax.f32 %v5126, 0.0
    %v5191 = vmax.f32 %v5127, 0.0
    %v5192 = vmax.f32 %v5128, 0.0
    %v5193 = vmax.f32 %v5129, 0.0
    %v5194 = vmax.f32 %v5130, 0.0
    %v5195 = vmax.f32 %v5131, 0.0
    %v5196 = vmax.f32 %v5132, 0.0
    %v5197 = vmax.f32 %v5133, 0.0
    %v5198 = vmax.f32 %v5134, 0.0
    %v5199 = vmax.f32 %v5135, 0.0
    %v5200 = vmax.f32 %v5136, 0.0
    %v5201 = vmax.f32 %v5137, 0.0
    %v5202 = vmax.f32 %v5138, 0.0
    %v5203 = vmax.f32 %v5139, 0.0
    %v5204 = vmax.f32 %v5140, 0.0
    %v5205 = vmax.f32 %v5141, 0.0
    %v5206 = vmax.f32 %v5142, 0.0
    %v5207 = vmax.f32 %v5143, 0.0
    %v5208 = vmax.f32 %v5144, 0.0
    %v5209 = vmax.f32 %v5145, 0.0
    %v5210 = vmax.f32 %v5146, 0.0
    %v5211 = vmax.f32 %v5147, 0.0
    %v5212 = vmax.f32 %v5148, 0.0
    %v5213 = vmax.f32 %v5149, 0.0
    %v5214 = vmax.f32 %v5150, 0.0
    %v5215 = vmax.f32 %v5151, 0.0
    %v5216 = vmax.f32 %v5152, 0.0
    %v5217 = vmax.f32 %v5153, 0.0
    %v5218 = vmax.f32 %v5154, 0.0
    %v5219 = vmax.f32 %v5155, 0.0
    %v5220 = vmax.f32 %v5156, 0.0
    %v5221 = vmax.f32 %v5157, 0.0
    %v5222 = vmax.f32 %v5158, 0.0
    %v5223 = vmax.f32 %v5159, 0.0
    %v5224 = vmax.f32 %v5160, 0.0
    %v5225 = vmax.f32 %v5161, 0.0
    %v5226 = vmax.f32 %v5162, 0.0
    %v5227 = vmax.f32 %v5163, 0.0
    %v5228 = vmax.f32 %v5164, 0.0
    %v5229 = vmax.f32 %v5165, 0.0
    %v5230 = vmax.f32 %v5166, 0.0
    %v5231 = vmax.f32 %v5167, 0.0
    %v5232 = vmax.f32 %v5168, 0.0
    %v5233 = vmax.f32 %v5169, 0.0
    %v5234 = vmax.f32 %v5170, 0.0
    %v5235 = vmax.f32 %v5171, 0.0
    %v5236 = vmax.f32 %v5172, 0.0
    %v5237 = vmax.f32 %v5173, 0.0
    %v5238 = vmax.f32 %v5174, 0.0
    %v5239 = vmax.f32 %v5175, 0.0
    %v5240 = vmax.f32 %v5176, 0.0
    %v5241 = vmax.f32 %v5177, 0.0
    %v5242 = vmax.f32 %v5178, 0.0
    %v5243 = vmax.f32 %v5179, 0.0
    %v5244 = vmax.f32 %v5180, 0.0
    %v5245 = vmax.f32 %v5181, 0.0
    %v5246 = vpack.c.bf16 %v5183, %v5182
    %v5247 = vpack.c.bf16 %v5185, %v5184
    %v5248 = vpack.c.bf16 %v5187, %v5186
    %v5249 = vpack.c.bf16 %v5189, %v5188
    %v5250 = vpack.c.bf16 %v5191, %v5190
    %v5251 = vpack.c.bf16 %v5193, %v5192
    %v5252 = vpack.c.bf16 %v5195, %v5194
    %v5253 = vpack.c.bf16 %v5197, %v5196
    %v5254 = vpack.c.bf16 %v5199, %v5198
    %v5255 = vpack.c.bf16 %v5201, %v5200
    %v5256 = vpack.c.bf16 %v5203, %v5202
    %v5257 = vpack.c.bf16 %v5205, %v5204
    %v5258 = vpack.c.bf16 %v5207, %v5206
    %v5259 = vpack.c.bf16 %v5209, %v5208
    %v5260 = vpack.c.bf16 %v5211, %v5210
    %v5261 = vpack.c.bf16 %v5213, %v5212
    %v5262 = vpack.c.bf16 %v5215, %v5214
    %v5263 = vpack.c.bf16 %v5217, %v5216
    %v5264 = vpack.c.bf16 %v5219, %v5218
    %v5265 = vpack.c.bf16 %v5221, %v5220
    %v5266 = vpack.c.bf16 %v5223, %v5222
    %v5267 = vpack.c.bf16 %v5225, %v5224
    %v5268 = vpack.c.bf16 %v5227, %v5226
    %v5269 = vpack.c.bf16 %v5229, %v5228
    %v5270 = vpack.c.bf16 %v5231, %v5230
    %v5271 = vpack.c.bf16 %v5233, %v5232
    %v5272 = vpack.c.bf16 %v5235, %v5234
    %v5273 = vpack.c.bf16 %v5237, %v5236
    %v5274 = vpack.c.bf16 %v5239, %v5238
    %v5275 = vpack.c.bf16 %v5241, %v5240
    %v5276 = vpack.c.bf16 %v5243, %v5242
    %v5277 = vpack.c.bf16 %v5245, %v5244
    %v5278 = vld [vmem:[#allocation14] sm:$0xff]
    %v5279 = vld [vmem:[#allocation14 + $0x8] sm:$0xff]
    %v5280 = vld [vmem:[#allocation14 + $0x10] sm:$0xff]
    %v5281 = vld [vmem:[#allocation14 + $0x18] sm:$0xff]
    %v5282 = vld [vmem:[#allocation14 + $0x20] sm:$0xff]
    %v5283 = vld [vmem:[#allocation14 + $0x28] sm:$0xff]
    %v5284 = vld [vmem:[#allocation14 + $0x30] sm:$0xff]
    %v5285 = vld [vmem:[#allocation14 + $0x38] sm:$0xff]
    %v5286 = vld [vmem:[#allocation14 + $0x40] sm:$0xff]
    %v5287 = vld [vmem:[#allocation14 + $0x48] sm:$0xff]
    %v5288 = vld [vmem:[#allocation14 + $0x50] sm:$0xff]
    %v5289 = vld [vmem:[#allocation14 + $0x58] sm:$0xff]
    %v5290 = vld [vmem:[#allocation14 + $0x60] sm:$0xff]
    %v5291 = vld [vmem:[#allocation14 + $0x68] sm:$0xff]
    %v5292 = vld [vmem:[#allocation14 + $0x70] sm:$0xff]
    %v5293 = vld [vmem:[#allocation14 + $0x78] sm:$0xff]
    %v5294 = vld [vmem:[#allocation5 + $0xd] sm:$0x3]
    %v5296 = vlaneseq
    %v5297 = vshrl.u32 %v5296, 7
    %v5298 = vsub.s32 0, %v5297
    %v5299 = vrot.slane %v5294, %v5298
    %v5300 = vlaneseq
    %v5301 = vshrl.u32 %v5300, 7
    %v5302 = vsub.s32 1, %v5301
    %v5303 = vrot.slane %v5294, %v5302
    %v5322 = vunpack.c.l.b16 %v5278
    %v5323 = vunpack.c.h.b16 %v5278
    %v5324 = vunpack.c.l.b16 %v5279
    %v5325 = vunpack.c.h.b16 %v5279
    %v5326 = vunpack.c.l.b16 %v5280
    %v5327 = vunpack.c.h.b16 %v5280
    %v5328 = vunpack.c.l.b16 %v5281
    %v5329 = vunpack.c.h.b16 %v5281
    %v5330 = vunpack.c.l.b16 %v5282
    %v5331 = vunpack.c.h.b16 %v5282
    %v5332 = vunpack.c.l.b16 %v5283
    %v5333 = vunpack.c.h.b16 %v5283
    %v5334 = vunpack.c.l.b16 %v5284
    %v5335 = vunpack.c.h.b16 %v5284
    %v5336 = vunpack.c.l.b16 %v5285
    %v5337 = vunpack.c.h.b16 %v5285
    %v5338 = vunpack.c.l.b16 %v5286
    %v5339 = vunpack.c.h.b16 %v5286
    %v5340 = vunpack.c.l.b16 %v5287
    %v5341 = vunpack.c.h.b16 %v5287
    %v5342 = vunpack.c.l.b16 %v5288
    %v5343 = vunpack.c.h.b16 %v5288
    %v5344 = vunpack.c.l.b16 %v5289
    %v5345 = vunpack.c.h.b16 %v5289
    %v5346 = vunpack.c.l.b16 %v5290
    %v5347 = vunpack.c.h.b16 %v5290
    %v5348 = vunpack.c.l.b16 %v5291
    %v5349 = vunpack.c.h.b16 %v5291
    %v5350 = vunpack.c.l.b16 %v5292
    %v5351 = vunpack.c.h.b16 %v5292
    %v5352 = vunpack.c.l.b16 %v5293
    %v5353 = vunpack.c.h.b16 %v5293
    %v5354 = vpack.c.b16 %v5324, %v5322
    %v5355 = vpack.c.b16 %v5325, %v5323
    %v5356 = vpack.c.b16 %v5328, %v5326
    %v5357 = vpack.c.b16 %v5329, %v5327
    %v5358 = vpack.c.b16 %v5332, %v5330
    %v5359 = vpack.c.b16 %v5333, %v5331
    %v5360 = vpack.c.b16 %v5336, %v5334
    %v5361 = vpack.c.b16 %v5337, %v5335
    %v5362 = vpack.c.b16 %v5340, %v5338
    %v5363 = vpack.c.b16 %v5341, %v5339
    %v5364 = vpack.c.b16 %v5344, %v5342
    %v5365 = vpack.c.b16 %v5345, %v5343
    %v5366 = vpack.c.b16 %v5348, %v5346
    %v5367 = vpack.c.b16 %v5349, %v5347
    %v5368 = vpack.c.b16 %v5352, %v5350
    %v5369 = vpack.c.b16 %v5353, %v5351
    %5386 = vmatprep.subr.bf16.mxu0 %v5355
    %5387 = vmatpush1.bf16.msra.mxu0 %v5354
    %5388 = vmatprep.subr.bf16.mxu0 %v5357
    %5389 = vmatpush1.bf16.msra.mxu0 %v5356
    %5390 = vmatprep.subr.bf16.mxu0 %v5359
    %5391 = vmatpush1.bf16.msra.mxu0 %v5358
    %5392 = vmatprep.subr.bf16.mxu0 %v5361
    %5393 = vmatpush1.bf16.msra.mxu0 %v5360
    %5394 = vmatprep.subr.bf16.mxu0 %v5363
    %5395 = vmatpush1.bf16.msra.mxu0 %v5362
    %5396 = vmatprep.subr.bf16.mxu0 %v5365
    %5397 = vmatpush1.bf16.msra.mxu0 %v5364
    %5398 = vmatprep.subr.bf16.mxu0 %v5367
    %5399 = vmatpush1.bf16.msra.mxu0 %v5366
    %5400 = vmatprep.subr.bf16.mxu0 %v5369
    %5401 = vmatpush1.bf16.msra.mxu0 %v5368
    %5402 = vmatprep.subr.bf16.mxu0 0
    %5403 = vmatpush1.bf16.msra.mxu0 0
    %5404 = vmatprep.subr.bf16.mxu0 0
    %5405 = vmatpush1.bf16.msra.mxu0 0
    %5406 = vmatprep.subr.bf16.mxu0 0
    %5407 = vmatpush1.bf16.msra.mxu0 0
    %5408 = vmatprep.subr.bf16.mxu0 0
    %5409 = vmatpush1.bf16.msra.mxu0 0
    %5410 = vmatprep.subr.bf16.mxu0 0
    %5411 = vmatpush1.bf16.msra.mxu0 0
    %5412 = vmatprep.subr.bf16.mxu0 0
    %5413 = vmatpush1.bf16.msra.mxu0 0
    %5414 = vmatprep.subr.bf16.mxu0 0
    %5415 = vmatpush1.bf16.msra.mxu0 0
    %5416 = vmatprep.subr.bf16.mxu0 0
    %5417 = vmatpush1.bf16.msra.mxu0 0
    %5418 = vmatprep.mubr.bf16.mxu0 0
    %5419 = vmatmul.mubr.bf16.gmra.mrb[0].mxu0 %v5246
    %v5420 = vpop.f32.mrb[0].mxu0
    %v5421 = vadd.f32 %v5299, %v5420
    %v5422 = vpop.f32.mrb[0].mxu0
    %v5423 = vadd.f32 %v5303, %v5422
    %v5424 = vpop.f32.mrb[0].mxu0
    %v5425 = vadd.f32 %v5299, %v5424
    %v5426 = vpop.f32.mrb[0].mxu0
    %v5427 = vadd.f32 %v5303, %v5426
    %5428 = vmatprep.mubr.bf16.mxu0 0
    %5429 = vmatmul.mubr.bf16.gmra.mrb[0].mxu0 %v5247
    %v5430 = vpop.f32.mrb[0].mxu0
    %v5431 = vadd.f32 %v5299, %v5430
    %v5432 = vpop.f32.mrb[0].mxu0
    %v5433 = vadd.f32 %v5303, %v5432
    %v5434 = vpop.f32.mrb[0].mxu0
    %v5435 = vadd.f32 %v5299, %v5434
    %v5436 = vpop.f32.mrb[0].mxu0
    %v5437 = vadd.f32 %v5303, %v5436
    %5438 = vmatprep.mubr.bf16.mxu0 0
    %5439 = vmatmul.mubr.bf16.gmra.mrb[0].mxu0 %v5248
    %v5440 = vpop.f32.mrb[0].mxu0
    %v5441 = vadd.f32 %v5299, %v5440
    %v5442 = vpop.f32.mrb[0].mxu0
    %v5443 = vadd.f32 %v5303, %v5442
    %v5444 = vpop.f32.mrb[0].mxu0
    %v5445 = vadd.f32 %v5299, %v5444
    %v5446 = vpop.f32.mrb[0].mxu0
    %v5447 = vadd.f32 %v5303, %v5446
    %5448 = vmatprep.mubr.bf16.mxu0 0
    %5449 = vmatmul.mubr.bf16.gmra.mrb[0].mxu0 %v5249
    %v5450 = vpop.f32.mrb[0].mxu0
    %v5451 = vadd.f32 %v5299, %v5450
    %v5452 = vpop.f32.mrb[0].mxu0
    %v5453 = vadd.f32 %v5303, %v5452
    %v5454 = vpop.f32.mrb[0].mxu0
    %v5455 = vadd.f32 %v5299, %v5454
    %v5456 = vpop.f32.mrb[0].mxu0
    %v5457 = vadd.f32 %v5303, %v5456
    %5458 = vmatprep.mubr.bf16.mxu0 0
    %5459 = vmatmul.mubr.bf16.gmra.mrb[0].mxu0 %v5250
    %v5460 = vpop.f32.mrb[0].mxu0
    %v5461 = vadd.f32 %v5299, %v5460
    %v5462 = vpop.f32.mrb[0].mxu0
    %v5463 = vadd.f32 %v5303, %v5462
    %v5464 = vpop.f32.mrb[0].mxu0
    %v5465 = vadd.f32 %v5299, %v5464
    %v5466 = vpop.f32.mrb[0].mxu0
    %v5467 = vadd.f32 %v5303, %v5466
    %5468 = vmatprep.mubr.bf16.mxu0 0
    %5469 = vmatmul.mubr.bf16.gmra.mrb[0].mxu0 %v5251
    %v5470 = vpop.f32.mrb[0].mxu0
    %v5471 = vadd.f32 %v5299, %v5470
    %v5472 = vpop.f32.mrb[0].mxu0
    %v5473 = vadd.f32 %v5303, %v5472
    %v5474 = vpop.f32.mrb[0].mxu0
    %v5475 = vadd.f32 %v5299, %v5474
    %v5476 = vpop.f32.mrb[0].mxu0
    %v5477 = vadd.f32 %v5303, %v5476
    %5478 = vmatprep.mubr.bf16.mxu0 0
    %5479 = vmatmul.mubr.bf16.gmra.mrb[0].mxu0 %v5252
    %v5480 = vpop.f32.mrb[0].mxu0
    %v5481 = vadd.f32 %v5299, %v5480
    %v5482 = vpop.f32.mrb[0].mxu0
    %v5483 = vadd.f32 %v5303, %v5482
    %v5484 = vpop.f32.mrb[0].mxu0
    %v5485 = vadd.f32 %v5299, %v5484
    %v5486 = vpop.f32.mrb[0].mxu0
    %v5487 = vadd.f32 %v5303, %v5486
    %5488 = vmatprep.mubr.bf16.mxu0 0
    %5489 = vmatmul.mubr.bf16.gmra.mrb[0].mxu0 %v5253
    %v5490 = vpop.f32.mrb[0].mxu0
    %v5491 = vadd.f32 %v5299, %v5490
    %v5492 = vpop.f32.mrb[0].mxu0
    %v5493 = vadd.f32 %v5303, %v5492
    %v5494 = vpop.f32.mrb[0].mxu0
    %v5495 = vadd.f32 %v5299, %v5494
    %v5496 = vpop.f32.mrb[0].mxu0
    %v5497 = vadd.f32 %v5303, %v5496
    %5498 = vmatprep.mubr.bf16.mxu0 0
    %5499 = vmatmul.mubr.bf16.gmra.mrb[0].mxu0 %v5254
    %v5500 = vpop.f32.mrb[0].mxu0
    %v5501 = vadd.f32 %v5299, %v5500
    %v5502 = vpop.f32.mrb[0].mxu0
    %v5503 = vadd.f32 %v5303, %v5502
    %v5504 = vpop.f32.mrb[0].mxu0
    %v5505 = vadd.f32 %v5299, %v5504
    %v5506 = vpop.f32.mrb[0].mxu0
    %v5507 = vadd.f32 %v5303, %v5506
    %5508 = vmatprep.mubr.bf16.mxu0 0
    %5509 = vmatmul.mubr.bf16.gmra.mrb[0].mxu0 %v5255
    %v5510 = vpop.f32.mrb[0].mxu0
    %v5511 = vadd.f32 %v5299, %v5510
    %v5512 = vpop.f32.mrb[0].mxu0
    %v5513 = vadd.f32 %v5303, %v5512
    %v5514 = vpop.f32.mrb[0].mxu0
    %v5515 = vadd.f32 %v5299, %v5514
    %v5516 = vpop.f32.mrb[0].mxu0
    %v5517 = vadd.f32 %v5303, %v5516
    %5518 = vmatprep.mubr.bf16.mxu0 0
    %5519 = vmatmul.mubr.bf16.gmra.mrb[0].mxu0 %v5256
    %v5520 = vpop.f32.mrb[0].mxu0
    %v5521 = vadd.f32 %v5299, %v5520
    %v5522 = vpop.f32.mrb[0].mxu0
    %v5523 = vadd.f32 %v5303, %v5522
    %v5524 = vpop.f32.mrb[0].mxu0
    %v5525 = vadd.f32 %v5299, %v5524
    %v5526 = vpop.f32.mrb[0].mxu0
    %v5527 = vadd.f32 %v5303, %v5526
    %5528 = vmatprep.mubr.bf16.mxu0 0
    %5529 = vmatmul.mubr.bf16.gmra.mrb[0].mxu0 %v5257
    %v5530 = vpop.f32.mrb[0].mxu0
    %v5531 = vadd.f32 %v5299, %v5530
    %v5532 = vpop.f32.mrb[0].mxu0
    %v5533 = vadd.f32 %v5303, %v5532
    %v5534 = vpop.f32.mrb[0].mxu0
    %v5535 = vadd.f32 %v5299, %v5534
    %v5536 = vpop.f32.mrb[0].mxu0
    %v5537 = vadd.f32 %v5303, %v5536
    %5538 = vmatprep.mubr.bf16.mxu0 0
    %5539 = vmatmul.mubr.bf16.gmra.mrb[0].mxu0 %v5258
    %v5540 = vpop.f32.mrb[0].mxu0
    %v5541 = vadd.f32 %v5299, %v5540
    %v5542 = vpop.f32.mrb[0].mxu0
    %v5543 = vadd.f32 %v5303, %v5542
    %v5544 = vpop.f32.mrb[0].mxu0
    %v5545 = vadd.f32 %v5299, %v5544
    %v5546 = vpop.f32.mrb[0].mxu0
    %v5547 = vadd.f32 %v5303, %v5546
    %5548 = vmatprep.mubr.bf16.mxu0 0
    %5549 = vmatmul.mubr.bf16.gmra.mrb[0].mxu0 %v5259
    %v5550 = vpop.f32.mrb[0].mxu0
    %v5551 = vadd.f32 %v5299, %v5550
    %v5552 = vpop.f32.mrb[0].mxu0
    %v5553 = vadd.f32 %v5303, %v5552
    %v5554 = vpop.f32.mrb[0].mxu0
    %v5555 = vadd.f32 %v5299, %v5554
    %v5556 = vpop.f32.mrb[0].mxu0
    %v5557 = vadd.f32 %v5303, %v5556
    %5558 = vmatprep.mubr.bf16.mxu0 0
    %5559 = vmatmul.mubr.bf16.gmra.mrb[0].mxu0 %v5260
    %v5560 = vpop.f32.mrb[0].mxu0
    %v5561 = vadd.f32 %v5299, %v5560
    %v5562 = vpop.f32.mrb[0].mxu0
    %v5563 = vadd.f32 %v5303, %v5562
    %v5564 = vpop.f32.mrb[0].mxu0
    %v5565 = vadd.f32 %v5299, %v5564
    %v5566 = vpop.f32.mrb[0].mxu0
    %v5567 = vadd.f32 %v5303, %v5566
    %5568 = vmatprep.mubr.bf16.mxu0 0
    %5569 = vmatmul.mubr.bf16.gmra.mrb[0].mxu0 %v5261
    %v5570 = vpop.f32.mrb[0].mxu0
    %v5571 = vadd.f32 %v5299, %v5570
    %v5572 = vpop.f32.mrb[0].mxu0
    %v5573 = vadd.f32 %v5303, %v5572
    %v5574 = vpop.f32.mrb[0].mxu0
    %v5575 = vadd.f32 %v5299, %v5574
    %v5576 = vpop.f32.mrb[0].mxu0
    %v5577 = vadd.f32 %v5303, %v5576
    %5578 = vmatprep.mubr.bf16.mxu0 0
    %5579 = vmatmul.mubr.bf16.gmra.mrb[0].mxu0 %v5262
    %v5580 = vpop.f32.mrb[0].mxu0
    %v5581 = vadd.f32 %v5299, %v5580
    %v5582 = vpop.f32.mrb[0].mxu0
    %v5583 = vadd.f32 %v5303, %v5582
    %v5584 = vpop.f32.mrb[0].mxu0
    %v5585 = vadd.f32 %v5299, %v5584
    %v5586 = vpop.f32.mrb[0].mxu0
    %v5587 = vadd.f32 %v5303, %v5586
    %5588 = vmatprep.mubr.bf16.mxu0 0
    %5589 = vmatmul.mubr.bf16.gmra.mrb[0].mxu0 %v5263
    %v5590 = vpop.f32.mrb[0].mxu0
    %v5591 = vadd.f32 %v5299, %v5590
    %v5592 = vpop.f32.mrb[0].mxu0
    %v5593 = vadd.f32 %v5303, %v5592
    %v5594 = vpop.f32.mrb[0].mxu0
    %v5595 = vadd.f32 %v5299, %v5594
    %v5596 = vpop.f32.mrb[0].mxu0
    %v5597 = vadd.f32 %v5303, %v5596
    %5598 = vmatprep.mubr.bf16.mxu0 0
    %5599 = vmatmul.mubr.bf16.gmra.mrb[0].mxu0 %v5264
    %v5600 = vpop.f32.mrb[0].mxu0
    %v5601 = vadd.f32 %v5299, %v5600
    %v5602 = vpop.f32.mrb[0].mxu0
    %v5603 = vadd.f32 %v5303, %v5602
    %v5604 = vpop.f32.mrb[0].mxu0
    %v5605 = vadd.f32 %v5299, %v5604
    %v5606 = vpop.f32.mrb[0].mxu0
    %v5607 = vadd.f32 %v5303, %v5606
    %5608 = vmatprep.mubr.bf16.mxu0 0
    %5609 = vmatmul.mubr.bf16.gmra.mrb[0].mxu0 %v5265
    %v5610 = vpop.f32.mrb[0].mxu0
    %v5611 = vadd.f32 %v5299, %v5610
    %v5612 = vpop.f32.mrb[0].mxu0
    %v5613 = vadd.f32 %v5303, %v5612
    %v5614 = vpop.f32.mrb[0].mxu0
    %v5615 = vadd.f32 %v5299, %v5614
    %v5616 = vpop.f32.mrb[0].mxu0
    %v5617 = vadd.f32 %v5303, %v5616
    %5618 = vmatprep.mubr.bf16.mxu0 0
    %5619 = vmatmul.mubr.bf16.gmra.mrb[0].mxu0 %v5266
    %v5620 = vpop.f32.mrb[0].mxu0
    %v5621 = vadd.f32 %v5299, %v5620
    %v5622 = vpop.f32.mrb[0].mxu0
    %v5623 = vadd.f32 %v5303, %v5622
    %v5624 = vpop.f32.mrb[0].mxu0
    %v5625 = vadd.f32 %v5299, %v5624
    %v5626 = vpop.f32.mrb[0].mxu0
    %v5627 = vadd.f32 %v5303, %v5626
    %5628 = vmatprep.mubr.bf16.mxu0 0
    %5629 = vmatmul.mubr.bf16.gmra.mrb[0].mxu0 %v5267
    %v5630 = vpop.f32.mrb[0].mxu0
    %v5631 = vadd.f32 %v5299, %v5630
    %v5632 = vpop.f32.mrb[0].mxu0
    %v5633 = vadd.f32 %v5303, %v5632
    %v5634 = vpop.f32.mrb[0].mxu0
    %v5635 = vadd.f32 %v5299, %v5634
    %v5636 = vpop.f32.mrb[0].mxu0
    %v5637 = vadd.f32 %v5303, %v5636
    %5638 = vmatprep.mubr.bf16.mxu0 0
    %5639 = vmatmul.mubr.bf16.gmra.mrb[0].mxu0 %v5268
    %v5640 = vpop.f32.mrb[0].mxu0
    %v5641 = vadd.f32 %v5299, %v5640
    %v5642 = vpop.f32.mrb[0].mxu0
    %v5643 = vadd.f32 %v5303, %v5642
    %v5644 = vpop.f32.mrb[0].mxu0
    %v5645 = vadd.f32 %v5299, %v5644
    %v5646 = vpop.f32.mrb[0].mxu0
    %v5647 = vadd.f32 %v5303, %v5646
    %5648 = vmatprep.mubr.bf16.mxu0 0
    %5649 = vmatmul.mubr.bf16.gmra.mrb[0].mxu0 %v5269
    %v5650 = vpop.f32.mrb[0].mxu0
    %v5651 = vadd.f32 %v5299, %v5650
    %v5652 = vpop.f32.mrb[0].mxu0
    %v5653 = vadd.f32 %v5303, %v5652
    %v5654 = vpop.f32.mrb[0].mxu0
    %v5655 = vadd.f32 %v5299, %v5654
    %v5656 = vpop.f32.mrb[0].mxu0
    %v5657 = vadd.f32 %v5303, %v5656
    %5658 = vmatprep.mubr.bf16.mxu0 0
    %5659 = vmatmul.mubr.bf16.gmra.mrb[0].mxu0 %v5270
    %v5660 = vpop.f32.mrb[0].mxu0
    %v5661 = vadd.f32 %v5299, %v5660
    %v5662 = vpop.f32.mrb[0].mxu0
    %v5663 = vadd.f32 %v5303, %v5662
    %v5664 = vpop.f32.mrb[0].mxu0
    %v5665 = vadd.f32 %v5299, %v5664
    %v5666 = vpop.f32.mrb[0].mxu0
    %v5667 = vadd.f32 %v5303, %v5666
    %5668 = vmatprep.mubr.bf16.mxu0 0
    %5669 = vmatmul.mubr.bf16.gmra.mrb[0].mxu0 %v5271
    %v5670 = vpop.f32.mrb[0].mxu0
    %v5671 = vadd.f32 %v5299, %v5670
    %v5672 = vpop.f32.mrb[0].mxu0
    %v5673 = vadd.f32 %v5303, %v5672
    %v5674 = vpop.f32.mrb[0].mxu0
    %v5675 = vadd.f32 %v5299, %v5674
    %v5676 = vpop.f32.mrb[0].mxu0
    %v5677 = vadd.f32 %v5303, %v5676
    %5678 = vmatprep.mubr.bf16.mxu0 0
    %5679 = vmatmul.mubr.bf16.gmra.mrb[0].mxu0 %v5272
    %v5680 = vpop.f32.mrb[0].mxu0
    %v5681 = vadd.f32 %v5299, %v5680
    %v5682 = vpop.f32.mrb[0].mxu0
    %v5683 = vadd.f32 %v5303, %v5682
    %v5684 = vpop.f32.mrb[0].mxu0
    %v5685 = vadd.f32 %v5299, %v5684
    %v5686 = vpop.f32.mrb[0].mxu0
    %v5687 = vadd.f32 %v5303, %v5686
    %5688 = vmatprep.mubr.bf16.mxu0 0
    %5689 = vmatmul.mubr.bf16.gmra.mrb[0].mxu0 %v5273
    %v5690 = vpop.f32.mrb[0].mxu0
    %v5691 = vadd.f32 %v5299, %v5690
    %v5692 = vpop.f32.mrb[0].mxu0
    %v5693 = vadd.f32 %v5303, %v5692
    %v5694 = vpop.f32.mrb[0].mxu0
    %v5695 = vadd.f32 %v5299, %v5694
    %v5696 = vpop.f32.mrb[0].mxu0
    %v5697 = vadd.f32 %v5303, %v5696
    %5698 = vmatprep.mubr.bf16.mxu0 0
    %5699 = vmatmul.mubr.bf16.gmra.mrb[0].mxu0 %v5274
    %v5700 = vpop.f32.mrb[0].mxu0
    %v5701 = vadd.f32 %v5299, %v5700
    %v5702 = vpop.f32.mrb[0].mxu0
    %v5703 = vadd.f32 %v5303, %v5702
    %v5704 = vpop.f32.mrb[0].mxu0
    %v5705 = vadd.f32 %v5299, %v5704
    %v5706 = vpop.f32.mrb[0].mxu0
    %v5707 = vadd.f32 %v5303, %v5706
    %5708 = vmatprep.mubr.bf16.mxu0 0
    %5709 = vmatmul.mubr.bf16.gmra.mrb[0].mxu0 %v5275
    %v5710 = vpop.f32.mrb[0].mxu0
    %v5711 = vadd.f32 %v5299, %v5710
    %v5712 = vpop.f32.mrb[0].mxu0
    %v5713 = vadd.f32 %v5303, %v5712
    %v5714 = vpop.f32.mrb[0].mxu0
    %v5715 = vadd.f32 %v5299, %v5714
    %v5716 = vpop.f32.mrb[0].mxu0
    %v5717 = vadd.f32 %v5303, %v5716
    %5718 = vmatprep.mubr.bf16.mxu0 0
    %5719 = vmatmul.mubr.bf16.gmra.mrb[0].mxu0 %v5276
    %v5720 = vpop.f32.mrb[0].mxu0
    %v5721 = vadd.f32 %v5299, %v5720
    %v5722 = vpop.f32.mrb[0].mxu0
    %v5723 = vadd.f32 %v5303, %v5722
    %v5724 = vpop.f32.mrb[0].mxu0
    %v5725 = vadd.f32 %v5299, %v5724
    %v5726 = vpop.f32.mrb[0].mxu0
    %v5727 = vadd.f32 %v5303, %v5726
    %5728 = vmatprep.mubr.bf16.mxu0 0
    %5729 = vmatmul.mubr.bf16.gmra.mrb[0].mxu0 %v5277
    %v5730 = vpop.f32.mrb[0].mxu0
    %v5731 = vadd.f32 %v5299, %v5730
    %v5732 = vpop.f32.mrb[0].mxu0
    %v5733 = vadd.f32 %v5303, %v5732
    %v5734 = vpop.f32.mrb[0].mxu0
    %v5735 = vadd.f32 %v5299, %v5734
    %v5736 = vpop.f32.mrb[0].mxu0
    %v5737 = vadd.f32 %v5303, %v5736
    %5738 = vdwg.mxu0
    %5739 = vmatprep.subr.mxu0 %v5423
    %5740 = vmatpush1.msra.mxu0 %v5421
    %5741 = vmatprep.subr.mxu0 %v5427
    %5742 = vmatpush1.msra.mxu0 %v5425
    %5743 = vmatprep.subr.mxu0 %v5433
    %5744 = vmatpush1.msra.mxu0 %v5431
    %5745 = vmatprep.subr.mxu0 %v5437
    %5746 = vmatpush1.msra.mxu0 %v5435
    %5747 = vmatprep.subr.mxu0 %v5443
    %5748 = vmatpush1.msra.mxu0 %v5441
    %5749 = vmatprep.subr.mxu0 %v5447
    %5750 = vmatpush1.msra.mxu0 %v5445
    %5751 = vmatprep.subr.mxu0 %v5453
    %5752 = vmatpush1.msra.mxu0 %v5451
    %5753 = vmatprep.subr.mxu0 %v5457
    %5754 = vmatpush1.msra.mxu0 %v5455
    %5755 = vmatprep.subr.mxu0 %v5463
    %5756 = vmatpush1.msra.mxu0 %v5461
    %5757 = vmatprep.subr.mxu0 %v5467
    %5758 = vmatpush1.msra.mxu0 %v5465
    %5759 = vmatprep.subr.mxu0 %v5473
    %5760 = vmatpush1.msra.mxu0 %v5471
    %5761 = vmatprep.subr.mxu0 %v5477
    %5762 = vmatpush1.msra.mxu0 %v5475
    %5763 = vmatprep.subr.mxu0 %v5483
    %5764 = vmatpush1.msra.mxu0 %v5481
    %5765 = vmatprep.subr.mxu0 %v5487
    %5766 = vmatpush1.msra.mxu0 %v5485
    %5767 = vmatprep.subr.mxu0 %v5493
    %5768 = vmatpush1.msra.mxu0 %v5491
    %5769 = vmatprep.subr.mxu0 %v5497
    %5770 = vmatpush1.msra.mxu0 %v5495
    %5771 = vmatprep.subr.mxu0 %v5503
    %5772 = vmatpush1.msra.mxu0 %v5501
    %5773 = vmatprep.subr.mxu0 %v5507
    %5774 = vmatpush1.msra.mxu0 %v5505
    %5775 = vmatprep.subr.mxu0 %v5513
    %5776 = vmatpush1.msra.mxu0 %v5511
    %5777 = vmatprep.subr.mxu0 %v5517
    %5778 = vmatpush1.msra.mxu0 %v5515
    %5779 = vmatprep.subr.mxu0 %v5523
    %5780 = vmatpush1.msra.mxu0 %v5521
    %5781 = vmatprep.subr.mxu0 %v5527
    %5782 = vmatpush1.msra.mxu0 %v5525
    %5783 = vmatprep.subr.mxu0 %v5533
    %5784 = vmatpush1.msra.mxu0 %v5531
    %5785 = vmatprep.subr.mxu0 %v5537
    %5786 = vmatpush1.msra.mxu0 %v5535
    %5787 = vmatprep.subr.mxu0 %v5543
    %5788 = vmatpush1.msra.mxu0 %v5541
    %5789 = vmatprep.subr.mxu0 %v5547
    %5790 = vmatpush1.msra.mxu0 %v5545
    %5791 = vmatprep.subr.mxu0 %v5553
    %5792 = vmatpush1.msra.mxu0 %v5551
    %5793 = vmatprep.subr.mxu0 %v5557
    %5794 = vmatpush1.msra.mxu0 %v5555
    %5795 = vmatprep.subr.mxu0 %v5563
    %5796 = vmatpush1.msra.mxu0 %v5561
    %5797 = vmatprep.subr.mxu0 %v5567
    %5798 = vmatpush1.msra.mxu0 %v5565
    %5799 = vmatprep.subr.mxu0 %v5573
    %5800 = vmatpush1.msra.mxu0 %v5571
    %5801 = vmatprep.subr.mxu0 %v5577
    %5802 = vmatpush1.msra.mxu0 %v5575
    %5803 = vmatprep.mubr.f32.mxu0 1.0
    %5804 = vmatmul.mubr.f32.gmra.mrb[0].mxu0 1.0
    %v5805 = vpop.f32.mrb[0].mxu0
    %v5806 = vadd.f32 0.0, %v5805
    %v5807 = vpop.f32.mrb[0].mxu0
    %v5808 = vadd.f32 0.0, %v5807
    %5809 = vdwg.mxu0
    %5810 = vmatprep.subr.mxu0 %v5583
    %5811 = vmatpush1.msra.mxu0 %v5581
    %5812 = vmatprep.subr.mxu0 %v5587
    %5813 = vmatpush1.msra.mxu0 %v5585
    %5814 = vmatprep.subr.mxu0 %v5593
    %5815 = vmatpush1.msra.mxu0 %v5591
    %5816 = vmatprep.subr.mxu0 %v5597
    %5817 = vmatpush1.msra.mxu0 %v5595
    %5818 = vmatprep.subr.mxu0 %v5603
    %5819 = vmatpush1.msra.mxu0 %v5601
    %5820 = vmatprep.subr.mxu0 %v5607
    %5821 = vmatpush1.msra.mxu0 %v5605
    %5822 = vmatprep.subr.mxu0 %v5613
    %5823 = vmatpush1.msra.mxu0 %v5611
    %5824 = vmatprep.subr.mxu0 %v5617
    %5825 = vmatpush1.msra.mxu0 %v5615
    %5826 = vmatprep.subr.mxu0 %v5623
    %5827 = vmatpush1.msra.mxu0 %v5621
    %5828 = vmatprep.subr.mxu0 %v5627
    %5829 = vmatpush1.msra.mxu0 %v5625
    %5830 = vmatprep.subr.mxu0 %v5633
    %5831 = vmatpush1.msra.mxu0 %v5631
    %5832 = vmatprep.subr.mxu0 %v5637
    %5833 = vmatpush1.msra.mxu0 %v5635
    %5834 = vmatprep.subr.mxu0 %v5643
    %5835 = vmatpush1.msra.mxu0 %v5641
    %5836 = vmatprep.subr.mxu0 %v5647
    %5837 = vmatpush1.msra.mxu0 %v5645
    %5838 = vmatprep.subr.mxu0 %v5653
    %5839 = vmatpush1.msra.mxu0 %v5651
    %5840 = vmatprep.subr.mxu0 %v5657
    %5841 = vmatpush1.msra.mxu0 %v5655
    %5842 = vmatprep.subr.mxu0 %v5663
    %5843 = vmatpush1.msra.mxu0 %v5661
    %5844 = vmatprep.subr.mxu0 %v5667
    %5845 = vmatpush1.msra.mxu0 %v5665
    %5846 = vmatprep.subr.mxu0 %v5673
    %5847 = vmatpush1.msra.mxu0 %v5671
    %5848 = vmatprep.subr.mxu0 %v5677
    %5849 = vmatpush1.msra.mxu0 %v5675
    %5850 = vmatprep.subr.mxu0 %v5683
    %5851 = vmatpush1.msra.mxu0 %v5681
    %5852 = vmatprep.subr.mxu0 %v5687
    %5853 = vmatpush1.msra.mxu0 %v5685
    %5854 = vmatprep.subr.mxu0 %v5693
    %5855 = vmatpush1.msra.mxu0 %v5691
    %5856 = vmatprep.subr.mxu0 %v5697
    %5857 = vmatpush1.msra.mxu0 %v5695
    %5858 = vmatprep.subr.mxu0 %v5703
    %5859 = vmatpush1.msra.mxu0 %v5701
    %5860 = vmatprep.subr.mxu0 %v5707
    %5861 = vmatpush1.msra.mxu0 %v5705
    %5862 = vmatprep.subr.mxu0 %v5713
    %5863 = vmatpush1.msra.mxu0 %v5711
    %5864 = vmatprep.subr.mxu0 %v5717
    %5865 = vmatpush1.msra.mxu0 %v5715
    %5866 = vmatprep.subr.mxu0 %v5723
    %5867 = vmatpush1.msra.mxu0 %v5721
    %5868 = vmatprep.subr.mxu0 %v5727
    %5869 = vmatpush1.msra.mxu0 %v5725
    %5870 = vmatprep.subr.mxu0 %v5733
    %5871 = vmatpush1.msra.mxu0 %v5731
    %5872 = vmatprep.subr.mxu0 %v5737
    %5873 = vmatpush1.msra.mxu0 %v5735
    %5874 = vmatprep.mubr.f32.mxu0 1.0
    %5875 = vmatmul.mubr.f32.gmra.mrb[0].mxu0 1.0
    %v5876 = vpop.f32.mrb[0].mxu0
    %v5877 = vadd.f32 %v5806, %v5876
    %v5878 = vpop.f32.mrb[0].mxu0
    %v5879 = vadd.f32 %v5808, %v5878
    %5880 = vdwg.mxu0
    %v5881 = vmul.f32 %v5877, 0.001953125
    %v5882 = vmul.f32 %v5879, 0.001953125
    %v5883 = vlaneseq
    %v5884 = vshrl.u32 %v5883, 7
    %v5885 = vsub.s32 0, %v5884
    %v5886 = vrot.slane %v5881, %v5885
    %v5887 = vlaneseq
    %v5888 = vshrl.u32 %v5887, 7
    %v5889 = vsub.s32 0, %v5888
    %v5890 = vrot.slane %v5882, %v5889
    %v5891 = vsub.f32 %v5421, %v5886
    %v5892 = vsub.f32 %v5423, %v5890
    %v5893 = vsub.f32 %v5425, %v5886
    %v5894 = vsub.f32 %v5427, %v5890
    %v5895 = vsub.f32 %v5431, %v5886
    %v5896 = vsub.f32 %v5433, %v5890
    %v5897 = vsub.f32 %v5435, %v5886
    %v5898 = vsub.f32 %v5437, %v5890
    %v5899 = vsub.f32 %v5441, %v5886
    %v5900 = vsub.f32 %v5443, %v5890
    %v5901 = vsub.f32 %v5445, %v5886
    %v5902 = vsub.f32 %v5447, %v5890
    %v5903 = vsub.f32 %v5451, %v5886
    %v5904 = vsub.f32 %v5453, %v5890
    %v5905 = vsub.f32 %v5455, %v5886
    %v5906 = vsub.f32 %v5457, %v5890
    %v5907 = vsub.f32 %v5461, %v5886
    %v5908 = vsub.f32 %v5463, %v5890
    %v5909 = vsub.f32 %v5465, %v5886
    %v5910 = vsub.f32 %v5467, %v5890
    %v5911 = vsub.f32 %v5471, %v5886
    %v5912 = vsub.f32 %v5473, %v5890
    %v5913 = vsub.f32 %v5475, %v5886
    %v5914 = vsub.f32 %v5477, %v5890
    %v5915 = vsub.f32 %v5481, %v5886
    %v5916 = vsub.f32 %v5483, %v5890
    %v5917 = vsub.f32 %v5485, %v5886
    %v5918 = vsub.f32 %v5487, %v5890
    %v5919 = vsub.f32 %v5491, %v5886
    %v5920 = vsub.f32 %v5493, %v5890
    %v5921 = vsub.f32 %v5495, %v5886
    %v5922 = vsub.f32 %v5497, %v5890
    %v5923 = vsub.f32 %v5501, %v5886
    %v5924 = vsub.f32 %v5503, %v5890
    %v5925 = vsub.f32 %v5505, %v5886
    %v5926 = vsub.f32 %v5507, %v5890
    %v5927 = vsub.f32 %v5511, %v5886
    %v5928 = vsub.f32 %v5513, %v5890
    %v5929 = vsub.f32 %v5515, %v5886
    %v5930 = vsub.f32 %v5517, %v5890
    %v5931 = vsub.f32 %v5521, %v5886
    %v5932 = vsub.f32 %v5523, %v5890
    %v5933 = vsub.f32 %v5525, %v5886
    %v5934 = vsub.f32 %v5527, %v5890
    %v5935 = vsub.f32 %v5531, %v5886
    %v5936 = vsub.f32 %v5533, %v5890
    %v5937 = vsub.f32 %v5535, %v5886
    %v5938 = vsub.f32 %v5537, %v5890
    %v5939 = vsub.f32 %v5541, %v5886
    %v5940 = vsub.f32 %v5543, %v5890
    %v5941 = vsub.f32 %v5545, %v5886
    %v5942 = vsub.f32 %v5547, %v5890
    %v5943 = vsub.f32 %v5551, %v5886
    %v5944 = vsub.f32 %v5553, %v5890
    %v5945 = vsub.f32 %v5555, %v5886
    %v5946 = vsub.f32 %v5557, %v5890
    %v5947 = vsub.f32 %v5561, %v5886
    %v5948 = vsub.f32 %v5563, %v5890
    %v5949 = vsub.f32 %v5565, %v5886
    %v5950 = vsub.f32 %v5567, %v5890
    %v5951 = vsub.f32 %v5571, %v5886
    %v5952 = vsub.f32 %v5573, %v5890
    %v5953 = vsub.f32 %v5575, %v5886
    %v5954 = vsub.f32 %v5577, %v5890
    %v5955 = vsub.f32 %v5581, %v5886
    %v5956 = vsub.f32 %v5583, %v5890
    %v5957 = vsub.f32 %v5585, %v5886
    %v5958 = vsub.f32 %v5587, %v5890
    %v5959 = vsub.f32 %v5591, %v5886
    %v5960 = vsub.f32 %v5593, %v5890
    %v5961 = vsub.f32 %v5595, %v5886
    %v5962 = vsub.f32 %v5597, %v5890
    %v5963 = vsub.f32 %v5601, %v5886
    %v5964 = vsub.f32 %v5603, %v5890
    %v5965 = vsub.f32 %v5605, %v5886
    %v5966 = vsub.f32 %v5607, %v5890
    %v5967 = vsub.f32 %v5611, %v5886
    %v5968 = vsub.f32 %v5613, %v5890
    %v5969 = vsub.f32 %v5615, %v5886
    %v5970 = vsub.f32 %v5617, %v5890
    %v5971 = vsub.f32 %v5621, %v5886
    %v5972 = vsub.f32 %v5623, %v5890
    %v5973 = vsub.f32 %v5625, %v5886
    %v5974 = vsub.f32 %v5627, %v5890
    %v5975 = vsub.f32 %v5631, %v5886
    %v5976 = vsub.f32 %v5633, %v5890
    %v5977 = vsub.f32 %v5635, %v5886
    %v5978 = vsub.f32 %v5637, %v5890
    %v5979 = vsub.f32 %v5641, %v5886
    %v5980 = vsub.f32 %v5643, %v5890
    %v5981 = vsub.f32 %v5645, %v5886
    %v5982 = vsub.f32 %v5647, %v5890
    %v5983 = vsub.f32 %v5651, %v5886
    %v5984 = vsub.f32 %v5653, %v5890
    %v5985 = vsub.f32 %v5655, %v5886
    %v5986 = vsub.f32 %v5657, %v5890
    %v5987 = vsub.f32 %v5661, %v5886
    %v5988 = vsub.f32 %v5663, %v5890
    %v5989 = vsub.f32 %v5665, %v5886
    %v5990 = vsub.f32 %v5667, %v5890
    %v5991 = vsub.f32 %v5671, %v5886
    %v5992 = vsub.f32 %v5673, %v5890
    %v5993 = vsub.f32 %v5675, %v5886
    %v5994 = vsub.f32 %v5677, %v5890
    %v5995 = vsub.f32 %v5681, %v5886
    %v5996 = vsub.f32 %v5683, %v5890
    %v5997 = vsub.f32 %v5685, %v5886
    %v5998 = vsub.f32 %v5687, %v5890
    %v5999 = vsub.f32 %v5691, %v5886
    %v6000 = vsub.f32 %v5693, %v5890
    %v6001 = vsub.f32 %v5695, %v5886
    %v6002 = vsub.f32 %v5697, %v5890
    %v6003 = vsub.f32 %v5701, %v5886
    %v6004 = vsub.f32 %v5703, %v5890
    %v6005 = vsub.f32 %v5705, %v5886
    %v6006 = vsub.f32 %v5707, %v5890
    %v6007 = vsub.f32 %v5711, %v5886
    %v6008 = vsub.f32 %v5713, %v5890
    %v6009 = vsub.f32 %v5715, %v5886
    %v6010 = vsub.f32 %v5717, %v5890
    %v6011 = vsub.f32 %v5721, %v5886
    %v6012 = vsub.f32 %v5723, %v5890
    %v6013 = vsub.f32 %v5725, %v5886
    %v6014 = vsub.f32 %v5727, %v5890
    %v6015 = vsub.f32 %v5731, %v5886
    %v6016 = vsub.f32 %v5733, %v5890
    %v6017 = vsub.f32 %v5735, %v5886
    %v6018 = vsub.f32 %v5737, %v5890
    %v6019 = vmul.f32 %v5891, %v5891
    %v6020 = vmul.f32 %v5892, %v5892
    %v6021 = vmul.f32 %v5893, %v5893
    %v6022 = vmul.f32 %v5894, %v5894
    %v6023 = vmul.f32 %v5895, %v5895
    %v6024 = vmul.f32 %v5896, %v5896
    %v6025 = vmul.f32 %v5897, %v5897
    %v6026 = vmul.f32 %v5898, %v5898
    %v6027 = vmul.f32 %v5899, %v5899
    %v6028 = vmul.f32 %v5900, %v5900
    %v6029 = vmul.f32 %v5901, %v5901
    %v6030 = vmul.f32 %v5902, %v5902
    %v6031 = vmul.f32 %v5903, %v5903
    %v6032 = vmul.f32 %v5904, %v5904
    %v6033 = vmul.f32 %v5905, %v5905
    %v6034 = vmul.f32 %v5906, %v5906
    %v6035 = vmul.f32 %v5907, %v5907
    %v6036 = vmul.f32 %v5908, %v5908
    %v6037 = vmul.f32 %v5909, %v5909
    %v6038 = vmul.f32 %v5910, %v5910
    %v6039 = vmul.f32 %v5911, %v5911
    %v6040 = vmul.f32 %v5912, %v5912
    %v6041 = vmul.f32 %v5913, %v5913
    %v6042 = vmul.f32 %v5914, %v5914
    %v6043 = vmul.f32 %v5915, %v5915
    %v6044 = vmul.f32 %v5916, %v5916
    %v6045 = vmul.f32 %v5917, %v5917
    %v6046 = vmul.f32 %v5918, %v5918
    %v6047 = vmul.f32 %v5919, %v5919
    %v6048 = vmul.f32 %v5920, %v5920
    %v6049 = vmul.f32 %v5921, %v5921
    %v6050 = vmul.f32 %v5922, %v5922
    %v6051 = vmul.f32 %v5923, %v5923
    %v6052 = vmul.f32 %v5924, %v5924
    %v6053 = vmul.f32 %v5925, %v5925
    %v6054 = vmul.f32 %v5926, %v5926
    %v6055 = vmul.f32 %v5927, %v5927
    %v6056 = vmul.f32 %v5928, %v5928
    %v6057 = vmul.f32 %v5929, %v5929
    %v6058 = vmul.f32 %v5930, %v5930
    %v6059 = vmul.f32 %v5931, %v5931
    %v6060 = vmul.f32 %v5932, %v5932
    %v6061 = vmul.f32 %v5933, %v5933
    %v6062 = vmul.f32 %v5934, %v5934
    %v6063 = vmul.f32 %v5935, %v5935
    %v6064 = vmul.f32 %v5936, %v5936
    %v6065 = vmul.f32 %v5937, %v5937
    %v6066 = vmul.f32 %v5938, %v5938
    %v6067 = vmul.f32 %v5939, %v5939
    %v6068 = vmul.f32 %v5940, %v5940
    %v6069 = vmul.f32 %v5941, %v5941
    %v6070 = vmul.f32 %v5942, %v5942
    %v6071 = vmul.f32 %v5943, %v5943
    %v6072 = vmul.f32 %v5944, %v5944
    %v6073 = vmul.f32 %v5945, %v5945
    %v6074 = vmul.f32 %v5946, %v5946
    %v6075 = vmul.f32 %v5947, %v5947
    %v6076 = vmul.f32 %v5948, %v5948
    %v6077 = vmul.f32 %v5949, %v5949
    %v6078 = vmul.f32 %v5950, %v5950
    %v6079 = vmul.f32 %v5951, %v5951
    %v6080 = vmul.f32 %v5952, %v5952
    %v6081 = vmul.f32 %v5953, %v5953
    %v6082 = vmul.f32 %v5954, %v5954
    %v6083 = vmul.f32 %v5955, %v5955
    %v6084 = vmul.f32 %v5956, %v5956
    %v6085 = vmul.f32 %v5957, %v5957
    %v6086 = vmul.f32 %v5958, %v5958
    %v6087 = vmul.f32 %v5959, %v5959
    %v6088 = vmul.f32 %v5960, %v5960
    %v6089 = vmul.f32 %v5961, %v5961
    %v6090 = vmul.f32 %v5962, %v5962
    %v6091 = vmul.f32 %v5963, %v5963
    %v6092 = vmul.f32 %v5964, %v5964
    %v6093 = vmul.f32 %v5965, %v5965
    %v6094 = vmul.f32 %v5966, %v5966
    %v6095 = vmul.f32 %v5967, %v5967
    %v6096 = vmul.f32 %v5968, %v5968
    %v6097 = vmul.f32 %v5969, %v5969
    %v6098 = vmul.f32 %v5970, %v5970
    %v6099 = vmul.f32 %v5971, %v5971
    %v6100 = vmul.f32 %v5972, %v5972
    %v6101 = vmul.f32 %v5973, %v5973
    %v6102 = vmul.f32 %v5974, %v5974
    %v6103 = vmul.f32 %v5975, %v5975
    %v6104 = vmul.f32 %v5976, %v5976
    %v6105 = vmul.f32 %v5977, %v5977
    %v6106 = vmul.f32 %v5978, %v5978
    %v6107 = vmul.f32 %v5979, %v5979
    %v6108 = vmul.f32 %v5980, %v5980
    %v6109 = vmul.f32 %v5981, %v5981
    %v6110 = vmul.f32 %v5982, %v5982
    %v6111 = vmul.f32 %v5983, %v5983
    %v6112 = vmul.f32 %v5984, %v5984
    %v6113 = vmul.f32 %v5985, %v5985
    %v6114 = vmul.f32 %v5986, %v5986
    %v6115 = vmul.f32 %v5987, %v5987
    %v6116 = vmul.f32 %v5988, %v5988
    %v6117 = vmul.f32 %v5989, %v5989
    %v6118 = vmul.f32 %v5990, %v5990
    %v6119 = vmul.f32 %v5991, %v5991
    %v6120 = vmul.f32 %v5992, %v5992
    %v6121 = vmul.f32 %v5993, %v5993
    %v6122 = vmul.f32 %v5994, %v5994
    %v6123 = vmul.f32 %v5995, %v5995
    %v6124 = vmul.f32 %v5996, %v5996
    %v6125 = vmul.f32 %v5997, %v5997
    %v6126 = vmul.f32 %v5998, %v5998
    %v6127 = vmul.f32 %v5999, %v5999
    %v6128 = vmul.f32 %v6000, %v6000
    %v6129 = vmul.f32 %v6001, %v6001
    %v6130 = vmul.f32 %v6002, %v6002
    %v6131 = vmul.f32 %v6003, %v6003
    %v6132 = vmul.f32 %v6004, %v6004
    %v6133 = vmul.f32 %v6005, %v6005
    %v6134 = vmul.f32 %v6006, %v6006
    %v6135 = vmul.f32 %v6007, %v6007
    %v6136 = vmul.f32 %v6008, %v6008
    %v6137 = vmul.f32 %v6009, %v6009
    %v6138 = vmul.f32 %v6010, %v6010
    %v6139 = vmul.f32 %v6011, %v6011
    %v6140 = vmul.f32 %v6012, %v6012
    %v6141 = vmul.f32 %v6013, %v6013
    %v6142 = vmul.f32 %v6014, %v6014
    %v6143 = vmul.f32 %v6015, %v6015
    %v6144 = vmul.f32 %v6016, %v6016
    %v6145 = vmul.f32 %v6017, %v6017
    %v6146 = vmul.f32 %v6018, %v6018
    %6147 = vmatprep.subr.mxu0 %v6020
    %6148 = vmatpush1.msra.mxu0 %v6019
    %6149 = vmatprep.subr.mxu0 %v6022
    %6150 = vmatpush1.msra.mxu0 %v6021
    %6151 = vmatprep.subr.mxu0 %v6024
    %6152 = vmatpush1.msra.mxu0 %v6023
    %6153 = vmatprep.subr.mxu0 %v6026
    %6154 = vmatpush1.msra.mxu0 %v6025
    %6155 = vmatprep.subr.mxu0 %v6028
    %6156 = vmatpush1.msra.mxu0 %v6027
    %6157 = vmatprep.subr.mxu0 %v6030
    %6158 = vmatpush1.msra.mxu0 %v6029
    %6159 = vmatprep.subr.mxu0 %v6032
    %6160 = vmatpush1.msra.mxu0 %v6031
    %6161 = vmatprep.subr.mxu0 %v6034
    %6162 = vmatpush1.msra.mxu0 %v6033
    %6163 = vmatprep.subr.mxu0 %v6036
    %6164 = vmatpush1.msra.mxu0 %v6035
    %6165 = vmatprep.subr.mxu0 %v6038
    %6166 = vmatpush1.msra.mxu0 %v6037
    %6167 = vmatprep.subr.mxu0 %v6040
    %6168 = vmatpush1.msra.mxu0 %v6039
    %6169 = vmatprep.subr.mxu0 %v6042
    %6170 = vmatpush1.msra.mxu0 %v6041
    %6171 = vmatprep.subr.mxu0 %v6044
    %6172 = vmatpush1.msra.mxu0 %v6043
    %6173 = vmatprep.subr.mxu0 %v6046
    %6174 = vmatpush1.msra.mxu0 %v6045
    %6175 = vmatprep.subr.mxu0 %v6048
    %6176 = vmatpush1.msra.mxu0 %v6047
    %6177 = vmatprep.subr.mxu0 %v6050
    %6178 = vmatpush1.msra.mxu0 %v6049
    %6179 = vmatprep.subr.mxu0 %v6052
    %6180 = vmatpush1.msra.mxu0 %v6051
    %6181 = vmatprep.subr.mxu0 %v6054
    %6182 = vmatpush1.msra.mxu0 %v6053
    %6183 = vmatprep.subr.mxu0 %v6056
    %6184 = vmatpush1.msra.mxu0 %v6055
    %6185 = vmatprep.subr.mxu0 %v6058
    %6186 = vmatpush1.msra.mxu0 %v6057
    %6187 = vmatprep.subr.mxu0 %v6060
    %6188 = vmatpush1.msra.mxu0 %v6059
    %6189 = vmatprep.subr.mxu0 %v6062
    %6190 = vmatpush1.msra.mxu0 %v6061
    %6191 = vmatprep.subr.mxu0 %v6064
    %6192 = vmatpush1.msra.mxu0 %v6063
    %6193 = vmatprep.subr.mxu0 %v6066
    %6194 = vmatpush1.msra.mxu0 %v6065
    %6195 = vmatprep.subr.mxu0 %v6068
    %6196 = vmatpush1.msra.mxu0 %v6067
    %6197 = vmatprep.subr.mxu0 %v6070
    %6198 = vmatpush1.msra.mxu0 %v6069
    %6199 = vmatprep.subr.mxu0 %v6072
    %6200 = vmatpush1.msra.mxu0 %v6071
    %6201 = vmatprep.subr.mxu0 %v6074
    %6202 = vmatpush1.msra.mxu0 %v6073
    %6203 = vmatprep.subr.mxu0 %v6076
    %6204 = vmatpush1.msra.mxu0 %v6075
    %6205 = vmatprep.subr.mxu0 %v6078
    %6206 = vmatpush1.msra.mxu0 %v6077
    %6207 = vmatprep.subr.mxu0 %v6080
    %6208 = vmatpush1.msra.mxu0 %v6079
    %6209 = vmatprep.subr.mxu0 %v6082
    %6210 = vmatpush1.msra.mxu0 %v6081
    %6211 = vmatprep.mubr.f32.mxu0 1.0
    %6212 = vmatmul.mubr.f32.gmra.mrb[0].mxu0 1.0
    %v6213 = vpop.f32.mrb[0].mxu0
    %v6214 = vadd.f32 0.0, %v6213
    %v6215 = vpop.f32.mrb[0].mxu0
    %v6216 = vadd.f32 0.0, %v6215
    %6217 = vdwg.mxu0
    %6218 = vmatprep.subr.mxu0 %v6084
    %6219 = vmatpush1.msra.mxu0 %v6083
    %6220 = vmatprep.subr.mxu0 %v6086
    %6221 = vmatpush1.msra.mxu0 %v6085
    %6222 = vmatprep.subr.mxu0 %v6088
    %6223 = vmatpush1.msra.mxu0 %v6087
    %6224 = vmatprep.subr.mxu0 %v6090
    %6225 = vmatpush1.msra.mxu0 %v6089
    %6226 = vmatprep.subr.mxu0 %v6092
    %6227 = vmatpush1.msra.mxu0 %v6091
    %6228 = vmatprep.subr.mxu0 %v6094
    %6229 = vmatpush1.msra.mxu0 %v6093
    %6230 = vmatprep.subr.mxu0 %v6096
    %6231 = vmatpush1.msra.mxu0 %v6095
    %6232 = vmatprep.subr.mxu0 %v6098
    %6233 = vmatpush1.msra.mxu0 %v6097
    %6234 = vmatprep.subr.mxu0 %v6100
    %6235 = vmatpush1.msra.mxu0 %v6099
    %6236 = vmatprep.subr.mxu0 %v6102
    %6237 = vmatpush1.msra.mxu0 %v6101
    %6238 = vmatprep.subr.mxu0 %v6104
    %6239 = vmatpush1.msra.mxu0 %v6103
    %6240 = vmatprep.subr.mxu0 %v6106
    %6241 = vmatpush1.msra.mxu0 %v6105
    %6242 = vmatprep.subr.mxu0 %v6108
    %6243 = vmatpush1.msra.mxu0 %v6107
    %6244 = vmatprep.subr.mxu0 %v6110
    %6245 = vmatpush1.msra.mxu0 %v6109
    %6246 = vmatprep.subr.mxu0 %v6112
    %6247 = vmatpush1.msra.mxu0 %v6111
    %6248 = vmatprep.subr.mxu0 %v6114
    %6249 = vmatpush1.msra.mxu0 %v6113
    %6250 = vmatprep.subr.mxu0 %v6116
    %6251 = vmatpush1.msra.mxu0 %v6115
    %6252 = vmatprep.subr.mxu0 %v6118
    %6253 = vmatpush1.msra.mxu0 %v6117
    %6254 = vmatprep.subr.mxu0 %v6120
    %6255 = vmatpush1.msra.mxu0 %v6119
    %6256 = vmatprep.subr.mxu0 %v6122
    %6257 = vmatpush1.msra.mxu0 %v6121
    %6258 = vmatprep.subr.mxu0 %v6124
    %6259 = vmatpush1.msra.mxu0 %v6123
    %6260 = vmatprep.subr.mxu0 %v6126
    %6261 = vmatpush1.msra.mxu0 %v6125
    %6262 = vmatprep.subr.mxu0 %v6128
    %6263 = vmatpush1.msra.mxu0 %v6127
    %6264 = vmatprep.subr.mxu0 %v6130
    %6265 = vmatpush1.msra.mxu0 %v6129
    %6266 = vmatprep.subr.mxu0 %v6132
    %6267 = vmatpush1.msra.mxu0 %v6131
    %6268 = vmatprep.subr.mxu0 %v6134
    %6269 = vmatpush1.msra.mxu0 %v6133
    %6270 = vmatprep.subr.mxu0 %v6136
    %6271 = vmatpush1.msra.mxu0 %v6135
    %6272 = vmatprep.subr.mxu0 %v6138
    %6273 = vmatpush1.msra.mxu0 %v6137
    %6274 = vmatprep.subr.mxu0 %v6140
    %6275 = vmatpush1.msra.mxu0 %v6139
    %6276 = vmatprep.subr.mxu0 %v6142
    %6277 = vmatpush1.msra.mxu0 %v6141
    %6278 = vmatprep.subr.mxu0 %v6144
    %6279 = vmatpush1.msra.mxu0 %v6143
    %6280 = vmatprep.subr.mxu0 %v6146
    %6281 = vmatpush1.msra.mxu0 %v6145
    %6282 = vmatprep.mubr.f32.mxu0 1.0
    %6283 = vmatmul.mubr.f32.gmra.mrb[0].mxu0 1.0
    %v6284 = vpop.f32.mrb[0].mxu0
    %v6285 = vadd.f32 %v6214, %v6284
    %v6286 = vpop.f32.mrb[0].mxu0
    %v6287 = vadd.f32 %v6216, %v6286
    %6288 = vdwg.mxu0
    %v6289 = vmul.f32 %v6285, 0.001953125
    %v6290 = vmul.f32 %v6287, 0.001953125
    %v6291 = vld [vmem:[#allocation5 + $0xf] sm:$0x3]
    %v6292 = vadd.f32 %v6289, 1e-05
    %v6293 = vadd.f32 %v6290, 1e-05
    %v6294 = vrsqrt.pop %v6292
    %v6295 = vrsqrt.pop %v6293
    %v6298 = vcombine.low %v6294, %v6295
    %v6300 = vunpack.c.l.s4 1966171168
    %v6301 = vunpack.c.0.s8 %v6300
    %v6302 = vlaneseq
    %v6303 = vshrl.u32 %v6302, 7
    %v6304 = vsub.s32 %v6301, %v6303
    %v6305 = vrot.slane %v6298, %v6304
    %v6307 = vunpack.c.l.s4 1966171168
    %v6308 = vunpack.c.0.s8 %v6307
    %v6309 = vlaneseq
    %v6310 = vshrl.u32 %v6309, 7
    %v6311 = vsub.s32 %v6308, %v6310
    %v6312 = vrot.slane %v6305, %v6311
    %v6314 = vmul.f32 %v6291, %v6312
    %v6316 = vlaneseq
    %v6317 = vshrl.u32 %v6316, 7
    %v6318 = vsub.s32 0, %v6317
    %v6319 = vrot.slane %v6314, %v6318
    %v6320 = vlaneseq
    %v6321 = vshrl.u32 %v6320, 7
    %v6322 = vsub.s32 1, %v6321
    %v6323 = vrot.slane %v6314, %v6322
    %v6326 = vmul.f32 %v5891, %v6319
    %v6327 = vmul.f32 %v5892, %v6323
    %v6328 = vmul.f32 %v5893, %v6319
    %v6329 = vmul.f32 %v5894, %v6323
    %v6330 = vmul.f32 %v5895, %v6319
    %v6331 = vmul.f32 %v5896, %v6323
    %v6332 = vmul.f32 %v5897, %v6319
    %v6333 = vmul.f32 %v5898, %v6323
    %v6334 = vmul.f32 %v5899, %v6319
    %v6335 = vmul.f32 %v5900, %v6323
    %v6336 = vmul.f32 %v5901, %v6319
    %v6337 = vmul.f32 %v5902, %v6323
    %v6338 = vmul.f32 %v5903, %v6319
    %v6339 = vmul.f32 %v5904, %v6323
    %v6340 = vmul.f32 %v5905, %v6319
    %v6341 = vmul.f32 %v5906, %v6323
    %v6342 = vmul.f32 %v5907, %v6319
    %v6343 = vmul.f32 %v5908, %v6323
    %v6344 = vmul.f32 %v5909, %v6319
    %v6345 = vmul.f32 %v5910, %v6323
    %v6346 = vmul.f32 %v5911, %v6319
    %v6347 = vmul.f32 %v5912, %v6323
    %v6348 = vmul.f32 %v5913, %v6319
    %v6349 = vmul.f32 %v5914, %v6323
    %v6350 = vmul.f32 %v5915, %v6319
    %v6351 = vmul.f32 %v5916, %v6323
    %v6352 = vmul.f32 %v5917, %v6319
    %v6353 = vmul.f32 %v5918, %v6323
    %v6354 = vmul.f32 %v5919, %v6319
    %v6355 = vmul.f32 %v5920, %v6323
    %v6356 = vmul.f32 %v5921, %v6319
    %v6357 = vmul.f32 %v5922, %v6323
    %v6358 = vmul.f32 %v5923, %v6319
    %v6359 = vmul.f32 %v5924, %v6323
    %v6360 = vmul.f32 %v5925, %v6319
    %v6361 = vmul.f32 %v5926, %v6323
    %v6362 = vmul.f32 %v5927, %v6319
    %v6363 = vmul.f32 %v5928, %v6323
    %v6364 = vmul.f32 %v5929, %v6319
    %v6365 = vmul.f32 %v5930, %v6323
    %v6366 = vmul.f32 %v5931, %v6319
    %v6367 = vmul.f32 %v5932, %v6323
    %v6368 = vmul.f32 %v5933, %v6319
    %v6369 = vmul.f32 %v5934, %v6323
    %v6370 = vmul.f32 %v5935, %v6319
    %v6371 = vmul.f32 %v5936, %v6323
    %v6372 = vmul.f32 %v5937, %v6319
    %v6373 = vmul.f32 %v5938, %v6323
    %v6374 = vmul.f32 %v5939, %v6319
    %v6375 = vmul.f32 %v5940, %v6323
    %v6376 = vmul.f32 %v5941, %v6319
    %v6377 = vmul.f32 %v5942, %v6323
    %v6378 = vmul.f32 %v5943, %v6319
    %v6379 = vmul.f32 %v5944, %v6323
    %v6380 = vmul.f32 %v5945, %v6319
    %v6381 = vmul.f32 %v5946, %v6323
    %v6382 = vmul.f32 %v5947, %v6319
    %v6383 = vmul.f32 %v5948, %v6323
    %v6384 = vmul.f32 %v5949, %v6319
    %v6385 = vmul.f32 %v5950, %v6323
    %v6386 = vmul.f32 %v5951, %v6319
    %v6387 = vmul.f32 %v5952, %v6323
    %v6388 = vmul.f32 %v5953, %v6319
    %v6389 = vmul.f32 %v5954, %v6323
    %v6390 = vmul.f32 %v5955, %v6319
    %v6391 = vmul.f32 %v5956, %v6323
    %v6392 = vmul.f32 %v5957, %v6319
    %v6393 = vmul.f32 %v5958, %v6323
    %v6394 = vmul.f32 %v5959, %v6319
    %v6395 = vmul.f32 %v5960, %v6323
    %v6396 = vmul.f32 %v5961, %v6319
    %v6397 = vmul.f32 %v5962, %v6323
    %v6398 = vmul.f32 %v5963, %v6319
    %v6399 = vmul.f32 %v5964, %v6323
    %v6400 = vmul.f32 %v5965, %v6319
    %v6401 = vmul.f32 %v5966, %v6323
    %v6402 = vmul.f32 %v5967, %v6319
    %v6403 = vmul.f32 %v5968, %v6323
    %v6404 = vmul.f32 %v5969, %v6319
    %v6405 = vmul.f32 %v5970, %v6323
    %v6406 = vmul.f32 %v5971, %v6319
    %v6407 = vmul.f32 %v5972, %v6323
    %v6408 = vmul.f32 %v5973, %v6319
    %v6409 = vmul.f32 %v5974, %v6323
    %v6410 = vmul.f32 %v5975, %v6319
    %v6411 = vmul.f32 %v5976, %v6323
    %v6412 = vmul.f32 %v5977, %v6319
    %v6413 = vmul.f32 %v5978, %v6323
    %v6414 = vmul.f32 %v5979, %v6319
    %v6415 = vmul.f32 %v5980, %v6323
    %v6416 = vmul.f32 %v5981, %v6319
    %v6417 = vmul.f32 %v5982, %v6323
    %v6418 = vmul.f32 %v5983, %v6319
    %v6419 = vmul.f32 %v5984, %v6323
    %v6420 = vmul.f32 %v5985, %v6319
    %v6421 = vmul.f32 %v5986, %v6323
    %v6422 = vmul.f32 %v5987, %v6319
    %v6423 = vmul.f32 %v5988, %v6323
    %v6424 = vmul.f32 %v5989, %v6319
    %v6425 = vmul.f32 %v5990, %v6323
    %v6426 = vmul.f32 %v5991, %v6319
    %v6427 = vmul.f32 %v5992, %v6323
    %v6428 = vmul.f32 %v5993, %v6319
    %v6429 = vmul.f32 %v5994, %v6323
    %v6430 = vmul.f32 %v5995, %v6319
    %v6431 = vmul.f32 %v5996, %v6323
    %v6432 = vmul.f32 %v5997, %v6319
    %v6433 = vmul.f32 %v5998, %v6323
    %v6434 = vmul.f32 %v5999, %v6319
    %v6435 = vmul.f32 %v6000, %v6323
    %v6436 = vmul.f32 %v6001, %v6319
    %v6437 = vmul.f32 %v6002, %v6323
    %v6438 = vmul.f32 %v6003, %v6319
    %v6439 = vmul.f32 %v6004, %v6323
    %v6440 = vmul.f32 %v6005, %v6319
    %v6441 = vmul.f32 %v6006, %v6323
    %v6442 = vmul.f32 %v6007, %v6319
    %v6443 = vmul.f32 %v6008, %v6323
    %v6444 = vmul.f32 %v6009, %v6319
    %v6445 = vmul.f32 %v6010, %v6323
    %v6446 = vmul.f32 %v6011, %v6319
    %v6447 = vmul.f32 %v6012, %v6323
    %v6448 = vmul.f32 %v6013, %v6319
    %v6449 = vmul.f32 %v6014, %v6323
    %v6450 = vmul.f32 %v6015, %v6319
    %v6451 = vmul.f32 %v6016, %v6323
    %v6452 = vmul.f32 %v6017, %v6319
    %v6453 = vmul.f32 %v6018, %v6323
    %v6454 = vld [vmem:[#allocation5 + $0x11] sm:$0x3]
    %v6456 = vlaneseq
    %v6457 = vshrl.u32 %v6456, 7
    %v6458 = vsub.s32 0, %v6457
    %v6459 = vrot.slane %v6454, %v6458
    %v6460 = vlaneseq
    %v6461 = vshrl.u32 %v6460, 7
    %v6462 = vsub.s32 1, %v6461
    %v6463 = vrot.slane %v6454, %v6462
    %v6466 = vadd.f32 %v6326, %v6459
    %v6467 = vadd.f32 %v6327, %v6463
    %v6468 = vadd.f32 %v6328, %v6459
    %v6469 = vadd.f32 %v6329, %v6463
    %v6470 = vadd.f32 %v6330, %v6459
    %v6471 = vadd.f32 %v6331, %v6463
    %v6472 = vadd.f32 %v6332, %v6459
    %v6473 = vadd.f32 %v6333, %v6463
    %v6474 = vadd.f32 %v6334, %v6459
    %v6475 = vadd.f32 %v6335, %v6463
    %v6476 = vadd.f32 %v6336, %v6459
    %v6477 = vadd.f32 %v6337, %v6463
    %v6478 = vadd.f32 %v6338, %v6459
    %v6479 = vadd.f32 %v6339, %v6463
    %v6480 = vadd.f32 %v6340, %v6459
    %v6481 = vadd.f32 %v6341, %v6463
    %v6482 = vadd.f32 %v6342, %v6459
    %v6483 = vadd.f32 %v6343, %v6463
    %v6484 = vadd.f32 %v6344, %v6459
    %v6485 = vadd.f32 %v6345, %v6463
    %v6486 = vadd.f32 %v6346, %v6459
    %v6487 = vadd.f32 %v6347, %v6463
    %v6488 = vadd.f32 %v6348, %v6459
    %v6489 = vadd.f32 %v6349, %v6463
    %v6490 = vadd.f32 %v6350, %v6459
    %v6491 = vadd.f32 %v6351, %v6463
    %v6492 = vadd.f32 %v6352, %v6459
    %v6493 = vadd.f32 %v6353, %v6463
    %v6494 = vadd.f32 %v6354, %v6459
    %v6495 = vadd.f32 %v6355, %v6463
    %v6496 = vadd.f32 %v6356, %v6459
    %v6497 = vadd.f32 %v6357, %v6463
    %v6498 = vadd.f32 %v6358, %v6459
    %v6499 = vadd.f32 %v6359, %v6463
    %v6500 = vadd.f32 %v6360, %v6459
    %v6501 = vadd.f32 %v6361, %v6463
    %v6502 = vadd.f32 %v6362, %v6459
    %v6503 = vadd.f32 %v6363, %v6463
    %v6504 = vadd.f32 %v6364, %v6459
    %v6505 = vadd.f32 %v6365, %v6463
    %v6506 = vadd.f32 %v6366, %v6459
    %v6507 = vadd.f32 %v6367, %v6463
    %v6508 = vadd.f32 %v6368, %v6459
    %v6509 = vadd.f32 %v6369, %v6463
    %v6510 = vadd.f32 %v6370, %v6459
    %v6511 = vadd.f32 %v6371, %v6463
    %v6512 = vadd.f32 %v6372, %v6459
    %v6513 = vadd.f32 %v6373, %v6463
    %v6514 = vadd.f32 %v6374, %v6459
    %v6515 = vadd.f32 %v6375, %v6463
    %v6516 = vadd.f32 %v6376, %v6459
    %v6517 = vadd.f32 %v6377, %v6463
    %v6518 = vadd.f32 %v6378, %v6459
    %v6519 = vadd.f32 %v6379, %v6463
    %v6520 = vadd.f32 %v6380, %v6459
    %v6521 = vadd.f32 %v6381, %v6463
    %v6522 = vadd.f32 %v6382, %v6459
    %v6523 = vadd.f32 %v6383, %v6463
    %v6524 = vadd.f32 %v6384, %v6459
    %v6525 = vadd.f32 %v6385, %v6463
    %v6526 = vadd.f32 %v6386, %v6459
    %v6527 = vadd.f32 %v6387, %v6463
    %v6528 = vadd.f32 %v6388, %v6459
    %v6529 = vadd.f32 %v6389, %v6463
    %v6530 = vadd.f32 %v6390, %v6459
    %v6531 = vadd.f32 %v6391, %v6463
    %v6532 = vadd.f32 %v6392, %v6459
    %v6533 = vadd.f32 %v6393, %v6463
    %v6534 = vadd.f32 %v6394, %v6459
    %v6535 = vadd.f32 %v6395, %v6463
    %v6536 = vadd.f32 %v6396, %v6459
    %v6537 = vadd.f32 %v6397, %v6463
    %v6538 = vadd.f32 %v6398, %v6459
    %v6539 = vadd.f32 %v6399, %v6463
    %v6540 = vadd.f32 %v6400, %v6459
    %v6541 = vadd.f32 %v6401, %v6463
    %v6542 = vadd.f32 %v6402, %v6459
    %v6543 = vadd.f32 %v6403, %v6463
    %v6544 = vadd.f32 %v6404, %v6459
    %v6545 = vadd.f32 %v6405, %v6463
    %v6546 = vadd.f32 %v6406, %v6459
    %v6547 = vadd.f32 %v6407, %v6463
    %v6548 = vadd.f32 %v6408, %v6459
    %v6549 = vadd.f32 %v6409, %v6463
    %v6550 = vadd.f32 %v6410, %v6459
    %v6551 = vadd.f32 %v6411, %v6463
    %v6552 = vadd.f32 %v6412, %v6459
    %v6553 = vadd.f32 %v6413, %v6463
    %v6554 = vadd.f32 %v6414, %v6459
    %v6555 = vadd.f32 %v6415, %v6463
    %v6556 = vadd.f32 %v6416, %v6459
    %v6557 = vadd.f32 %v6417, %v6463
    %v6558 = vadd.f32 %v6418, %v6459
    %v6559 = vadd.f32 %v6419, %v6463
    %v6560 = vadd.f32 %v6420, %v6459
    %v6561 = vadd.f32 %v6421, %v6463
    %v6562 = vadd.f32 %v6422, %v6459
    %v6563 = vadd.f32 %v6423, %v6463
    %v6564 = vadd.f32 %v6424, %v6459
    %v6565 = vadd.f32 %v6425, %v6463
    %v6566 = vadd.f32 %v6426, %v6459
    %v6567 = vadd.f32 %v6427, %v6463
    %v6568 = vadd.f32 %v6428, %v6459
    %v6569 = vadd.f32 %v6429, %v6463
    %v6570 = vadd.f32 %v6430, %v6459
    %v6571 = vadd.f32 %v6431, %v6463
    %v6572 = vadd.f32 %v6432, %v6459
    %v6573 = vadd.f32 %v6433, %v6463
    %v6574 = vadd.f32 %v6434, %v6459
    %v6575 = vadd.f32 %v6435, %v6463
    %v6576 = vadd.f32 %v6436, %v6459
    %v6577 = vadd.f32 %v6437, %v6463
    %v6578 = vadd.f32 %v6438, %v6459
    %v6579 = vadd.f32 %v6439, %v6463
    %v6580 = vadd.f32 %v6440, %v6459
    %v6581 = vadd.f32 %v6441, %v6463
    %v6582 = vadd.f32 %v6442, %v6459
    %v6583 = vadd.f32 %v6443, %v6463
    %v6584 = vadd.f32 %v6444, %v6459
    %v6585 = vadd.f32 %v6445, %v6463
    %v6586 = vadd.f32 %v6446, %v6459
    %v6587 = vadd.f32 %v6447, %v6463
    %v6588 = vadd.f32 %v6448, %v6459
    %v6589 = vadd.f32 %v6449, %v6463
    %v6590 = vadd.f32 %v6450, %v6459
    %v6591 = vadd.f32 %v6451, %v6463
    %v6592 = vadd.f32 %v6452, %v6459
    %v6593 = vadd.f32 %v6453, %v6463
    %v6594 = vmax.f32 %v6466, 0.0
    %v6595 = vmax.f32 %v6467, 0.0
    %v6596 = vmax.f32 %v6468, 0.0
    %v6597 = vmax.f32 %v6469, 0.0
    %v6598 = vmax.f32 %v6470, 0.0
    %v6599 = vmax.f32 %v6471, 0.0
    %v6600 = vmax.f32 %v6472, 0.0
    %v6601 = vmax.f32 %v6473, 0.0
    %v6602 = vmax.f32 %v6474, 0.0
    %v6603 = vmax.f32 %v6475, 0.0
    %v6604 = vmax.f32 %v6476, 0.0
    %v6605 = vmax.f32 %v6477, 0.0
    %v6606 = vmax.f32 %v6478, 0.0
    %v6607 = vmax.f32 %v6479, 0.0
    %v6608 = vmax.f32 %v6480, 0.0
    %v6609 = vmax.f32 %v6481, 0.0
    %v6610 = vmax.f32 %v6482, 0.0
    %v6611 = vmax.f32 %v6483, 0.0
    %v6612 = vmax.f32 %v6484, 0.0
    %v6613 = vmax.f32 %v6485, 0.0
    %v6614 = vmax.f32 %v6486, 0.0
    %v6615 = vmax.f32 %v6487, 0.0
    %v6616 = vmax.f32 %v6488, 0.0
    %v6617 = vmax.f32 %v6489, 0.0
    %v6618 = vmax.f32 %v6490, 0.0
    %v6619 = vmax.f32 %v6491, 0.0
    %v6620 = vmax.f32 %v6492, 0.0
    %v6621 = vmax.f32 %v6493, 0.0
    %v6622 = vmax.f32 %v6494, 0.0
    %v6623 = vmax.f32 %v6495, 0.0
    %v6624 = vmax.f32 %v6496, 0.0
    %v6625 = vmax.f32 %v6497, 0.0
    %v6626 = vmax.f32 %v6498, 0.0
    %v6627 = vmax.f32 %v6499, 0.0
    %v6628 = vmax.f32 %v6500, 0.0
    %v6629 = vmax.f32 %v6501, 0.0
    %v6630 = vmax.f32 %v6502, 0.0
    %v6631 = vmax.f32 %v6503, 0.0
    %v6632 = vmax.f32 %v6504, 0.0
    %v6633 = vmax.f32 %v6505, 0.0
    %v6634 = vmax.f32 %v6506, 0.0
    %v6635 = vmax.f32 %v6507, 0.0
    %v6636 = vmax.f32 %v6508, 0.0
    %v6637 = vmax.f32 %v6509, 0.0
    %v6638 = vmax.f32 %v6510, 0.0
    %v6639 = vmax.f32 %v6511, 0.0
    %v6640 = vmax.f32 %v6512, 0.0
    %v6641 = vmax.f32 %v6513, 0.0
    %v6642 = vmax.f32 %v6514, 0.0
    %v6643 = vmax.f32 %v6515, 0.0
    %v6644 = vmax.f32 %v6516, 0.0
    %v6645 = vmax.f32 %v6517, 0.0
    %v6646 = vmax.f32 %v6518, 0.0
    %v6647 = vmax.f32 %v6519, 0.0
    %v6648 = vmax.f32 %v6520, 0.0
    %v6649 = vmax.f32 %v6521, 0.0
    %v6650 = vmax.f32 %v6522, 0.0
    %v6651 = vmax.f32 %v6523, 0.0
    %v6652 = vmax.f32 %v6524, 0.0
    %v6653 = vmax.f32 %v6525, 0.0
    %v6654 = vmax.f32 %v6526, 0.0
    %v6655 = vmax.f32 %v6527, 0.0
    %v6656 = vmax.f32 %v6528, 0.0
    %v6657 = vmax.f32 %v6529, 0.0
    %v6658 = vmax.f32 %v6530, 0.0
    %v6659 = vmax.f32 %v6531, 0.0
    %v6660 = vmax.f32 %v6532, 0.0
    %v6661 = vmax.f32 %v6533, 0.0
    %v6662 = vmax.f32 %v6534, 0.0
    %v6663 = vmax.f32 %v6535, 0.0
    %v6664 = vmax.f32 %v6536, 0.0
    %v6665 = vmax.f32 %v6537, 0.0
    %v6666 = vmax.f32 %v6538, 0.0
    %v6667 = vmax.f32 %v6539, 0.0
    %v6668 = vmax.f32 %v6540, 0.0
    %v6669 = vmax.f32 %v6541, 0.0
    %v6670 = vmax.f32 %v6542, 0.0
    %v6671 = vmax.f32 %v6543, 0.0
    %v6672 = vmax.f32 %v6544, 0.0
    %v6673 = vmax.f32 %v6545, 0.0
    %v6674 = vmax.f32 %v6546, 0.0
    %v6675 = vmax.f32 %v6547, 0.0
    %v6676 = vmax.f32 %v6548, 0.0
    %v6677 = vmax.f32 %v6549, 0.0
    %v6678 = vmax.f32 %v6550, 0.0
    %v6679 = vmax.f32 %v6551, 0.0
    %v6680 = vmax.f32 %v6552, 0.0
    %v6681 = vmax.f32 %v6553, 0.0
    %v6682 = vmax.f32 %v6554, 0.0
    %v6683 = vmax.f32 %v6555, 0.0
    %v6684 = vmax.f32 %v6556, 0.0
    %v6685 = vmax.f32 %v6557, 0.0
    %v6686 = vmax.f32 %v6558, 0.0
    %v6687 = vmax.f32 %v6559, 0.0
    %v6688 = vmax.f32 %v6560, 0.0
    %v6689 = vmax.f32 %v6561, 0.0
    %v6690 = vmax.f32 %v6562, 0.0
    %v6691 = vmax.f32 %v6563, 0.0
    %v6692 = vmax.f32 %v6564, 0.0
    %v6693 = vmax.f32 %v6565, 0.0
    %v6694 = vmax.f32 %v6566, 0.0
    %v6695 = vmax.f32 %v6567, 0.0
    %v6696 = vmax.f32 %v6568, 0.0
    %v6697 = vmax.f32 %v6569, 0.0
    %v6698 = vmax.f32 %v6570, 0.0
    %v6699 = vmax.f32 %v6571, 0.0
    %v6700 = vmax.f32 %v6572, 0.0
    %v6701 = vmax.f32 %v6573, 0.0
    %v6702 = vmax.f32 %v6574, 0.0
    %v6703 = vmax.f32 %v6575, 0.0
    %v6704 = vmax.f32 %v6576, 0.0
    %v6705 = vmax.f32 %v6577, 0.0
    %v6706 = vmax.f32 %v6578, 0.0
    %v6707 = vmax.f32 %v6579, 0.0
    %v6708 = vmax.f32 %v6580, 0.0
    %v6709 = vmax.f32 %v6581, 0.0
    %v6710 = vmax.f32 %v6582, 0.0
    %v6711 = vmax.f32 %v6583, 0.0
    %v6712 = vmax.f32 %v6584, 0.0
    %v6713 = vmax.f32 %v6585, 0.0
    %v6714 = vmax.f32 %v6586, 0.0
    %v6715 = vmax.f32 %v6587, 0.0
    %v6716 = vmax.f32 %v6588, 0.0
    %v6717 = vmax.f32 %v6589, 0.0
    %v6718 = vmax.f32 %v6590, 0.0
    %v6719 = vmax.f32 %v6591, 0.0
    %v6720 = vmax.f32 %v6592, 0.0
    %v6721 = vmax.f32 %v6593, 0.0
    %v6722 = vpack.c.bf16 %v6596, %v6594
    %v6723 = vpack.c.bf16 %v6597, %v6595
    %v6724 = vpack.c.bf16 %v6600, %v6598
    %v6725 = vpack.c.bf16 %v6601, %v6599
    %v6726 = vpack.c.bf16 %v6604, %v6602
    %v6727 = vpack.c.bf16 %v6605, %v6603
    %v6728 = vpack.c.bf16 %v6608, %v6606
    %v6729 = vpack.c.bf16 %v6609, %v6607
    %v6730 = vpack.c.bf16 %v6612, %v6610
    %v6731 = vpack.c.bf16 %v6613, %v6611
    %v6732 = vpack.c.bf16 %v6616, %v6614
    %v6733 = vpack.c.bf16 %v6617, %v6615
    %v6734 = vpack.c.bf16 %v6620, %v6618
    %v6735 = vpack.c.bf16 %v6621, %v6619
    %v6736 = vpack.c.bf16 %v6624, %v6622
    %v6737 = vpack.c.bf16 %v6625, %v6623
    %v6738 = vpack.c.bf16 %v6628, %v6626
    %v6739 = vpack.c.bf16 %v6629, %v6627
    %v6740 = vpack.c.bf16 %v6632, %v6630
    %v6741 = vpack.c.bf16 %v6633, %v6631
    %v6742 = vpack.c.bf16 %v6636, %v6634
    %v6743 = vpack.c.bf16 %v6637, %v6635
    %v6744 = vpack.c.bf16 %v6640, %v6638
    %v6745 = vpack.c.bf16 %v6641, %v6639
    %v6746 = vpack.c.bf16 %v6644, %v6642
    %v6747 = vpack.c.bf16 %v6645, %v6643
    %v6748 = vpack.c.bf16 %v6648, %v6646
    %v6749 = vpack.c.bf16 %v6649, %v6647
    %v6750 = vpack.c.bf16 %v6652, %v6650
    %v6751 = vpack.c.bf16 %v6653, %v6651
    %v6752 = vpack.c.bf16 %v6656, %v6654
    %v6753 = vpack.c.bf16 %v6657, %v6655
    %v6754 = vpack.c.bf16 %v6660, %v6658
    %v6755 = vpack.c.bf16 %v6661, %v6659
    %v6756 = vpack.c.bf16 %v6664, %v6662
    %v6757 = vpack.c.bf16 %v6665, %v6663
    %v6758 = vpack.c.bf16 %v6668, %v6666
    %v6759 = vpack.c.bf16 %v6669, %v6667
    %v6760 = vpack.c.bf16 %v6672, %v6670
    %v6761 = vpack.c.bf16 %v6673, %v6671
    %v6762 = vpack.c.bf16 %v6676, %v6674
    %v6763 = vpack.c.bf16 %v6677, %v6675
    %v6764 = vpack.c.bf16 %v6680, %v6678
    %v6765 = vpack.c.bf16 %v6681, %v6679
    %v6766 = vpack.c.bf16 %v6684, %v6682
    %v6767 = vpack.c.bf16 %v6685, %v6683
    %v6768 = vpack.c.bf16 %v6688, %v6686
    %v6769 = vpack.c.bf16 %v6689, %v6687
    %v6770 = vpack.c.bf16 %v6692, %v6690
    %v6771 = vpack.c.bf16 %v6693, %v6691
    %v6772 = vpack.c.bf16 %v6696, %v6694
    %v6773 = vpack.c.bf16 %v6697, %v6695
    %v6774 = vpack.c.bf16 %v6700, %v6698
    %v6775 = vpack.c.bf16 %v6701, %v6699
    %v6776 = vpack.c.bf16 %v6704, %v6702
    %v6777 = vpack.c.bf16 %v6705, %v6703
    %v6778 = vpack.c.bf16 %v6708, %v6706
    %v6779 = vpack.c.bf16 %v6709, %v6707
    %v6780 = vpack.c.bf16 %v6712, %v6710
    %v6781 = vpack.c.bf16 %v6713, %v6711
    %v6782 = vpack.c.bf16 %v6716, %v6714
    %v6783 = vpack.c.bf16 %v6717, %v6715
    %v6784 = vpack.c.bf16 %v6720, %v6718
    %v6785 = vpack.c.bf16 %v6721, %v6719
    %v6786 = vld [vmem:[#allocation16] sm:$0xf]
    %v6787 = vld [vmem:[#allocation16 + $0x4] sm:$0xf]
    %v6788 = vld [vmem:[#allocation16 + $0x8] sm:$0xf]
    %v6789 = vld [vmem:[#allocation16 + $0xc] sm:$0xf]
    %v6790 = vld [vmem:[#allocation16 + $0x10] sm:$0xf]
    %v6791 = vld [vmem:[#allocation16 + $0x14] sm:$0xf]
    %v6792 = vld [vmem:[#allocation16 + $0x18] sm:$0xf]
    %v6793 = vld [vmem:[#allocation16 + $0x1c] sm:$0xf]
    %v6794 = vld [vmem:[#allocation16 + $0x20] sm:$0xf]
    %v6795 = vld [vmem:[#allocation16 + $0x24] sm:$0xf]
    %v6796 = vld [vmem:[#allocation16 + $0x28] sm:$0xf]
    %v6797 = vld [vmem:[#allocation16 + $0x2c] sm:$0xf]
    %v6798 = vld [vmem:[#allocation16 + $0x30] sm:$0xf]
    %v6799 = vld [vmem:[#allocation16 + $0x34] sm:$0xf]
    %v6800 = vld [vmem:[#allocation16 + $0x38] sm:$0xf]
    %v6801 = vld [vmem:[#allocation16 + $0x3c] sm:$0xf]
    %v6802 = vld [vmem:[#allocation16 + $0x40] sm:$0xf]
    %v6803 = vld [vmem:[#allocation16 + $0x44] sm:$0xf]
    %v6804 = vld [vmem:[#allocation16 + $0x48] sm:$0xf]
    %v6805 = vld [vmem:[#allocation16 + $0x4c] sm:$0xf]
    %v6806 = vld [vmem:[#allocation16 + $0x50] sm:$0xf]
    %v6807 = vld [vmem:[#allocation16 + $0x54] sm:$0xf]
    %v6808 = vld [vmem:[#allocation16 + $0x58] sm:$0xf]
    %v6809 = vld [vmem:[#allocation16 + $0x5c] sm:$0xf]
    %v6810 = vld [vmem:[#allocation16 + $0x60] sm:$0xf]
    %v6811 = vld [vmem:[#allocation16 + $0x64] sm:$0xf]
    %v6812 = vld [vmem:[#allocation16 + $0x68] sm:$0xf]
    %v6813 = vld [vmem:[#allocation16 + $0x6c] sm:$0xf]
    %v6814 = vld [vmem:[#allocation16 + $0x70] sm:$0xf]
    %v6815 = vld [vmem:[#allocation16 + $0x74] sm:$0xf]
    %v6816 = vld [vmem:[#allocation16 + $0x78] sm:$0xf]
    %v6817 = vld [vmem:[#allocation16 + $0x7c] sm:$0xf]
    %v6818 = vld [vmem:[#allocation5 + $0x13] sm:$0x1]
    %v6820 = vlaneseq
    %v6821 = vshrl.u32 %v6820, 7
    %v6822 = vsub.s32 0, %v6821
    %v6823 = vrot.slane %v6818, %v6822
    %v6857 = vunpack.c.l.b16 %v6786
    %v6858 = vunpack.c.l.b16 %v6787
    %v6859 = vunpack.c.l.b16 %v6788
    %v6860 = vunpack.c.l.b16 %v6789
    %v6861 = vunpack.c.l.b16 %v6790
    %v6862 = vunpack.c.l.b16 %v6791
    %v6863 = vunpack.c.l.b16 %v6792
    %v6864 = vunpack.c.l.b16 %v6793
    %v6865 = vunpack.c.l.b16 %v6794
    %v6866 = vunpack.c.l.b16 %v6795
    %v6867 = vunpack.c.l.b16 %v6796
    %v6868 = vunpack.c.l.b16 %v6797
    %v6869 = vunpack.c.l.b16 %v6798
    %v6870 = vunpack.c.l.b16 %v6799
    %v6871 = vunpack.c.l.b16 %v6800
    %v6872 = vunpack.c.l.b16 %v6801
    %v6873 = vunpack.c.l.b16 %v6802
    %v6874 = vunpack.c.l.b16 %v6803
    %v6875 = vunpack.c.l.b16 %v6804
    %v6876 = vunpack.c.l.b16 %v6805
    %v6877 = vunpack.c.l.b16 %v6806
    %v6878 = vunpack.c.l.b16 %v6807
    %v6879 = vunpack.c.l.b16 %v6808
    %v6880 = vunpack.c.l.b16 %v6809
    %v6881 = vunpack.c.l.b16 %v6810
    %v6882 = vunpack.c.l.b16 %v6811
    %v6883 = vunpack.c.l.b16 %v6812
    %v6884 = vunpack.c.l.b16 %v6813
    %v6885 = vunpack.c.l.b16 %v6814
    %v6886 = vunpack.c.l.b16 %v6815
    %v6887 = vunpack.c.l.b16 %v6816
    %v6888 = vunpack.c.l.b16 %v6817
    %v6889 = vpack.c.b16 %v6858, %v6857
    %v6890 = vpack.c.b16 %v6860, %v6859
    %v6891 = vpack.c.b16 %v6862, %v6861
    %v6892 = vpack.c.b16 %v6864, %v6863
    %v6893 = vpack.c.b16 %v6866, %v6865
    %v6894 = vpack.c.b16 %v6868, %v6867
    %v6895 = vpack.c.b16 %v6870, %v6869
    %v6896 = vpack.c.b16 %v6872, %v6871
    %v6897 = vpack.c.b16 %v6874, %v6873
    %v6898 = vpack.c.b16 %v6876, %v6875
    %v6899 = vpack.c.b16 %v6878, %v6877
    %v6900 = vpack.c.b16 %v6880, %v6879
    %v6901 = vpack.c.b16 %v6882, %v6881
    %v6902 = vpack.c.b16 %v6884, %v6883
    %v6903 = vpack.c.b16 %v6886, %v6885
    %v6904 = vpack.c.b16 %v6888, %v6887
    %6921 = vmatprep.subr.bf16.mxu0 0
    %6922 = vmatpush1.bf16.msra.mxu0 %v6889
    %6923 = vmatprep.subr.bf16.mxu0 0
    %6924 = vmatpush1.bf16.msra.mxu0 %v6890
    %6925 = vmatprep.subr.bf16.mxu0 0
    %6926 = vmatpush1.bf16.msra.mxu0 %v6891
    %6927 = vmatprep.subr.bf16.mxu0 0
    %6928 = vmatpush1.bf16.msra.mxu0 %v6892
    %6929 = vmatprep.subr.bf16.mxu0 0
    %6930 = vmatpush1.bf16.msra.mxu0 %v6893
    %6931 = vmatprep.subr.bf16.mxu0 0
    %6932 = vmatpush1.bf16.msra.mxu0 %v6894
    %6933 = vmatprep.subr.bf16.mxu0 0
    %6934 = vmatpush1.bf16.msra.mxu0 %v6895
    %6935 = vmatprep.subr.bf16.mxu0 0
    %6936 = vmatpush1.bf16.msra.mxu0 %v6896
    %6937 = vmatprep.subr.bf16.mxu0 0
    %6938 = vmatpush1.bf16.msra.mxu0 %v6897
    %6939 = vmatprep.subr.bf16.mxu0 0
    %6940 = vmatpush1.bf16.msra.mxu0 %v6898
    %6941 = vmatprep.subr.bf16.mxu0 0
    %6942 = vmatpush1.bf16.msra.mxu0 %v6899
    %6943 = vmatprep.subr.bf16.mxu0 0
    %6944 = vmatpush1.bf16.msra.mxu0 %v6900
    %6945 = vmatprep.subr.bf16.mxu0 0
    %6946 = vmatpush1.bf16.msra.mxu0 %v6901
    %6947 = vmatprep.subr.bf16.mxu0 0
    %6948 = vmatpush1.bf16.msra.mxu0 %v6902
    %6949 = vmatprep.subr.bf16.mxu0 0
    %6950 = vmatpush1.bf16.msra.mxu0 %v6903
    %6951 = vmatprep.subr.bf16.mxu0 0
    %6952 = vmatpush1.bf16.msra.mxu0 %v6904
    %6953 = vmatprep.mubr.bf16.mxu0 %v6723
    %6954 = vmatmul.mubr.bf16.gmra.mrb[0].mxu0 %v6722
    %v6955 = vpop.f32.mrb[0].mxu0
    %v6956 = vadd.f32 %v6823, %v6955
    %v6957 = vpop.f32.mrb[0].mxu0
    %v6958 = vpop.f32.mrb[0].mxu0
    %v6959 = vadd.f32 %v6823, %v6958
    %v6960 = vpop.f32.mrb[0].mxu0
    %6961 = vmatprep.mubr.bf16.mxu0 %v6725
    %6962 = vmatmul.mubr.bf16.gmra.mrb[0].mxu0 %v6724
    %v6963 = vpop.f32.mrb[0].mxu0
    %v6964 = vadd.f32 %v6823, %v6963
    %v6965 = vpop.f32.mrb[0].mxu0
    %v6966 = vpop.f32.mrb[0].mxu0
    %v6967 = vadd.f32 %v6823, %v6966
    %v6968 = vpop.f32.mrb[0].mxu0
    %6969 = vmatprep.mubr.bf16.mxu0 %v6727
    %6970 = vmatmul.mubr.bf16.gmra.mrb[0].mxu0 %v6726
    %v6971 = vpop.f32.mrb[0].mxu0
    %v6972 = vadd.f32 %v6823, %v6971
    %v6973 = vpop.f32.mrb[0].mxu0
    %v6974 = vpop.f32.mrb[0].mxu0
    %v6975 = vadd.f32 %v6823, %v6974
    %v6976 = vpop.f32.mrb[0].mxu0
    %6977 = vmatprep.mubr.bf16.mxu0 %v6729
    %6978 = vmatmul.mubr.bf16.gmra.mrb[0].mxu0 %v6728
    %v6979 = vpop.f32.mrb[0].mxu0
    %v6980 = vadd.f32 %v6823, %v6979
    %v6981 = vpop.f32.mrb[0].mxu0
    %v6982 = vpop.f32.mrb[0].mxu0
    %v6983 = vadd.f32 %v6823, %v6982
    %v6984 = vpop.f32.mrb[0].mxu0
    %6985 = vmatprep.mubr.bf16.mxu0 %v6731
    %6986 = vmatmul.mubr.bf16.gmra.mrb[0].mxu0 %v6730
    %v6987 = vpop.f32.mrb[0].mxu0
    %v6988 = vadd.f32 %v6823, %v6987
    %v6989 = vpop.f32.mrb[0].mxu0
    %v6990 = vpop.f32.mrb[0].mxu0
    %v6991 = vadd.f32 %v6823, %v6990
    %v6992 = vpop.f32.mrb[0].mxu0
    %6993 = vmatprep.mubr.bf16.mxu0 %v6733
    %6994 = vmatmul.mubr.bf16.gmra.mrb[0].mxu0 %v6732
    %v6995 = vpop.f32.mrb[0].mxu0
    %v6996 = vadd.f32 %v6823, %v6995
    %v6997 = vpop.f32.mrb[0].mxu0
    %v6998 = vpop.f32.mrb[0].mxu0
    %v6999 = vadd.f32 %v6823, %v6998
    %v7000 = vpop.f32.mrb[0].mxu0
    %7001 = vmatprep.mubr.bf16.mxu0 %v6735
    %7002 = vmatmul.mubr.bf16.gmra.mrb[0].mxu0 %v6734
    %v7003 = vpop.f32.mrb[0].mxu0
    %v7004 = vadd.f32 %v6823, %v7003
    %v7005 = vpop.f32.mrb[0].mxu0
    %v7006 = vpop.f32.mrb[0].mxu0
    %v7007 = vadd.f32 %v6823, %v7006
    %v7008 = vpop.f32.mrb[0].mxu0
    %7009 = vmatprep.mubr.bf16.mxu0 %v6737
    %7010 = vmatmul.mubr.bf16.gmra.mrb[0].mxu0 %v6736
    %v7011 = vpop.f32.mrb[0].mxu0
    %v7012 = vadd.f32 %v6823, %v7011
    %v7013 = vpop.f32.mrb[0].mxu0
    %v7014 = vpop.f32.mrb[0].mxu0
    %v7015 = vadd.f32 %v6823, %v7014
    %v7016 = vpop.f32.mrb[0].mxu0
    %7017 = vmatprep.mubr.bf16.mxu0 %v6739
    %7018 = vmatmul.mubr.bf16.gmra.mrb[0].mxu0 %v6738
    %v7019 = vpop.f32.mrb[0].mxu0
    %v7020 = vadd.f32 %v6823, %v7019
    %v7021 = vpop.f32.mrb[0].mxu0
    %v7022 = vpop.f32.mrb[0].mxu0
    %v7023 = vadd.f32 %v6823, %v7022
    %v7024 = vpop.f32.mrb[0].mxu0
    %7025 = vmatprep.mubr.bf16.mxu0 %v6741
    %7026 = vmatmul.mubr.bf16.gmra.mrb[0].mxu0 %v6740
    %v7027 = vpop.f32.mrb[0].mxu0
    %v7028 = vadd.f32 %v6823, %v7027
    %v7029 = vpop.f32.mrb[0].mxu0
    %v7030 = vpop.f32.mrb[0].mxu0
    %v7031 = vadd.f32 %v6823, %v7030
    %v7032 = vpop.f32.mrb[0].mxu0
    %7033 = vmatprep.mubr.bf16.mxu0 %v6743
    %7034 = vmatmul.mubr.bf16.gmra.mrb[0].mxu0 %v6742
    %v7035 = vpop.f32.mrb[0].mxu0
    %v7036 = vadd.f32 %v6823, %v7035
    %v7037 = vpop.f32.mrb[0].mxu0
    %v7038 = vpop.f32.mrb[0].mxu0
    %v7039 = vadd.f32 %v6823, %v7038
    %v7040 = vpop.f32.mrb[0].mxu0
    %7041 = vmatprep.mubr.bf16.mxu0 %v6745
    %7042 = vmatmul.mubr.bf16.gmra.mrb[0].mxu0 %v6744
    %v7043 = vpop.f32.mrb[0].mxu0
    %v7044 = vadd.f32 %v6823, %v7043
    %v7045 = vpop.f32.mrb[0].mxu0
    %v7046 = vpop.f32.mrb[0].mxu0
    %v7047 = vadd.f32 %v6823, %v7046
    %v7048 = vpop.f32.mrb[0].mxu0
    %7049 = vmatprep.mubr.bf16.mxu0 %v6747
    %7050 = vmatmul.mubr.bf16.gmra.mrb[0].mxu0 %v6746
    %v7051 = vpop.f32.mrb[0].mxu0
    %v7052 = vadd.f32 %v6823, %v7051
    %v7053 = vpop.f32.mrb[0].mxu0
    %v7054 = vpop.f32.mrb[0].mxu0
    %v7055 = vadd.f32 %v6823, %v7054
    %v7056 = vpop.f32.mrb[0].mxu0
    %7057 = vmatprep.mubr.bf16.mxu0 %v6749
    %7058 = vmatmul.mubr.bf16.gmra.mrb[0].mxu0 %v6748
    %v7059 = vpop.f32.mrb[0].mxu0
    %v7060 = vadd.f32 %v6823, %v7059
    %v7061 = vpop.f32.mrb[0].mxu0
    %v7062 = vpop.f32.mrb[0].mxu0
    %v7063 = vadd.f32 %v6823, %v7062
    %v7064 = vpop.f32.mrb[0].mxu0
    %7065 = vmatprep.mubr.bf16.mxu0 %v6751
    %7066 = vmatmul.mubr.bf16.gmra.mrb[0].mxu0 %v6750
    %v7067 = vpop.f32.mrb[0].mxu0
    %v7068 = vadd.f32 %v6823, %v7067
    %v7069 = vpop.f32.mrb[0].mxu0
    %v7070 = vpop.f32.mrb[0].mxu0
    %v7071 = vadd.f32 %v6823, %v7070
    %v7072 = vpop.f32.mrb[0].mxu0
    %7073 = vmatprep.mubr.bf16.mxu0 %v6753
    %7074 = vmatmul.mubr.bf16.gmra.mrb[0].mxu0 %v6752
    %v7075 = vpop.f32.mrb[0].mxu0
    %v7076 = vadd.f32 %v6823, %v7075
    %v7077 = vpop.f32.mrb[0].mxu0
    %v7078 = vpop.f32.mrb[0].mxu0
    %v7079 = vadd.f32 %v6823, %v7078
    %v7080 = vpop.f32.mrb[0].mxu0
    %7081 = vmatprep.mubr.bf16.mxu0 %v6755
    %7082 = vmatmul.mubr.bf16.gmra.mrb[0].mxu0 %v6754
    %v7083 = vpop.f32.mrb[0].mxu0
    %v7084 = vadd.f32 %v6823, %v7083
    %v7085 = vpop.f32.mrb[0].mxu0
    %v7086 = vpop.f32.mrb[0].mxu0
    %v7087 = vadd.f32 %v6823, %v7086
    %v7088 = vpop.f32.mrb[0].mxu0
    %7089 = vmatprep.mubr.bf16.mxu0 %v6757
    %7090 = vmatmul.mubr.bf16.gmra.mrb[0].mxu0 %v6756
    %v7091 = vpop.f32.mrb[0].mxu0
    %v7092 = vadd.f32 %v6823, %v7091
    %v7093 = vpop.f32.mrb[0].mxu0
    %v7094 = vpop.f32.mrb[0].mxu0
    %v7095 = vadd.f32 %v6823, %v7094
    %v7096 = vpop.f32.mrb[0].mxu0
    %7097 = vmatprep.mubr.bf16.mxu0 %v6759
    %7098 = vmatmul.mubr.bf16.gmra.mrb[0].mxu0 %v6758
    %v7099 = vpop.f32.mrb[0].mxu0
    %v7100 = vadd.f32 %v6823, %v7099
    %v7101 = vpop.f32.mrb[0].mxu0
    %v7102 = vpop.f32.mrb[0].mxu0
    %v7103 = vadd.f32 %v6823, %v7102
    %v7104 = vpop.f32.mrb[0].mxu0
    %7105 = vmatprep.mubr.bf16.mxu0 %v6761
    %7106 = vmatmul.mubr.bf16.gmra.mrb[0].mxu0 %v6760
    %v7107 = vpop.f32.mrb[0].mxu0
    %v7108 = vadd.f32 %v6823, %v7107
    %v7109 = vpop.f32.mrb[0].mxu0
    %v7110 = vpop.f32.mrb[0].mxu0
    %v7111 = vadd.f32 %v6823, %v7110
    %v7112 = vpop.f32.mrb[0].mxu0
    %7113 = vmatprep.mubr.bf16.mxu0 %v6763
    %7114 = vmatmul.mubr.bf16.gmra.mrb[0].mxu0 %v6762
    %v7115 = vpop.f32.mrb[0].mxu0
    %v7116 = vadd.f32 %v6823, %v7115
    %v7117 = vpop.f32.mrb[0].mxu0
    %v7118 = vpop.f32.mrb[0].mxu0
    %v7119 = vadd.f32 %v6823, %v7118
    %v7120 = vpop.f32.mrb[0].mxu0
    %7121 = vmatprep.mubr.bf16.mxu0 %v6765
    %7122 = vmatmul.mubr.bf16.gmra.mrb[0].mxu0 %v6764
    %v7123 = vpop.f32.mrb[0].mxu0
    %v7124 = vadd.f32 %v6823, %v7123
    %v7125 = vpop.f32.mrb[0].mxu0
    %v7126 = vpop.f32.mrb[0].mxu0
    %v7127 = vadd.f32 %v6823, %v7126
    %v7128 = vpop.f32.mrb[0].mxu0
    %7129 = vmatprep.mubr.bf16.mxu0 %v6767
    %7130 = vmatmul.mubr.bf16.gmra.mrb[0].mxu0 %v6766
    %v7131 = vpop.f32.mrb[0].mxu0
    %v7132 = vadd.f32 %v6823, %v7131
    %v7133 = vpop.f32.mrb[0].mxu0
    %v7134 = vpop.f32.mrb[0].mxu0
    %v7135 = vadd.f32 %v6823, %v7134
    %v7136 = vpop.f32.mrb[0].mxu0
    %7137 = vmatprep.mubr.bf16.mxu0 %v6769
    %7138 = vmatmul.mubr.bf16.gmra.mrb[0].mxu0 %v6768
    %v7139 = vpop.f32.mrb[0].mxu0
    %v7140 = vadd.f32 %v6823, %v7139
    %v7141 = vpop.f32.mrb[0].mxu0
    %v7142 = vpop.f32.mrb[0].mxu0
    %v7143 = vadd.f32 %v6823, %v7142
    %v7144 = vpop.f32.mrb[0].mxu0
    %7145 = vmatprep.mubr.bf16.mxu0 %v6771
    %7146 = vmatmul.mubr.bf16.gmra.mrb[0].mxu0 %v6770
    %v7147 = vpop.f32.mrb[0].mxu0
    %v7148 = vadd.f32 %v6823, %v7147
    %v7149 = vpop.f32.mrb[0].mxu0
    %v7150 = vpop.f32.mrb[0].mxu0
    %v7151 = vadd.f32 %v6823, %v7150
    %v7152 = vpop.f32.mrb[0].mxu0
    %7153 = vmatprep.mubr.bf16.mxu0 %v6773
    %7154 = vmatmul.mubr.bf16.gmra.mrb[0].mxu0 %v6772
    %v7155 = vpop.f32.mrb[0].mxu0
    %v7156 = vadd.f32 %v6823, %v7155
    %v7157 = vpop.f32.mrb[0].mxu0
    %v7158 = vpop.f32.mrb[0].mxu0
    %v7159 = vadd.f32 %v6823, %v7158
    %v7160 = vpop.f32.mrb[0].mxu0
    %7161 = vmatprep.mubr.bf16.mxu0 %v6775
    %7162 = vmatmul.mubr.bf16.gmra.mrb[0].mxu0 %v6774
    %v7163 = vpop.f32.mrb[0].mxu0
    %v7164 = vadd.f32 %v6823, %v7163
    %v7165 = vpop.f32.mrb[0].mxu0
    %v7166 = vpop.f32.mrb[0].mxu0
    %v7167 = vadd.f32 %v6823, %v7166
    %v7168 = vpop.f32.mrb[0].mxu0
    %7169 = vmatprep.mubr.bf16.mxu0 %v6777
    %7170 = vmatmul.mubr.bf16.gmra.mrb[0].mxu0 %v6776
    %v7171 = vpop.f32.mrb[0].mxu0
    %v7172 = vadd.f32 %v6823, %v7171
    %v7173 = vpop.f32.mrb[0].mxu0
    %v7174 = vpop.f32.mrb[0].mxu0
    %v7175 = vadd.f32 %v6823, %v7174
    %v7176 = vpop.f32.mrb[0].mxu0
    %7177 = vmatprep.mubr.bf16.mxu0 %v6779
    %7178 = vmatmul.mubr.bf16.gmra.mrb[0].mxu0 %v6778
    %v7179 = vpop.f32.mrb[0].mxu0
    %v7180 = vadd.f32 %v6823, %v7179
    %v7181 = vpop.f32.mrb[0].mxu0
    %v7182 = vpop.f32.mrb[0].mxu0
    %v7183 = vadd.f32 %v6823, %v7182
    %v7184 = vpop.f32.mrb[0].mxu0
    %7185 = vmatprep.mubr.bf16.mxu0 %v6781
    %7186 = vmatmul.mubr.bf16.gmra.mrb[0].mxu0 %v6780
    %v7187 = vpop.f32.mrb[0].mxu0
    %v7188 = vadd.f32 %v6823, %v7187
    %v7189 = vpop.f32.mrb[0].mxu0
    %v7190 = vpop.f32.mrb[0].mxu0
    %v7191 = vadd.f32 %v6823, %v7190
    %v7192 = vpop.f32.mrb[0].mxu0
    %7193 = vmatprep.mubr.bf16.mxu0 %v6783
    %7194 = vmatmul.mubr.bf16.gmra.mrb[0].mxu0 %v6782
    %v7195 = vpop.f32.mrb[0].mxu0
    %v7196 = vadd.f32 %v6823, %v7195
    %v7197 = vpop.f32.mrb[0].mxu0
    %v7198 = vpop.f32.mrb[0].mxu0
    %v7199 = vadd.f32 %v6823, %v7198
    %v7200 = vpop.f32.mrb[0].mxu0
    %7201 = vmatprep.mubr.bf16.mxu0 %v6785
    %7202 = vmatmul.mubr.bf16.gmra.mrb[0].mxu0 %v6784
    %v7203 = vpop.f32.mrb[0].mxu0
    %v7204 = vadd.f32 %v6823, %v7203
    %v7205 = vpop.f32.mrb[0].mxu0
    %v7206 = vpop.f32.mrb[0].mxu0
    %v7207 = vadd.f32 %v6823, %v7206
    %v7208 = vpop.f32.mrb[0].mxu0
    %7209 = vdwg.mxu0
    %7210 = vmatprep.subr.mxu0 0.0
    %7211 = vmatpush1.msra.mxu0 %v6956
    %7212 = vmatprep.subr.mxu0 0.0
    %7213 = vmatpush1.msra.mxu0 %v6959
    %7214 = vmatprep.subr.mxu0 0.0
    %7215 = vmatpush1.msra.mxu0 %v6964
    %7216 = vmatprep.subr.mxu0 0.0
    %7217 = vmatpush1.msra.mxu0 %v6967
    %7218 = vmatprep.subr.mxu0 0.0
    %7219 = vmatpush1.msra.mxu0 %v6972
    %7220 = vmatprep.subr.mxu0 0.0
    %7221 = vmatpush1.msra.mxu0 %v6975
    %7222 = vmatprep.subr.mxu0 0.0
    %7223 = vmatpush1.msra.mxu0 %v6980
    %7224 = vmatprep.subr.mxu0 0.0
    %7225 = vmatpush1.msra.mxu0 %v6983
    %7226 = vmatprep.subr.mxu0 0.0
    %7227 = vmatpush1.msra.mxu0 %v6988
    %7228 = vmatprep.subr.mxu0 0.0
    %7229 = vmatpush1.msra.mxu0 %v6991
    %7230 = vmatprep.subr.mxu0 0.0
    %7231 = vmatpush1.msra.mxu0 %v6996
    %7232 = vmatprep.subr.mxu0 0.0
    %7233 = vmatpush1.msra.mxu0 %v6999
    %7234 = vmatprep.subr.mxu0 0.0
    %7235 = vmatpush1.msra.mxu0 %v7004
    %7236 = vmatprep.subr.mxu0 0.0
    %7237 = vmatpush1.msra.mxu0 %v7007
    %7238 = vmatprep.subr.mxu0 0.0
    %7239 = vmatpush1.msra.mxu0 %v7012
    %7240 = vmatprep.subr.mxu0 0.0
    %7241 = vmatpush1.msra.mxu0 %v7015
    %7242 = vmatprep.subr.mxu0 0.0
    %7243 = vmatpush1.msra.mxu0 %v7020
    %7244 = vmatprep.subr.mxu0 0.0
    %7245 = vmatpush1.msra.mxu0 %v7023
    %7246 = vmatprep.subr.mxu0 0.0
    %7247 = vmatpush1.msra.mxu0 %v7028
    %7248 = vmatprep.subr.mxu0 0.0
    %7249 = vmatpush1.msra.mxu0 %v7031
    %7250 = vmatprep.subr.mxu0 0.0
    %7251 = vmatpush1.msra.mxu0 %v7036
    %7252 = vmatprep.subr.mxu0 0.0
    %7253 = vmatpush1.msra.mxu0 %v7039
    %7254 = vmatprep.subr.mxu0 0.0
    %7255 = vmatpush1.msra.mxu0 %v7044
    %7256 = vmatprep.subr.mxu0 0.0
    %7257 = vmatpush1.msra.mxu0 %v7047
    %7258 = vmatprep.subr.mxu0 0.0
    %7259 = vmatpush1.msra.mxu0 %v7052
    %7260 = vmatprep.subr.mxu0 0.0
    %7261 = vmatpush1.msra.mxu0 %v7055
    %7262 = vmatprep.subr.mxu0 0.0
    %7263 = vmatpush1.msra.mxu0 %v7060
    %7264 = vmatprep.subr.mxu0 0.0
    %7265 = vmatpush1.msra.mxu0 %v7063
    %7266 = vmatprep.subr.mxu0 0.0
    %7267 = vmatpush1.msra.mxu0 %v7068
    %7268 = vmatprep.subr.mxu0 0.0
    %7269 = vmatpush1.msra.mxu0 %v7071
    %7270 = vmatprep.subr.mxu0 0.0
    %7271 = vmatpush1.msra.mxu0 %v7076
    %7272 = vmatprep.subr.mxu0 0.0
    %7273 = vmatpush1.msra.mxu0 %v7079
    %7274 = vmatprep.mubr.f32.mxu0 1.0
    %7275 = vmatmul.mubr.f32.gmra.mrb[0].mxu0 1.0
    %v7276 = vpop.f32.mrb[0].mxu0
    %v7277 = vadd.f32 0.0, %v7276
    %v7278 = vpop.f32.mrb[0].mxu0
    %7279 = vdwg.mxu0
    %7280 = vmatprep.subr.mxu0 0.0
    %7281 = vmatpush1.msra.mxu0 %v7084
    %7282 = vmatprep.subr.mxu0 0.0
    %7283 = vmatpush1.msra.mxu0 %v7087
    %7284 = vmatprep.subr.mxu0 0.0
    %7285 = vmatpush1.msra.mxu0 %v7092
    %7286 = vmatprep.subr.mxu0 0.0
    %7287 = vmatpush1.msra.mxu0 %v7095
    %7288 = vmatprep.subr.mxu0 0.0
    %7289 = vmatpush1.msra.mxu0 %v7100
    %7290 = vmatprep.subr.mxu0 0.0
    %7291 = vmatpush1.msra.mxu0 %v7103
    %7292 = vmatprep.subr.mxu0 0.0
    %7293 = vmatpush1.msra.mxu0 %v7108
    %7294 = vmatprep.subr.mxu0 0.0
    %7295 = vmatpush1.msra.mxu0 %v7111
    %7296 = vmatprep.subr.mxu0 0.0
    %7297 = vmatpush1.msra.mxu0 %v7116
    %7298 = vmatprep.subr.mxu0 0.0
    %7299 = vmatpush1.msra.mxu0 %v7119
    %7300 = vmatprep.subr.mxu0 0.0
    %7301 = vmatpush1.msra.mxu0 %v7124
    %7302 = vmatprep.subr.mxu0 0.0
    %7303 = vmatpush1.msra.mxu0 %v7127
    %7304 = vmatprep.subr.mxu0 0.0
    %7305 = vmatpush1.msra.mxu0 %v7132
    %7306 = vmatprep.subr.mxu0 0.0
    %7307 = vmatpush1.msra.mxu0 %v7135
    %7308 = vmatprep.subr.mxu0 0.0
    %7309 = vmatpush1.msra.mxu0 %v7140
    %7310 = vmatprep.subr.mxu0 0.0
    %7311 = vmatpush1.msra.mxu0 %v7143
    %7312 = vmatprep.subr.mxu0 0.0
    %7313 = vmatpush1.msra.mxu0 %v7148
    %7314 = vmatprep.subr.mxu0 0.0
    %7315 = vmatpush1.msra.mxu0 %v7151
    %7316 = vmatprep.subr.mxu0 0.0
    %7317 = vmatpush1.msra.mxu0 %v7156
    %7318 = vmatprep.subr.mxu0 0.0
    %7319 = vmatpush1.msra.mxu0 %v7159
    %7320 = vmatprep.subr.mxu0 0.0
    %7321 = vmatpush1.msra.mxu0 %v7164
    %7322 = vmatprep.subr.mxu0 0.0
    %7323 = vmatpush1.msra.mxu0 %v7167
    %7324 = vmatprep.subr.mxu0 0.0
    %7325 = vmatpush1.msra.mxu0 %v7172
    %7326 = vmatprep.subr.mxu0 0.0
    %7327 = vmatpush1.msra.mxu0 %v7175
    %7328 = vmatprep.subr.mxu0 0.0
    %7329 = vmatpush1.msra.mxu0 %v7180
    %7330 = vmatprep.subr.mxu0 0.0
    %7331 = vmatpush1.msra.mxu0 %v7183
    %7332 = vmatprep.subr.mxu0 0.0
    %7333 = vmatpush1.msra.mxu0 %v7188
    %7334 = vmatprep.subr.mxu0 0.0
    %7335 = vmatpush1.msra.mxu0 %v7191
    %7336 = vmatprep.subr.mxu0 0.0
    %7337 = vmatpush1.msra.mxu0 %v7196
    %7338 = vmatprep.subr.mxu0 0.0
    %7339 = vmatpush1.msra.mxu0 %v7199
    %7340 = vmatprep.subr.mxu0 0.0
    %7341 = vmatpush1.msra.mxu0 %v7204
    %7342 = vmatprep.subr.mxu0 0.0
    %7343 = vmatpush1.msra.mxu0 %v7207
    %7344 = vmatprep.mubr.f32.mxu0 1.0
    %7345 = vmatmul.mubr.f32.gmra.mrb[0].mxu0 1.0
    %v7346 = vpop.f32.mrb[0].mxu0
    %v7347 = vadd.f32 %v7277, %v7346
    %v7348 = vpop.f32.mrb[0].mxu0
    %7349 = vdwg.mxu0
    %v7350 = vmul.f32 %v7347, 0.001953125
    %v7351 = vlaneseq
    %v7352 = vshrl.u32 %v7351, 7
    %v7353 = vsub.s32 0, %v7352
    %v7354 = vrot.slane %v7350, %v7353
    %v7355 = vsub.f32 %v6956, %v7354
    %v7356 = vsub.f32 %v6959, %v7354
    %v7357 = vsub.f32 %v6964, %v7354
    %v7358 = vsub.f32 %v6967, %v7354
    %v7359 = vsub.f32 %v6972, %v7354
    %v7360 = vsub.f32 %v6975, %v7354
    %v7361 = vsub.f32 %v6980, %v7354
    %v7362 = vsub.f32 %v6983, %v7354
    %v7363 = vsub.f32 %v6988, %v7354
    %v7364 = vsub.f32 %v6991, %v7354
    %v7365 = vsub.f32 %v6996, %v7354
    %v7366 = vsub.f32 %v6999, %v7354
    %v7367 = vsub.f32 %v7004, %v7354
    %v7368 = vsub.f32 %v7007, %v7354
    %v7369 = vsub.f32 %v7012, %v7354
    %v7370 = vsub.f32 %v7015, %v7354
    %v7371 = vsub.f32 %v7020, %v7354
    %v7372 = vsub.f32 %v7023, %v7354
    %v7373 = vsub.f32 %v7028, %v7354
    %v7374 = vsub.f32 %v7031, %v7354
    %v7375 = vsub.f32 %v7036, %v7354
    %v7376 = vsub.f32 %v7039, %v7354
    %v7377 = vsub.f32 %v7044, %v7354
    %v7378 = vsub.f32 %v7047, %v7354
    %v7379 = vsub.f32 %v7052, %v7354
    %v7380 = vsub.f32 %v7055, %v7354
    %v7381 = vsub.f32 %v7060, %v7354
    %v7382 = vsub.f32 %v7063, %v7354
    %v7383 = vsub.f32 %v7068, %v7354
    %v7384 = vsub.f32 %v7071, %v7354
    %v7385 = vsub.f32 %v7076, %v7354
    %v7386 = vsub.f32 %v7079, %v7354
    %v7387 = vsub.f32 %v7084, %v7354
    %v7388 = vsub.f32 %v7087, %v7354
    %v7389 = vsub.f32 %v7092, %v7354
    %v7390 = vsub.f32 %v7095, %v7354
    %v7391 = vsub.f32 %v7100, %v7354
    %v7392 = vsub.f32 %v7103, %v7354
    %v7393 = vsub.f32 %v7108, %v7354
    %v7394 = vsub.f32 %v7111, %v7354
    %v7395 = vsub.f32 %v7116, %v7354
    %v7396 = vsub.f32 %v7119, %v7354
    %v7397 = vsub.f32 %v7124, %v7354
    %v7398 = vsub.f32 %v7127, %v7354
    %v7399 = vsub.f32 %v7132, %v7354
    %v7400 = vsub.f32 %v7135, %v7354
    %v7401 = vsub.f32 %v7140, %v7354
    %v7402 = vsub.f32 %v7143, %v7354
    %v7403 = vsub.f32 %v7148, %v7354
    %v7404 = vsub.f32 %v7151, %v7354
    %v7405 = vsub.f32 %v7156, %v7354
    %v7406 = vsub.f32 %v7159, %v7354
    %v7407 = vsub.f32 %v7164, %v7354
    %v7408 = vsub.f32 %v7167, %v7354
    %v7409 = vsub.f32 %v7172, %v7354
    %v7410 = vsub.f32 %v7175, %v7354
    %v7411 = vsub.f32 %v7180, %v7354
    %v7412 = vsub.f32 %v7183, %v7354
    %v7413 = vsub.f32 %v7188, %v7354
    %v7414 = vsub.f32 %v7191, %v7354
    %v7415 = vsub.f32 %v7196, %v7354
    %v7416 = vsub.f32 %v7199, %v7354
    %v7417 = vsub.f32 %v7204, %v7354
    %v7418 = vsub.f32 %v7207, %v7354
    %v7419 = vmul.f32 %v7355, %v7355
    %v7420 = vmul.f32 %v7356, %v7356
    %v7421 = vmul.f32 %v7357, %v7357
    %v7422 = vmul.f32 %v7358, %v7358
    %v7423 = vmul.f32 %v7359, %v7359
    %v7424 = vmul.f32 %v7360, %v7360
    %v7425 = vmul.f32 %v7361, %v7361
    %v7426 = vmul.f32 %v7362, %v7362
    %v7427 = vmul.f32 %v7363, %v7363
    %v7428 = vmul.f32 %v7364, %v7364
    %v7429 = vmul.f32 %v7365, %v7365
    %v7430 = vmul.f32 %v7366, %v7366
    %v7431 = vmul.f32 %v7367, %v7367
    %v7432 = vmul.f32 %v7368, %v7368
    %v7433 = vmul.f32 %v7369, %v7369
    %v7434 = vmul.f32 %v7370, %v7370
    %v7435 = vmul.f32 %v7371, %v7371
    %v7436 = vmul.f32 %v7372, %v7372
    %v7437 = vmul.f32 %v7373, %v7373
    %v7438 = vmul.f32 %v7374, %v7374
    %v7439 = vmul.f32 %v7375, %v7375
    %v7440 = vmul.f32 %v7376, %v7376
    %v7441 = vmul.f32 %v7377, %v7377
    %v7442 = vmul.f32 %v7378, %v7378
    %v7443 = vmul.f32 %v7379, %v7379
    %v7444 = vmul.f32 %v7380, %v7380
    %v7445 = vmul.f32 %v7381, %v7381
    %v7446 = vmul.f32 %v7382, %v7382
    %v7447 = vmul.f32 %v7383, %v7383
    %v7448 = vmul.f32 %v7384, %v7384
    %v7449 = vmul.f32 %v7385, %v7385
    %v7450 = vmul.f32 %v7386, %v7386
    %v7451 = vmul.f32 %v7387, %v7387
    %v7452 = vmul.f32 %v7388, %v7388
    %v7453 = vmul.f32 %v7389, %v7389
    %v7454 = vmul.f32 %v7390, %v7390
    %v7455 = vmul.f32 %v7391, %v7391
    %v7456 = vmul.f32 %v7392, %v7392
    %v7457 = vmul.f32 %v7393, %v7393
    %v7458 = vmul.f32 %v7394, %v7394
    %v7459 = vmul.f32 %v7395, %v7395
    %v7460 = vmul.f32 %v7396, %v7396
    %v7461 = vmul.f32 %v7397, %v7397
    %v7462 = vmul.f32 %v7398, %v7398
    %v7463 = vmul.f32 %v7399, %v7399
    %v7464 = vmul.f32 %v7400, %v7400
    %v7465 = vmul.f32 %v7401, %v7401
    %v7466 = vmul.f32 %v7402, %v7402
    %v7467 = vmul.f32 %v7403, %v7403
    %v7468 = vmul.f32 %v7404, %v7404
    %v7469 = vmul.f32 %v7405, %v7405
    %v7470 = vmul.f32 %v7406, %v7406
    %v7471 = vmul.f32 %v7407, %v7407
    %v7472 = vmul.f32 %v7408, %v7408
    %v7473 = vmul.f32 %v7409, %v7409
    %v7474 = vmul.f32 %v7410, %v7410
    %v7475 = vmul.f32 %v7411, %v7411
    %v7476 = vmul.f32 %v7412, %v7412
    %v7477 = vmul.f32 %v7413, %v7413
    %v7478 = vmul.f32 %v7414, %v7414
    %v7479 = vmul.f32 %v7415, %v7415
    %v7480 = vmul.f32 %v7416, %v7416
    %v7481 = vmul.f32 %v7417, %v7417
    %v7482 = vmul.f32 %v7418, %v7418
    %7483 = vmatprep.subr.mxu0 0.0
    %7484 = vmatpush1.msra.mxu0 %v7419
    %7485 = vmatprep.subr.mxu0 0.0
    %7486 = vmatpush1.msra.mxu0 %v7420
    %7487 = vmatprep.subr.mxu0 0.0
    %7488 = vmatpush1.msra.mxu0 %v7421
    %7489 = vmatprep.subr.mxu0 0.0
    %7490 = vmatpush1.msra.mxu0 %v7422
    %7491 = vmatprep.subr.mxu0 0.0
    %7492 = vmatpush1.msra.mxu0 %v7423
    %7493 = vmatprep.subr.mxu0 0.0
    %7494 = vmatpush1.msra.mxu0 %v7424
    %7495 = vmatprep.subr.mxu0 0.0
    %7496 = vmatpush1.msra.mxu0 %v7425
    %7497 = vmatprep.subr.mxu0 0.0
    %7498 = vmatpush1.msra.mxu0 %v7426
    %7499 = vmatprep.subr.mxu0 0.0
    %7500 = vmatpush1.msra.mxu0 %v7427
    %7501 = vmatprep.subr.mxu0 0.0
    %7502 = vmatpush1.msra.mxu0 %v7428
    %7503 = vmatprep.subr.mxu0 0.0
    %7504 = vmatpush1.msra.mxu0 %v7429
    %7505 = vmatprep.subr.mxu0 0.0
    %7506 = vmatpush1.msra.mxu0 %v7430
    %7507 = vmatprep.subr.mxu0 0.0
    %7508 = vmatpush1.msra.mxu0 %v7431
    %7509 = vmatprep.subr.mxu0 0.0
    %7510 = vmatpush1.msra.mxu0 %v7432
    %7511 = vmatprep.subr.mxu0 0.0
    %7512 = vmatpush1.msra.mxu0 %v7433
    %7513 = vmatprep.subr.mxu0 0.0
    %7514 = vmatpush1.msra.mxu0 %v7434
    %7515 = vmatprep.subr.mxu0 0.0
    %7516 = vmatpush1.msra.mxu0 %v7435
    %7517 = vmatprep.subr.mxu0 0.0
    %7518 = vmatpush1.msra.mxu0 %v7436
    %7519 = vmatprep.subr.mxu0 0.0
    %7520 = vmatpush1.msra.mxu0 %v7437
    %7521 = vmatprep.subr.mxu0 0.0
    %7522 = vmatpush1.msra.mxu0 %v7438
    %7523 = vmatprep.subr.mxu0 0.0
    %7524 = vmatpush1.msra.mxu0 %v7439
    %7525 = vmatprep.subr.mxu0 0.0
    %7526 = vmatpush1.msra.mxu0 %v7440
    %7527 = vmatprep.subr.mxu0 0.0
    %7528 = vmatpush1.msra.mxu0 %v7441
    %7529 = vmatprep.subr.mxu0 0.0
    %7530 = vmatpush1.msra.mxu0 %v7442
    %7531 = vmatprep.subr.mxu0 0.0
    %7532 = vmatpush1.msra.mxu0 %v7443
    %7533 = vmatprep.subr.mxu0 0.0
    %7534 = vmatpush1.msra.mxu0 %v7444
    %7535 = vmatprep.subr.mxu0 0.0
    %7536 = vmatpush1.msra.mxu0 %v7445
    %7537 = vmatprep.subr.mxu0 0.0
    %7538 = vmatpush1.msra.mxu0 %v7446
    %7539 = vmatprep.subr.mxu0 0.0
    %7540 = vmatpush1.msra.mxu0 %v7447
    %7541 = vmatprep.subr.mxu0 0.0
    %7542 = vmatpush1.msra.mxu0 %v7448
    %7543 = vmatprep.subr.mxu0 0.0
    %7544 = vmatpush1.msra.mxu0 %v7449
    %7545 = vmatprep.subr.mxu0 0.0
    %7546 = vmatpush1.msra.mxu0 %v7450
    %7547 = vmatprep.mubr.f32.mxu0 1.0
    %7548 = vmatmul.mubr.f32.gmra.mrb[0].mxu0 1.0
    %v7549 = vpop.f32.mrb[0].mxu0
    %v7550 = vadd.f32 0.0, %v7549
    %v7551 = vpop.f32.mrb[0].mxu0
    %7552 = vdwg.mxu0
    %7553 = vmatprep.subr.mxu0 0.0
    %7554 = vmatpush1.msra.mxu0 %v7451
    %7555 = vmatprep.subr.mxu0 0.0
    %7556 = vmatpush1.msra.mxu0 %v7452
    %7557 = vmatprep.subr.mxu0 0.0
    %7558 = vmatpush1.msra.mxu0 %v7453
    %7559 = vmatprep.subr.mxu0 0.0
    %7560 = vmatpush1.msra.mxu0 %v7454
    %7561 = vmatprep.subr.mxu0 0.0
    %7562 = vmatpush1.msra.mxu0 %v7455
    %7563 = vmatprep.subr.mxu0 0.0
    %7564 = vmatpush1.msra.mxu0 %v7456
    %7565 = vmatprep.subr.mxu0 0.0
    %7566 = vmatpush1.msra.mxu0 %v7457
    %7567 = vmatprep.subr.mxu0 0.0
    %7568 = vmatpush1.msra.mxu0 %v7458
    %7569 = vmatprep.subr.mxu0 0.0
    %7570 = vmatpush1.msra.mxu0 %v7459
    %7571 = vmatprep.subr.mxu0 0.0
    %7572 = vmatpush1.msra.mxu0 %v7460
    %7573 = vmatprep.subr.mxu0 0.0
    %7574 = vmatpush1.msra.mxu0 %v7461
    %7575 = vmatprep.subr.mxu0 0.0
    %7576 = vmatpush1.msra.mxu0 %v7462
    %7577 = vmatprep.subr.mxu0 0.0
    %7578 = vmatpush1.msra.mxu0 %v7463
    %7579 = vmatprep.subr.mxu0 0.0
    %7580 = vmatpush1.msra.mxu0 %v7464
    %7581 = vmatprep.subr.mxu0 0.0
    %7582 = vmatpush1.msra.mxu0 %v7465
    %7583 = vmatprep.subr.mxu0 0.0
    %7584 = vmatpush1.msra.mxu0 %v7466
    %7585 = vmatprep.subr.mxu0 0.0
    %7586 = vmatpush1.msra.mxu0 %v7467
    %7587 = vmatprep.subr.mxu0 0.0
    %7588 = vmatpush1.msra.mxu0 %v7468
    %7589 = vmatprep.subr.mxu0 0.0
    %7590 = vmatpush1.msra.mxu0 %v7469
    %7591 = vmatprep.subr.mxu0 0.0
    %7592 = vmatpush1.msra.mxu0 %v7470
    %7593 = vmatprep.subr.mxu0 0.0
    %7594 = vmatpush1.msra.mxu0 %v7471
    %7595 = vmatprep.subr.mxu0 0.0
    %7596 = vmatpush1.msra.mxu0 %v7472
    %7597 = vmatprep.subr.mxu0 0.0
    %7598 = vmatpush1.msra.mxu0 %v7473
    %7599 = vmatprep.subr.mxu0 0.0
    %7600 = vmatpush1.msra.mxu0 %v7474
    %7601 = vmatprep.subr.mxu0 0.0
    %7602 = vmatpush1.msra.mxu0 %v7475
    %7603 = vmatprep.subr.mxu0 0.0
    %7604 = vmatpush1.msra.mxu0 %v7476
    %7605 = vmatprep.subr.mxu0 0.0
    %7606 = vmatpush1.msra.mxu0 %v7477
    %7607 = vmatprep.subr.mxu0 0.0
    %7608 = vmatpush1.msra.mxu0 %v7478
    %7609 = vmatprep.subr.mxu0 0.0
    %7610 = vmatpush1.msra.mxu0 %v7479
    %7611 = vmatprep.subr.mxu0 0.0
    %7612 = vmatpush1.msra.mxu0 %v7480
    %7613 = vmatprep.subr.mxu0 0.0
    %7614 = vmatpush1.msra.mxu0 %v7481
    %7615 = vmatprep.subr.mxu0 0.0
    %7616 = vmatpush1.msra.mxu0 %v7482
    %7617 = vmatprep.mubr.f32.mxu0 1.0
    %7618 = vmatmul.mubr.f32.gmra.mrb[0].mxu0 1.0
    %v7619 = vpop.f32.mrb[0].mxu0
    %v7620 = vadd.f32 %v7550, %v7619
    %v7621 = vpop.f32.mrb[0].mxu0
    %7622 = vdwg.mxu0
    %v7623 = vmul.f32 %v7620, 0.001953125
    %v7624 = vld [vmem:[#allocation5 + $0x14] sm:$0x1]
    %v7625 = vadd.f32 %v7623, 1e-05
    %v7626 = vrsqrt.pop %v7625
    %v7627 = vmul.f32 %v7624, %v7626
    %v7629 = vlaneseq
    %v7630 = vshrl.u32 %v7629, 7
    %v7631 = vsub.s32 0, %v7630
    %v7632 = vrot.slane %v7627, %v7631
    %v7634 = vmul.f32 %v7355, %v7632
    %v7635 = vmul.f32 %v7356, %v7632
    %v7636 = vmul.f32 %v7357, %v7632
    %v7637 = vmul.f32 %v7358, %v7632
    %v7638 = vmul.f32 %v7359, %v7632
    %v7639 = vmul.f32 %v7360, %v7632
    %v7640 = vmul.f32 %v7361, %v7632
    %v7641 = vmul.f32 %v7362, %v7632
    %v7642 = vmul.f32 %v7363, %v7632
    %v7643 = vmul.f32 %v7364, %v7632
    %v7644 = vmul.f32 %v7365, %v7632
    %v7645 = vmul.f32 %v7366, %v7632
    %v7646 = vmul.f32 %v7367, %v7632
    %v7647 = vmul.f32 %v7368, %v7632
    %v7648 = vmul.f32 %v7369, %v7632
    %v7649 = vmul.f32 %v7370, %v7632
    %v7650 = vmul.f32 %v7371, %v7632
    %v7651 = vmul.f32 %v7372, %v7632
    %v7652 = vmul.f32 %v7373, %v7632
    %v7653 = vmul.f32 %v7374, %v7632
    %v7654 = vmul.f32 %v7375, %v7632
    %v7655 = vmul.f32 %v7376, %v7632
    %v7656 = vmul.f32 %v7377, %v7632
    %v7657 = vmul.f32 %v7378, %v7632
    %v7658 = vmul.f32 %v7379, %v7632
    %v7659 = vmul.f32 %v7380, %v7632
    %v7660 = vmul.f32 %v7381, %v7632
    %v7661 = vmul.f32 %v7382, %v7632
    %v7662 = vmul.f32 %v7383, %v7632
    %v7663 = vmul.f32 %v7384, %v7632
    %v7664 = vmul.f32 %v7385, %v7632
    %v7665 = vmul.f32 %v7386, %v7632
    %v7666 = vmul.f32 %v7387, %v7632
    %v7667 = vmul.f32 %v7388, %v7632
    %v7668 = vmul.f32 %v7389, %v7632
    %v7669 = vmul.f32 %v7390, %v7632
    %v7670 = vmul.f32 %v7391, %v7632
    %v7671 = vmul.f32 %v7392, %v7632
    %v7672 = vmul.f32 %v7393, %v7632
    %v7673 = vmul.f32 %v7394, %v7632
    %v7674 = vmul.f32 %v7395, %v7632
    %v7675 = vmul.f32 %v7396, %v7632
    %v7676 = vmul.f32 %v7397, %v7632
    %v7677 = vmul.f32 %v7398, %v7632
    %v7678 = vmul.f32 %v7399, %v7632
    %v7679 = vmul.f32 %v7400, %v7632
    %v7680 = vmul.f32 %v7401, %v7632
    %v7681 = vmul.f32 %v7402, %v7632
    %v7682 = vmul.f32 %v7403, %v7632
    %v7683 = vmul.f32 %v7404, %v7632
    %v7684 = vmul.f32 %v7405, %v7632
    %v7685 = vmul.f32 %v7406, %v7632
    %v7686 = vmul.f32 %v7407, %v7632
    %v7687 = vmul.f32 %v7408, %v7632
    %v7688 = vmul.f32 %v7409, %v7632
    %v7689 = vmul.f32 %v7410, %v7632
    %v7690 = vmul.f32 %v7411, %v7632
    %v7691 = vmul.f32 %v7412, %v7632
    %v7692 = vmul.f32 %v7413, %v7632
    %v7693 = vmul.f32 %v7414, %v7632
    %v7694 = vmul.f32 %v7415, %v7632
    %v7695 = vmul.f32 %v7416, %v7632
    %v7696 = vmul.f32 %v7417, %v7632
    %v7697 = vmul.f32 %v7418, %v7632
    %v7698 = vld [vmem:[#allocation5 + $0x15] sm:$0x1]
    %v7700 = vlaneseq
    %v7701 = vshrl.u32 %v7700, 7
    %v7702 = vsub.s32 0, %v7701
    %v7703 = vrot.slane %v7698, %v7702
    %v7705 = vadd.f32 %v7634, %v7703
    %v7706 = vadd.f32 %v7635, %v7703
    %v7707 = vadd.f32 %v7636, %v7703
    %v7708 = vadd.f32 %v7637, %v7703
    %v7709 = vadd.f32 %v7638, %v7703
    %v7710 = vadd.f32 %v7639, %v7703
    %v7711 = vadd.f32 %v7640, %v7703
    %v7712 = vadd.f32 %v7641, %v7703
    %v7713 = vadd.f32 %v7642, %v7703
    %v7714 = vadd.f32 %v7643, %v7703
    %v7715 = vadd.f32 %v7644, %v7703
    %v7716 = vadd.f32 %v7645, %v7703
    %v7717 = vadd.f32 %v7646, %v7703
    %v7718 = vadd.f32 %v7647, %v7703
    %v7719 = vadd.f32 %v7648, %v7703
    %v7720 = vadd.f32 %v7649, %v7703
    %v7721 = vadd.f32 %v7650, %v7703
    %v7722 = vadd.f32 %v7651, %v7703
    %v7723 = vadd.f32 %v7652, %v7703
    %v7724 = vadd.f32 %v7653, %v7703
    %v7725 = vadd.f32 %v7654, %v7703
    %v7726 = vadd.f32 %v7655, %v7703
    %v7727 = vadd.f32 %v7656, %v7703
    %v7728 = vadd.f32 %v7657, %v7703
    %v7729 = vadd.f32 %v7658, %v7703
    %v7730 = vadd.f32 %v7659, %v7703
    %v7731 = vadd.f32 %v7660, %v7703
    %v7732 = vadd.f32 %v7661, %v7703
    %v7733 = vadd.f32 %v7662, %v7703
    %v7734 = vadd.f32 %v7663, %v7703
    %v7735 = vadd.f32 %v7664, %v7703
    %v7736 = vadd.f32 %v7665, %v7703
    %v7737 = vadd.f32 %v7666, %v7703
    %v7738 = vadd.f32 %v7667, %v7703
    %v7739 = vadd.f32 %v7668, %v7703
    %v7740 = vadd.f32 %v7669, %v7703
    %v7741 = vadd.f32 %v7670, %v7703
    %v7742 = vadd.f32 %v7671, %v7703
    %v7743 = vadd.f32 %v7672, %v7703
    %v7744 = vadd.f32 %v7673, %v7703
    %v7745 = vadd.f32 %v7674, %v7703
    %v7746 = vadd.f32 %v7675, %v7703
    %v7747 = vadd.f32 %v7676, %v7703
    %v7748 = vadd.f32 %v7677, %v7703
    %v7749 = vadd.f32 %v7678, %v7703
    %v7750 = vadd.f32 %v7679, %v7703
    %v7751 = vadd.f32 %v7680, %v7703
    %v7752 = vadd.f32 %v7681, %v7703
    %v7753 = vadd.f32 %v7682, %v7703
    %v7754 = vadd.f32 %v7683, %v7703
    %v7755 = vadd.f32 %v7684, %v7703
    %v7756 = vadd.f32 %v7685, %v7703
    %v7757 = vadd.f32 %v7686, %v7703
    %v7758 = vadd.f32 %v7687, %v7703
    %v7759 = vadd.f32 %v7688, %v7703
    %v7760 = vadd.f32 %v7689, %v7703
    %v7761 = vadd.f32 %v7690, %v7703
    %v7762 = vadd.f32 %v7691, %v7703
    %v7763 = vadd.f32 %v7692, %v7703
    %v7764 = vadd.f32 %v7693, %v7703
    %v7765 = vadd.f32 %v7694, %v7703
    %v7766 = vadd.f32 %v7695, %v7703
    %v7767 = vadd.f32 %v7696, %v7703
    %v7768 = vadd.f32 %v7697, %v7703
    %v7769 = vxor.u32 %v7705, 2147483648
    %v7770 = vxor.u32 %v7706, 2147483648
    %v7771 = vxor.u32 %v7707, 2147483648
    %v7772 = vxor.u32 %v7708, 2147483648
    %v7773 = vxor.u32 %v7709, 2147483648
    %v7774 = vxor.u32 %v7710, 2147483648
    %v7775 = vxor.u32 %v7711, 2147483648
    %v7776 = vxor.u32 %v7712, 2147483648
    %v7777 = vxor.u32 %v7713, 2147483648
    %v7778 = vxor.u32 %v7714, 2147483648
    %v7779 = vxor.u32 %v7715, 2147483648
    %v7780 = vxor.u32 %v7716, 2147483648
    %v7781 = vxor.u32 %v7717, 2147483648
    %v7782 = vxor.u32 %v7718, 2147483648
    %v7783 = vxor.u32 %v7719, 2147483648
    %v7784 = vxor.u32 %v7720, 2147483648
    %v7785 = vxor.u32 %v7721, 2147483648
    %v7786 = vxor.u32 %v7722, 2147483648
    %v7787 = vxor.u32 %v7723, 2147483648
    %v7788 = vxor.u32 %v7724, 2147483648
    %v7789 = vxor.u32 %v7725, 2147483648
    %v7790 = vxor.u32 %v7726, 2147483648
    %v7791 = vxor.u32 %v7727, 2147483648
    %v7792 = vxor.u32 %v7728, 2147483648
    %v7793 = vxor.u32 %v7729, 2147483648
    %v7794 = vxor.u32 %v7730, 2147483648
    %v7795 = vxor.u32 %v7731, 2147483648
    %v7796 = vxor.u32 %v7732, 2147483648
    %v7797 = vxor.u32 %v7733, 2147483648
    %v7798 = vxor.u32 %v7734, 2147483648
    %v7799 = vxor.u32 %v7735, 2147483648
    %v7800 = vxor.u32 %v7736, 2147483648
    %v7801 = vxor.u32 %v7737, 2147483648
    %v7802 = vxor.u32 %v7738, 2147483648
    %v7803 = vxor.u32 %v7739, 2147483648
    %v7804 = vxor.u32 %v7740, 2147483648
    %v7805 = vxor.u32 %v7741, 2147483648
    %v7806 = vxor.u32 %v7742, 2147483648
    %v7807 = vxor.u32 %v7743, 2147483648
    %v7808 = vxor.u32 %v7744, 2147483648
    %v7809 = vxor.u32 %v7745, 2147483648
    %v7810 = vxor.u32 %v7746, 2147483648
    %v7811 = vxor.u32 %v7747, 2147483648
    %v7812 = vxor.u32 %v7748, 2147483648
    %v7813 = vxor.u32 %v7749, 2147483648
    %v7814 = vxor.u32 %v7750, 2147483648
    %v7815 = vxor.u32 %v7751, 2147483648
    %v7816 = vxor.u32 %v7752, 2147483648
    %v7817 = vxor.u32 %v7753, 2147483648
    %v7818 = vxor.u32 %v7754, 2147483648
    %v7819 = vxor.u32 %v7755, 2147483648
    %v7820 = vxor.u32 %v7756, 2147483648
    %v7821 = vxor.u32 %v7757, 2147483648
    %v7822 = vxor.u32 %v7758, 2147483648
    %v7823 = vxor.u32 %v7759, 2147483648
    %v7824 = vxor.u32 %v7760, 2147483648
    %v7825 = vxor.u32 %v7761, 2147483648
    %v7826 = vxor.u32 %v7762, 2147483648
    %v7827 = vxor.u32 %v7763, 2147483648
    %v7828 = vxor.u32 %v7764, 2147483648
    %v7829 = vxor.u32 %v7765, 2147483648
    %v7830 = vxor.u32 %v7766, 2147483648
    %v7831 = vxor.u32 %v7767, 2147483648
    %v7832 = vxor.u32 %v7768, 2147483648
    %v7833 = vmul.f32 %v7769, 1.442695
    %v7834 = vpow.pop %v7833
    %v7835 = vmul.f32 %v7770, 1.442695
    %v7836 = vpow.pop %v7835
    %v7837 = vmul.f32 %v7771, 1.442695
    %v7838 = vpow.pop %v7837
    %v7839 = vmul.f32 %v7772, 1.442695
    %v7840 = vpow.pop %v7839
    %v7841 = vmul.f32 %v7773, 1.442695
    %v7842 = vpow.pop %v7841
    %v7843 = vmul.f32 %v7774, 1.442695
    %v7844 = vpow.pop %v7843
    %v7845 = vmul.f32 %v7775, 1.442695
    %v7846 = vpow.pop %v7845
    %v7847 = vmul.f32 %v7776, 1.442695
    %v7848 = vpow.pop %v7847
    %v7849 = vmul.f32 %v7777, 1.442695
    %v7850 = vpow.pop %v7849
    %v7851 = vmul.f32 %v7778, 1.442695
    %v7852 = vpow.pop %v7851
    %v7853 = vmul.f32 %v7779, 1.442695
    %v7854 = vpow.pop %v7853
    %v7855 = vmul.f32 %v7780, 1.442695
    %v7856 = vpow.pop %v7855
    %v7857 = vmul.f32 %v7781, 1.442695
    %v7858 = vpow.pop %v7857
    %v7859 = vmul.f32 %v7782, 1.442695
    %v7860 = vpow.pop %v7859
    %v7861 = vmul.f32 %v7783, 1.442695
    %v7862 = vpow.pop %v7861
    %v7863 = vmul.f32 %v7784, 1.442695
    %v7864 = vpow.pop %v7863
    %v7865 = vmul.f32 %v7785, 1.442695
    %v7866 = vpow.pop %v7865
    %v7867 = vmul.f32 %v7786, 1.442695
    %v7868 = vpow.pop %v7867
    %v7869 = vmul.f32 %v7787, 1.442695
    %v7870 = vpow.pop %v7869
    %v7871 = vmul.f32 %v7788, 1.442695
    %v7872 = vpow.pop %v7871
    %v7873 = vmul.f32 %v7789, 1.442695
    %v7874 = vpow.pop %v7873
    %v7875 = vmul.f32 %v7790, 1.442695
    %v7876 = vpow.pop %v7875
    %v7877 = vmul.f32 %v7791, 1.442695
    %v7878 = vpow.pop %v7877
    %v7879 = vmul.f32 %v7792, 1.442695
    %v7880 = vpow.pop %v7879
    %v7881 = vmul.f32 %v7793, 1.442695
    %v7882 = vpow.pop %v7881
    %v7883 = vmul.f32 %v7794, 1.442695
    %v7884 = vpow.pop %v7883
    %v7885 = vmul.f32 %v7795, 1.442695
    %v7886 = vpow.pop %v7885
    %v7887 = vmul.f32 %v7796, 1.442695
    %v7888 = vpow.pop %v7887
    %v7889 = vmul.f32 %v7797, 1.442695
    %v7890 = vpow.pop %v7889
    %v7891 = vmul.f32 %v7798, 1.442695
    %v7892 = vpow.pop %v7891
    %v7893 = vmul.f32 %v7799, 1.442695
    %v7894 = vpow.pop %v7893
    %v7895 = vmul.f32 %v7800, 1.442695
    %v7896 = vpow.pop %v7895
    %v7897 = vmul.f32 %v7801, 1.442695
    %v7898 = vpow.pop %v7897
    %v7899 = vmul.f32 %v7802, 1.442695
    %v7900 = vpow.pop %v7899
    %v7901 = vmul.f32 %v7803, 1.442695
    %v7902 = vpow.pop %v7901
    %v7903 = vmul.f32 %v7804, 1.442695
    %v7904 = vpow.pop %v7903
    %v7905 = vmul.f32 %v7805, 1.442695
    %v7906 = vpow.pop %v7905
    %v7907 = vmul.f32 %v7806, 1.442695
    %v7908 = vpow.pop %v7907
    %v7909 = vmul.f32 %v7807, 1.442695
    %v7910 = vpow.pop %v7909
    %v7911 = vmul.f32 %v7808, 1.442695
    %v7912 = vpow.pop %v7911
    %v7913 = vmul.f32 %v7809, 1.442695
    %v7914 = vpow.pop %v7913
    %v7915 = vmul.f32 %v7810, 1.442695
    %v7916 = vpow.pop %v7915
    %v7917 = vmul.f32 %v7811, 1.442695
    %v7918 = vpow.pop %v7917
    %v7919 = vmul.f32 %v7812, 1.442695
    %v7920 = vpow.pop %v7919
    %v7921 = vmul.f32 %v7813, 1.442695
    %v7922 = vpow.pop %v7921
    %v7923 = vmul.f32 %v7814, 1.442695
    %v7924 = vpow.pop %v7923
    %v7925 = vmul.f32 %v7815, 1.442695
    %v7926 = vpow.pop %v7925
    %v7927 = vmul.f32 %v7816, 1.442695
    %v7928 = vpow.pop %v7927
    %v7929 = vmul.f32 %v7817, 1.442695
    %v7930 = vpow.pop %v7929
    %v7931 = vmul.f32 %v7818, 1.442695
    %v7932 = vpow.pop %v7931
    %v7933 = vmul.f32 %v7819, 1.442695
    %v7934 = vpow.pop %v7933
    %v7935 = vmul.f32 %v7820, 1.442695
    %v7936 = vpow.pop %v7935
    %v7937 = vmul.f32 %v7821, 1.442695
    %v7938 = vpow.pop %v7937
    %v7939 = vmul.f32 %v7822, 1.442695
    %v7940 = vpow.pop %v7939
    %v7941 = vmul.f32 %v7823, 1.442695
    %v7942 = vpow.pop %v7941
    %v7943 = vmul.f32 %v7824, 1.442695
    %v7944 = vpow.pop %v7943
    %v7945 = vmul.f32 %v7825, 1.442695
    %v7946 = vpow.pop %v7945
    %v7947 = vmul.f32 %v7826, 1.442695
    %v7948 = vpow.pop %v7947
    %v7949 = vmul.f32 %v7827, 1.442695
    %v7950 = vpow.pop %v7949
    %v7951 = vmul.f32 %v7828, 1.442695
    %v7952 = vpow.pop %v7951
    %v7953 = vmul.f32 %v7829, 1.442695
    %v7954 = vpow.pop %v7953
    %v7955 = vmul.f32 %v7830, 1.442695
    %v7956 = vpow.pop %v7955
    %v7957 = vmul.f32 %v7831, 1.442695
    %v7958 = vpow.pop %v7957
    %v7959 = vmul.f32 %v7832, 1.442695
    %v7960 = vpow.pop %v7959
    %v7961 = vadd.f32 %v7834, 1.0
    %v7962 = vadd.f32 %v7836, 1.0
    %v7963 = vadd.f32 %v7838, 1.0
    %v7964 = vadd.f32 %v7840, 1.0
    %v7965 = vadd.f32 %v7842, 1.0
    %v7966 = vadd.f32 %v7844, 1.0
    %v7967 = vadd.f32 %v7846, 1.0
    %v7968 = vadd.f32 %v7848, 1.0
    %v7969 = vadd.f32 %v7850, 1.0
    %v7970 = vadd.f32 %v7852, 1.0
    %v7971 = vadd.f32 %v7854, 1.0
    %v7972 = vadd.f32 %v7856, 1.0
    %v7973 = vadd.f32 %v7858, 1.0
    %v7974 = vadd.f32 %v7860, 1.0
    %v7975 = vadd.f32 %v7862, 1.0
    %v7976 = vadd.f32 %v7864, 1.0
    %v7977 = vadd.f32 %v7866, 1.0
    %v7978 = vadd.f32 %v7868, 1.0
    %v7979 = vadd.f32 %v7870, 1.0
    %v7980 = vadd.f32 %v7872, 1.0
    %v7981 = vadd.f32 %v7874, 1.0
    %v7982 = vadd.f32 %v7876, 1.0
    %v7983 = vadd.f32 %v7878, 1.0
    %v7984 = vadd.f32 %v7880, 1.0
    %v7985 = vadd.f32 %v7882, 1.0
    %v7986 = vadd.f32 %v7884, 1.0
    %v7987 = vadd.f32 %v7886, 1.0
    %v7988 = vadd.f32 %v7888, 1.0
    %v7989 = vadd.f32 %v7890, 1.0
    %v7990 = vadd.f32 %v7892, 1.0
    %v7991 = vadd.f32 %v7894, 1.0
    %v7992 = vadd.f32 %v7896, 1.0
    %v7993 = vadd.f32 %v7898, 1.0
    %v7994 = vadd.f32 %v7900, 1.0
    %v7995 = vadd.f32 %v7902, 1.0
    %v7996 = vadd.f32 %v7904, 1.0
    %v7997 = vadd.f32 %v7906, 1.0
    %v7998 = vadd.f32 %v7908, 1.0
    %v7999 = vadd.f32 %v7910, 1.0
    %v8000 = vadd.f32 %v7912, 1.0
    %v8001 = vadd.f32 %v7914, 1.0
    %v8002 = vadd.f32 %v7916, 1.0
    %v8003 = vadd.f32 %v7918, 1.0
    %v8004 = vadd.f32 %v7920, 1.0
    %v8005 = vadd.f32 %v7922, 1.0
    %v8006 = vadd.f32 %v7924, 1.0
    %v8007 = vadd.f32 %v7926, 1.0
    %v8008 = vadd.f32 %v7928, 1.0
    %v8009 = vadd.f32 %v7930, 1.0
    %v8010 = vadd.f32 %v7932, 1.0
    %v8011 = vadd.f32 %v7934, 1.0
    %v8012 = vadd.f32 %v7936, 1.0
    %v8013 = vadd.f32 %v7938, 1.0
    %v8014 = vadd.f32 %v7940, 1.0
    %v8015 = vadd.f32 %v7942, 1.0
    %v8016 = vadd.f32 %v7944, 1.0
    %v8017 = vadd.f32 %v7946, 1.0
    %v8018 = vadd.f32 %v7948, 1.0
    %v8019 = vadd.f32 %v7950, 1.0
    %v8020 = vadd.f32 %v7952, 1.0
    %v8021 = vadd.f32 %v7954, 1.0
    %v8022 = vadd.f32 %v7956, 1.0
    %v8023 = vadd.f32 %v7958, 1.0
    %v8024 = vadd.f32 %v7960, 1.0
    %v8025 = vrcp.pop %v7961
    %v8026 = vmul.f32 1.0, %v8025
    %v8027 = vrcp.pop %v7962
    %v8028 = vmul.f32 1.0, %v8027
    %v8029 = vrcp.pop %v7963
    %v8030 = vmul.f32 1.0, %v8029
    %v8031 = vrcp.pop %v7964
    %v8032 = vmul.f32 1.0, %v8031
    %v8033 = vrcp.pop %v7965
    %v8034 = vmul.f32 1.0, %v8033
    %v8035 = vrcp.pop %v7966
    %v8036 = vmul.f32 1.0, %v8035
    %v8037 = vrcp.pop %v7967
    %v8038 = vmul.f32 1.0, %v8037
    %v8039 = vrcp.pop %v7968
    %v8040 = vmul.f32 1.0, %v8039
    %v8041 = vrcp.pop %v7969
    %v8042 = vmul.f32 1.0, %v8041
    %v8043 = vrcp.pop %v7970
    %v8044 = vmul.f32 1.0, %v8043
    %v8045 = vrcp.pop %v7971
    %v8046 = vmul.f32 1.0, %v8045
    %v8047 = vrcp.pop %v7972
    %v8048 = vmul.f32 1.0, %v8047
    %v8049 = vrcp.pop %v7973
    %v8050 = vmul.f32 1.0, %v8049
    %v8051 = vrcp.pop %v7974
    %v8052 = vmul.f32 1.0, %v8051
    %v8053 = vrcp.pop %v7975
    %v8054 = vmul.f32 1.0, %v8053
    %v8055 = vrcp.pop %v7976
    %v8056 = vmul.f32 1.0, %v8055
    %v8057 = vrcp.pop %v7977
    %v8058 = vmul.f32 1.0, %v8057
    %v8059 = vrcp.pop %v7978
    %v8060 = vmul.f32 1.0, %v8059
    %v8061 = vrcp.pop %v7979
    %v8062 = vmul.f32 1.0, %v8061
    %v8063 = vrcp.pop %v7980
    %v8064 = vmul.f32 1.0, %v8063
    %v8065 = vrcp.pop %v7981
    %v8066 = vmul.f32 1.0, %v8065
    %v8067 = vrcp.pop %v7982
    %v8068 = vmul.f32 1.0, %v8067
    %v8069 = vrcp.pop %v7983
    %v8070 = vmul.f32 1.0, %v8069
    %v8071 = vrcp.pop %v7984
    %v8072 = vmul.f32 1.0, %v8071
    %v8073 = vrcp.pop %v7985
    %v8074 = vmul.f32 1.0, %v8073
    %v8075 = vrcp.pop %v7986
    %v8076 = vmul.f32 1.0, %v8075
    %v8077 = vrcp.pop %v7987
    %v8078 = vmul.f32 1.0, %v8077
    %v8079 = vrcp.pop %v7988
    %v8080 = vmul.f32 1.0, %v8079
    %v8081 = vrcp.pop %v7989
    %v8082 = vmul.f32 1.0, %v8081
    %v8083 = vrcp.pop %v7990
    %v8084 = vmul.f32 1.0, %v8083
    %v8085 = vrcp.pop %v7991
    %v8086 = vmul.f32 1.0, %v8085
    %v8087 = vrcp.pop %v7992
    %v8088 = vmul.f32 1.0, %v8087
    %v8089 = vrcp.pop %v7993
    %v8090 = vmul.f32 1.0, %v8089
    %v8091 = vrcp.pop %v7994
    %v8092 = vmul.f32 1.0, %v8091
    %v8093 = vrcp.pop %v7995
    %v8094 = vmul.f32 1.0, %v8093
    %v8095 = vrcp.pop %v7996
    %v8096 = vmul.f32 1.0, %v8095
    %v8097 = vrcp.pop %v7997
    %v8098 = vmul.f32 1.0, %v8097
    %v8099 = vrcp.pop %v7998
    %v8100 = vmul.f32 1.0, %v8099
    %v8101 = vrcp.pop %v7999
    %v8102 = vmul.f32 1.0, %v8101
    %v8103 = vrcp.pop %v8000
    %v8104 = vmul.f32 1.0, %v8103
    %v8105 = vrcp.pop %v8001
    %v8106 = vmul.f32 1.0, %v8105
    %v8107 = vrcp.pop %v8002
    %v8108 = vmul.f32 1.0, %v8107
    %v8109 = vrcp.pop %v8003
    %v8110 = vmul.f32 1.0, %v8109
    %v8111 = vrcp.pop %v8004
    %v8112 = vmul.f32 1.0, %v8111
    %v8113 = vrcp.pop %v8005
    %v8114 = vmul.f32 1.0, %v8113
    %v8115 = vrcp.pop %v8006
    %v8116 = vmul.f32 1.0, %v8115
    %v8117 = vrcp.pop %v8007
    %v8118 = vmul.f32 1.0, %v8117
    %v8119 = vrcp.pop %v8008
    %v8120 = vmul.f32 1.0, %v8119
    %v8121 = vrcp.pop %v8009
    %v8122 = vmul.f32 1.0, %v8121
    %v8123 = vrcp.pop %v8010
    %v8124 = vmul.f32 1.0, %v8123
    %v8125 = vrcp.pop %v8011
    %v8126 = vmul.f32 1.0, %v8125
    %v8127 = vrcp.pop %v8012
    %v8128 = vmul.f32 1.0, %v8127
    %v8129 = vrcp.pop %v8013
    %v8130 = vmul.f32 1.0, %v8129
    %v8131 = vrcp.pop %v8014
    %v8132 = vmul.f32 1.0, %v8131
    %v8133 = vrcp.pop %v8015
    %v8134 = vmul.f32 1.0, %v8133
    %v8135 = vrcp.pop %v8016
    %v8136 = vmul.f32 1.0, %v8135
    %v8137 = vrcp.pop %v8017
    %v8138 = vmul.f32 1.0, %v8137
    %v8139 = vrcp.pop %v8018
    %v8140 = vmul.f32 1.0, %v8139
    %v8141 = vrcp.pop %v8019
    %v8142 = vmul.f32 1.0, %v8141
    %v8143 = vrcp.pop %v8020
    %v8144 = vmul.f32 1.0, %v8143
    %v8145 = vrcp.pop %v8021
    %v8146 = vmul.f32 1.0, %v8145
    %v8147 = vrcp.pop %v8022
    %v8148 = vmul.f32 1.0, %v8147
    %v8149 = vrcp.pop %v8023
    %v8150 = vmul.f32 1.0, %v8149
    %v8151 = vrcp.pop %v8024
    %v8152 = vmul.f32 1.0, %v8151
    %8153 = vst [vmem:[#allocation17 + $0x8] sm:$0xff] %v8026
    %8154 = vst [vmem:[#allocation17 + $0x18] sm:$0xff] %v8028
    %8155 = vst [vmem:[#allocation17 + $0x28] sm:$0xff] %v8030
    %8156 = vst [vmem:[#allocation17 + $0x38] sm:$0xff] %v8032
    %8157 = vst [vmem:[#allocation17 + $0x48] sm:$0xff] %v8034
    %8158 = vst [vmem:[#allocation17 + $0x58] sm:$0xff] %v8036
    %8159 = vst [vmem:[#allocation17 + $0x68] sm:$0xff] %v8038
    %8160 = vst [vmem:[#allocation17 + $0x78] sm:$0xff] %v8040
    %8161 = vst [vmem:[#allocation17 + $0x88] sm:$0xff] %v8042
    %8162 = vst [vmem:[#allocation17 + $0x98] sm:$0xff] %v8044
    %8163 = vst [vmem:[#allocation17 + $0xa8] sm:$0xff] %v8046
    %8164 = vst [vmem:[#allocation17 + $0xb8] sm:$0xff] %v8048
    %8165 = vst [vmem:[#allocation17 + $0xc8] sm:$0xff] %v8050
    %8166 = vst [vmem:[#allocation17 + $0xd8] sm:$0xff] %v8052
    %8167 = vst [vmem:[#allocation17 + $0xe8] sm:$0xff] %v8054
    %8168 = vst [vmem:[#allocation17 + $0xf8] sm:$0xff] %v8056
    %8169 = vst [vmem:[#allocation17 + $0x108] sm:$0xff] %v8058
    %8170 = vst [vmem:[#allocation17 + $0x118] sm:$0xff] %v8060
    %8171 = vst [vmem:[#allocation17 + $0x128] sm:$0xff] %v8062
    %8172 = vst [vmem:[#allocation17 + $0x138] sm:$0xff] %v8064
    %8173 = vst [vmem:[#allocation17 + $0x148] sm:$0xff] %v8066
    %8174 = vst [vmem:[#allocation17 + $0x158] sm:$0xff] %v8068
    %8175 = vst [vmem:[#allocation17 + $0x168] sm:$0xff] %v8070
    %8176 = vst [vmem:[#allocation17 + $0x178] sm:$0xff] %v8072
    %8177 = vst [vmem:[#allocation17 + $0x188] sm:$0xff] %v8074
    %8178 = vst [vmem:[#allocation17 + $0x198] sm:$0xff] %v8076
    %8179 = vst [vmem:[#allocation17 + $0x1a8] sm:$0xff] %v8078
    %8180 = vst [vmem:[#allocation17 + $0x1b8] sm:$0xff] %v8080
    %8181 = vst [vmem:[#allocation17 + $0x1c8] sm:$0xff] %v8082
    %8182 = vst [vmem:[#allocation17 + $0x1d8] sm:$0xff] %v8084
    %8183 = vst [vmem:[#allocation17 + $0x1e8] sm:$0xff] %v8086
    %8184 = vst [vmem:[#allocation17 + $0x1f8] sm:$0xff] %v8088
    %8185 = vst [vmem:[#allocation17 + $0x208] sm:$0xff] %v8090
    %8186 = vst [vmem:[#allocation17 + $0x218] sm:$0xff] %v8092
    %8187 = vst [vmem:[#allocation17 + $0x228] sm:$0xff] %v8094
    %8188 = vst [vmem:[#allocation17 + $0x238] sm:$0xff] %v8096
    %8189 = vst [vmem:[#allocation17 + $0x248] sm:$0xff] %v8098
    %8190 = vst [vmem:[#allocation17 + $0x258] sm:$0xff] %v8100
    %8191 = vst [vmem:[#allocation17 + $0x268] sm:$0xff] %v8102
    %8192 = vst [vmem:[#allocation17 + $0x278] sm:$0xff] %v8104
    %8193 = vst [vmem:[#allocation17 + $0x288] sm:$0xff] %v8106
    %8194 = vst [vmem:[#allocation17 + $0x298] sm:$0xff] %v8108
    %8195 = vst [vmem:[#allocation17 + $0x2a8] sm:$0xff] %v8110
    %8196 = vst [vmem:[#allocation17 + $0x2b8] sm:$0xff] %v8112
    %8197 = vst [vmem:[#allocation17 + $0x2c8] sm:$0xff] %v8114
    %8198 = vst [vmem:[#allocation17 + $0x2d8] sm:$0xff] %v8116
    %8199 = vst [vmem:[#allocation17 + $0x2e8] sm:$0xff] %v8118
    %8200 = vst [vmem:[#allocation17 + $0x2f8] sm:$0xff] %v8120
    %8201 = vst [vmem:[#allocation17 + $0x308] sm:$0xff] %v8122
    %8202 = vst [vmem:[#allocation17 + $0x318] sm:$0xff] %v8124
    %8203 = vst [vmem:[#allocation17 + $0x328] sm:$0xff] %v8126
    %8204 = vst [vmem:[#allocation17 + $0x338] sm:$0xff] %v8128
    %8205 = vst [vmem:[#allocation17 + $0x348] sm:$0xff] %v8130
    %8206 = vst [vmem:[#allocation17 + $0x358] sm:$0xff] %v8132
    %8207 = vst [vmem:[#allocation17 + $0x368] sm:$0xff] %v8134
    %8208 = vst [vmem:[#allocation17 + $0x378] sm:$0xff] %v8136
    %8209 = vst [vmem:[#allocation17 + $0x388] sm:$0xff] %v8138
    %8210 = vst [vmem:[#allocation17 + $0x398] sm:$0xff] %v8140
    %8211 = vst [vmem:[#allocation17 + $0x3a8] sm:$0xff] %v8142
    %8212 = vst [vmem:[#allocation17 + $0x3b8] sm:$0xff] %v8144
    %8213 = vst [vmem:[#allocation17 + $0x3c8] sm:$0xff] %v8146
    %8214 = vst [vmem:[#allocation17 + $0x3d8] sm:$0xff] %v8148
    %8215 = vst [vmem:[#allocation17 + $0x3e8] sm:$0xff] %v8150
    %8216 = vst [vmem:[#allocation17 + $0x3f8] sm:$0xff] %v8152
    // Predicated region
    $region74: #{tpu_custom_call.1} parent=1 // pred_check
      _
    $region75: #{tpu_custom_call.1} parent=1 // pred_check_branch
      %8218 = sbr.rel (0) target = $region77
    $region76: #{tpu_custom_call.1} parent=1 // pred_region
      %s8220 = ssub.s32 16384, 16384
      %8221 = vsyncadd [#allocation4], %s8220
      %s8222 = sshll.u32 [#allocation17], 4
      %s8223 = int_to_ptr.vmem [resolvable:$true] %s8222
      %8228 = dma.vmem_to_hbm [thread:$0]  %s8223, 16384, %s9, [#allocation4], 256, 256, 16
    $region77: #{tpu_custom_call.1} parent=1 // pred_fallthru
      _
    // Predicated region
    $region78: #{tpu_custom_call.1} parent=1 // pred_check
      _
    $region79: #{tpu_custom_call.1} parent=1 // pred_check_branch
      %8230 = sbr.rel (0) target = $region81
    $region80: #{tpu_custom_call.1} parent=1 // pred_region
      %8231 = dma.done [#allocation4], 16384
    $region81: #{tpu_custom_call.1} parent=1 // pred_fallthru
      _
    %8232 = vsyncpa [#allocation3], 1
    %8233 = vsyncpa [#allocation6], 1
    %8234 = vsyncpa [#allocation9], 1
    %8235 = vsyncpa [#allocation12], 1
    %8236 = vsyncpa [#allocation15], 1
    %8237 = vsyncpa [#allocation4], 1

</llo_original>
